<compile_context>
chip_gen: v5e
topology: v5e:2x2
jax: 0.10.0
libtpu: 0.0.40
codegen_flags: <defaults>
</compile_context>

<pallas_src>
import functools

import jax
import jax.numpy as jnp
from jax.experimental import pallas as pl
from jax.experimental.pallas import tpu as pltpu


# ----------------------------- helpers -----------------------------

def _round_up(x, m):
    return ((x + m - 1) // m) * m


def _pad2d(x, rows, cols, value=0.0):
    r, c = x.shape
    if r == rows and c == cols:
        return x
    return jnp.pad(x, ((0, rows - r), (0, cols - c)), constant_values=value)


def _cparams(*sems):
    return pltpu.CompilerParams(dimension_semantics=sems,
                                vmem_limit_bytes=32 * 1024 * 1024)


# ----------------------------- Pallas kernels -----------------------------

def _fused_matmul_kernel(*refs, prologue, bias, residual, relu_out):
    """acc += relu(a*asc+ash) @ b  ;  out = [acc + bias + res*rsc+rsh] (+relu)."""
    o_ref, acc_ref = refs[-2], refs[-1]
    it = iter(refs[:-2])
    a_ref = next(it)
    b_ref = next(it)
    asc_ref = ash_ref = bias_ref = res_ref = rsc_ref = rsh_ref = None
    if prologue:
        asc_ref = next(it)
        ash_ref = next(it)
    if bias:
        bias_ref = next(it)
    if residual:
        res_ref = next(it)
        rsc_ref = next(it)
        rsh_ref = next(it)

    k = pl.program_id(2)

    @pl.when(k == 0)
    def _():
        acc_ref[...] = jnp.zeros_like(acc_ref)

    a = a_ref[...]
    if prologue:
        # fused BN-apply + ReLU on the A operand (per-K-column affine)
        a = jnp.maximum(a.astype(jnp.float32) * asc_ref[...] + ash_ref[...], 0.0)
        a = a.astype(b_ref.dtype)
    acc_ref[...] += jnp.dot(a, b_ref[...], preferred_element_type=jnp.float32)

    @pl.when(k == pl.num_programs(2) - 1)
    def _():
        out = acc_ref[...]
        if bias:
            out = out + bias_ref[...]
        if residual:
            out = out + res_ref[...] * rsc_ref[...] + rsh_ref[...]
        if relu_out:
            out = jnp.maximum(out, 0.0)
        o_ref[...] = out.astype(o_ref.dtype)


def _bn_stats_kernel(x_ref, sum_ref, ssq_ref):
    """Accumulate per-channel sum / sum-of-squares across M tiles."""
    @pl.when(pl.program_id(0) == 0)
    def _():
        sum_ref[...] = jnp.zeros_like(sum_ref)
        ssq_ref[...] = jnp.zeros_like(ssq_ref)

    x = x_ref[...]
    sum_ref[...] += jnp.sum(x, axis=0, keepdims=True)
    ssq_ref[...] += jnp.sum(x * x, axis=0, keepdims=True)


def _bn_pool_kernel(a_ref, b_ref, c_ref, d_ref, sc_ref, sh_ref, o_ref):
    """Fused BN-apply + 2x2 max-pool over the four window taps."""
    sc = sc_ref[...]
    sh = sh_ref[...]
    y0 = jnp.maximum(a_ref[...] * sc + sh, b_ref[...] * sc + sh)
    y1 = jnp.maximum(c_ref[...] * sc + sh, d_ref[...] * sc + sh)
    o_ref[...] = jnp.maximum(y0, y1)


def _gap_kernel(x_ref, o_ref):
    # x block: (1, H*W, C) -> mean over spatial axis -> (1, 1, C)
    o_ref[...] = jnp.mean(x_ref[...], axis=1, keepdims=True)


# ----------------------------- Pallas wrappers -----------------------------

def fused_matmul(a, b, *, a_scale=None, a_shift=None, bias=None,
                 residual=None, r_scale=None, r_shift=None, relu_out=False):
    """out = epilogue( relu(a*a_scale+a_shift) @ b ), all padding handled here.

    a: (M, K), b: (K, N) -> (M, N) float32.
    a_scale/a_shift: per-K-column BN affine applied (with ReLU) before the dot.
    bias: (N,) added in the epilogue.
    residual/r_scale/r_shift: (M,N)/(N,)/(N,) -> out += residual*r_scale+r_shift.
    relu_out: final ReLU in the epilogue.
    """
    M, K = a.shape
    Kb, N = b.shape
    assert K == Kb

    tm = 256 if M >= 256 else _round_up(M, 8)
    tn = 256 if N >= 256 else 128
    tk = 512 if K >= 512 else 128
    Mp, Np, Kp = _round_up(M, tm), _round_up(N, tn), _round_up(K, tk)

    a_p = _pad2d(a.astype(jnp.bfloat16), Mp, Kp)
    b_p = _pad2d(b.astype(jnp.bfloat16), Kp, Np)

    has_pro = a_scale is not None
    has_bias = bias is not None
    has_res = residual is not None

    inputs = [a_p, b_p]
    in_specs = [pl.BlockSpec((tm, tk), lambda i, j, k: (i, k)),
                pl.BlockSpec((tk, tn), lambda i, j, k: (k, j))]
    if has_pro:
        inputs += [_pad2d(a_scale.reshape(1, K).astype(jnp.float32), 1, Kp, 1.0),
                   _pad2d(a_shift.reshape(1, K).astype(jnp.float32), 1, Kp, 0.0)]
        in_specs += [pl.BlockSpec((1, tk), lambda i, j, k: (0, k)),
                     pl.BlockSpec((1, tk), lambda i, j, k: (0, k))]
    if has_bias:
        inputs += [_pad2d(bias.reshape(1, N).astype(jnp.float32), 1, Np)]
        in_specs += [pl.BlockSpec((1, tn), lambda i, j, k: (0, j))]
    if has_res:
        inputs += [_pad2d(residual.astype(jnp.float32), Mp, Np),
                   _pad2d(r_scale.reshape(1, N).astype(jnp.float32), 1, Np, 1.0),
                   _pad2d(r_shift.reshape(1, N).astype(jnp.float32), 1, Np, 0.0)]
        in_specs += [pl.BlockSpec((tm, tn), lambda i, j, k: (i, j)),
                     pl.BlockSpec((1, tn), lambda i, j, k: (0, j)),
                     pl.BlockSpec((1, tn), lambda i, j, k: (0, j))]

    kernel = functools.partial(_fused_matmul_kernel, prologue=has_pro,
                               bias=has_bias, residual=has_res,
                               relu_out=relu_out)
    out = pl.pallas_call(
        kernel,
        out_shape=jax.ShapeDtypeStruct((Mp, Np), jnp.float32),
        grid=(Mp // tm, Np // tn, Kp // tk),
        in_specs=in_specs,
        out_specs=pl.BlockSpec((tm, tn), lambda i, j, k: (i, j)),
        scratch_shapes=[pltpu.VMEM((tm, tn), jnp.float32)],
        compiler_params=_cparams("parallel", "parallel", "arbitrary"),
    )(*inputs)
    return out[:M, :N]


def bn_scale_shift(x2d, gamma, beta, eps=1e-5):
    """Batch-stat BN -> per-channel (scale, shift) so y = x*scale + shift."""
    M, C = x2d.shape
    tm = 512 if M >= 512 else _round_up(M, 8)
    Mp = _round_up(M, tm)
    xp = _pad2d(x2d.astype(jnp.float32), Mp, C)
    s, ss = pl.pallas_call(
        _bn_stats_kernel,
        out_shape=(jax.ShapeDtypeStruct((1, C), jnp.float32),
                   jax.ShapeDtypeStruct((1, C), jnp.float32)),
        grid=(Mp // tm,),
        in_specs=[pl.BlockSpec((tm, C), lambda i: (i, 0))],
        out_specs=(pl.BlockSpec((1, C), lambda i: (0, 0)),
                   pl.BlockSpec((1, C), lambda i: (0, 0))),
        compiler_params=_cparams("arbitrary"),
    )(xp)
    mean = s[0] / M
    var = jnp.maximum(ss[0] / M - mean * mean, 0.0)
    inv = jax.lax.rsqrt(var + eps)
    scale = gamma * inv
    shift = beta - mean * scale
    return scale, shift


def pallas_bn_maxpool(x_nhwc, scale, shift):
    """y = maxpool2x2(x*scale + shift); x: (N,H,W,C) -> (N,H//2,W//2,C)."""
    N, H, W, C = x_nhwc.shape
    He, We = (H // 2) * 2, (W // 2) * 2
    xc = x_nhwc[:, :He, :We, :]
    taps = [xc[:, 0::2, 0::2, :], xc[:, 0::2, 1::2, :],
            xc[:, 1::2, 0::2, :], xc[:, 1::2, 1::2, :]]
    taps = [t.reshape(-1, C).astype(jnp.float32) for t in taps]
    M = taps[0].shape[0]
    tm = 512 if M >= 512 else _round_up(M, 8)
    Mp = _round_up(M, tm)
    taps = [_pad2d(t, Mp, C) for t in taps]
    y = pl.pallas_call(
        _bn_pool_kernel,
        out_shape=jax.ShapeDtypeStruct((Mp, C), jnp.float32),
        grid=(Mp // tm,),
        in_specs=[pl.BlockSpec((tm, C), lambda i: (i, 0))] * 4
                 + [pl.BlockSpec((1, C), lambda i: (0, 0))] * 2,
        out_specs=pl.BlockSpec((tm, C), lambda i: (i, 0)),
        compiler_params=_cparams("parallel"),
    )(*taps, scale.reshape(1, C), shift.reshape(1, C))
    return y[:M].reshape(N, He // 2, We // 2, C)


def pallas_gap(x_nhwc):
    """Global average pool: (N, H, W, C) -> (N, C)."""
    N, H, W, C = x_nhwc.shape
    x3 = x_nhwc.reshape(N, H * W, C).astype(jnp.float32)
    y = pl.pallas_call(
        _gap_kernel,
        out_shape=jax.ShapeDtypeStruct((N, 1, C), jnp.float32),
        grid=(N,),
        in_specs=[pl.BlockSpec((1, H * W, C), lambda n: (n, 0, 0))],
        out_specs=pl.BlockSpec((1, 1, C), lambda n: (n, 0, 0)),
        compiler_params=_cparams("parallel"),
    )(x3)
    return y.reshape(N, C)


# ----------------------------- conv glue (JAX) -----------------------------

def _im2col_3x3(x_nhwc, pad):
    """Patch extraction (glue, bf16); stride 1, 3x3 kernel."""
    N, H, W, C = x_nhwc.shape
    xp = jnp.pad(x_nhwc, ((0, 0), (1, 1), (1, 1), (0, 0))) if pad else x_nhwc
    Ho, Wo = xp.shape[1] - 2, xp.shape[2] - 2
    cols = [xp[:, di:di + Ho, dj:dj + Wo, :]
            for di in range(3) for dj in range(3)]
    p = jnp.concatenate(cols, axis=-1).reshape(N * Ho * Wo, 9 * C)
    return p, (N, Ho, Wo)


def conv3x3(x_nhwc, w_mat, *, pad=True, bias=None, bn_scale=None, bn_shift=None,
            residual2d=None, r_scale=None, r_shift=None, relu_out=False):
    """3x3 conv, stride 1.  w_mat: pre-transformed (9*I, O) bf16 matrix."""
    O = w_mat.shape[1]
    patches, (N, Ho, Wo) = _im2col_3x3(x_nhwc.astype(jnp.bfloat16), pad)
    a_scale = a_shift = None
    if bn_scale is not None:
        a_scale = jnp.tile(bn_scale, 9)      # per-tap copies of per-channel affine
        a_shift = jnp.tile(bn_shift, 9)
    y = fused_matmul(patches, w_mat, a_scale=a_scale, a_shift=a_shift, bias=bias,
                     residual=residual2d, r_scale=r_scale, r_shift=r_shift,
                     relu_out=relu_out)
    return y.reshape(N, Ho, Wo, O)


# ----------------------------- model forward -----------------------------

def resblock_forward(x_nhwc, p):
    """Pre-activation residual block, stride 1."""
    N, H, W, Cin = x_nhwc.shape
    x2d = x_nhwc.reshape(-1, Cin)
    Cout = p['conv1_wm'].shape[1]

    # shortcut (projection conv1x1 + BN-affine folded into conv2 epilogue)
    if 'sc_wm' in p:
        s2d = fused_matmul(x2d.astype(jnp.bfloat16), p['sc_wm'])
        r_scale, r_shift = bn_scale_shift(s2d, p['sc_g'], p['sc_b'])
        residual = s2d
    else:
        residual = x2d
        r_scale = jnp.ones((Cout,), jnp.float32)
        r_shift = jnp.zeros((Cout,), jnp.float32)

    # bn1 + relu fused into conv1 prologue
    sc1, sh1 = bn_scale_shift(x2d, p['bn1_g'], p['bn1_b'])
    out1 = conv3x3(x_nhwc, p['conv1_wm'], pad=True, bn_scale=sc1, bn_shift=sh1)

    # bn2 + relu fused into conv2 prologue; residual add + final relu in epilogue
    sc2, sh2 = bn_scale_shift(out1.reshape(-1, Cout), p['bn2_g'], p['bn2_b'])
    y = conv3x3(out1, p['conv2_wm'], pad=True, bn_scale=sc2, bn_shift=sh2,
                residual2d=residual, r_scale=r_scale, r_shift=r_shift,
                relu_out=True)
    return y


def resnet_forward(x_nchw, params):
    x = jnp.transpose(x_nchw, (0, 2, 3, 1)).astype(jnp.float32)   # -> NHWC
    # conv1: 3x3, stride 1, padding 0, with bias (bias fused into epilogue)
    x = conv3x3(x, params['conv1_wm'], pad=False, bias=params['conv1_b'])
    N, H, W, C = x.shape
    # bn1 fused with the 2x2 max-pool apply
    sc, sh = bn_scale_shift(x.reshape(-1, C), params['bn1_g'], params['bn1_b'])
    x = pallas_bn_maxpool(x, sc, sh)
    for bp in params['blocks']:
        x = resblock_forward(x, bp)
    g = pallas_gap(x)                                              # (N, 8k)
    # fc: y = g @ W^T + b  (weight pre-transposed to (8k, 10) at init)
    return fused_matmul(g.astype(jnp.bfloat16), params['fc_wm'],
                        bias=params['fc_b'])


# ----------------------------- parameter init -----------------------------

def _bn_init(key, c):
    kg, kb = jax.random.split(key)
    gamma = 1.0 + 0.1 * jax.random.normal(kg, (c,), jnp.float32)
    beta = 0.1 * jax.random.normal(kb, (c,), jnp.float32)
    return gamma, beta


def _conv3x3_mat(key, o, i):
    # PyTorch layout (O, I, 3, 3) -> (kh, kw, I, O) -> (9*I, O), bf16, once.
    w = 0.1 * jax.random.normal(key, (o, i, 3, 3), jnp.float32)
    return jnp.transpose(w, (2, 3, 1, 0)).reshape(9 * i, o).astype(jnp.bfloat16)


def _conv1x1_mat(key, o, i):
    w = 0.1 * jax.random.normal(key, (o, i, 1, 1), jnp.float32)
    return w.reshape(o, i).T.astype(jnp.bfloat16)


def init_params(key, k):
    keys = iter(jax.random.split(key, 64))
    p = {}
    p['conv1_wm'] = _conv3x3_mat(next(keys), k, 3)
    p['conv1_b'] = 0.1 * jax.random.normal(next(keys), (k,), jnp.float32)
    p['bn1_g'], p['bn1_b'] = _bn_init(next(keys), k)
    cfg = [(k, k), (k, k), (k, 2 * k), (2 * k, 2 * k),
           (2 * k, 4 * k), (4 * k, 4 * k), (4 * k, 8 * k), (8 * k, 8 * k)]
    blocks = []
    for cin, cout in cfg:
        bp = {}
        bp['bn1_g'], bp['bn1_b'] = _bn_init(next(keys), cin)
        bp['conv1_wm'] = _conv3x3_mat(next(keys), cout, cin)
        bp['bn2_g'], bp['bn2_b'] = _bn_init(next(keys), cout)
        bp['conv2_wm'] = _conv3x3_mat(next(keys), cout, cout)
        if cin != cout:
            bp['sc_wm'] = _conv1x1_mat(next(keys), cout, cin)
            bp['sc_g'], bp['sc_b'] = _bn_init(next(keys), cout)
        blocks.append(bp)
    p['blocks'] = blocks
    fc_w = 0.1 * jax.random.normal(next(keys), (10, 8 * k), jnp.float32)
    p['fc_wm'] = fc_w.T.astype(jnp.bfloat16)          # pre-transposed (8k, 10)
    p['fc_b'] = 0.1 * jax.random.normal(next(keys), (10,), jnp.float32)
    return p


# ----------------------------- main -----------------------------

if __name__ == "__main__":
    key = jax.random.PRNGKey(0)
    kp, kx = jax.random.split(key)
    width = 4  # small "width" for a quick run; PyTorch default is 64
    params = init_params(kp, width)

    # NCHW input, like PyTorch.  18x18 -> conv1(valid 3x3) -> 16x16 -> pool -> 8x8
    x = jax.random.normal(kx, (2, 3, 18, 18), jnp.float32)

    fwd = jax.jit(resnet_forward)
    out = fwd(x, params)
    out = jax.block_until_ready(out)
    assert out.shape == (2, 10), out.shape
    print("KERNEL_OK")
</pallas_src>

<mosaic_0001>
module attributes {stable_mosaic.version = 11 : i64} {
  func.func @_fused_matmul_kernel(%arg0: i32, %arg1: i32, %arg2: i32, %arg3: memref<256x128xbf16, #tpu.memory_space<vmem>>, %arg4: memref<128x128xbf16, #tpu.memory_space<vmem>>, %arg5: memref<1x128xf32, #tpu.memory_space<vmem>>, %arg6: memref<256x128xf32, #tpu.memory_space<vmem>>, %arg7: memref<256x128xf32, #tpu.memory_space<vmem>>) attributes {dimension_semantics = [#tpu.dimension_semantics<parallel>, #tpu.dimension_semantics<parallel>, #tpu.dimension_semantics<arbitrary>], iteration_bounds = array<i64: 2, 1, 1>, scalar_prefetch = 0 : i64, scratch_operands = 1 : i64, tpu.core_type = #tpu.core_type<tc>, window_params = [{transform_indices = @transform_0, window_bounds = array<i64: 256, 128>}, {transform_indices = @transform_1, window_bounds = array<i64: 128, 128>}, {transform_indices = @transform_2, window_bounds = array<i64: 1, 128>}, {transform_indices = @transform_3, window_bounds = array<i64: 256, 128>}]} {
    %c0_i32 = arith.constant 0 : i32
    %0 = arith.cmpi eq, %arg2, %c0_i32 : i32
    %1 = arith.extui %0 : i1 to i32
    %c0_i32_0 = arith.constant 0 : i32
    %2 = arith.cmpi ne, %1, %c0_i32_0 : i32
    scf.if %2 {
      %cst_10 = arith.constant 0.000000e+00 : f32
      %12 = vector.broadcast %cst_10 : f32 to vector<256x128xf32>
      %c0_11 = arith.constant 0 : index
      %c0_12 = arith.constant 0 : index
      %13 = vector.load %arg7[%c0_11, %c0_12] : memref<256x128xf32, #tpu.memory_space<vmem>>, vector<256x128xf32>
      tpu.vector_store %arg7[%c0_11, %c0_12], %12 {strides = array<i32>} : memref<256x128xf32, #tpu.memory_space<vmem>>, vector<256x128xf32>,
    } else {
    }
    %c0 = arith.constant 0 : index
    %c0_1 = arith.constant 0 : index
    %3 = vector.load %arg3[%c0, %c0_1] : memref<256x128xbf16, #tpu.memory_space<vmem>>, vector<256x128xbf16>
    %c0_2 = arith.constant 0 : index
    %c0_3 = arith.constant 0 : index
    %4 = vector.load %arg7[%c0_2, %c0_3] : memref<256x128xf32, #tpu.memory_space<vmem>>, vector<256x128xf32>
    %c0_4 = arith.constant 0 : index
    %c0_5 = arith.constant 0 : index
    %5 = vector.load %arg4[%c0_4, %c0_5] : memref<128x128xbf16, #tpu.memory_space<vmem>>, vector<128x128xbf16>
    %cst = arith.constant dense<0.000000e+00> : vector<256x128xf32>
    %6 = tpu.matmul %3, %5, %cst {dimension_numbers = #tpu.dot_dimension_numbers<[1], [0], [0], [1], [0, 0, 1, 1], [], []>} : vector<256x128xbf16>, vector<128x128xbf16>, vector<256x128xf32> -> vector<256x128xf32>
    %7 = arith.addf %4, %6 : vector<256x128xf32>
    %c0_6 = arith.constant 0 : index
    %c0_7 = arith.constant 0 : index
    %8 = vector.load %arg7[%c0_6, %c0_7] : memref<256x128xf32, #tpu.memory_space<vmem>>, vector<256x128xf32>
    tpu.vector_store %arg7[%c0_6, %c0_7], %7 {strides = array<i32>} : memref<256x128xf32, #tpu.memory_space<vmem>>, vector<256x128xf32>,
    %c0_i32_8 = arith.constant 0 : i32
    %9 = arith.cmpi eq, %arg2, %c0_i32_8 : i32
    %10 = arith.extui %9 : i1 to i32
    %c0_i32_9 = arith.constant 0 : i32
    %11 = arith.cmpi ne, %10, %c0_i32_9 : i32
    scf.if %11 {
      %c0_10 = arith.constant 0 : index
      %c0_11 = arith.constant 0 : index
      %12 = vector.load %arg7[%c0_10, %c0_11] : memref<256x128xf32, #tpu.memory_space<vmem>>, vector<256x128xf32>
      %c0_12 = arith.constant 0 : index
      %c0_13 = arith.constant 0 : index
      %13 = vector.load %arg5[%c0_12, %c0_13] : memref<1x128xf32, #tpu.memory_space<vmem>>, vector<1x128xf32>
      %14 = vector.broadcast %13 : vector<1x128xf32> to vector<256x128xf32>
      %15 = arith.addf %12, %14 : vector<256x128xf32>
      %c0_14 = arith.constant 0 : index
      %c0_15 = arith.constant 0 : index
      %16 = vector.load %arg6[%c0_14, %c0_15] : memref<256x128xf32, #tpu.memory_space<vmem>>, vector<256x128xf32>
      tpu.vector_store %arg6[%c0_14, %c0_15], %15 {strides = array<i32>} : memref<256x128xf32, #tpu.memory_space<vmem>>, vector<256x128xf32>,
    } else {
    }
    return
  }
  func.func @transform_0(%arg0: i32, %arg1: i32, %arg2: i32) -> (i32, i32) {
    %c0_i32 = arith.constant 0 : i32
    return %arg0, %arg2 : i32, i32
  }
  func.func @transform_1(%arg0: i32, %arg1: i32, %arg2: i32) -> (i32, i32) {
    %c0_i32 = arith.constant 0 : i32
    return %arg2, %arg1 : i32, i32
  }
  func.func @transform_2(%arg0: i32, %arg1: i32, %arg2: i32) -> (i32, i32) {
    %c0_i32 = arith.constant 0 : i32
    %c0_i32_0 = arith.constant 0 : i32
    return %c0_i32, %arg1 : i32, i32
  }
  func.func @transform_3(%arg0: i32, %arg1: i32, %arg2: i32) -> (i32, i32) {
    %c0_i32 = arith.constant 0 : i32
    return %arg0, %arg1 : i32, i32
  }
}

module attributes {stable_mosaic.version = 11 : i64} {
  func.func @_bn_stats_kernel(%arg0: i32, %arg1: memref<512x4xf32, #tpu.memory_space<vmem>>, %arg2: memref<1x4xf32, #tpu.memory_space<vmem>>, %arg3: memref<1x4xf32, #tpu.memory_space<vmem>>) attributes {dimension_semantics = [#tpu.dimension_semantics<arbitrary>], iteration_bounds = array<i64: 1>, scalar_prefetch = 0 : i64, scratch_operands = 0 : i64, tpu.core_type = #tpu.core_type<tc>, window_params = [{transform_indices = @transform_0, window_bounds = array<i64: 512, 4>}, {pipeline_mode = #tpu.pipeline_mode<synchronous>, transform_indices = @transform_1, window_bounds = array<i64: 1, 4>}, {pipeline_mode = #tpu.pipeline_mode<synchronous>, transform_indices = @transform_2, window_bounds = array<i64: 1, 4>}]} {
    %c0_i32 = arith.constant 0 : i32
    %0 = arith.cmpi eq, %arg0, %c0_i32 : i32
    %1 = arith.extui %0 : i1 to i32
    %c0_i32_0 = arith.constant 0 : i32
    %2 = arith.cmpi ne, %1, %c0_i32_0 : i32
    scf.if %2 {
      %cst_11 = arith.constant 0.000000e+00 : f32
      %15 = vector.broadcast %cst_11 : f32 to vector<1x4xf32>
      %c0_12 = arith.constant 0 : index
      %c0_13 = arith.constant 0 : index
      %16 = vector.load %arg2[%c0_12, %c0_13] : memref<1x4xf32, #tpu.memory_space<vmem>>, vector<1x4xf32>
      tpu.vector_store %arg2[%c0_12, %c0_13], %15 {strides = array<i32>} : memref<1x4xf32, #tpu.memory_space<vmem>>, vector<1x4xf32>,
      %cst_14 = arith.constant 0.000000e+00 : f32
      %17 = vector.broadcast %cst_14 : f32 to vector<1x4xf32>
      %c0_15 = arith.constant 0 : index
      %c0_16 = arith.constant 0 : index
      %18 = vector.load %arg3[%c0_15, %c0_16] : memref<1x4xf32, #tpu.memory_space<vmem>>, vector<1x4xf32>
      tpu.vector_store %arg3[%c0_15, %c0_16], %17 {strides = array<i32>} : memref<1x4xf32, #tpu.memory_space<vmem>>, vector<1x4xf32>,
    } else {
    }
    %c0 = arith.constant 0 : index
    %c0_1 = arith.constant 0 : index
    %3 = vector.load %arg1[%c0, %c0_1] : memref<512x4xf32, #tpu.memory_space<vmem>>, vector<512x4xf32>
    %c0_2 = arith.constant 0 : index
    %c0_3 = arith.constant 0 : index
    %4 = vector.load %arg2[%c0_2, %c0_3] : memref<1x4xf32, #tpu.memory_space<vmem>>, vector<1x4xf32>
    %cst = arith.constant dense<0.000000e+00> : vector<4xf32>
    %5 = vector.multi_reduction <add>, %3, %cst [0] : vector<512x4xf32> to vector<4xf32>
    %6 = vector.shape_cast %5 : vector<4xf32> to vector<1x4xf32>
    %7 = arith.addf %4, %6 : vector<1x4xf32>
    %c0_4 = arith.constant 0 : index
    %c0_5 = arith.constant 0 : index
    %8 = vector.load %arg2[%c0_4, %c0_5] : memref<1x4xf32, #tpu.memory_space<vmem>>, vector<1x4xf32>
    tpu.vector_store %arg2[%c0_4, %c0_5], %7 {strides = array<i32>} : memref<1x4xf32, #tpu.memory_space<vmem>>, vector<1x4xf32>,
    %c0_6 = arith.constant 0 : index
    %c0_7 = arith.constant 0 : index
    %9 = vector.load %arg3[%c0_6, %c0_7] : memref<1x4xf32, #tpu.memory_space<vmem>>, vector<1x4xf32>
    %10 = arith.mulf %3, %3 : vector<512x4xf32>
    %cst_8 = arith.constant dense<0.000000e+00> : vector<4xf32>
    %11 = vector.multi_reduction <add>, %10, %cst_8 [0] : vector<512x4xf32> to vector<4xf32>
    %12 = vector.shape_cast %11 : vector<4xf32> to vector<1x4xf32>
    %13 = arith.addf %9, %12 : vector<1x4xf32>
    %c0_9 = arith.constant 0 : index
    %c0_10 = arith.constant 0 : index
    %14 = vector.load %arg3[%c0_9, %c0_10] : memref<1x4xf32, #tpu.memory_space<vmem>>, vector<1x4xf32>
    tpu.vector_store %arg3[%c0_9, %c0_10], %13 {strides = array<i32>} : memref<1x4xf32, #tpu.memory_space<vmem>>, vector<1x4xf32>,
    return
  }
  func.func @transform_0(%arg0: i32) -> (i32, i32) {
    %c0_i32 = arith.constant 0 : i32
    %c0_i32_0 = arith.constant 0 : i32
    return %arg0, %c0_i32 : i32, i32
  }
  func.func @transform_1(%arg0: i32) -> (i32, i32) {
    %c0_i32 = arith.constant 0 : i32
    %c0_i32_0 = arith.constant 0 : i32
    %c0_i32_1 = arith.constant 0 : i32
    return %c0_i32, %c0_i32_0 : i32, i32
  }
  func.func @transform_2(%arg0: i32) -> (i32, i32) {
    %c0_i32 = arith.constant 0 : i32
    %c0_i32_0 = arith.constant 0 : i32
    %c0_i32_1 = arith.constant 0 : i32
    return %c0_i32, %c0_i32_0 : i32, i32
  }
}

module attributes {stable_mosaic.version = 11 : i64} {
  func.func @_bn_pool_kernel(%arg0: i32, %arg1: memref<128x4xf32, #tpu.memory_space<vmem>>, %arg2: memref<128x4xf32, #tpu.memory_space<vmem>>, %arg3: memref<128x4xf32, #tpu.memory_space<vmem>>, %arg4: memref<128x4xf32, #tpu.memory_space<vmem>>, %arg5: memref<1x4xf32, #tpu.memory_space<vmem>>, %arg6: memref<1x4xf32, #tpu.memory_space<vmem>>, %arg7: memref<128x4xf32, #tpu.memory_space<vmem>>) attributes {dimension_semantics = [#tpu.dimension_semantics<parallel>], iteration_bounds = array<i64: 1>, scalar_prefetch = 0 : i64, scratch_operands = 0 : i64, tpu.core_type = #tpu.core_type<tc>, window_params = [{transform_indices = @transform_0, window_bounds = array<i64: 128, 4>}, {transform_indices = @transform_1, window_bounds = array<i64: 128, 4>}, {transform_indices = @transform_2, window_bounds = array<i64: 128, 4>}, {transform_indices = @transform_3, window_bounds = array<i64: 128, 4>}, {pipeline_mode = #tpu.pipeline_mode<synchronous>, transform_indices = @transform_4, window_bounds = array<i64: 1, 4>}, {pipeline_mode = #tpu.pipeline_mode<synchronous>, transform_indices = @transform_5, window_bounds = array<i64: 1, 4>}, {transform_indices = @transform_6, window_bounds = array<i64: 128, 4>}]} {
    %c0 = arith.constant 0 : index
    %c0_0 = arith.constant 0 : index
    %0 = vector.load %arg5[%c0, %c0_0] : memref<1x4xf32, #tpu.memory_space<vmem>>, vector<1x4xf32>
    %c0_1 = arith.constant 0 : index
    %c0_2 = arith.constant 0 : index
    %1 = vector.load %arg6[%c0_1, %c0_2] : memref<1x4xf32, #tpu.memory_space<vmem>>, vector<1x4xf32>
    %c0_3 = arith.constant 0 : index
    %c0_4 = arith.constant 0 : index
    %2 = vector.load %arg1[%c0_3, %c0_4] : memref<128x4xf32, #tpu.memory_space<vmem>>, vector<128x4xf32>
    %3 = vector.broadcast %0 : vector<1x4xf32> to vector<128x4xf32>
    %4 = arith.mulf %2, %3 : vector<128x4xf32>
    %5 = vector.broadcast %1 : vector<1x4xf32> to vector<128x4xf32>
    %6 = arith.addf %4, %5 : vector<128x4xf32>
    %c0_5 = arith.constant 0 : index
    %c0_6 = arith.constant 0 : index
    %7 = vector.load %arg2[%c0_5, %c0_6] : memref<128x4xf32, #tpu.memory_space<vmem>>, vector<128x4xf32>
    %8 = vector.broadcast %0 : vector<1x4xf32> to vector<128x4xf32>
    %9 = arith.mulf %7, %8 : vector<128x4xf32>
    %10 = vector.broadcast %1 : vector<1x4xf32> to vector<128x4xf32>
    %11 = arith.addf %9, %10 : vector<128x4xf32>
    %12 = arith.maximumf %6, %11 : vector<128x4xf32>
    %c0_7 = arith.constant 0 : index
    %c0_8 = arith.constant 0 : index
    %13 = vector.load %arg3[%c0_7, %c0_8] : memref<128x4xf32, #tpu.memory_space<vmem>>, vector<128x4xf32>
    %14 = vector.broadcast %0 : vector<1x4xf32> to vector<128x4xf32>
    %15 = arith.mulf %13, %14 : vector<128x4xf32>
    %16 = vector.broadcast %1 : vector<1x4xf32> to vector<128x4xf32>
    %17 = arith.addf %15, %16 : vector<128x4xf32>
    %c0_9 = arith.constant 0 : index
    %c0_10 = arith.constant 0 : index
    %18 = vector.load %arg4[%c0_9, %c0_10] : memref<128x4xf32, #tpu.memory_space<vmem>>, vector<128x4xf32>
    %19 = vector.broadcast %0 : vector<1x4xf32> to vector<128x4xf32>
    %20 = arith.mulf %18, %19 : vector<128x4xf32>
    %21 = vector.broadcast %1 : vector<1x4xf32> to vector<128x4xf32>
    %22 = arith.addf %20, %21 : vector<128x4xf32>
    %23 = arith.maximumf %17, %22 : vector<128x4xf32>
    %24 = arith.maximumf %12, %23 : vector<128x4xf32>
    %c0_11 = arith.constant 0 : index
    %c0_12 = arith.constant 0 : index
    %25 = vector.load %arg7[%c0_11, %c0_12] : memref<128x4xf32, #tpu.memory_space<vmem>>, vector<128x4xf32>
    tpu.vector_store %arg7[%c0_11, %c0_12], %24 {strides = array<i32>} : memref<128x4xf32, #tpu.memory_space<vmem>>, vector<128x4xf32>,
    return
  }
  func.func @transform_0(%arg0: i32) -> (i32, i32) {
    %c0_i32 = arith.constant 0 : i32
    %c0_i32_0 = arith.constant 0 : i32
    return %arg0, %c0_i32 : i32, i32
  }
  func.func @transform_1(%arg0: i32) -> (i32, i32) {
    %c0_i32 = arith.constant 0 : i32
    %c0_i32_0 = arith.constant 0 : i32
    return %arg0, %c0_i32 : i32, i32
  }
  func.func @transform_2(%arg0: i32) -> (i32, i32) {
    %c0_i32 = arith.constant 0 : i32
    %c0_i32_0 = arith.constant 0 : i32
    return %arg0, %c0_i32 : i32, i32
  }
  func.func @transform_3(%arg0: i32) -> (i32, i32) {
    %c0_i32 = arith.constant 0 : i32
    %c0_i32_0 = arith.constant 0 : i32
    return %arg0, %c0_i32 : i32, i32
  }
  func.func @transform_4(%arg0: i32) -> (i32, i32) {
    %c0_i32 = arith.constant 0 : i32
    %c0_i32_0 = arith.constant 0 : i32
    %c0_i32_1 = arith.constant 0 : i32
    return %c0_i32, %c0_i32_0 : i32, i32
  }
  func.func @transform_5(%arg0: i32) -> (i32, i32) {
    %c0_i32 = arith.constant 0 : i32
    %c0_i32_0 = arith.constant 0 : i32
    %c0_i32_1 = arith.constant 0 : i32
    return %c0_i32, %c0_i32_0 : i32, i32
  }
  func.func @transform_6(%arg0: i32) -> (i32, i32) {
    %c0_i32 = arith.constant 0 : i32
    %c0_i32_0 = arith.constant 0 : i32
    return %arg0, %c0_i32 : i32, i32
  }
}

module attributes {stable_mosaic.version = 11 : i64} {
  func.func @_bn_stats_kernel(%arg0: i32, %arg1: memref<128x4xf32, #tpu.memory_space<vmem>>, %arg2: memref<1x4xf32, #tpu.memory_space<vmem>>, %arg3: memref<1x4xf32, #tpu.memory_space<vmem>>) attributes {dimension_semantics = [#tpu.dimension_semantics<arbitrary>], iteration_bounds = array<i64: 1>, scalar_prefetch = 0 : i64, scratch_operands = 0 : i64, tpu.core_type = #tpu.core_type<tc>, window_params = [{transform_indices = @transform_0, window_bounds = array<i64: 128, 4>}, {pipeline_mode = #tpu.pipeline_mode<synchronous>, transform_indices = @transform_1, window_bounds = array<i64: 1, 4>}, {pipeline_mode = #tpu.pipeline_mode<synchronous>, transform_indices = @transform_2, window_bounds = array<i64: 1, 4>}]} {
    %c0_i32 = arith.constant 0 : i32
    %0 = arith.cmpi eq, %arg0, %c0_i32 : i32
    %1 = arith.extui %0 : i1 to i32
    %c0_i32_0 = arith.constant 0 : i32
    %2 = arith.cmpi ne, %1, %c0_i32_0 : i32
    scf.if %2 {
      %cst_11 = arith.constant 0.000000e+00 : f32
      %15 = vector.broadcast %cst_11 : f32 to vector<1x4xf32>
      %c0_12 = arith.constant 0 : index
      %c0_13 = arith.constant 0 : index
      %16 = vector.load %arg2[%c0_12, %c0_13] : memref<1x4xf32, #tpu.memory_space<vmem>>, vector<1x4xf32>
      tpu.vector_store %arg2[%c0_12, %c0_13], %15 {strides = array<i32>} : memref<1x4xf32, #tpu.memory_space<vmem>>, vector<1x4xf32>,
      %cst_14 = arith.constant 0.000000e+00 : f32
      %17 = vector.broadcast %cst_14 : f32 to vector<1x4xf32>
      %c0_15 = arith.constant 0 : index
      %c0_16 = arith.constant 0 : index
      %18 = vector.load %arg3[%c0_15, %c0_16] : memref<1x4xf32, #tpu.memory_space<vmem>>, vector<1x4xf32>
      tpu.vector_store %arg3[%c0_15, %c0_16], %17 {strides = array<i32>} : memref<1x4xf32, #tpu.memory_space<vmem>>, vector<1x4xf32>,
    } else {
    }
    %c0 = arith.constant 0 : index
    %c0_1 = arith.constant 0 : index
    %3 = vector.load %arg1[%c0, %c0_1] : memref<128x4xf32, #tpu.memory_space<vmem>>, vector<128x4xf32>
    %c0_2 = arith.constant 0 : index
    %c0_3 = arith.constant 0 : index
    %4 = vector.load %arg2[%c0_2, %c0_3] : memref<1x4xf32, #tpu.memory_space<vmem>>, vector<1x4xf32>
    %cst = arith.constant dense<0.000000e+00> : vector<4xf32>
    %5 = vector.multi_reduction <add>, %3, %cst [0] : vector<128x4xf32> to vector<4xf32>
    %6 = vector.shape_cast %5 : vector<4xf32> to vector<1x4xf32>
    %7 = arith.addf %4, %6 : vector<1x4xf32>
    %c0_4 = arith.constant 0 : index
    %c0_5 = arith.constant 0 : index
    %8 = vector.load %arg2[%c0_4, %c0_5] : memref<1x4xf32, #tpu.memory_space<vmem>>, vector<1x4xf32>
    tpu.vector_store %arg2[%c0_4, %c0_5], %7 {strides = array<i32>} : memref<1x4xf32, #tpu.memory_space<vmem>>, vector<1x4xf32>,
    %c0_6 = arith.constant 0 : index
    %c0_7 = arith.constant 0 : index
    %9 = vector.load %arg3[%c0_6, %c0_7] : memref<1x4xf32, #tpu.memory_space<vmem>>, vector<1x4xf32>
    %10 = arith.mulf %3, %3 : vector<128x4xf32>
    %cst_8 = arith.constant dense<0.000000e+00> : vector<4xf32>
    %11 = vector.multi_reduction <add>, %10, %cst_8 [0] : vector<128x4xf32> to vector<4xf32>
    %12 = vector.shape_cast %11 : vector<4xf32> to vector<1x4xf32>
    %13 = arith.addf %9, %12 : vector<1x4xf32>
    %c0_9 = arith.constant 0 : index
    %c0_10 = arith.constant 0 : index
    %14 = vector.load %arg3[%c0_9, %c0_10] : memref<1x4xf32, #tpu.memory_space<vmem>>, vector<1x4xf32>
    tpu.vector_store %arg3[%c0_9, %c0_10], %13 {strides = array<i32>} : memref<1x4xf32, #tpu.memory_space<vmem>>, vector<1x4xf32>,
    return
  }
  func.func @transform_0(%arg0: i32) -> (i32, i32) {
    %c0_i32 = arith.constant 0 : i32
    %c0_i32_0 = arith.constant 0 : i32
    return %arg0, %c0_i32 : i32, i32
  }
  func.func @transform_1(%arg0: i32) -> (i32, i32) {
    %c0_i32 = arith.constant 0 : i32
    %c0_i32_0 = arith.constant 0 : i32
    %c0_i32_1 = arith.constant 0 : i32
    return %c0_i32, %c0_i32_0 : i32, i32
  }
  func.func @transform_2(%arg0: i32) -> (i32, i32) {
    %c0_i32 = arith.constant 0 : i32
    %c0_i32_0 = arith.constant 0 : i32
    %c0_i32_1 = arith.constant 0 : i32
    return %c0_i32, %c0_i32_0 : i32, i32
  }
}

module attributes {stable_mosaic.version = 11 : i64} {
  func.func @_fused_matmul_kernel(%arg0: i32, %arg1: i32, %arg2: i32, %arg3: memref<128x128xbf16, #tpu.memory_space<vmem>>, %arg4: memref<128x128xbf16, #tpu.memory_space<vmem>>, %arg5: memref<1x128xf32, #tpu.memory_space<vmem>>, %arg6: memref<1x128xf32, #tpu.memory_space<vmem>>, %arg7: memref<128x128xf32, #tpu.memory_space<vmem>>, %arg8: memref<128x128xf32, #tpu.memory_space<vmem>>) attributes {dimension_semantics = [#tpu.dimension_semantics<parallel>, #tpu.dimension_semantics<parallel>, #tpu.dimension_semantics<arbitrary>], iteration_bounds = array<i64: 1, 1, 1>, scalar_prefetch = 0 : i64, scratch_operands = 1 : i64, tpu.core_type = #tpu.core_type<tc>, window_params = [{transform_indices = @transform_0, window_bounds = array<i64: 128, 128>}, {transform_indices = @transform_1, window_bounds = array<i64: 128, 128>}, {transform_indices = @transform_2, window_bounds = array<i64: 1, 128>}, {transform_indices = @transform_3, window_bounds = array<i64: 1, 128>}, {transform_indices = @transform_4, window_bounds = array<i64: 128, 128>}]} {
    %c0_i32 = arith.constant 0 : i32
    %0 = arith.cmpi eq, %arg2, %c0_i32 : i32
    %1 = arith.extui %0 : i1 to i32
    %c0_i32_0 = arith.constant 0 : i32
    %2 = arith.cmpi ne, %1, %c0_i32_0 : i32
    scf.if %2 {
      %cst_15 = arith.constant 0.000000e+00 : f32
      %22 = vector.broadcast %cst_15 : f32 to vector<128x128xf32>
      %c0_16 = arith.constant 0 : index
      %c0_17 = arith.constant 0 : index
      %23 = vector.load %arg8[%c0_16, %c0_17] : memref<128x128xf32, #tpu.memory_space<vmem>>, vector<128x128xf32>
      tpu.vector_store %arg8[%c0_16, %c0_17], %22 {strides = array<i32>} : memref<128x128xf32, #tpu.memory_space<vmem>>, vector<128x128xf32>,
    } else {
    }
    %c0 = arith.constant 0 : index
    %c0_1 = arith.constant 0 : index
    %3 = vector.load %arg3[%c0, %c0_1] : memref<128x128xbf16, #tpu.memory_space<vmem>>, vector<128x128xbf16>
    %4 = arith.extf %3 : vector<128x128xbf16> to vector<128x128xf32>
    %c0_2 = arith.constant 0 : index
    %c0_3 = arith.constant 0 : index
    %5 = vector.load %arg5[%c0_2, %c0_3] : memref<1x128xf32, #tpu.memory_space<vmem>>, vector<1x128xf32>
    %6 = vector.broadcast %5 : vector<1x128xf32> to vector<128x128xf32>
    %7 = arith.mulf %4, %6 : vector<128x128xf32>
    %c0_4 = arith.constant 0 : index
    %c0_5 = arith.constant 0 : index
    %8 = vector.load %arg6[%c0_4, %c0_5] : memref<1x128xf32, #tpu.memory_space<vmem>>, vector<1x128xf32>
    %9 = vector.broadcast %8 : vector<1x128xf32> to vector<128x128xf32>
    %10 = arith.addf %7, %9 : vector<128x128xf32>
    %cst = arith.constant 0.000000e+00 : f32
    %11 = vector.broadcast %cst : f32 to vector<128x128xf32>
    %12 = arith.maximumf %10, %11 : vector<128x128xf32>
    %13 = arith.truncf %12 : vector<128x128xf32> to vector<128x128xbf16>
    %c0_6 = arith.constant 0 : index
    %c0_7 = arith.constant 0 : index
    %14 = vector.load %arg8[%c0_6, %c0_7] : memref<128x128xf32, #tpu.memory_space<vmem>>, vector<128x128xf32>
    %c0_8 = arith.constant 0 : index
    %c0_9 = arith.constant 0 : index
    %15 = vector.load %arg4[%c0_8, %c0_9] : memref<128x128xbf16, #tpu.memory_space<vmem>>, vector<128x128xbf16>
    %cst_10 = arith.constant dense<0.000000e+00> : vector<128x128xf32>
    %16 = tpu.matmul %13, %15, %cst_10 {dimension_numbers = #tpu.dot_dimension_numbers<[1], [0], [0], [1], [0, 0, 1, 1], [], []>} : vector<128x128xbf16>, vector<128x128xbf16>, vector<128x128xf32> -> vector<128x128xf32>
    %17 = arith.addf %14, %16 : vector<128x128xf32>
    %c0_11 = arith.constant 0 : index
    %c0_12 = arith.constant 0 : index
    %18 = vector.load %arg8[%c0_11, %c0_12] : memref<128x128xf32, #tpu.memory_space<vmem>>, vector<128x128xf32>
    tpu.vector_store %arg8[%c0_11, %c0_12], %17 {strides = array<i32>} : memref<128x128xf32, #tpu.memory_space<vmem>>, vector<128x128xf32>,
    %c0_i32_13 = arith.constant 0 : i32
    %19 = arith.cmpi eq, %arg2, %c0_i32_13 : i32
    %20 = arith.extui %19 : i1 to i32
    %c0_i32_14 = arith.constant 0 : i32
    %21 = arith.cmpi ne, %20, %c0_i32_14 : i32
    scf.if %21 {
      %c0_15 = arith.constant 0 : index
      %c0_16 = arith.constant 0 : index
      %22 = vector.load %arg8[%c0_15, %c0_16] : memref<128x128xf32, #tpu.memory_space<vmem>>, vector<128x128xf32>
      %c0_17 = arith.constant 0 : index
      %c0_18 = arith.constant 0 : index
      %23 = vector.load %arg7[%c0_17, %c0_18] : memref<128x128xf32, #tpu.memory_space<vmem>>, vector<128x128xf32>
      tpu.vector_store %arg7[%c0_17, %c0_18], %22 {strides = array<i32>} : memref<128x128xf32, #tpu.memory_space<vmem>>, vector<128x128xf32>,
    } else {
    }
    return
  }
  func.func @transform_0(%arg0: i32, %arg1: i32, %arg2: i32) -> (i32, i32) {
    %c0_i32 = arith.constant 0 : i32
    return %arg0, %arg2 : i32, i32
  }
  func.func @transform_1(%arg0: i32, %arg1: i32, %arg2: i32) -> (i32, i32) {
    %c0_i32 = arith.constant 0 : i32
    return %arg2, %arg1 : i32, i32
  }
  func.func @transform_2(%arg0: i32, %arg1: i32, %arg2: i32) -> (i32, i32) {
    %c0_i32 = arith.constant 0 : i32
    %c0_i32_0 = arith.constant 0 : i32
    return %c0_i32, %arg2 : i32, i32
  }
  func.func @transform_3(%arg0: i32, %arg1: i32, %arg2: i32) -> (i32, i32) {
    %c0_i32 = arith.constant 0 : i32
    %c0_i32_0 = arith.constant 0 : i32
    return %c0_i32, %arg2 : i32, i32
  }
  func.func @transform_4(%arg0: i32, %arg1: i32, %arg2: i32) -> (i32, i32) {
    %c0_i32 = arith.constant 0 : i32
    return %arg0, %arg1 : i32, i32
  }
}

module attributes {stable_mosaic.version = 11 : i64} {
  func.func @_bn_stats_kernel(%arg0: i32, %arg1: memref<128x8xf32, #tpu.memory_space<vmem>>, %arg2: memref<1x8xf32, #tpu.memory_space<vmem>>, %arg3: memref<1x8xf32, #tpu.memory_space<vmem>>) attributes {dimension_semantics = [#tpu.dimension_semantics<arbitrary>], iteration_bounds = array<i64: 1>, scalar_prefetch = 0 : i64, scratch_operands = 0 : i64, tpu.core_type = #tpu.core_type<tc>, window_params = [{transform_indices = @transform_0, window_bounds = array<i64: 128, 8>}, {pipeline_mode = #tpu.pipeline_mode<synchronous>, transform_indices = @transform_1, window_bounds = array<i64: 1, 8>}, {pipeline_mode = #tpu.pipeline_mode<synchronous>, transform_indices = @transform_2, window_bounds = array<i64: 1, 8>}]} {
    %c0_i32 = arith.constant 0 : i32
    %0 = arith.cmpi eq, %arg0, %c0_i32 : i32
    %1 = arith.extui %0 : i1 to i32
    %c0_i32_0 = arith.constant 0 : i32
    %2 = arith.cmpi ne, %1, %c0_i32_0 : i32
    scf.if %2 {
      %cst_11 = arith.constant 0.000000e+00 : f32
      %15 = vector.broadcast %cst_11 : f32 to vector<1x8xf32>
      %c0_12 = arith.constant 0 : index
      %c0_13 = arith.constant 0 : index
      %16 = vector.load %arg2[%c0_12, %c0_13] : memref<1x8xf32, #tpu.memory_space<vmem>>, vector<1x8xf32>
      tpu.vector_store %arg2[%c0_12, %c0_13], %15 {strides = array<i32>} : memref<1x8xf32, #tpu.memory_space<vmem>>, vector<1x8xf32>,
      %cst_14 = arith.constant 0.000000e+00 : f32
      %17 = vector.broadcast %cst_14 : f32 to vector<1x8xf32>
      %c0_15 = arith.constant 0 : index
      %c0_16 = arith.constant 0 : index
      %18 = vector.load %arg3[%c0_15, %c0_16] : memref<1x8xf32, #tpu.memory_space<vmem>>, vector<1x8xf32>
      tpu.vector_store %arg3[%c0_15, %c0_16], %17 {strides = array<i32>} : memref<1x8xf32, #tpu.memory_space<vmem>>, vector<1x8xf32>,
    } else {
    }
    %c0 = arith.constant 0 : index
    %c0_1 = arith.constant 0 : index
    %3 = vector.load %arg1[%c0, %c0_1] : memref<128x8xf32, #tpu.memory_space<vmem>>, vector<128x8xf32>
    %c0_2 = arith.constant 0 : index
    %c0_3 = arith.constant 0 : index
    %4 = vector.load %arg2[%c0_2, %c0_3] : memref<1x8xf32, #tpu.memory_space<vmem>>, vector<1x8xf32>
    %cst = arith.constant dense<0.000000e+00> : vector<8xf32>
    %5 = vector.multi_reduction <add>, %3, %cst [0] : vector<128x8xf32> to vector<8xf32>
    %6 = vector.shape_cast %5 : vector<8xf32> to vector<1x8xf32>
    %7 = arith.addf %4, %6 : vector<1x8xf32>
    %c0_4 = arith.constant 0 : index
    %c0_5 = arith.constant 0 : index
    %8 = vector.load %arg2[%c0_4, %c0_5] : memref<1x8xf32, #tpu.memory_space<vmem>>, vector<1x8xf32>
    tpu.vector_store %arg2[%c0_4, %c0_5], %7 {strides = array<i32>} : memref<1x8xf32, #tpu.memory_space<vmem>>, vector<1x8xf32>,
    %c0_6 = arith.constant 0 : index
    %c0_7 = arith.constant 0 : index
    %9 = vector.load %arg3[%c0_6, %c0_7] : memref<1x8xf32, #tpu.memory_space<vmem>>, vector<1x8xf32>
    %10 = arith.mulf %3, %3 : vector<128x8xf32>
    %cst_8 = arith.constant dense<0.000000e+00> : vector<8xf32>
    %11 = vector.multi_reduction <add>, %10, %cst_8 [0] : vector<128x8xf32> to vector<8xf32>
    %12 = vector.shape_cast %11 : vector<8xf32> to vector<1x8xf32>
    %13 = arith.addf %9, %12 : vector<1x8xf32>
    %c0_9 = arith.constant 0 : index
    %c0_10 = arith.constant 0 : index
    %14 = vector.load %arg3[%c0_9, %c0_10] : memref<1x8xf32, #tpu.memory_space<vmem>>, vector<1x8xf32>
    tpu.vector_store %arg3[%c0_9, %c0_10], %13 {strides = array<i32>} : memref<1x8xf32, #tpu.memory_space<vmem>>, vector<1x8xf32>,
    return
  }
  func.func @transform_0(%arg0: i32) -> (i32, i32) {
    %c0_i32 = arith.constant 0 : i32
    %c0_i32_0 = arith.constant 0 : i32
    return %arg0, %c0_i32 : i32, i32
  }
  func.func @transform_1(%arg0: i32) -> (i32, i32) {
    %c0_i32 = arith.constant 0 : i32
    %c0_i32_0 = arith.constant 0 : i32
    %c0_i32_1 = arith.constant 0 : i32
    return %c0_i32, %c0_i32_0 : i32, i32
  }
  func.func @transform_2(%arg0: i32) -> (i32, i32) {
    %c0_i32 = arith.constant 0 : i32
    %c0_i32_0 = arith.constant 0 : i32
    %c0_i32_1 = arith.constant 0 : i32
    return %c0_i32, %c0_i32_0 : i32, i32
  }
}

module attributes {stable_mosaic.version = 11 : i64} {
  func.func @_fused_matmul_kernel(%arg0: i32, %arg1: i32, %arg2: i32, %arg3: memref<128x128xbf16, #tpu.memory_space<vmem>>, %arg4: memref<128x128xbf16, #tpu.memory_space<vmem>>, %arg5: memref<128x128xf32, #tpu.memory_space<vmem>>, %arg6: memref<128x128xf32, #tpu.memory_space<vmem>>) attributes {dimension_semantics = [#tpu.dimension_semantics<parallel>, #tpu.dimension_semantics<parallel>, #tpu.dimension_semantics<arbitrary>], iteration_bounds = array<i64: 1, 1, 1>, scalar_prefetch = 0 : i64, scratch_operands = 1 : i64, tpu.core_type = #tpu.core_type<tc>, window_params = [{transform_indices = @transform_0, window_bounds = array<i64: 128, 128>}, {transform_indices = @transform_1, window_bounds = array<i64: 128, 128>}, {transform_indices = @transform_2, window_bounds = array<i64: 128, 128>}]} {
    %c0_i32 = arith.constant 0 : i32
    %0 = arith.cmpi eq, %arg2, %c0_i32 : i32
    %1 = arith.extui %0 : i1 to i32
    %c0_i32_0 = arith.constant 0 : i32
    %2 = arith.cmpi ne, %1, %c0_i32_0 : i32
    scf.if %2 {
      %cst_10 = arith.constant 0.000000e+00 : f32
      %12 = vector.broadcast %cst_10 : f32 to vector<128x128xf32>
      %c0_11 = arith.constant 0 : index
      %c0_12 = arith.constant 0 : index
      %13 = vector.load %arg6[%c0_11, %c0_12] : memref<128x128xf32, #tpu.memory_space<vmem>>, vector<128x128xf32>
      tpu.vector_store %arg6[%c0_11, %c0_12], %12 {strides = array<i32>} : memref<128x128xf32, #tpu.memory_space<vmem>>, vector<128x128xf32>,
    } else {
    }
    %c0 = arith.constant 0 : index
    %c0_1 = arith.constant 0 : index
    %3 = vector.load %arg3[%c0, %c0_1] : memref<128x128xbf16, #tpu.memory_space<vmem>>, vector<128x128xbf16>
    %c0_2 = arith.constant 0 : index
    %c0_3 = arith.constant 0 : index
    %4 = vector.load %arg6[%c0_2, %c0_3] : memref<128x128xf32, #tpu.memory_space<vmem>>, vector<128x128xf32>
    %c0_4 = arith.constant 0 : index
    %c0_5 = arith.constant 0 : index
    %5 = vector.load %arg4[%c0_4, %c0_5] : memref<128x128xbf16, #tpu.memory_space<vmem>>, vector<128x128xbf16>
    %cst = arith.constant dense<0.000000e+00> : vector<128x128xf32>
    %6 = tpu.matmul %3, %5, %cst {dimension_numbers = #tpu.dot_dimension_numbers<[1], [0], [0], [1], [0, 0, 1, 1], [], []>} : vector<128x128xbf16>, vector<128x128xbf16>, vector<128x128xf32> -> vector<128x128xf32>
    %7 = arith.addf %4, %6 : vector<128x128xf32>
    %c0_6 = arith.constant 0 : index
    %c0_7 = arith.constant 0 : index
    %8 = vector.load %arg6[%c0_6, %c0_7] : memref<128x128xf32, #tpu.memory_space<vmem>>, vector<128x128xf32>
    tpu.vector_store %arg6[%c0_6, %c0_7], %7 {strides = array<i32>} : memref<128x128xf32, #tpu.memory_space<vmem>>, vector<128x128xf32>,
    %c0_i32_8 = arith.constant 0 : i32
    %9 = arith.cmpi eq, %arg2, %c0_i32_8 : i32
    %10 = arith.extui %9 : i1 to i32
    %c0_i32_9 = arith.constant 0 : i32
    %11 = arith.cmpi ne, %10, %c0_i32_9 : i32
    scf.if %11 {
      %c0_10 = arith.constant 0 : index
      %c0_11 = arith.constant 0 : index
      %12 = vector.load %arg6[%c0_10, %c0_11] : memref<128x128xf32, #tpu.memory_space<vmem>>, vector<128x128xf32>
      %c0_12 = arith.constant 0 : index
      %c0_13 = arith.constant 0 : index
      %13 = vector.load %arg5[%c0_12, %c0_13] : memref<128x128xf32, #tpu.memory_space<vmem>>, vector<128x128xf32>
      tpu.vector_store %arg5[%c0_12, %c0_13], %12 {strides = array<i32>} : memref<128x128xf32, #tpu.memory_space<vmem>>, vector<128x128xf32>,
    } else {
    }
    return
  }
  func.func @transform_0(%arg0: i32, %arg1: i32, %arg2: i32) -> (i32, i32) {
    %c0_i32 = arith.constant 0 : i32
    return %arg0, %arg2 : i32, i32
  }
  func.func @transform_1(%arg0: i32, %arg1: i32, %arg2: i32) -> (i32, i32) {
    %c0_i32 = arith.constant 0 : i32
    return %arg2, %arg1 : i32, i32
  }
  func.func @transform_2(%arg0: i32, %arg1: i32, %arg2: i32) -> (i32, i32) {
    %c0_i32 = arith.constant 0 : i32
    return %arg0, %arg1 : i32, i32
  }
}

module attributes {stable_mosaic.version = 11 : i64} {
  func.func @_fused_matmul_kernel(%arg0: i32, %arg1: i32, %arg2: i32, %arg3: memref<128x128xbf16, #tpu.memory_space<vmem>>, %arg4: memref<128x128xbf16, #tpu.memory_space<vmem>>, %arg5: memref<1x128xf32, #tpu.memory_space<vmem>>, %arg6: memref<1x128xf32, #tpu.memory_space<vmem>>, %arg7: memref<128x128xf32, #tpu.memory_space<vmem>>, %arg8: memref<1x128xf32, #tpu.memory_space<vmem>>, %arg9: memref<1x128xf32, #tpu.memory_space<vmem>>, %arg10: memref<128x128xf32, #tpu.memory_space<vmem>>, %arg11: memref<128x128xf32, #tpu.memory_space<vmem>>) attributes {dimension_semantics = [#tpu.dimension_semantics<parallel>, #tpu.dimension_semantics<parallel>, #tpu.dimension_semantics<arbitrary>], iteration_bounds = array<i64: 1, 1, 1>, scalar_prefetch = 0 : i64, scratch_operands = 1 : i64, tpu.core_type = #tpu.core_type<tc>, window_params = [{transform_indices = @transform_0, window_bounds = array<i64: 128, 128>}, {transform_indices = @transform_1, window_bounds = array<i64: 128, 128>}, {transform_indices = @transform_2, window_bounds = array<i64: 1, 128>}, {transform_indices = @transform_3, window_bounds = array<i64: 1, 128>}, {transform_indices = @transform_4, window_bounds = array<i64: 128, 128>}, {transform_indices = @transform_5, window_bounds = array<i64: 1, 128>}, {transform_indices = @transform_6, window_bounds = array<i64: 1, 128>}, {transform_indices = @transform_7, window_bounds = array<i64: 128, 128>}]} {
    %c0_i32 = arith.constant 0 : i32
    %0 = arith.cmpi eq, %arg2, %c0_i32 : i32
    %1 = arith.extui %0 : i1 to i32
    %c0_i32_0 = arith.constant 0 : i32
    %2 = arith.cmpi ne, %1, %c0_i32_0 : i32
    scf.if %2 {
      %cst_15 = arith.constant 0.000000e+00 : f32
      %22 = vector.broadcast %cst_15 : f32 to vector<128x128xf32>
      %c0_16 = arith.constant 0 : index
      %c0_17 = arith.constant 0 : index
      %23 = vector.load %arg11[%c0_16, %c0_17] : memref<128x128xf32, #tpu.memory_space<vmem>>, vector<128x128xf32>
      tpu.vector_store %arg11[%c0_16, %c0_17], %22 {strides = array<i32>} : memref<128x128xf32, #tpu.memory_space<vmem>>, vector<128x128xf32>,
    } else {
    }
    %c0 = arith.constant 0 : index
    %c0_1 = arith.constant 0 : index
    %3 = vector.load %arg3[%c0, %c0_1] : memref<128x128xbf16, #tpu.memory_space<vmem>>, vector<128x128xbf16>
    %4 = arith.extf %3 : vector<128x128xbf16> to vector<128x128xf32>
    %c0_2 = arith.constant 0 : index
    %c0_3 = arith.constant 0 : index
    %5 = vector.load %arg5[%c0_2, %c0_3] : memref<1x128xf32, #tpu.memory_space<vmem>>, vector<1x128xf32>
    %6 = vector.broadcast %5 : vector<1x128xf32> to vector<128x128xf32>
    %7 = arith.mulf %4, %6 : vector<128x128xf32>
    %c0_4 = arith.constant 0 : index
    %c0_5 = arith.constant 0 : index
    %8 = vector.load %arg6[%c0_4, %c0_5] : memref<1x128xf32, #tpu.memory_space<vmem>>, vector<1x128xf32>
    %9 = vector.broadcast %8 : vector<1x128xf32> to vector<128x128xf32>
    %10 = arith.addf %7, %9 : vector<128x128xf32>
    %cst = arith.constant 0.000000e+00 : f32
    %11 = vector.broadcast %cst : f32 to vector<128x128xf32>
    %12 = arith.maximumf %10, %11 : vector<128x128xf32>
    %13 = arith.truncf %12 : vector<128x128xf32> to vector<128x128xbf16>
    %c0_6 = arith.constant 0 : index
    %c0_7 = arith.constant 0 : index
    %14 = vector.load %arg11[%c0_6, %c0_7] : memref<128x128xf32, #tpu.memory_space<vmem>>, vector<128x128xf32>
    %c0_8 = arith.constant 0 : index
    %c0_9 = arith.constant 0 : index
    %15 = vector.load %arg4[%c0_8, %c0_9] : memref<128x128xbf16, #tpu.memory_space<vmem>>, vector<128x128xbf16>
    %cst_10 = arith.constant dense<0.000000e+00> : vector<128x128xf32>
    %16 = tpu.matmul %13, %15, %cst_10 {dimension_numbers = #tpu.dot_dimension_numbers<[1], [0], [0], [1], [0, 0, 1, 1], [], []>} : vector<128x128xbf16>, vector<128x128xbf16>, vector<128x128xf32> -> vector<128x128xf32>
    %17 = arith.addf %14, %16 : vector<128x128xf32>
    %c0_11 = arith.constant 0 : index
    %c0_12 = arith.constant 0 : index
    %18 = vector.load %arg11[%c0_11, %c0_12] : memref<128x128xf32, #tpu.memory_space<vmem>>, vector<128x128xf32>
    tpu.vector_store %arg11[%c0_11, %c0_12], %17 {strides = array<i32>} : memref<128x128xf32, #tpu.memory_space<vmem>>, vector<128x128xf32>,
    %c0_i32_13 = arith.constant 0 : i32
    %19 = arith.cmpi eq, %arg2, %c0_i32_13 : i32
    %20 = arith.extui %19 : i1 to i32
    %c0_i32_14 = arith.constant 0 : i32
    %21 = arith.cmpi ne, %20, %c0_i32_14 : i32
    scf.if %21 {
      %c0_15 = arith.constant 0 : index
      %c0_16 = arith.constant 0 : index
      %22 = vector.load %arg11[%c0_15, %c0_16] : memref<128x128xf32, #tpu.memory_space<vmem>>, vector<128x128xf32>
      %c0_17 = arith.constant 0 : index
      %c0_18 = arith.constant 0 : index
      %23 = vector.load %arg7[%c0_17, %c0_18] : memref<128x128xf32, #tpu.memory_space<vmem>>, vector<128x128xf32>
      %c0_19 = arith.constant 0 : index
      %c0_20 = arith.constant 0 : index
      %24 = vector.load %arg8[%c0_19, %c0_20] : memref<1x128xf32, #tpu.memory_space<vmem>>, vector<1x128xf32>
      %25 = vector.broadcast %24 : vector<1x128xf32> to vector<128x128xf32>
      %26 = arith.mulf %23, %25 : vector<128x128xf32>
      %27 = arith.addf %22, %26 : vector<128x128xf32>
      %c0_21 = arith.constant 0 : index
      %c0_22 = arith.constant 0 : index
      %28 = vector.load %arg9[%c0_21, %c0_22] : memref<1x128xf32, #tpu.memory_space<vmem>>, vector<1x128xf32>
      %29 = vector.broadcast %28 : vector<1x128xf32> to vector<128x128xf32>
      %30 = arith.addf %27, %29 : vector<128x128xf32>
      %cst_23 = arith.constant 0.000000e+00 : f32
      %31 = vector.broadcast %cst_23 : f32 to vector<128x128xf32>
      %32 = arith.maximumf %30, %31 : vector<128x128xf32>
      %c0_24 = arith.constant 0 : index
      %c0_25 = arith.constant 0 : index
      %33 = vector.load %arg10[%c0_24, %c0_25] : memref<128x128xf32, #tpu.memory_space<vmem>>, vector<128x128xf32>
      tpu.vector_store %arg10[%c0_24, %c0_25], %32 {strides = array<i32>} : memref<128x128xf32, #tpu.memory_space<vmem>>, vector<128x128xf32>,
    } else {
    }
    return
  }
  func.func @transform_0(%arg0: i32, %arg1: i32, %arg2: i32) -> (i32, i32) {
    %c0_i32 = arith.constant 0 : i32
    return %arg0, %arg2 : i32, i32
  }
  func.func @transform_1(%arg0: i32, %arg1: i32, %arg2: i32) -> (i32, i32) {
    %c0_i32 = arith.constant 0 : i32
    return %arg2, %arg1 : i32, i32
  }
  func.func @transform_2(%arg0: i32, %arg1: i32, %arg2: i32) -> (i32, i32) {
    %c0_i32 = arith.constant 0 : i32
    %c0_i32_0 = arith.constant 0 : i32
    return %c0_i32, %arg2 : i32, i32
  }
  func.func @transform_3(%arg0: i32, %arg1: i32, %arg2: i32) -> (i32, i32) {
    %c0_i32 = arith.constant 0 : i32
    %c0_i32_0 = arith.constant 0 : i32
    return %c0_i32, %arg2 : i32, i32
  }
  func.func @transform_4(%arg0: i32, %arg1: i32, %arg2: i32) -> (i32, i32) {
    %c0_i32 = arith.constant 0 : i32
    return %arg0, %arg1 : i32, i32
  }
  func.func @transform_5(%arg0: i32, %arg1: i32, %arg2: i32) -> (i32, i32) {
    %c0_i32 = arith.constant 0 : i32
    %c0_i32_0 = arith.constant 0 : i32
    return %c0_i32, %arg1 : i32, i32
  }
  func.func @transform_6(%arg0: i32, %arg1: i32, %arg2: i32) -> (i32, i32) {
    %c0_i32 = arith.constant 0 : i32
    %c0_i32_0 = arith.constant 0 : i32
    return %c0_i32, %arg1 : i32, i32
  }
  func.func @transform_7(%arg0: i32, %arg1: i32, %arg2: i32) -> (i32, i32) {
    %c0_i32 = arith.constant 0 : i32
    return %arg0, %arg1 : i32, i32
  }
}

module attributes {stable_mosaic.version = 11 : i64} {
  func.func @_bn_stats_kernel(%arg0: i32, %arg1: memref<128x16xf32, #tpu.memory_space<vmem>>, %arg2: memref<1x16xf32, #tpu.memory_space<vmem>>, %arg3: memref<1x16xf32, #tpu.memory_space<vmem>>) attributes {dimension_semantics = [#tpu.dimension_semantics<arbitrary>], iteration_bounds = array<i64: 1>, scalar_prefetch = 0 : i64, scratch_operands = 0 : i64, tpu.core_type = #tpu.core_type<tc>, window_params = [{transform_indices = @transform_0, window_bounds = array<i64: 128, 16>}, {pipeline_mode = #tpu.pipeline_mode<synchronous>, transform_indices = @transform_1, window_bounds = array<i64: 1, 16>}, {pipeline_mode = #tpu.pipeline_mode<synchronous>, transform_indices = @transform_2, window_bounds = array<i64: 1, 16>}]} {
    %c0_i32 = arith.constant 0 : i32
    %0 = arith.cmpi eq, %arg0, %c0_i32 : i32
    %1 = arith.extui %0 : i1 to i32
    %c0_i32_0 = arith.constant 0 : i32
    %2 = arith.cmpi ne, %1, %c0_i32_0 : i32
    scf.if %2 {
      %cst_11 = arith.constant 0.000000e+00 : f32
      %15 = vector.broadcast %cst_11 : f32 to vector<1x16xf32>
      %c0_12 = arith.constant 0 : index
      %c0_13 = arith.constant 0 : index
      %16 = vector.load %arg2[%c0_12, %c0_13] : memref<1x16xf32, #tpu.memory_space<vmem>>, vector<1x16xf32>
      tpu.vector_store %arg2[%c0_12, %c0_13], %15 {strides = array<i32>} : memref<1x16xf32, #tpu.memory_space<vmem>>, vector<1x16xf32>,
      %cst_14 = arith.constant 0.000000e+00 : f32
      %17 = vector.broadcast %cst_14 : f32 to vector<1x16xf32>
      %c0_15 = arith.constant 0 : index
      %c0_16 = arith.constant 0 : index
      %18 = vector.load %arg3[%c0_15, %c0_16] : memref<1x16xf32, #tpu.memory_space<vmem>>, vector<1x16xf32>
      tpu.vector_store %arg3[%c0_15, %c0_16], %17 {strides = array<i32>} : memref<1x16xf32, #tpu.memory_space<vmem>>, vector<1x16xf32>,
    } else {
    }
    %c0 = arith.constant 0 : index
    %c0_1 = arith.constant 0 : index
    %3 = vector.load %arg1[%c0, %c0_1] : memref<128x16xf32, #tpu.memory_space<vmem>>, vector<128x16xf32>
    %c0_2 = arith.constant 0 : index
    %c0_3 = arith.constant 0 : index
    %4 = vector.load %arg2[%c0_2, %c0_3] : memref<1x16xf32, #tpu.memory_space<vmem>>, vector<1x16xf32>
    %cst = arith.constant dense<0.000000e+00> : vector<16xf32>
    %5 = vector.multi_reduction <add>, %3, %cst [0] : vector<128x16xf32> to vector<16xf32>
    %6 = vector.shape_cast %5 : vector<16xf32> to vector<1x16xf32>
    %7 = arith.addf %4, %6 : vector<1x16xf32>
    %c0_4 = arith.constant 0 : index
    %c0_5 = arith.constant 0 : index
    %8 = vector.load %arg2[%c0_4, %c0_5] : memref<1x16xf32, #tpu.memory_space<vmem>>, vector<1x16xf32>
    tpu.vector_store %arg2[%c0_4, %c0_5], %7 {strides = array<i32>} : memref<1x16xf32, #tpu.memory_space<vmem>>, vector<1x16xf32>,
    %c0_6 = arith.constant 0 : index
    %c0_7 = arith.constant 0 : index
    %9 = vector.load %arg3[%c0_6, %c0_7] : memref<1x16xf32, #tpu.memory_space<vmem>>, vector<1x16xf32>
    %10 = arith.mulf %3, %3 : vector<128x16xf32>
    %cst_8 = arith.constant dense<0.000000e+00> : vector<16xf32>
    %11 = vector.multi_reduction <add>, %10, %cst_8 [0] : vector<128x16xf32> to vector<16xf32>
    %12 = vector.shape_cast %11 : vector<16xf32> to vector<1x16xf32>
    %13 = arith.addf %9, %12 : vector<1x16xf32>
    %c0_9 = arith.constant 0 : index
    %c0_10 = arith.constant 0 : index
    %14 = vector.load %arg3[%c0_9, %c0_10] : memref<1x16xf32, #tpu.memory_space<vmem>>, vector<1x16xf32>
    tpu.vector_store %arg3[%c0_9, %c0_10], %13 {strides = array<i32>} : memref<1x16xf32, #tpu.memory_space<vmem>>, vector<1x16xf32>,
    return
  }
  func.func @transform_0(%arg0: i32) -> (i32, i32) {
    %c0_i32 = arith.constant 0 : i32
    %c0_i32_0 = arith.constant 0 : i32
    return %arg0, %c0_i32 : i32, i32
  }
  func.func @transform_1(%arg0: i32) -> (i32, i32) {
    %c0_i32 = arith.constant 0 : i32
    %c0_i32_0 = arith.constant 0 : i32
    %c0_i32_1 = arith.constant 0 : i32
    return %c0_i32, %c0_i32_0 : i32, i32
  }
  func.func @transform_2(%arg0: i32) -> (i32, i32) {
    %c0_i32 = arith.constant 0 : i32
    %c0_i32_0 = arith.constant 0 : i32
    %c0_i32_1 = arith.constant 0 : i32
    return %c0_i32, %c0_i32_0 : i32, i32
  }
}

module attributes {stable_mosaic.version = 11 : i64} {
  func.func @_fused_matmul_kernel(%arg0: i32, %arg1: i32, %arg2: i32, %arg3: memref<128x128xbf16, #tpu.memory_space<vmem>>, %arg4: memref<128x128xbf16, #tpu.memory_space<vmem>>, %arg5: memref<1x128xf32, #tpu.memory_space<vmem>>, %arg6: memref<1x128xf32, #tpu.memory_space<vmem>>, %arg7: memref<128x128xf32, #tpu.memory_space<vmem>>, %arg8: memref<1x128xf32, #tpu.memory_space<vmem>>, %arg9: memref<1x128xf32, #tpu.memory_space<vmem>>, %arg10: memref<128x128xf32, #tpu.memory_space<vmem>>, %arg11: memref<128x128xf32, #tpu.memory_space<vmem>>) attributes {dimension_semantics = [#tpu.dimension_semantics<parallel>, #tpu.dimension_semantics<parallel>, #tpu.dimension_semantics<arbitrary>], iteration_bounds = array<i64: 1, 1, 2>, scalar_prefetch = 0 : i64, scratch_operands = 1 : i64, tpu.core_type = #tpu.core_type<tc>, window_params = [{transform_indices = @transform_0, window_bounds = array<i64: 128, 128>}, {transform_indices = @transform_1, window_bounds = array<i64: 128, 128>}, {transform_indices = @transform_2, window_bounds = array<i64: 1, 128>}, {transform_indices = @transform_3, window_bounds = array<i64: 1, 128>}, {transform_indices = @transform_4, window_bounds = array<i64: 128, 128>}, {transform_indices = @transform_5, window_bounds = array<i64: 1, 128>}, {transform_indices = @transform_6, window_bounds = array<i64: 1, 128>}, {transform_indices = @transform_7, window_bounds = array<i64: 128, 128>}]} {
    %c0_i32 = arith.constant 0 : i32
    %0 = arith.cmpi eq, %arg2, %c0_i32 : i32
    %1 = arith.extui %0 : i1 to i32
    %c0_i32_0 = arith.constant 0 : i32
    %2 = arith.cmpi ne, %1, %c0_i32_0 : i32
    scf.if %2 {
      %cst_14 = arith.constant 0.000000e+00 : f32
      %22 = vector.broadcast %cst_14 : f32 to vector<128x128xf32>
      %c0_15 = arith.constant 0 : index
      %c0_16 = arith.constant 0 : index
      %23 = vector.load %arg11[%c0_15, %c0_16] : memref<128x128xf32, #tpu.memory_space<vmem>>, vector<128x128xf32>
      tpu.vector_store %arg11[%c0_15, %c0_16], %22 {strides = array<i32>} : memref<128x128xf32, #tpu.memory_space<vmem>>, vector<128x128xf32>,
    } else {
    }
    %c0 = arith.constant 0 : index
    %c0_1 = arith.constant 0 : index
    %3 = vector.load %arg3[%c0, %c0_1] : memref<128x128xbf16, #tpu.memory_space<vmem>>, vector<128x128xbf16>
    %4 = arith.extf %3 : vector<128x128xbf16> to vector<128x128xf32>
    %c0_2 = arith.constant 0 : index
    %c0_3 = arith.constant 0 : index
    %5 = vector.load %arg5[%c0_2, %c0_3] : memref<1x128xf32, #tpu.memory_space<vmem>>, vector<1x128xf32>
    %6 = vector.broadcast %5 : vector<1x128xf32> to vector<128x128xf32>
    %7 = arith.mulf %4, %6 : vector<128x128xf32>
    %c0_4 = arith.constant 0 : index
    %c0_5 = arith.constant 0 : index
    %8 = vector.load %arg6[%c0_4, %c0_5] : memref<1x128xf32, #tpu.memory_space<vmem>>, vector<1x128xf32>
    %9 = vector.broadcast %8 : vector<1x128xf32> to vector<128x128xf32>
    %10 = arith.addf %7, %9 : vector<128x128xf32>
    %cst = arith.constant 0.000000e+00 : f32
    %11 = vector.broadcast %cst : f32 to vector<128x128xf32>
    %12 = arith.maximumf %10, %11 : vector<128x128xf32>
    %13 = arith.truncf %12 : vector<128x128xf32> to vector<128x128xbf16>
    %c0_6 = arith.constant 0 : index
    %c0_7 = arith.constant 0 : index
    %14 = vector.load %arg11[%c0_6, %c0_7] : memref<128x128xf32, #tpu.memory_space<vmem>>, vector<128x128xf32>
    %c0_8 = arith.constant 0 : index
    %c0_9 = arith.constant 0 : index
    %15 = vector.load %arg4[%c0_8, %c0_9] : memref<128x128xbf16, #tpu.memory_space<vmem>>, vector<128x128xbf16>
    %cst_10 = arith.constant dense<0.000000e+00> : vector<128x128xf32>
    %16 = tpu.matmul %13, %15, %cst_10 {dimension_numbers = #tpu.dot_dimension_numbers<[1], [0], [0], [1], [0, 0, 1, 1], [], []>} : vector<128x128xbf16>, vector<128x128xbf16>, vector<128x128xf32> -> vector<128x128xf32>
    %17 = arith.addf %14, %16 : vector<128x128xf32>
    %c0_11 = arith.constant 0 : index
    %c0_12 = arith.constant 0 : index
    %18 = vector.load %arg11[%c0_11, %c0_12] : memref<128x128xf32, #tpu.memory_space<vmem>>, vector<128x128xf32>
    tpu.vector_store %arg11[%c0_11, %c0_12], %17 {strides = array<i32>} : memref<128x128xf32, #tpu.memory_space<vmem>>, vector<128x128xf32>,
    %c1_i32 = arith.constant 1 : i32
    %19 = arith.cmpi eq, %arg2, %c1_i32 : i32
    %20 = arith.extui %19 : i1 to i32
    %c0_i32_13 = arith.constant 0 : i32
    %21 = arith.cmpi ne, %20, %c0_i32_13 : i32
    scf.if %21 {
      %c0_14 = arith.constant 0 : index
      %c0_15 = arith.constant 0 : index
      %22 = vector.load %arg11[%c0_14, %c0_15] : memref<128x128xf32, #tpu.memory_space<vmem>>, vector<128x128xf32>
      %c0_16 = arith.constant 0 : index
      %c0_17 = arith.constant 0 : index
      %23 = vector.load %arg7[%c0_16, %c0_17] : memref<128x128xf32, #tpu.memory_space<vmem>>, vector<128x128xf32>
      %c0_18 = arith.constant 0 : index
      %c0_19 = arith.constant 0 : index
      %24 = vector.load %arg8[%c0_18, %c0_19] : memref<1x128xf32, #tpu.memory_space<vmem>>, vector<1x128xf32>
      %25 = vector.broadcast %24 : vector<1x128xf32> to vector<128x128xf32>
      %26 = arith.mulf %23, %25 : vector<128x128xf32>
      %27 = arith.addf %22, %26 : vector<128x128xf32>
      %c0_20 = arith.constant 0 : index
      %c0_21 = arith.constant 0 : index
      %28 = vector.load %arg9[%c0_20, %c0_21] : memref<1x128xf32, #tpu.memory_space<vmem>>, vector<1x128xf32>
      %29 = vector.broadcast %28 : vector<1x128xf32> to vector<128x128xf32>
      %30 = arith.addf %27, %29 : vector<128x128xf32>
      %cst_22 = arith.constant 0.000000e+00 : f32
      %31 = vector.broadcast %cst_22 : f32 to vector<128x128xf32>
      %32 = arith.maximumf %30, %31 : vector<128x128xf32>
      %c0_23 = arith.constant 0 : index
      %c0_24 = arith.constant 0 : index
      %33 = vector.load %arg10[%c0_23, %c0_24] : memref<128x128xf32, #tpu.memory_space<vmem>>, vector<128x128xf32>
      tpu.vector_store %arg10[%c0_23, %c0_24], %32 {strides = array<i32>} : memref<128x128xf32, #tpu.memory_space<vmem>>, vector<128x128xf32>,
    } else {
    }
    return
  }
  func.func @transform_0(%arg0: i32, %arg1: i32, %arg2: i32) -> (i32, i32) {
    %c0_i32 = arith.constant 0 : i32
    return %arg0, %arg2 : i32, i32
  }
  func.func @transform_1(%arg0: i32, %arg1: i32, %arg2: i32) -> (i32, i32) {
    %c0_i32 = arith.constant 0 : i32
    return %arg2, %arg1 : i32, i32
  }
  func.func @transform_2(%arg0: i32, %arg1: i32, %arg2: i32) -> (i32, i32) {
    %c0_i32 = arith.constant 0 : i32
    %c0_i32_0 = arith.constant 0 : i32
    return %c0_i32, %arg2 : i32, i32
  }
  func.func @transform_3(%arg0: i32, %arg1: i32, %arg2: i32) -> (i32, i32) {
    %c0_i32 = arith.constant 0 : i32
    %c0_i32_0 = arith.constant 0 : i32
    return %c0_i32, %arg2 : i32, i32
  }
  func.func @transform_4(%arg0: i32, %arg1: i32, %arg2: i32) -> (i32, i32) {
    %c0_i32 = arith.constant 0 : i32
    return %arg0, %arg1 : i32, i32
  }
  func.func @transform_5(%arg0: i32, %arg1: i32, %arg2: i32) -> (i32, i32) {
    %c0_i32 = arith.constant 0 : i32
    %c0_i32_0 = arith.constant 0 : i32
    return %c0_i32, %arg1 : i32, i32
  }
  func.func @transform_6(%arg0: i32, %arg1: i32, %arg2: i32) -> (i32, i32) {
    %c0_i32 = arith.constant 0 : i32
    %c0_i32_0 = arith.constant 0 : i32
    return %c0_i32, %arg1 : i32, i32
  }
  func.func @transform_7(%arg0: i32, %arg1: i32, %arg2: i32) -> (i32, i32) {
    %c0_i32 = arith.constant 0 : i32
    return %arg0, %arg1 : i32, i32
  }
}

module attributes {stable_mosaic.version = 11 : i64} {
  func.func @_fused_matmul_kernel(%arg0: i32, %arg1: i32, %arg2: i32, %arg3: memref<128x128xbf16, #tpu.memory_space<vmem>>, %arg4: memref<128x128xbf16, #tpu.memory_space<vmem>>, %arg5: memref<1x128xf32, #tpu.memory_space<vmem>>, %arg6: memref<1x128xf32, #tpu.memory_space<vmem>>, %arg7: memref<128x128xf32, #tpu.memory_space<vmem>>, %arg8: memref<128x128xf32, #tpu.memory_space<vmem>>) attributes {dimension_semantics = [#tpu.dimension_semantics<parallel>, #tpu.dimension_semantics<parallel>, #tpu.dimension_semantics<arbitrary>], iteration_bounds = array<i64: 1, 1, 2>, scalar_prefetch = 0 : i64, scratch_operands = 1 : i64, tpu.core_type = #tpu.core_type<tc>, window_params = [{transform_indices = @transform_0, window_bounds = array<i64: 128, 128>}, {transform_indices = @transform_1, window_bounds = array<i64: 128, 128>}, {transform_indices = @transform_2, window_bounds = array<i64: 1, 128>}, {transform_indices = @transform_3, window_bounds = array<i64: 1, 128>}, {transform_indices = @transform_4, window_bounds = array<i64: 128, 128>}]} {
    %c0_i32 = arith.constant 0 : i32
    %0 = arith.cmpi eq, %arg2, %c0_i32 : i32
    %1 = arith.extui %0 : i1 to i32
    %c0_i32_0 = arith.constant 0 : i32
    %2 = arith.cmpi ne, %1, %c0_i32_0 : i32
    scf.if %2 {
      %cst_14 = arith.constant 0.000000e+00 : f32
      %22 = vector.broadcast %cst_14 : f32 to vector<128x128xf32>
      %c0_15 = arith.constant 0 : index
      %c0_16 = arith.constant 0 : index
      %23 = vector.load %arg8[%c0_15, %c0_16] : memref<128x128xf32, #tpu.memory_space<vmem>>, vector<128x128xf32>
      tpu.vector_store %arg8[%c0_15, %c0_16], %22 {strides = array<i32>} : memref<128x128xf32, #tpu.memory_space<vmem>>, vector<128x128xf32>,
    } else {
    }
    %c0 = arith.constant 0 : index
    %c0_1 = arith.constant 0 : index
    %3 = vector.load %arg3[%c0, %c0_1] : memref<128x128xbf16, #tpu.memory_space<vmem>>, vector<128x128xbf16>
    %4 = arith.extf %3 : vector<128x128xbf16> to vector<128x128xf32>
    %c0_2 = arith.constant 0 : index
    %c0_3 = arith.constant 0 : index
    %5 = vector.load %arg5[%c0_2, %c0_3] : memref<1x128xf32, #tpu.memory_space<vmem>>, vector<1x128xf32>
    %6 = vector.broadcast %5 : vector<1x128xf32> to vector<128x128xf32>
    %7 = arith.mulf %4, %6 : vector<128x128xf32>
    %c0_4 = arith.constant 0 : index
    %c0_5 = arith.constant 0 : index
    %8 = vector.load %arg6[%c0_4, %c0_5] : memref<1x128xf32, #tpu.memory_space<vmem>>, vector<1x128xf32>
    %9 = vector.broadcast %8 : vector<1x128xf32> to vector<128x128xf32>
    %10 = arith.addf %7, %9 : vector<128x128xf32>
    %cst = arith.constant 0.000000e+00 : f32
    %11 = vector.broadcast %cst : f32 to vector<128x128xf32>
    %12 = arith.maximumf %10, %11 : vector<128x128xf32>
    %13 = arith.truncf %12 : vector<128x128xf32> to vector<128x128xbf16>
    %c0_6 = arith.constant 0 : index
    %c0_7 = arith.constant 0 : index
    %14 = vector.load %arg8[%c0_6, %c0_7] : memref<128x128xf32, #tpu.memory_space<vmem>>, vector<128x128xf32>
    %c0_8 = arith.constant 0 : index
    %c0_9 = arith.constant 0 : index
    %15 = vector.load %arg4[%c0_8, %c0_9] : memref<128x128xbf16, #tpu.memory_space<vmem>>, vector<128x128xbf16>
    %cst_10 = arith.constant dense<0.000000e+00> : vector<128x128xf32>
    %16 = tpu.matmul %13, %15, %cst_10 {dimension_numbers = #tpu.dot_dimension_numbers<[1], [0], [0], [1], [0, 0, 1, 1], [], []>} : vector<128x128xbf16>, vector<128x128xbf16>, vector<128x128xf32> -> vector<128x128xf32>
    %17 = arith.addf %14, %16 : vector<128x128xf32>
    %c0_11 = arith.constant 0 : index
    %c0_12 = arith.constant 0 : index
    %18 = vector.load %arg8[%c0_11, %c0_12] : memref<128x128xf32, #tpu.memory_space<vmem>>, vector<128x128xf32>
    tpu.vector_store %arg8[%c0_11, %c0_12], %17 {strides = array<i32>} : memref<128x128xf32, #tpu.memory_space<vmem>>, vector<128x128xf32>,
    %c1_i32 = arith.constant 1 : i32
    %19 = arith.cmpi eq, %arg2, %c1_i32 : i32
    %20 = arith.extui %19 : i1 to i32
    %c0_i32_13 = arith.constant 0 : i32
    %21 = arith.cmpi ne, %20, %c0_i32_13 : i32
    scf.if %21 {
      %c0_14 = arith.constant 0 : index
      %c0_15 = arith.constant 0 : index
      %22 = vector.load %arg8[%c0_14, %c0_15] : memref<128x128xf32, #tpu.memory_space<vmem>>, vector<128x128xf32>
      %c0_16 = arith.constant 0 : index
      %c0_17 = arith.constant 0 : index
      %23 = vector.load %arg7[%c0_16, %c0_17] : memref<128x128xf32, #tpu.memory_space<vmem>>, vector<128x128xf32>
      tpu.vector_store %arg7[%c0_16, %c0_17], %22 {strides = array<i32>} : memref<128x128xf32, #tpu.memory_space<vmem>>, vector<128x128xf32>,
    } else {
    }
    return
  }
  func.func @transform_0(%arg0: i32, %arg1: i32, %arg2: i32) -> (i32, i32) {
    %c0_i32 = arith.constant 0 : i32
    return %arg0, %arg2 : i32, i32
  }
  func.func @transform_1(%arg0: i32, %arg1: i32, %arg2: i32) -> (i32, i32) {
    %c0_i32 = arith.constant 0 : i32
    return %arg2, %arg1 : i32, i32
  }
  func.func @transform_2(%arg0: i32, %arg1: i32, %arg2: i32) -> (i32, i32) {
    %c0_i32 = arith.constant 0 : i32
    %c0_i32_0 = arith.constant 0 : i32
    return %c0_i32, %arg2 : i32, i32
  }
  func.func @transform_3(%arg0: i32, %arg1: i32, %arg2: i32) -> (i32, i32) {
    %c0_i32 = arith.constant 0 : i32
    %c0_i32_0 = arith.constant 0 : i32
    return %c0_i32, %arg2 : i32, i32
  }
  func.func @transform_4(%arg0: i32, %arg1: i32, %arg2: i32) -> (i32, i32) {
    %c0_i32 = arith.constant 0 : i32
    return %arg0, %arg1 : i32, i32
  }
}

module attributes {stable_mosaic.version = 11 : i64} {
  func.func @_bn_stats_kernel(%arg0: i32, %arg1: memref<128x32xf32, #tpu.memory_space<vmem>>, %arg2: memref<1x32xf32, #tpu.memory_space<vmem>>, %arg3: memref<1x32xf32, #tpu.memory_space<vmem>>) attributes {dimension_semantics = [#tpu.dimension_semantics<arbitrary>], iteration_bounds = array<i64: 1>, scalar_prefetch = 0 : i64, scratch_operands = 0 : i64, tpu.core_type = #tpu.core_type<tc>, window_params = [{transform_indices = @transform_0, window_bounds = array<i64: 128, 32>}, {pipeline_mode = #tpu.pipeline_mode<synchronous>, transform_indices = @transform_1, window_bounds = array<i64: 1, 32>}, {pipeline_mode = #tpu.pipeline_mode<synchronous>, transform_indices = @transform_2, window_bounds = array<i64: 1, 32>}]} {
    %c0_i32 = arith.constant 0 : i32
    %0 = arith.cmpi eq, %arg0, %c0_i32 : i32
    %1 = arith.extui %0 : i1 to i32
    %c0_i32_0 = arith.constant 0 : i32
    %2 = arith.cmpi ne, %1, %c0_i32_0 : i32
    scf.if %2 {
      %cst_11 = arith.constant 0.000000e+00 : f32
      %15 = vector.broadcast %cst_11 : f32 to vector<1x32xf32>
      %c0_12 = arith.constant 0 : index
      %c0_13 = arith.constant 0 : index
      %16 = vector.load %arg2[%c0_12, %c0_13] : memref<1x32xf32, #tpu.memory_space<vmem>>, vector<1x32xf32>
      tpu.vector_store %arg2[%c0_12, %c0_13], %15 {strides = array<i32>} : memref<1x32xf32, #tpu.memory_space<vmem>>, vector<1x32xf32>,
      %cst_14 = arith.constant 0.000000e+00 : f32
      %17 = vector.broadcast %cst_14 : f32 to vector<1x32xf32>
      %c0_15 = arith.constant 0 : index
      %c0_16 = arith.constant 0 : index
      %18 = vector.load %arg3[%c0_15, %c0_16] : memref<1x32xf32, #tpu.memory_space<vmem>>, vector<1x32xf32>
      tpu.vector_store %arg3[%c0_15, %c0_16], %17 {strides = array<i32>} : memref<1x32xf32, #tpu.memory_space<vmem>>, vector<1x32xf32>,
    } else {
    }
    %c0 = arith.constant 0 : index
    %c0_1 = arith.constant 0 : index
    %3 = vector.load %arg1[%c0, %c0_1] : memref<128x32xf32, #tpu.memory_space<vmem>>, vector<128x32xf32>
    %c0_2 = arith.constant 0 : index
    %c0_3 = arith.constant 0 : index
    %4 = vector.load %arg2[%c0_2, %c0_3] : memref<1x32xf32, #tpu.memory_space<vmem>>, vector<1x32xf32>
    %cst = arith.constant dense<0.000000e+00> : vector<32xf32>
    %5 = vector.multi_reduction <add>, %3, %cst [0] : vector<128x32xf32> to vector<32xf32>
    %6 = vector.shape_cast %5 : vector<32xf32> to vector<1x32xf32>
    %7 = arith.addf %4, %6 : vector<1x32xf32>
    %c0_4 = arith.constant 0 : index
    %c0_5 = arith.constant 0 : index
    %8 = vector.load %arg2[%c0_4, %c0_5] : memref<1x32xf32, #tpu.memory_space<vmem>>, vector<1x32xf32>
    tpu.vector_store %arg2[%c0_4, %c0_5], %7 {strides = array<i32>} : memref<1x32xf32, #tpu.memory_space<vmem>>, vector<1x32xf32>,
    %c0_6 = arith.constant 0 : index
    %c0_7 = arith.constant 0 : index
    %9 = vector.load %arg3[%c0_6, %c0_7] : memref<1x32xf32, #tpu.memory_space<vmem>>, vector<1x32xf32>
    %10 = arith.mulf %3, %3 : vector<128x32xf32>
    %cst_8 = arith.constant dense<0.000000e+00> : vector<32xf32>
    %11 = vector.multi_reduction <add>, %10, %cst_8 [0] : vector<128x32xf32> to vector<32xf32>
    %12 = vector.shape_cast %11 : vector<32xf32> to vector<1x32xf32>
    %13 = arith.addf %9, %12 : vector<1x32xf32>
    %c0_9 = arith.constant 0 : index
    %c0_10 = arith.constant 0 : index
    %14 = vector.load %arg3[%c0_9, %c0_10] : memref<1x32xf32, #tpu.memory_space<vmem>>, vector<1x32xf32>
    tpu.vector_store %arg3[%c0_9, %c0_10], %13 {strides = array<i32>} : memref<1x32xf32, #tpu.memory_space<vmem>>, vector<1x32xf32>,
    return
  }
  func.func @transform_0(%arg0: i32) -> (i32, i32) {
    %c0_i32 = arith.constant 0 : i32
    %c0_i32_0 = arith.constant 0 : i32
    return %arg0, %c0_i32 : i32, i32
  }
  func.func @transform_1(%arg0: i32) -> (i32, i32) {
    %c0_i32 = arith.constant 0 : i32
    %c0_i32_0 = arith.constant 0 : i32
    %c0_i32_1 = arith.constant 0 : i32
    return %c0_i32, %c0_i32_0 : i32, i32
  }
  func.func @transform_2(%arg0: i32) -> (i32, i32) {
    %c0_i32 = arith.constant 0 : i32
    %c0_i32_0 = arith.constant 0 : i32
    %c0_i32_1 = arith.constant 0 : i32
    return %c0_i32, %c0_i32_0 : i32, i32
  }
}

module attributes {stable_mosaic.version = 11 : i64} {
  func.func @_fused_matmul_kernel(%arg0: i32, %arg1: i32, %arg2: i32, %arg3: memref<128x128xbf16, #tpu.memory_space<vmem>>, %arg4: memref<128x128xbf16, #tpu.memory_space<vmem>>, %arg5: memref<1x128xf32, #tpu.memory_space<vmem>>, %arg6: memref<1x128xf32, #tpu.memory_space<vmem>>, %arg7: memref<128x128xf32, #tpu.memory_space<vmem>>, %arg8: memref<1x128xf32, #tpu.memory_space<vmem>>, %arg9: memref<1x128xf32, #tpu.memory_space<vmem>>, %arg10: memref<128x128xf32, #tpu.memory_space<vmem>>, %arg11: memref<128x128xf32, #tpu.memory_space<vmem>>) attributes {dimension_semantics = [#tpu.dimension_semantics<parallel>, #tpu.dimension_semantics<parallel>, #tpu.dimension_semantics<arbitrary>], iteration_bounds = array<i64: 1, 1, 3>, scalar_prefetch = 0 : i64, scratch_operands = 1 : i64, tpu.core_type = #tpu.core_type<tc>, window_params = [{transform_indices = @transform_0, window_bounds = array<i64: 128, 128>}, {transform_indices = @transform_1, window_bounds = array<i64: 128, 128>}, {transform_indices = @transform_2, window_bounds = array<i64: 1, 128>}, {transform_indices = @transform_3, window_bounds = array<i64: 1, 128>}, {transform_indices = @transform_4, window_bounds = array<i64: 128, 128>}, {transform_indices = @transform_5, window_bounds = array<i64: 1, 128>}, {transform_indices = @transform_6, window_bounds = array<i64: 1, 128>}, {transform_indices = @transform_7, window_bounds = array<i64: 128, 128>}]} {
    %c0_i32 = arith.constant 0 : i32
    %0 = arith.cmpi eq, %arg2, %c0_i32 : i32
    %1 = arith.extui %0 : i1 to i32
    %c0_i32_0 = arith.constant 0 : i32
    %2 = arith.cmpi ne, %1, %c0_i32_0 : i32
    scf.if %2 {
      %cst_14 = arith.constant 0.000000e+00 : f32
      %22 = vector.broadcast %cst_14 : f32 to vector<128x128xf32>
      %c0_15 = arith.constant 0 : index
      %c0_16 = arith.constant 0 : index
      %23 = vector.load %arg11[%c0_15, %c0_16] : memref<128x128xf32, #tpu.memory_space<vmem>>, vector<128x128xf32>
      tpu.vector_store %arg11[%c0_15, %c0_16], %22 {strides = array<i32>} : memref<128x128xf32, #tpu.memory_space<vmem>>, vector<128x128xf32>,
    } else {
    }
    %c0 = arith.constant 0 : index
    %c0_1 = arith.constant 0 : index
    %3 = vector.load %arg3[%c0, %c0_1] : memref<128x128xbf16, #tpu.memory_space<vmem>>, vector<128x128xbf16>
    %4 = arith.extf %3 : vector<128x128xbf16> to vector<128x128xf32>
    %c0_2 = arith.constant 0 : index
    %c0_3 = arith.constant 0 : index
    %5 = vector.load %arg5[%c0_2, %c0_3] : memref<1x128xf32, #tpu.memory_space<vmem>>, vector<1x128xf32>
    %6 = vector.broadcast %5 : vector<1x128xf32> to vector<128x128xf32>
    %7 = arith.mulf %4, %6 : vector<128x128xf32>
    %c0_4 = arith.constant 0 : index
    %c0_5 = arith.constant 0 : index
    %8 = vector.load %arg6[%c0_4, %c0_5] : memref<1x128xf32, #tpu.memory_space<vmem>>, vector<1x128xf32>
    %9 = vector.broadcast %8 : vector<1x128xf32> to vector<128x128xf32>
    %10 = arith.addf %7, %9 : vector<128x128xf32>
    %cst = arith.constant 0.000000e+00 : f32
    %11 = vector.broadcast %cst : f32 to vector<128x128xf32>
    %12 = arith.maximumf %10, %11 : vector<128x128xf32>
    %13 = arith.truncf %12 : vector<128x128xf32> to vector<128x128xbf16>
    %c0_6 = arith.constant 0 : index
    %c0_7 = arith.constant 0 : index
    %14 = vector.load %arg11[%c0_6, %c0_7] : memref<128x128xf32, #tpu.memory_space<vmem>>, vector<128x128xf32>
    %c0_8 = arith.constant 0 : index
    %c0_9 = arith.constant 0 : index
    %15 = vector.load %arg4[%c0_8, %c0_9] : memref<128x128xbf16, #tpu.memory_space<vmem>>, vector<128x128xbf16>
    %cst_10 = arith.constant dense<0.000000e+00> : vector<128x128xf32>
    %16 = tpu.matmul %13, %15, %cst_10 {dimension_numbers = #tpu.dot_dimension_numbers<[1], [0], [0], [1], [0, 0, 1, 1], [], []>} : vector<128x128xbf16>, vector<128x128xbf16>, vector<128x128xf32> -> vector<128x128xf32>
    %17 = arith.addf %14, %16 : vector<128x128xf32>
    %c0_11 = arith.constant 0 : index
    %c0_12 = arith.constant 0 : index
    %18 = vector.load %arg11[%c0_11, %c0_12] : memref<128x128xf32, #tpu.memory_space<vmem>>, vector<128x128xf32>
    tpu.vector_store %arg11[%c0_11, %c0_12], %17 {strides = array<i32>} : memref<128x128xf32, #tpu.memory_space<vmem>>, vector<128x128xf32>,
    %c2_i32 = arith.constant 2 : i32
    %19 = arith.cmpi eq, %arg2, %c2_i32 : i32
    %20 = arith.extui %19 : i1 to i32
    %c0_i32_13 = arith.constant 0 : i32
    %21 = arith.cmpi ne, %20, %c0_i32_13 : i32
    scf.if %21 {
      %c0_14 = arith.constant 0 : index
      %c0_15 = arith.constant 0 : index
      %22 = vector.load %arg11[%c0_14, %c0_15] : memref<128x128xf32, #tpu.memory_space<vmem>>, vector<128x128xf32>
      %c0_16 = arith.constant 0 : index
      %c0_17 = arith.constant 0 : index
      %23 = vector.load %arg7[%c0_16, %c0_17] : memref<128x128xf32, #tpu.memory_space<vmem>>, vector<128x128xf32>
      %c0_18 = arith.constant 0 : index
      %c0_19 = arith.constant 0 : index
      %24 = vector.load %arg8[%c0_18, %c0_19] : memref<1x128xf32, #tpu.memory_space<vmem>>, vector<1x128xf32>
      %25 = vector.broadcast %24 : vector<1x128xf32> to vector<128x128xf32>
      %26 = arith.mulf %23, %25 : vector<128x128xf32>
      %27 = arith.addf %22, %26 : vector<128x128xf32>
      %c0_20 = arith.constant 0 : index
      %c0_21 = arith.constant 0 : index
      %28 = vector.load %arg9[%c0_20, %c0_21] : memref<1x128xf32, #tpu.memory_space<vmem>>, vector<1x128xf32>
      %29 = vector.broadcast %28 : vector<1x128xf32> to vector<128x128xf32>
      %30 = arith.addf %27, %29 : vector<128x128xf32>
      %cst_22 = arith.constant 0.000000e+00 : f32
      %31 = vector.broadcast %cst_22 : f32 to vector<128x128xf32>
      %32 = arith.maximumf %30, %31 : vector<128x128xf32>
      %c0_23 = arith.constant 0 : index
      %c0_24 = arith.constant 0 : index
      %33 = vector.load %arg10[%c0_23, %c0_24] : memref<128x128xf32, #tpu.memory_space<vmem>>, vector<128x128xf32>
      tpu.vector_store %arg10[%c0_23, %c0_24], %32 {strides = array<i32>} : memref<128x128xf32, #tpu.memory_space<vmem>>, vector<128x128xf32>,
    } else {
    }
    return
  }
  func.func @transform_0(%arg0: i32, %arg1: i32, %arg2: i32) -> (i32, i32) {
    %c0_i32 = arith.constant 0 : i32
    return %arg0, %arg2 : i32, i32
  }
  func.func @transform_1(%arg0: i32, %arg1: i32, %arg2: i32) -> (i32, i32) {
    %c0_i32 = arith.constant 0 : i32
    return %arg2, %arg1 : i32, i32
  }
  func.func @transform_2(%arg0: i32, %arg1: i32, %arg2: i32) -> (i32, i32) {
    %c0_i32 = arith.constant 0 : i32
    %c0_i32_0 = arith.constant 0 : i32
    return %c0_i32, %arg2 : i32, i32
  }
  func.func @transform_3(%arg0: i32, %arg1: i32, %arg2: i32) -> (i32, i32) {
    %c0_i32 = arith.constant 0 : i32
    %c0_i32_0 = arith.constant 0 : i32
    return %c0_i32, %arg2 : i32, i32
  }
  func.func @transform_4(%arg0: i32, %arg1: i32, %arg2: i32) -> (i32, i32) {
    %c0_i32 = arith.constant 0 : i32
    return %arg0, %arg1 : i32, i32
  }
  func.func @transform_5(%arg0: i32, %arg1: i32, %arg2: i32) -> (i32, i32) {
    %c0_i32 = arith.constant 0 : i32
    %c0_i32_0 = arith.constant 0 : i32
    return %c0_i32, %arg1 : i32, i32
  }
  func.func @transform_6(%arg0: i32, %arg1: i32, %arg2: i32) -> (i32, i32) {
    %c0_i32 = arith.constant 0 : i32
    %c0_i32_0 = arith.constant 0 : i32
    return %c0_i32, %arg1 : i32, i32
  }
  func.func @transform_7(%arg0: i32, %arg1: i32, %arg2: i32) -> (i32, i32) {
    %c0_i32 = arith.constant 0 : i32
    return %arg0, %arg1 : i32, i32
  }
}

module attributes {stable_mosaic.version = 11 : i64} {
  func.func @_fused_matmul_kernel(%arg0: i32, %arg1: i32, %arg2: i32, %arg3: memref<128x128xbf16, #tpu.memory_space<vmem>>, %arg4: memref<128x128xbf16, #tpu.memory_space<vmem>>, %arg5: memref<1x128xf32, #tpu.memory_space<vmem>>, %arg6: memref<1x128xf32, #tpu.memory_space<vmem>>, %arg7: memref<128x128xf32, #tpu.memory_space<vmem>>, %arg8: memref<128x128xf32, #tpu.memory_space<vmem>>) attributes {dimension_semantics = [#tpu.dimension_semantics<parallel>, #tpu.dimension_semantics<parallel>, #tpu.dimension_semantics<arbitrary>], iteration_bounds = array<i64: 1, 1, 3>, scalar_prefetch = 0 : i64, scratch_operands = 1 : i64, tpu.core_type = #tpu.core_type<tc>, window_params = [{transform_indices = @transform_0, window_bounds = array<i64: 128, 128>}, {transform_indices = @transform_1, window_bounds = array<i64: 128, 128>}, {transform_indices = @transform_2, window_bounds = array<i64: 1, 128>}, {transform_indices = @transform_3, window_bounds = array<i64: 1, 128>}, {transform_indices = @transform_4, window_bounds = array<i64: 128, 128>}]} {
    %c0_i32 = arith.constant 0 : i32
    %0 = arith.cmpi eq, %arg2, %c0_i32 : i32
    %1 = arith.extui %0 : i1 to i32
    %c0_i32_0 = arith.constant 0 : i32
    %2 = arith.cmpi ne, %1, %c0_i32_0 : i32
    scf.if %2 {
      %cst_14 = arith.constant 0.000000e+00 : f32
      %22 = vector.broadcast %cst_14 : f32 to vector<128x128xf32>
      %c0_15 = arith.constant 0 : index
      %c0_16 = arith.constant 0 : index
      %23 = vector.load %arg8[%c0_15, %c0_16] : memref<128x128xf32, #tpu.memory_space<vmem>>, vector<128x128xf32>
      tpu.vector_store %arg8[%c0_15, %c0_16], %22 {strides = array<i32>} : memref<128x128xf32, #tpu.memory_space<vmem>>, vector<128x128xf32>,
    } else {
    }
    %c0 = arith.constant 0 : index
    %c0_1 = arith.constant 0 : index
    %3 = vector.load %arg3[%c0, %c0_1] : memref<128x128xbf16, #tpu.memory_space<vmem>>, vector<128x128xbf16>
    %4 = arith.extf %3 : vector<128x128xbf16> to vector<128x128xf32>
    %c0_2 = arith.constant 0 : index
    %c0_3 = arith.constant 0 : index
    %5 = vector.load %arg5[%c0_2, %c0_3] : memref<1x128xf32, #tpu.memory_space<vmem>>, vector<1x128xf32>
    %6 = vector.broadcast %5 : vector<1x128xf32> to vector<128x128xf32>
    %7 = arith.mulf %4, %6 : vector<128x128xf32>
    %c0_4 = arith.constant 0 : index
    %c0_5 = arith.constant 0 : index
    %8 = vector.load %arg6[%c0_4, %c0_5] : memref<1x128xf32, #tpu.memory_space<vmem>>, vector<1x128xf32>
    %9 = vector.broadcast %8 : vector<1x128xf32> to vector<128x128xf32>
    %10 = arith.addf %7, %9 : vector<128x128xf32>
    %cst = arith.constant 0.000000e+00 : f32
    %11 = vector.broadcast %cst : f32 to vector<128x128xf32>
    %12 = arith.maximumf %10, %11 : vector<128x128xf32>
    %13 = arith.truncf %12 : vector<128x128xf32> to vector<128x128xbf16>
    %c0_6 = arith.constant 0 : index
    %c0_7 = arith.constant 0 : index
    %14 = vector.load %arg8[%c0_6, %c0_7] : memref<128x128xf32, #tpu.memory_space<vmem>>, vector<128x128xf32>
    %c0_8 = arith.constant 0 : index
    %c0_9 = arith.constant 0 : index
    %15 = vector.load %arg4[%c0_8, %c0_9] : memref<128x128xbf16, #tpu.memory_space<vmem>>, vector<128x128xbf16>
    %cst_10 = arith.constant dense<0.000000e+00> : vector<128x128xf32>
    %16 = tpu.matmul %13, %15, %cst_10 {dimension_numbers = #tpu.dot_dimension_numbers<[1], [0], [0], [1], [0, 0, 1, 1], [], []>} : vector<128x128xbf16>, vector<128x128xbf16>, vector<128x128xf32> -> vector<128x128xf32>
    %17 = arith.addf %14, %16 : vector<128x128xf32>
    %c0_11 = arith.constant 0 : index
    %c0_12 = arith.constant 0 : index
    %18 = vector.load %arg8[%c0_11, %c0_12] : memref<128x128xf32, #tpu.memory_space<vmem>>, vector<128x128xf32>
    tpu.vector_store %arg8[%c0_11, %c0_12], %17 {strides = array<i32>} : memref<128x128xf32, #tpu.memory_space<vmem>>, vector<128x128xf32>,
    %c2_i32 = arith.constant 2 : i32
    %19 = arith.cmpi eq, %arg2, %c2_i32 : i32
    %20 = arith.extui %19 : i1 to i32
    %c0_i32_13 = arith.constant 0 : i32
    %21 = arith.cmpi ne, %20, %c0_i32_13 : i32
    scf.if %21 {
      %c0_14 = arith.constant 0 : index
      %c0_15 = arith.constant 0 : index
      %22 = vector.load %arg8[%c0_14, %c0_15] : memref<128x128xf32, #tpu.memory_space<vmem>>, vector<128x128xf32>
      %c0_16 = arith.constant 0 : index
      %c0_17 = arith.constant 0 : index
      %23 = vector.load %arg7[%c0_16, %c0_17] : memref<128x128xf32, #tpu.memory_space<vmem>>, vector<128x128xf32>
      tpu.vector_store %arg7[%c0_16, %c0_17], %22 {strides = array<i32>} : memref<128x128xf32, #tpu.memory_space<vmem>>, vector<128x128xf32>,
    } else {
    }
    return
  }
  func.func @transform_0(%arg0: i32, %arg1: i32, %arg2: i32) -> (i32, i32) {
    %c0_i32 = arith.constant 0 : i32
    return %arg0, %arg2 : i32, i32
  }
  func.func @transform_1(%arg0: i32, %arg1: i32, %arg2: i32) -> (i32, i32) {
    %c0_i32 = arith.constant 0 : i32
    return %arg2, %arg1 : i32, i32
  }
  func.func @transform_2(%arg0: i32, %arg1: i32, %arg2: i32) -> (i32, i32) {
    %c0_i32 = arith.constant 0 : i32
    %c0_i32_0 = arith.constant 0 : i32
    return %c0_i32, %arg2 : i32, i32
  }
  func.func @transform_3(%arg0: i32, %arg1: i32, %arg2: i32) -> (i32, i32) {
    %c0_i32 = arith.constant 0 : i32
    %c0_i32_0 = arith.constant 0 : i32
    return %c0_i32, %arg2 : i32, i32
  }
  func.func @transform_4(%arg0: i32, %arg1: i32, %arg2: i32) -> (i32, i32) {
    %c0_i32 = arith.constant 0 : i32
    return %arg0, %arg1 : i32, i32
  }
}

module attributes {stable_mosaic.version = 11 : i64} {
  func.func @_gap_kernel(%arg0: i32, %arg1: memref<1x64x32xf32, #tpu.memory_space<vmem>>, %arg2: memref<1x1x32xf32, #tpu.memory_space<vmem>>) attributes {dimension_semantics = [#tpu.dimension_semantics<parallel>], iteration_bounds = array<i64: 2>, scalar_prefetch = 0 : i64, scratch_operands = 0 : i64, tpu.core_type = #tpu.core_type<tc>, window_params = [{transform_indices = @transform_0, window_bounds = array<i64: 1, 64, 32>}, {transform_indices = @transform_1, window_bounds = array<i64: 1, 1, 32>}]} {
    %c0 = arith.constant 0 : index
    %c0_0 = arith.constant 0 : index
    %c0_1 = arith.constant 0 : index
    %0 = vector.load %arg1[%c0, %c0_0, %c0_1] : memref<1x64x32xf32, #tpu.memory_space<vmem>>, vector<1x64x32xf32>
    %cst = arith.constant dense<0.000000e+00> : vector<1x32xf32>
    %1 = vector.multi_reduction <add>, %0, %cst [1] : vector<1x64x32xf32> to vector<1x32xf32>
    %2 = vector.shape_cast %1 : vector<1x32xf32> to vector<1x1x32xf32>
    %cst_2 = arith.constant 6.400000e+01 : f32
    %3 = vector.broadcast %cst_2 : f32 to vector<1x1x32xf32>
    %4 = arith.divf %2, %3 : vector<1x1x32xf32>
    %c0_3 = arith.constant 0 : index
    %c0_4 = arith.constant 0 : index
    %c0_5 = arith.constant 0 : index
    %5 = vector.load %arg2[%c0_3, %c0_4, %c0_5] : memref<1x1x32xf32, #tpu.memory_space<vmem>>, vector<1x1x32xf32>
    tpu.vector_store %arg2[%c0_3, %c0_4, %c0_5], %4 {strides = array<i32>} : memref<1x1x32xf32, #tpu.memory_space<vmem>>, vector<1x1x32xf32>,
    return
  }
  func.func @transform_0(%arg0: i32) -> (i32, i32, i32) {
    %c0_i32 = arith.constant 0 : i32
    %c0_i32_0 = arith.constant 0 : i32
    %c0_i32_1 = arith.constant 0 : i32
    return %arg0, %c0_i32, %c0_i32_0 : i32, i32, i32
  }
  func.func @transform_1(%arg0: i32) -> (i32, i32, i32) {
    %c0_i32 = arith.constant 0 : i32
    %c0_i32_0 = arith.constant 0 : i32
    %c0_i32_1 = arith.constant 0 : i32
    return %arg0, %c0_i32, %c0_i32_0 : i32, i32, i32
  }
}

module attributes {stable_mosaic.version = 11 : i64} {
  func.func @_fused_matmul_kernel(%arg0: i32, %arg1: i32, %arg2: i32, %arg3: memref<8x128xbf16, #tpu.memory_space<vmem>>, %arg4: memref<128x128xbf16, #tpu.memory_space<vmem>>, %arg5: memref<1x128xf32, #tpu.memory_space<vmem>>, %arg6: memref<8x128xf32, #tpu.memory_space<vmem>>, %arg7: memref<8x128xf32, #tpu.memory_space<vmem>>) attributes {dimension_semantics = [#tpu.dimension_semantics<parallel>, #tpu.dimension_semantics<parallel>, #tpu.dimension_semantics<arbitrary>], iteration_bounds = array<i64: 1, 1, 1>, scalar_prefetch = 0 : i64, scratch_operands = 1 : i64, tpu.core_type = #tpu.core_type<tc>, window_params = [{transform_indices = @transform_0, window_bounds = array<i64: 8, 128>}, {transform_indices = @transform_1, window_bounds = array<i64: 128, 128>}, {transform_indices = @transform_2, window_bounds = array<i64: 1, 128>}, {transform_indices = @transform_3, window_bounds = array<i64: 8, 128>}]} {
    %c0_i32 = arith.constant 0 : i32
    %0 = arith.cmpi eq, %arg2, %c0_i32 : i32
    %1 = arith.extui %0 : i1 to i32
    %c0_i32_0 = arith.constant 0 : i32
    %2 = arith.cmpi ne, %1, %c0_i32_0 : i32
    scf.if %2 {
      %cst_10 = arith.constant 0.000000e+00 : f32
      %12 = vector.broadcast %cst_10 : f32 to vector<8x128xf32>
      %c0_11 = arith.constant 0 : index
      %c0_12 = arith.constant 0 : index
      %13 = vector.load %arg7[%c0_11, %c0_12] : memref<8x128xf32, #tpu.memory_space<vmem>>, vector<8x128xf32>
      tpu.vector_store %arg7[%c0_11, %c0_12], %12 {strides = array<i32>} : memref<8x128xf32, #tpu.memory_space<vmem>>, vector<8x128xf32>,
    } else {
    }
    %c0 = arith.constant 0 : index
    %c0_1 = arith.constant 0 : index
    %3 = vector.load %arg3[%c0, %c0_1] : memref<8x128xbf16, #tpu.memory_space<vmem>>, vector<8x128xbf16>
    %c0_2 = arith.constant 0 : index
    %c0_3 = arith.constant 0 : index
    %4 = vector.load %arg7[%c0_2, %c0_3] : memref<8x128xf32, #tpu.memory_space<vmem>>, vector<8x128xf32>
    %c0_4 = arith.constant 0 : index
    %c0_5 = arith.constant 0 : index
    %5 = vector.load %arg4[%c0_4, %c0_5] : memref<128x128xbf16, #tpu.memory_space<vmem>>, vector<128x128xbf16>
    %cst = arith.constant dense<0.000000e+00> : vector<8x128xf32>
    %6 = tpu.matmul %3, %5, %cst {dimension_numbers = #tpu.dot_dimension_numbers<[1], [0], [0], [1], [0, 0, 1, 1], [], []>} : vector<8x128xbf16>, vector<128x128xbf16>, vector<8x128xf32> -> vector<8x128xf32>
    %7 = arith.addf %4, %6 : vector<8x128xf32>
    %c0_6 = arith.constant 0 : index
    %c0_7 = arith.constant 0 : index
    %8 = vector.load %arg7[%c0_6, %c0_7] : memref<8x128xf32, #tpu.memory_space<vmem>>, vector<8x128xf32>
    tpu.vector_store %arg7[%c0_6, %c0_7], %7 {strides = array<i32>} : memref<8x128xf32, #tpu.memory_space<vmem>>, vector<8x128xf32>,
    %c0_i32_8 = arith.constant 0 : i32
    %9 = arith.cmpi eq, %arg2, %c0_i32_8 : i32
    %10 = arith.extui %9 : i1 to i32
    %c0_i32_9 = arith.constant 0 : i32
    %11 = arith.cmpi ne, %10, %c0_i32_9 : i32
    scf.if %11 {
      %c0_10 = arith.constant 0 : index
      %c0_11 = arith.constant 0 : index
      %12 = vector.load %arg7[%c0_10, %c0_11] : memref<8x128xf32, #tpu.memory_space<vmem>>, vector<8x128xf32>
      %c0_12 = arith.constant 0 : index
      %c0_13 = arith.constant 0 : index
      %13 = vector.load %arg5[%c0_12, %c0_13] : memref<1x128xf32, #tpu.memory_space<vmem>>, vector<1x128xf32>
      %14 = vector.broadcast %13 : vector<1x128xf32> to vector<8x128xf32>
      %15 = arith.addf %12, %14 : vector<8x128xf32>
      %c0_14 = arith.constant 0 : index
      %c0_15 = arith.constant 0 : index
      %16 = vector.load %arg6[%c0_14, %c0_15] : memref<8x128xf32, #tpu.memory_space<vmem>>, vector<8x128xf32>
      tpu.vector_store %arg6[%c0_14, %c0_15], %15 {strides = array<i32>} : memref<8x128xf32, #tpu.memory_space<vmem>>, vector<8x128xf32>,
    } else {
    }
    return
  }
  func.func @transform_0(%arg0: i32, %arg1: i32, %arg2: i32) -> (i32, i32) {
    %c0_i32 = arith.constant 0 : i32
    return %arg0, %arg2 : i32, i32
  }
  func.func @transform_1(%arg0: i32, %arg1: i32, %arg2: i32) -> (i32, i32) {
    %c0_i32 = arith.constant 0 : i32
    return %arg2, %arg1 : i32, i32
  }
  func.func @transform_2(%arg0: i32, %arg1: i32, %arg2: i32) -> (i32, i32) {
    %c0_i32 = arith.constant 0 : i32
    %c0_i32_0 = arith.constant 0 : i32
    return %c0_i32, %arg1 : i32, i32
  }
  func.func @transform_3(%arg0: i32, %arg1: i32, %arg2: i32) -> (i32, i32) {
    %c0_i32 = arith.constant 0 : i32
    return %arg0, %arg1 : i32, i32
  }
}

</mosaic_0001>

<llo_original>
// kernel: resnet_forward.44
$region0: #{resnet_forward.44}
  #allocation0 [shape = 'u32[]', space=smem, size = 0x4, offset = 0x4, fixed_abs, tag = 'smem constant byte address 0x4 - core index']
  #allocation1 [shape = 'u32[72,128]{1,0:T(1,128)}', space=vmem, size = 0x9000, scoped, tag = 'internal scratch']
  %s0 = inlined_call_operand.vmem [shape: f32[512,4], index: 0, kind: input, shape index: {}]
  %s1 = inlined_call_operand.vmem [shape: f32[1,4], index: 1, kind: output, shape index: {0}]
  %s2 = inlined_call_operand.vmem [shape: f32[1,4], index: 2, kind: output, shape index: {1}]
  %3 = xla_tuple %s1, %s2
  %s4 = sld [smem:[#allocation0]]
  $region26: #{resnet_forward.44} parent=0
    _
  %s6 = ssub.s32 1, %s4
  %s7 = scalar_select 0, %s6, %s4
  // Predicated region
  $region2: #{resnet_forward.44} parent=0 // pred_check
    _
  $region3: #{resnet_forward.44} parent=0 // pred_check_branch
    %9 = sbr.rel (0) target = $region5
  $region4: #{resnet_forward.44} parent=0 // pred_region
    _
  $region5: #{resnet_forward.44} parent=0 // pred_fallthru
    _
  %p10 = scmp.eq.s32.totalorder 0, 0
  // Predicated region
  $region6: #{resnet_forward.44} parent=0 // pred_check
    %p11 = pneg %p10
  $region7: #{resnet_forward.44} parent=0 // pred_check_branch
    %13 = sbr.rel (%p11) target = $region9
  $region8: #{resnet_forward.44} parent=0 // pred_region
    %vm14 = vcmask 24576
    %15 = vst.msk [vmem:[%s1] sm:$0x1] %vm14, 0.0
    %16 = vst.msk [vmem:[%s2] sm:$0x1] %vm14, 0.0
  $region9: #{resnet_forward.44} parent=0 // pred_fallthru
    _
  %v17 = vld [vmem:[%s0] sm:$0xff]
  %v18 = vld [vmem:[%s0 + $0x8] sm:$0xff]
  %v19 = vld [vmem:[%s0 + $0x10] sm:$0xff]
  %v20 = vld [vmem:[%s0 + $0x18] sm:$0xff]
  %v21 = vld [vmem:[%s0 + $0x20] sm:$0xff]
  %v22 = vld [vmem:[%s0 + $0x28] sm:$0xff]
  %v23 = vld [vmem:[%s0 + $0x30] sm:$0xff]
  %v24 = vld [vmem:[%s0 + $0x38] sm:$0xff]
  %v25 = vld [vmem:[%s0 + $0x40] sm:$0xff]
  %v26 = vld [vmem:[%s0 + $0x48] sm:$0xff]
  %v27 = vld [vmem:[%s0 + $0x50] sm:$0xff]
  %v28 = vld [vmem:[%s0 + $0x58] sm:$0xff]
  %v29 = vld [vmem:[%s0 + $0x60] sm:$0xff]
  %v30 = vld [vmem:[%s0 + $0x68] sm:$0xff]
  %v31 = vld [vmem:[%s0 + $0x70] sm:$0xff]
  %v32 = vld [vmem:[%s0 + $0x78] sm:$0xff]
  %v33 = vld [vmem:[%s0 + $0x80] sm:$0xff]
  %v34 = vld [vmem:[%s0 + $0x88] sm:$0xff]
  %v35 = vld [vmem:[%s0 + $0x90] sm:$0xff]
  %v36 = vld [vmem:[%s0 + $0x98] sm:$0xff]
  %v37 = vld [vmem:[%s0 + $0xa0] sm:$0xff]
  %v38 = vld [vmem:[%s0 + $0xa8] sm:$0xff]
  %v39 = vld [vmem:[%s0 + $0xb0] sm:$0xff]
  %v40 = vld [vmem:[%s0 + $0xb8] sm:$0xff]
  %v41 = vld [vmem:[%s0 + $0xc0] sm:$0xff]
  %v42 = vld [vmem:[%s0 + $0xc8] sm:$0xff]
  %v43 = vld [vmem:[%s0 + $0xd0] sm:$0xff]
  %v44 = vld [vmem:[%s0 + $0xd8] sm:$0xff]
  %v45 = vld [vmem:[%s0 + $0xe0] sm:$0xff]
  %v46 = vld [vmem:[%s0 + $0xe8] sm:$0xff]
  %v47 = vld [vmem:[%s0 + $0xf0] sm:$0xff]
  %v48 = vld [vmem:[%s0 + $0xf8] sm:$0xff]
  %v49 = vld [vmem:[%s0 + $0x100] sm:$0xff]
  %v50 = vld [vmem:[%s0 + $0x108] sm:$0xff]
  %v51 = vld [vmem:[%s0 + $0x110] sm:$0xff]
  %v52 = vld [vmem:[%s0 + $0x118] sm:$0xff]
  %v53 = vld [vmem:[%s0 + $0x120] sm:$0xff]
  %v54 = vld [vmem:[%s0 + $0x128] sm:$0xff]
  %v55 = vld [vmem:[%s0 + $0x130] sm:$0xff]
  %v56 = vld [vmem:[%s0 + $0x138] sm:$0xff]
  %v57 = vld [vmem:[%s0 + $0x140] sm:$0xff]
  %v58 = vld [vmem:[%s0 + $0x148] sm:$0xff]
  %v59 = vld [vmem:[%s0 + $0x150] sm:$0xff]
  %v60 = vld [vmem:[%s0 + $0x158] sm:$0xff]
  %v61 = vld [vmem:[%s0 + $0x160] sm:$0xff]
  %v62 = vld [vmem:[%s0 + $0x168] sm:$0xff]
  %v63 = vld [vmem:[%s0 + $0x170] sm:$0xff]
  %v64 = vld [vmem:[%s0 + $0x178] sm:$0xff]
  %v65 = vld [vmem:[%s0 + $0x180] sm:$0xff]
  %v66 = vld [vmem:[%s0 + $0x188] sm:$0xff]
  %v67 = vld [vmem:[%s0 + $0x190] sm:$0xff]
  %v68 = vld [vmem:[%s0 + $0x198] sm:$0xff]
  %v69 = vld [vmem:[%s0 + $0x1a0] sm:$0xff]
  %v70 = vld [vmem:[%s0 + $0x1a8] sm:$0xff]
  %v71 = vld [vmem:[%s0 + $0x1b0] sm:$0xff]
  %v72 = vld [vmem:[%s0 + $0x1b8] sm:$0xff]
  %v73 = vld [vmem:[%s0 + $0x1c0] sm:$0xff]
  %v74 = vld [vmem:[%s0 + $0x1c8] sm:$0xff]
  %v75 = vld [vmem:[%s0 + $0x1d0] sm:$0xff]
  %v76 = vld [vmem:[%s0 + $0x1d8] sm:$0xff]
  %v77 = vld [vmem:[%s0 + $0x1e0] sm:$0xff]
  %v78 = vld [vmem:[%s0 + $0x1e8] sm:$0xff]
  %v79 = vld [vmem:[%s0 + $0x1f0] sm:$0xff]
  %v80 = vld [vmem:[%s0 + $0x1f8] sm:$0xff]
  %v81 = vld [vmem:[%s1] sm:$0x1]
  %vm82 = vcmask 31744
  %v83 = vsel %vm82, %v17, 0.0
  %v84 = vsel %vm82, %v18, 0.0
  %v85 = vadd.f32 %v83, %v84
  %v86 = vsel %vm82, %v19, 0.0
  %v87 = vadd.f32 %v85, %v86
  %v88 = vsel %vm82, %v20, 0.0
  %v89 = vadd.f32 %v87, %v88
  %v90 = vsel %vm82, %v21, 0.0
  %v91 = vadd.f32 %v89, %v90
  %v92 = vsel %vm82, %v22, 0.0
  %v93 = vadd.f32 %v91, %v92
  %v94 = vsel %vm82, %v23, 0.0
  %v95 = vadd.f32 %v93, %v94
  %v96 = vsel %vm82, %v24, 0.0
  %v97 = vadd.f32 %v95, %v96
  %v98 = vsel %vm82, %v25, 0.0
  %v99 = vadd.f32 %v97, %v98
  %v100 = vsel %vm82, %v26, 0.0
  %v101 = vadd.f32 %v99, %v100
  %v102 = vsel %vm82, %v27, 0.0
  %v103 = vadd.f32 %v101, %v102
  %v104 = vsel %vm82, %v28, 0.0
  %v105 = vadd.f32 %v103, %v104
  %v106 = vsel %vm82, %v29, 0.0
  %v107 = vadd.f32 %v105, %v106
  %v108 = vsel %vm82, %v30, 0.0
  %v109 = vadd.f32 %v107, %v108
  %v110 = vsel %vm82, %v31, 0.0
  %v111 = vadd.f32 %v109, %v110
  %v112 = vsel %vm82, %v32, 0.0
  %v113 = vadd.f32 %v111, %v112
  %v114 = vsel %vm82, %v33, 0.0
  %v115 = vadd.f32 %v113, %v114
  %v116 = vsel %vm82, %v34, 0.0
  %v117 = vadd.f32 %v115, %v116
  %v118 = vsel %vm82, %v35, 0.0
  %v119 = vadd.f32 %v117, %v118
  %v120 = vsel %vm82, %v36, 0.0
  %v121 = vadd.f32 %v119, %v120
  %v122 = vsel %vm82, %v37, 0.0
  %v123 = vadd.f32 %v121, %v122
  %v124 = vsel %vm82, %v38, 0.0
  %v125 = vadd.f32 %v123, %v124
  %v126 = vsel %vm82, %v39, 0.0
  %v127 = vadd.f32 %v125, %v126
  %v128 = vsel %vm82, %v40, 0.0
  %v129 = vadd.f32 %v127, %v128
  %v130 = vsel %vm82, %v41, 0.0
  %v131 = vadd.f32 %v129, %v130
  %v132 = vsel %vm82, %v42, 0.0
  %v133 = vadd.f32 %v131, %v132
  %v134 = vsel %vm82, %v43, 0.0
  %v135 = vadd.f32 %v133, %v134
  %v136 = vsel %vm82, %v44, 0.0
  %v137 = vadd.f32 %v135, %v136
  %v138 = vsel %vm82, %v45, 0.0
  %v139 = vadd.f32 %v137, %v138
  %v140 = vsel %vm82, %v46, 0.0
  %v141 = vadd.f32 %v139, %v140
  %v142 = vsel %vm82, %v47, 0.0
  %v143 = vadd.f32 %v141, %v142
  %v144 = vsel %vm82, %v48, 0.0
  %v145 = vadd.f32 %v143, %v144
  %v146 = vsel %vm82, %v49, 0.0
  %v147 = vadd.f32 %v145, %v146
  %v148 = vsel %vm82, %v50, 0.0
  %v149 = vadd.f32 %v147, %v148
  %v150 = vsel %vm82, %v51, 0.0
  %v151 = vadd.f32 %v149, %v150
  %v152 = vsel %vm82, %v52, 0.0
  %v153 = vadd.f32 %v151, %v152
  %v154 = vsel %vm82, %v53, 0.0
  %v155 = vadd.f32 %v153, %v154
  %v156 = vsel %vm82, %v54, 0.0
  %v157 = vadd.f32 %v155, %v156
  %v158 = vsel %vm82, %v55, 0.0
  %v159 = vadd.f32 %v157, %v158
  %v160 = vsel %vm82, %v56, 0.0
  %v161 = vadd.f32 %v159, %v160
  %v162 = vsel %vm82, %v57, 0.0
  %v163 = vadd.f32 %v161, %v162
  %v164 = vsel %vm82, %v58, 0.0
  %v165 = vadd.f32 %v163, %v164
  %v166 = vsel %vm82, %v59, 0.0
  %v167 = vadd.f32 %v165, %v166
  %v168 = vsel %vm82, %v60, 0.0
  %v169 = vadd.f32 %v167, %v168
  %v170 = vsel %vm82, %v61, 0.0
  %v171 = vadd.f32 %v169, %v170
  %v172 = vsel %vm82, %v62, 0.0
  %v173 = vadd.f32 %v171, %v172
  %v174 = vsel %vm82, %v63, 0.0
  %v175 = vadd.f32 %v173, %v174
  %v176 = vsel %vm82, %v64, 0.0
  %v177 = vadd.f32 %v175, %v176
  %v178 = vsel %vm82, %v65, 0.0
  %v179 = vadd.f32 %v177, %v178
  %v180 = vsel %vm82, %v66, 0.0
  %v181 = vadd.f32 %v179, %v180
  %v182 = vsel %vm82, %v67, 0.0
  %v183 = vadd.f32 %v181, %v182
  %v184 = vsel %vm82, %v68, 0.0
  %v185 = vadd.f32 %v183, %v184
  %v186 = vsel %vm82, %v69, 0.0
  %v187 = vadd.f32 %v185, %v186
  %v188 = vsel %vm82, %v70, 0.0
  %v189 = vadd.f32 %v187, %v188
  %v190 = vsel %vm82, %v71, 0.0
  %v191 = vadd.f32 %v189, %v190
  %v192 = vsel %vm82, %v72, 0.0
  %v193 = vadd.f32 %v191, %v192
  %v194 = vsel %vm82, %v73, 0.0
  %v195 = vadd.f32 %v193, %v194
  %v196 = vsel %vm82, %v74, 0.0
  %v197 = vadd.f32 %v195, %v196
  %v198 = vsel %vm82, %v75, 0.0
  %v199 = vadd.f32 %v197, %v198
  %v200 = vsel %vm82, %v76, 0.0
  %v201 = vadd.f32 %v199, %v200
  %v202 = vsel %vm82, %v77, 0.0
  %v203 = vadd.f32 %v201, %v202
  %v204 = vsel %vm82, %v78, 0.0
  %v205 = vadd.f32 %v203, %v204
  %v206 = vsel %vm82, %v79, 0.0
  %v207 = vadd.f32 %v205, %v206
  %v208 = vsel %vm82, %v80, 0.0
  %v209 = vadd.f32 %v207, %v208
  %v210 = vrot.slane %v209, 4
  %v211 = vadd.f32 %v209, %v210
  %v212 = vrot.slane %v211, 2
  %v213 = vadd.f32 %v211, %v212
  %v214 = vrot.slane %v213, 1
  %v215 = vadd.f32 %v213, %v214
  %v216 = vadd.f32 %v81, %v215
  %vm217 = vcmask 24576
  %218 = vst.msk [vmem:[%s1] sm:$0x1] %vm217, %v216
  %v219 = vld [vmem:[%s2] sm:$0x1]
  %v220 = vmul.f32 %v17, %v17
  %v221 = vmul.f32 %v18, %v18
  %v222 = vmul.f32 %v19, %v19
  %v223 = vmul.f32 %v20, %v20
  %v224 = vmul.f32 %v21, %v21
  %v225 = vmul.f32 %v22, %v22
  %v226 = vmul.f32 %v23, %v23
  %v227 = vmul.f32 %v24, %v24
  %v228 = vmul.f32 %v25, %v25
  %v229 = vmul.f32 %v26, %v26
  %v230 = vmul.f32 %v27, %v27
  %v231 = vmul.f32 %v28, %v28
  %v232 = vmul.f32 %v29, %v29
  %v233 = vmul.f32 %v30, %v30
  %v234 = vmul.f32 %v31, %v31
  %v235 = vmul.f32 %v32, %v32
  %v236 = vmul.f32 %v33, %v33
  %v237 = vmul.f32 %v34, %v34
  %v238 = vmul.f32 %v35, %v35
  %v239 = vmul.f32 %v36, %v36
  %v240 = vmul.f32 %v37, %v37
  %v241 = vmul.f32 %v38, %v38
  %v242 = vmul.f32 %v39, %v39
  %v243 = vmul.f32 %v40, %v40
  %v244 = vmul.f32 %v41, %v41
  %v245 = vmul.f32 %v42, %v42
  %v246 = vmul.f32 %v43, %v43
  %v247 = vmul.f32 %v44, %v44
  %v248 = vmul.f32 %v45, %v45
  %v249 = vmul.f32 %v46, %v46
  %v250 = vmul.f32 %v47, %v47
  %v251 = vmul.f32 %v48, %v48
  %v252 = vmul.f32 %v49, %v49
  %v253 = vmul.f32 %v50, %v50
  %v254 = vmul.f32 %v51, %v51
  %v255 = vmul.f32 %v52, %v52
  %v256 = vmul.f32 %v53, %v53
  %v257 = vmul.f32 %v54, %v54
  %v258 = vmul.f32 %v55, %v55
  %v259 = vmul.f32 %v56, %v56
  %v260 = vmul.f32 %v57, %v57
  %v261 = vmul.f32 %v58, %v58
  %v262 = vmul.f32 %v59, %v59
  %v263 = vmul.f32 %v60, %v60
  %v264 = vmul.f32 %v61, %v61
  %v265 = vmul.f32 %v62, %v62
  %v266 = vmul.f32 %v63, %v63
  %v267 = vmul.f32 %v64, %v64
  %v268 = vmul.f32 %v65, %v65
  %v269 = vmul.f32 %v66, %v66
  %v270 = vmul.f32 %v67, %v67
  %v271 = vmul.f32 %v68, %v68
  %v272 = vmul.f32 %v69, %v69
  %v273 = vmul.f32 %v70, %v70
  %v274 = vmul.f32 %v71, %v71
  %v275 = vmul.f32 %v72, %v72
  %v276 = vmul.f32 %v73, %v73
  %v277 = vmul.f32 %v74, %v74
  %v278 = vmul.f32 %v75, %v75
  %v279 = vmul.f32 %v76, %v76
  %v280 = vmul.f32 %v77, %v77
  %v281 = vmul.f32 %v78, %v78
  %v282 = vmul.f32 %v79, %v79
  %v283 = vmul.f32 %v80, %v80
  %v284 = vsel %vm82, %v220, 0.0
  %v285 = vsel %vm82, %v221, 0.0
  %v286 = vadd.f32 %v284, %v285
  %v287 = vsel %vm82, %v222, 0.0
  %v288 = vadd.f32 %v286, %v287
  %v289 = vsel %vm82, %v223, 0.0
  %v290 = vadd.f32 %v288, %v289
  %v291 = vsel %vm82, %v224, 0.0
  %v292 = vadd.f32 %v290, %v291
  %v293 = vsel %vm82, %v225, 0.0
  %v294 = vadd.f32 %v292, %v293
  %v295 = vsel %vm82, %v226, 0.0
  %v296 = vadd.f32 %v294, %v295
  %v297 = vsel %vm82, %v227, 0.0
  %v298 = vadd.f32 %v296, %v297
  %v299 = vsel %vm82, %v228, 0.0
  %v300 = vadd.f32 %v298, %v299
  %v301 = vsel %vm82, %v229, 0.0
  %v302 = vadd.f32 %v300, %v301
  %v303 = vsel %vm82, %v230, 0.0
  %v304 = vadd.f32 %v302, %v303
  %v305 = vsel %vm82, %v231, 0.0
  %v306 = vadd.f32 %v304, %v305
  %v307 = vsel %vm82, %v232, 0.0
  %v308 = vadd.f32 %v306, %v307
  %v309 = vsel %vm82, %v233, 0.0
  %v310 = vadd.f32 %v308, %v309
  %v311 = vsel %vm82, %v234, 0.0
  %v312 = vadd.f32 %v310, %v311
  %v313 = vsel %vm82, %v235, 0.0
  %v314 = vadd.f32 %v312, %v313
  %v315 = vsel %vm82, %v236, 0.0
  %v316 = vadd.f32 %v314, %v315
  %v317 = vsel %vm82, %v237, 0.0
  %v318 = vadd.f32 %v316, %v317
  %v319 = vsel %vm82, %v238, 0.0
  %v320 = vadd.f32 %v318, %v319
  %v321 = vsel %vm82, %v239, 0.0
  %v322 = vadd.f32 %v320, %v321
  %v323 = vsel %vm82, %v240, 0.0
  %v324 = vadd.f32 %v322, %v323
  %v325 = vsel %vm82, %v241, 0.0
  %v326 = vadd.f32 %v324, %v325
  %v327 = vsel %vm82, %v242, 0.0
  %v328 = vadd.f32 %v326, %v327
  %v329 = vsel %vm82, %v243, 0.0
  %v330 = vadd.f32 %v328, %v329
  %v331 = vsel %vm82, %v244, 0.0
  %v332 = vadd.f32 %v330, %v331
  %v333 = vsel %vm82, %v245, 0.0
  %v334 = vadd.f32 %v332, %v333
  %v335 = vsel %vm82, %v246, 0.0
  %v336 = vadd.f32 %v334, %v335
  %v337 = vsel %vm82, %v247, 0.0
  %v338 = vadd.f32 %v336, %v337
  %v339 = vsel %vm82, %v248, 0.0
  %v340 = vadd.f32 %v338, %v339
  %v341 = vsel %vm82, %v249, 0.0
  %v342 = vadd.f32 %v340, %v341
  %v343 = vsel %vm82, %v250, 0.0
  %v344 = vadd.f32 %v342, %v343
  %v345 = vsel %vm82, %v251, 0.0
  %v346 = vadd.f32 %v344, %v345
  %v347 = vsel %vm82, %v252, 0.0
  %v348 = vadd.f32 %v346, %v347
  %v349 = vsel %vm82, %v253, 0.0
  %v350 = vadd.f32 %v348, %v349
  %v351 = vsel %vm82, %v254, 0.0
  %v352 = vadd.f32 %v350, %v351
  %v353 = vsel %vm82, %v255, 0.0
  %v354 = vadd.f32 %v352, %v353
  %v355 = vsel %vm82, %v256, 0.0
  %v356 = vadd.f32 %v354, %v355
  %v357 = vsel %vm82, %v257, 0.0
  %v358 = vadd.f32 %v356, %v357
  %v359 = vsel %vm82, %v258, 0.0
  %v360 = vadd.f32 %v358, %v359
  %v361 = vsel %vm82, %v259, 0.0
  %v362 = vadd.f32 %v360, %v361
  %v363 = vsel %vm82, %v260, 0.0
  %v364 = vadd.f32 %v362, %v363
  %v365 = vsel %vm82, %v261, 0.0
  %v366 = vadd.f32 %v364, %v365
  %v367 = vsel %vm82, %v262, 0.0
  %v368 = vadd.f32 %v366, %v367
  %v369 = vsel %vm82, %v263, 0.0
  %v370 = vadd.f32 %v368, %v369
  %v371 = vsel %vm82, %v264, 0.0
  %v372 = vadd.f32 %v370, %v371
  %v373 = vsel %vm82, %v265, 0.0
  %v374 = vadd.f32 %v372, %v373
  %v375 = vsel %vm82, %v266, 0.0
  %v376 = vadd.f32 %v374, %v375
  %v377 = vsel %vm82, %v267, 0.0
  %v378 = vadd.f32 %v376, %v377
  %v379 = vsel %vm82, %v268, 0.0
  %v380 = vadd.f32 %v378, %v379
  %v381 = vsel %vm82, %v269, 0.0
  %v382 = vadd.f32 %v380, %v381
  %v383 = vsel %vm82, %v270, 0.0
  %v384 = vadd.f32 %v382, %v383
  %v385 = vsel %vm82, %v271, 0.0
  %v386 = vadd.f32 %v384, %v385
  %v387 = vsel %vm82, %v272, 0.0
  %v388 = vadd.f32 %v386, %v387
  %v389 = vsel %vm82, %v273, 0.0
  %v390 = vadd.f32 %v388, %v389
  %v391 = vsel %vm82, %v274, 0.0
  %v392 = vadd.f32 %v390, %v391
  %v393 = vsel %vm82, %v275, 0.0
  %v394 = vadd.f32 %v392, %v393
  %v395 = vsel %vm82, %v276, 0.0
  %v396 = vadd.f32 %v394, %v395
  %v397 = vsel %vm82, %v277, 0.0
  %v398 = vadd.f32 %v396, %v397
  %v399 = vsel %vm82, %v278, 0.0
  %v400 = vadd.f32 %v398, %v399
  %v401 = vsel %vm82, %v279, 0.0
  %v402 = vadd.f32 %v400, %v401
  %v403 = vsel %vm82, %v280, 0.0
  %v404 = vadd.f32 %v402, %v403
  %v405 = vsel %vm82, %v281, 0.0
  %v406 = vadd.f32 %v404, %v405
  %v407 = vsel %vm82, %v282, 0.0
  %v408 = vadd.f32 %v406, %v407
  %v409 = vsel %vm82, %v283, 0.0
  %v410 = vadd.f32 %v408, %v409
  %v411 = vrot.slane %v410, 4
  %v412 = vadd.f32 %v410, %v411
  %v413 = vrot.slane %v412, 2
  %v414 = vadd.f32 %v412, %v413
  %v415 = vrot.slane %v414, 1
  %v416 = vadd.f32 %v414, %v415
  %v417 = vadd.f32 %v219, %v416
  %418 = vst.msk [vmem:[%s2] sm:$0x1] %vm217, %v417
  // Predicated region
  $region10: #{resnet_forward.44} parent=0 // pred_check
    _
  $region11: #{resnet_forward.44} parent=0 // pred_check_branch
    %420 = sbr.rel (0) target = $region13
  $region12: #{resnet_forward.44} parent=0 // pred_region
    _
  $region13: #{resnet_forward.44} parent=0 // pred_fallthru
    _
  // Predicated region
  $region14: #{resnet_forward.44} parent=0 // pred_check
    _
  $region15: #{resnet_forward.44} parent=0 // pred_check_branch
    %422 = sbr.rel (0) target = $region17
  $region16: #{resnet_forward.44} parent=0 // pred_region
    _
  $region17: #{resnet_forward.44} parent=0 // pred_fallthru
    _
  // Predicated region
  $region18: #{resnet_forward.44} parent=0 // pred_check
    _
  $region19: #{resnet_forward.44} parent=0 // pred_check_branch
    %424 = sbr.rel (0) target = $region21
  $region20: #{resnet_forward.44} parent=0 // pred_region
    _
  $region21: #{resnet_forward.44} parent=0 // pred_fallthru
    _
  // Predicated region
  $region22: #{resnet_forward.44} parent=0 // pred_check
    _
  $region23: #{resnet_forward.44} parent=0 // pred_check_branch
    %426 = sbr.rel (0) target = $region25
  $region24: #{resnet_forward.44} parent=0 // pred_region
    _
  $region25: #{resnet_forward.44} parent=0 // pred_fallthru
    _

// kernel: resnet_forward.43
$region0: #{resnet_forward.43}
  #allocation0 [shape = 'u32[]', space=smem, size = 0x4, offset = 0x4, fixed_abs, tag = 'smem constant byte address 0x4 - core index']
  #allocation1 [shape = 'u32[72,128]{1,0:T(1,128)}', space=vmem, size = 0x9000, scoped, tag = 'internal scratch']
  #allocation2 [shape = 'f32[256,128]{1,0:T(8,128)}', space=vmem, size = 0x20000, scoped, tag = 'scratch operand']
  %s0 = inlined_call_operand.vmem [shape: bf16[512,128], index: 0, kind: input, shape index: {}]
  %s1 = inlined_call_operand.vmem [shape: bf16[128,128], index: 1, kind: input, shape index: {}]
  %s2 = inlined_call_operand.vmem [shape: f32[1,128], index: 2, kind: input, shape index: {}]
  %s3 = inlined_call_operand.vmem [shape: f32[512,128], index: 3, kind: output, shape index: {}]
  %s4 = sld [smem:[#allocation0]]
  $region53: #{resnet_forward.43} parent=0
    _
  %s6 = ssub.s32 1, %s4
  %s7 = scalar_select 0, %s6, %s4
  loop: start=0, step=1, limit=4
  $region2: #{resnet_forward.43} parent=0 // loop_pre_header
    _
  $region3: #{resnet_forward.43} parent=0 // loop_header
    %s9 = sphi 0, %s13
    %p10 = scmp.ge.s32.totalorder %s9, 4
    %s16 = sphi 0, %s35
    %s17 = sphi 0, %s31
    %s18 = sphi 0, %s27
    %s19 = sphi 0, %s16
    %s20 = sphi 0, %s17
    %s21 = sphi 0, %s18
    %s22 = sphi 0, %s19
    %s23 = sphi 0, %s20
    %s24 = sphi 0, %s21
    %s40 = sphi 0, %s42
    %s43 = sphi 0, %s40
    %s44 = sphi 0, %s43
    %s60 = sphi 0, %s44
    %s68 = sphi 0, %s70
    %s71 = sphi 0, %s68
    %s72 = sphi 0, %s71
    %s88 = sphi 0, %s72
    %s94 = sphi 0, %s96
    %s97 = sphi 0, %s94
    %s98 = sphi 0, %s97
    %s114 = sphi 0, %s98
    %s122 = sphi 0, %s124
    %s125 = sphi 0, %s122
    %s126 = sphi 0, %s125
    %s142 = sphi 0, %s126
  $region4: #{resnet_forward.43} parent=0 // loop_header_branch
    %12 = sbr.rel (%p10) target = $region8
  $region5: #{resnet_forward.43} parent=0 // loop_body
    %s14 = ssub.s32 %s9, 1
    %s15 = ssub.s32 %s9, 2
    %s25 = sadd.s32 1, %s18
    %p26 = scmp.ge.s32.totalorder %s25, 1
    %s27 = scalar_select %p26, 0, %s25
    %s28 = sadd.s32 1, %s17
    %s29 = scalar_select %p26, %s28, %s17
    %p30 = scmp.ge.s32.totalorder %s29, 1
    %s31 = scalar_select %p30, 0, %s29
    %s32 = sadd.s32 1, %s16
    %s33 = scalar_select %p30, %s32, %s16
    %p34 = scmp.ge.s32.totalorder %s33, 2
    %s35 = scalar_select %p34, 0, %s33
    %s36 = ssub.s32 %s16, %s35
    %s37 = ssub.s32 %s18, %s27
    %s38 = sor.u32 %s36, %s37
    %p39 = scmp.eq.s32.totalorder %s38, 0
    %s41 = sadd.s32 %s40, 1
    %s42 = scalar_select %p39, %s40, %s41
    %p45 = pneg %p39
    %p46 = scmp.eq.s32.totalorder %s9, 1
    %p47 = por %p45, %p46
    %p48 = scmp.ne.s32.totalorder %s40, %s43
    %p49 = scmp.eq.s32.totalorder %s9, 0
    %p50 = por %p48, %p49
    %p51 = scmp.ne.s32.totalorder %s40, %s43
    %p52 = scmp.eq.s32.totalorder %s14, 1
    %p53 = por %p51, %p52
    %p54 = scmp.ne.s32.totalorder %s43, %s44
    %p55 = scmp.eq.s32.totalorder %s14, 0
    %p56 = por %p54, %p55
    %p57 = scmp.ne.s32.totalorder %s43, %s44
    %p58 = scmp.eq.s32.totalorder %s15, 1
    %p59 = por %p57, %p58
    %p61 = scmp.ne.s32.totalorder %s44, %s60
    %p62 = scmp.eq.s32.totalorder %s15, 0
    %p63 = por %p61, %p62
    %s64 = ssub.s32 %s18, %s27
    %s65 = ssub.s32 %s17, %s31
    %s66 = sor.u32 %s64, %s65
    %p67 = scmp.eq.s32.totalorder %s66, 0
    %s69 = sadd.s32 %s68, 1
    %s70 = scalar_select %p67, %s68, %s69
    %p73 = pneg %p67
    %p74 = scmp.eq.s32.totalorder %s9, 1
    %p75 = por %p73, %p74
    %p76 = scmp.ne.s32.totalorder %s68, %s71
    %p77 = scmp.eq.s32.totalorder %s9, 0
    %p78 = por %p76, %p77
    %p79 = scmp.ne.s32.totalorder %s68, %s71
    %p80 = scmp.eq.s32.totalorder %s14, 1
    %p81 = por %p79, %p80
    %p82 = scmp.ne.s32.totalorder %s71, %s72
    %p83 = scmp.eq.s32.totalorder %s14, 0
    %p84 = por %p82, %p83
    %p85 = scmp.ne.s32.totalorder %s71, %s72
    %p86 = scmp.eq.s32.totalorder %s15, 1
    %p87 = por %p85, %p86
    %p89 = scmp.ne.s32.totalorder %s72, %s88
    %p90 = scmp.eq.s32.totalorder %s15, 0
    %p91 = por %p89, %p90
    %s92 = ssub.s32 %s17, %s31
    %p93 = scmp.eq.s32.totalorder %s92, 0
    %s95 = sadd.s32 %s94, 1
    %s96 = scalar_select %p93, %s94, %s95
    %p99 = pneg %p93
    %p100 = scmp.eq.s32.totalorder %s9, 1
    %p101 = por %p99, %p100
    %p102 = scmp.ne.s32.totalorder %s94, %s97
    %p103 = scmp.eq.s32.totalorder %s9, 0
    %p104 = por %p102, %p103
    %p105 = scmp.ne.s32.totalorder %s94, %s97
    %p106 = scmp.eq.s32.totalorder %s14, 1
    %p107 = por %p105, %p106
    %p108 = scmp.ne.s32.totalorder %s97, %s98
    %p109 = scmp.eq.s32.totalorder %s14, 0
    %p110 = por %p108, %p109
    %p111 = scmp.ne.s32.totalorder %s97, %s98
    %p112 = scmp.eq.s32.totalorder %s15, 1
    %p113 = por %p111, %p112
    %p115 = scmp.ne.s32.totalorder %s98, %s114
    %p116 = scmp.eq.s32.totalorder %s15, 0
    %p117 = por %p115, %p116
    %s118 = ssub.s32 %s16, %s35
    %s119 = ssub.s32 %s17, %s31
    %s120 = sor.u32 %s118, %s119
    %p121 = scmp.eq.s32.totalorder %s120, 0
    %s123 = sadd.s32 %s122, 1
    %s124 = scalar_select %p121, %s122, %s123
    %p127 = pneg %p121
    %p128 = scmp.eq.s32.totalorder %s9, 1
    %p129 = por %p127, %p128
    %p130 = scmp.ne.s32.totalorder %s122, %s125
    %p131 = scmp.eq.s32.totalorder %s9, 0
    %p132 = por %p130, %p131
    %p133 = scmp.ne.s32.totalorder %s122, %s125
    %p134 = scmp.eq.s32.totalorder %s14, 1
    %p135 = por %p133, %p134
    %p136 = scmp.ne.s32.totalorder %s125, %s126
    %p137 = scmp.eq.s32.totalorder %s14, 0
    %p138 = por %p136, %p137
    %p139 = scmp.ne.s32.totalorder %s125, %s126
    %p140 = scmp.eq.s32.totalorder %s15, 1
    %p141 = por %p139, %p140
    %p143 = scmp.ne.s32.totalorder %s126, %s142
    %p144 = scmp.eq.s32.totalorder %s15, 0
    %p145 = por %p143, %p144
    %p146 = scmp.le.s32.totalorder 1, %s9
    %p147 = scmp.lt.s32.totalorder %s9, 3
    %p148 = pnand %p146, %p147
    %p149 = pneg %p148
    // Predicated region
    $region9: #{resnet_forward.43} parent=5 // pred_check
      _
    $region10: #{resnet_forward.43} parent=5 // pred_check_branch
      %151 = sbr.rel (%p148) target = $region12
    $region11: #{resnet_forward.43} parent=5 // pred_region
      %s152 = ssub.s32 %s9, 1
      // Predicated region
      $region13: #{resnet_forward.43} parent=11 // pred_check
        %p153 = pneg %p84
      $region14: #{resnet_forward.43} parent=11 // pred_check_branch
        %155 = sbr.rel (%p153) target = $region16
      $region15: #{resnet_forward.43} parent=11 // pred_region
        %s156 = smul.u32 16, %s21
        %p157 = scmp.lt.s32.totalorder %s156, 15
        %s158 = scalar_select %p157, %s156, 15
        %p159 = scmp.lt.s32.totalorder %s20, 0
        %s160 = scalar_select %p159, %s20, 0
        %s161 = sadd.s32 %s160, %s158
        %s162 = smul.addr %s161, 4
        %s163 = scalar_lea.vmem %s1, %s162
        %s164 = smul.u32 16, %s21
      $region16: #{resnet_forward.43} parent=11 // pred_fallthru
        _
      // Predicated region
      $region17: #{resnet_forward.43} parent=11 // pred_check
        %p165 = pneg %p110
      $region18: #{resnet_forward.43} parent=11 // pred_check_branch
        %167 = sbr.rel (%p165) target = $region20
      $region19: #{resnet_forward.43} parent=11 // pred_region
        %p168 = scmp.lt.s32.totalorder %s20, 0
        %s169 = scalar_select %p168, %s20, 0
        %s170 = scalar_lea.vmem %s2, %s169
      $region20: #{resnet_forward.43} parent=11 // pred_fallthru
        _
    $region12: #{resnet_forward.43} parent=5 // pred_fallthru
      _
    %p171 = scmp.lt.s32.totalorder %s9, 2
    // Predicated region
    $region21: #{resnet_forward.43} parent=5 // pred_check
      %p172 = pneg %p171
    $region22: #{resnet_forward.43} parent=5 // pred_check_branch
      %174 = sbr.rel (%p172) target = $region24
    $region23: #{resnet_forward.43} parent=5 // pred_region
      // Predicated region
      $region25: #{resnet_forward.43} parent=23 // pred_check
        %p175 = pneg %p50
      $region26: #{resnet_forward.43} parent=23 // pred_check_branch
        %177 = sbr.rel (%p175) target = $region28
      $region27: #{resnet_forward.43} parent=23 // pred_region
        %s178 = smul.u32 32, %s16
        %p179 = scmp.lt.s32.totalorder %s178, 63
        %s180 = scalar_select %p179, %s178, 63
        %p181 = scmp.lt.s32.totalorder %s18, 0
        %s182 = scalar_select %p181, %s18, 0
        %s183 = sadd.s32 %s182, %s180
        %s184 = smul.addr %s183, 4
        %s185 = scalar_lea.vmem %s0, %s184
        %s186 = smul.u32 32, %s16
      $region28: #{resnet_forward.43} parent=23 // pred_fallthru
        _
    $region24: #{resnet_forward.43} parent=5 // pred_fallthru
      _
    %p187 = scmp.le.s32.totalorder 1, %s9
    %p188 = scmp.lt.s32.totalorder %s9, 3
    %p189 = pnand %p187, %p188
    %p190 = pneg %p189
    // Predicated region
    $region29: #{resnet_forward.43} parent=5 // pred_check
      _
    $region30: #{resnet_forward.43} parent=5 // pred_check_branch
      %192 = sbr.rel (%p189) target = $region32
    $region31: #{resnet_forward.43} parent=5 // pred_region
      %s193 = ssub.s32 %s9, 1
      %s194 = smul.u32 32, %s19
      %p195 = scmp.lt.s32.totalorder %s194, 63
      %s196 = scalar_select %p195, %s194, 63
      %p197 = scmp.lt.s32.totalorder %s21, 0
      %s198 = scalar_select %p197, %s21, 0
      %s199 = sadd.s32 %s198, %s196
      %s200 = smul.addr %s199, 4
      %s201 = scalar_lea.vmem %s0, %s200
      %p202 = pneg %p56
      %p203 = pneg %p53
      %s204 = smul.u32 16, %s21
      %p205 = scmp.lt.s32.totalorder %s204, 15
      %s206 = scalar_select %p205, %s204, 15
      %p207 = scmp.lt.s32.totalorder %s20, 0
      %s208 = scalar_select %p207, %s20, 0
      %s209 = sadd.s32 %s208, %s206
      %s210 = smul.addr %s209, 4
      %s211 = scalar_lea.vmem %s1, %s210
      %p212 = pneg %p84
      %p213 = pneg %p81
      %p214 = scmp.lt.s32.totalorder %s20, 0
      %s215 = scalar_select %p214, %s20, 0
      %s216 = scalar_lea.vmem %s2, %s215
      %p217 = pneg %p110
      %p218 = pneg %p107
      %p219 = pneg %p138
      %p220 = pneg %p135
      %s221 = smul.u32 32, %s19
      %p222 = scmp.lt.s32.totalorder %s221, 63
      %s223 = scalar_select %p222, %s221, 63
      %p224 = scmp.lt.s32.totalorder %s20, 0
      %s225 = scalar_select %p224, %s20, 0
      %s226 = sadd.s32 %s225, %s223
      %s227 = smul.addr %s226, 8
      %s228 = scalar_lea.vmem %s3, %s227
      %s229 = smul.u32 32, %s19
      %p230 = scmp.lt.s32.totalorder %s229, 63
      %s231 = scalar_select %p230, %s229, 63
      %p232 = scmp.lt.s32.totalorder %s21, 0
      %s233 = scalar_select %p232, %s21, 0
      %s234 = sadd.s32 %s233, %s231
      %s235 = smul.addr %s234, 4
      %s236 = scalar_lea.vmem %s0, %s235
      %s237 = smul.u32 32, %s19
      %s238 = smul.u32 16, %s21
      %p239 = scmp.lt.s32.totalorder %s238, 15
      %s240 = scalar_select %p239, %s238, 15
      %p241 = scmp.lt.s32.totalorder %s20, 0
      %s242 = scalar_select %p241, %s20, 0
      %s243 = sadd.s32 %s242, %s240
      %s244 = smul.addr %s243, 4
      %s245 = scalar_lea.vmem %s1, %s244
      %s246 = smul.u32 16, %s21
      %p247 = scmp.lt.s32.totalorder %s20, 0
      %s248 = scalar_select %p247, %s20, 0
      %s249 = scalar_lea.vmem %s2, %s248
      %s250 = smul.u32 32, %s19
      %p251 = scmp.lt.s32.totalorder %s250, 63
      %s252 = scalar_select %p251, %s250, 63
      %p253 = scmp.lt.s32.totalorder %s20, 0
      %s254 = scalar_select %p253, %s20, 0
      %s255 = sadd.s32 %s254, %s252
      %s256 = smul.addr %s255, 8
      %s257 = scalar_lea.vmem %s3, %s256
      %s258 = smul.u32 32, %s19
      %p259 = scmp.eq.s32.totalorder %s21, 0
      // Predicated region
      $region33: #{resnet_forward.43} parent=31 // pred_check
        %p260 = pneg %p259
      $region34: #{resnet_forward.43} parent=31 // pred_check_branch
        %262 = sbr.rel (%p260) target = $region36
      $region35: #{resnet_forward.43} parent=31 // pred_region
        %263 = vst [vmem:[#allocation2] sm:$0xff] 0.0
        %264 = vst [vmem:[#allocation2 + $0x8] sm:$0xff] 0.0
        %265 = vst [vmem:[#allocation2 + $0x10] sm:$0xff] 0.0
        %266 = vst [vmem:[#allocation2 + $0x18] sm:$0xff] 0.0
        %267 = vst [vmem:[#allocation2 + $0x20] sm:$0xff] 0.0
        %268 = vst [vmem:[#allocation2 + $0x28] sm:$0xff] 0.0
        %269 = vst [vmem:[#allocation2 + $0x30] sm:$0xff] 0.0
        %270 = vst [vmem:[#allocation2 + $0x38] sm:$0xff] 0.0
        %271 = vst [vmem:[#allocation2 + $0x40] sm:$0xff] 0.0
        %272 = vst [vmem:[#allocation2 + $0x48] sm:$0xff] 0.0
        %273 = vst [vmem:[#allocation2 + $0x50] sm:$0xff] 0.0
        %274 = vst [vmem:[#allocation2 + $0x58] sm:$0xff] 0.0
        %275 = vst [vmem:[#allocation2 + $0x60] sm:$0xff] 0.0
        %276 = vst [vmem:[#allocation2 + $0x68] sm:$0xff] 0.0
        %277 = vst [vmem:[#allocation2 + $0x70] sm:$0xff] 0.0
        %278 = vst [vmem:[#allocation2 + $0x78] sm:$0xff] 0.0
        %279 = vst [vmem:[#allocation2 + $0x80] sm:$0xff] 0.0
        %280 = vst [vmem:[#allocation2 + $0x88] sm:$0xff] 0.0
        %281 = vst [vmem:[#allocation2 + $0x90] sm:$0xff] 0.0
        %282 = vst [vmem:[#allocation2 + $0x98] sm:$0xff] 0.0
        %283 = vst [vmem:[#allocation2 + $0xa0] sm:$0xff] 0.0
        %284 = vst [vmem:[#allocation2 + $0xa8] sm:$0xff] 0.0
        %285 = vst [vmem:[#allocation2 + $0xb0] sm:$0xff] 0.0
        %286 = vst [vmem:[#allocation2 + $0xb8] sm:$0xff] 0.0
        %287 = vst [vmem:[#allocation2 + $0xc0] sm:$0xff] 0.0
        %288 = vst [vmem:[#allocation2 + $0xc8] sm:$0xff] 0.0
        %289 = vst [vmem:[#allocation2 + $0xd0] sm:$0xff] 0.0
        %290 = vst [vmem:[#allocation2 + $0xd8] sm:$0xff] 0.0
        %291 = vst [vmem:[#allocation2 + $0xe0] sm:$0xff] 0.0
        %292 = vst [vmem:[#allocation2 + $0xe8] sm:$0xff] 0.0
        %293 = vst [vmem:[#allocation2 + $0xf0] sm:$0xff] 0.0
        %294 = vst [vmem:[#allocation2 + $0xf8] sm:$0xff] 0.0
      $region36: #{resnet_forward.43} parent=31 // pred_fallthru
        _
      %v295 = vld [vmem:[%s236] sm:$0xf]
      %v296 = vld [vmem:[%s236 + $0x4] sm:$0xf]
      %v297 = vld [vmem:[%s236 + $0x8] sm:$0xf]
      %v298 = vld [vmem:[%s236 + $0xc] sm:$0xf]
      %v299 = vld [vmem:[%s236 + $0x10] sm:$0xf]
      %v300 = vld [vmem:[%s236 + $0x14] sm:$0xf]
      %v301 = vld [vmem:[%s236 + $0x18] sm:$0xf]
      %v302 = vld [vmem:[%s236 + $0x1c] sm:$0xf]
      %v303 = vld [vmem:[%s236 + $0x20] sm:$0xf]
      %v304 = vld [vmem:[%s236 + $0x24] sm:$0xf]
      %v305 = vld [vmem:[%s236 + $0x28] sm:$0xf]
      %v306 = vld [vmem:[%s236 + $0x2c] sm:$0xf]
      %v307 = vld [vmem:[%s236 + $0x30] sm:$0xf]
      %v308 = vld [vmem:[%s236 + $0x34] sm:$0xf]
      %v309 = vld [vmem:[%s236 + $0x38] sm:$0xf]
      %v310 = vld [vmem:[%s236 + $0x3c] sm:$0xf]
      %v311 = vld [vmem:[%s236 + $0x40] sm:$0xf]
      %v312 = vld [vmem:[%s236 + $0x44] sm:$0xf]
      %v313 = vld [vmem:[%s236 + $0x48] sm:$0xf]
      %v314 = vld [vmem:[%s236 + $0x4c] sm:$0xf]
      %v315 = vld [vmem:[%s236 + $0x50] sm:$0xf]
      %v316 = vld [vmem:[%s236 + $0x54] sm:$0xf]
      %v317 = vld [vmem:[%s236 + $0x58] sm:$0xf]
      %v318 = vld [vmem:[%s236 + $0x5c] sm:$0xf]
      %v319 = vld [vmem:[%s236 + $0x60] sm:$0xf]
      %v320 = vld [vmem:[%s236 + $0x64] sm:$0xf]
      %v321 = vld [vmem:[%s236 + $0x68] sm:$0xf]
      %v322 = vld [vmem:[%s236 + $0x6c] sm:$0xf]
      %v323 = vld [vmem:[%s236 + $0x70] sm:$0xf]
      %v324 = vld [vmem:[%s236 + $0x74] sm:$0xf]
      %v325 = vld [vmem:[%s236 + $0x78] sm:$0xf]
      %v326 = vld [vmem:[%s236 + $0x7c] sm:$0xf]
      %v327 = vld [vmem:[#allocation2] sm:$0xff]
      %v328 = vld [vmem:[#allocation2 + $0x8] sm:$0xff]
      %v329 = vld [vmem:[#allocation2 + $0x10] sm:$0xff]
      %v330 = vld [vmem:[#allocation2 + $0x18] sm:$0xff]
      %v331 = vld [vmem:[#allocation2 + $0x20] sm:$0xff]
      %v332 = vld [vmem:[#allocation2 + $0x28] sm:$0xff]
      %v333 = vld [vmem:[#allocation2 + $0x30] sm:$0xff]
      %v334 = vld [vmem:[#allocation2 + $0x38] sm:$0xff]
      %v335 = vld [vmem:[#allocation2 + $0x40] sm:$0xff]
      %v336 = vld [vmem:[#allocation2 + $0x48] sm:$0xff]
      %v337 = vld [vmem:[#allocation2 + $0x50] sm:$0xff]
      %v338 = vld [vmem:[#allocation2 + $0x58] sm:$0xff]
      %v339 = vld [vmem:[#allocation2 + $0x60] sm:$0xff]
      %v340 = vld [vmem:[#allocation2 + $0x68] sm:$0xff]
      %v341 = vld [vmem:[#allocation2 + $0x70] sm:$0xff]
      %v342 = vld [vmem:[#allocation2 + $0x78] sm:$0xff]
      %v343 = vld [vmem:[#allocation2 + $0x80] sm:$0xff]
      %v344 = vld [vmem:[#allocation2 + $0x88] sm:$0xff]
      %v345 = vld [vmem:[#allocation2 + $0x90] sm:$0xff]
      %v346 = vld [vmem:[#allocation2 + $0x98] sm:$0xff]
      %v347 = vld [vmem:[#allocation2 + $0xa0] sm:$0xff]
      %v348 = vld [vmem:[#allocation2 + $0xa8] sm:$0xff]
      %v349 = vld [vmem:[#allocation2 + $0xb0] sm:$0xff]
      %v350 = vld [vmem:[#allocation2 + $0xb8] sm:$0xff]
      %v351 = vld [vmem:[#allocation2 + $0xc0] sm:$0xff]
      %v352 = vld [vmem:[#allocation2 + $0xc8] sm:$0xff]
      %v353 = vld [vmem:[#allocation2 + $0xd0] sm:$0xff]
      %v354 = vld [vmem:[#allocation2 + $0xd8] sm:$0xff]
      %v355 = vld [vmem:[#allocation2 + $0xe0] sm:$0xff]
      %v356 = vld [vmem:[#allocation2 + $0xe8] sm:$0xff]
      %v357 = vld [vmem:[#allocation2 + $0xf0] sm:$0xff]
      %v358 = vld [vmem:[#allocation2 + $0xf8] sm:$0xff]
      %v359 = vld [vmem:[%s245] sm:$0xf]
      %v360 = vld [vmem:[%s245 + $0x4] sm:$0xf]
      %v361 = vld [vmem:[%s245 + $0x8] sm:$0xf]
      %v362 = vld [vmem:[%s245 + $0xc] sm:$0xf]
      %v363 = vld [vmem:[%s245 + $0x10] sm:$0xf]
      %v364 = vld [vmem:[%s245 + $0x14] sm:$0xf]
      %v365 = vld [vmem:[%s245 + $0x18] sm:$0xf]
      %v366 = vld [vmem:[%s245 + $0x1c] sm:$0xf]
      %v367 = vld [vmem:[%s245 + $0x20] sm:$0xf]
      %v368 = vld [vmem:[%s245 + $0x24] sm:$0xf]
      %v369 = vld [vmem:[%s245 + $0x28] sm:$0xf]
      %v370 = vld [vmem:[%s245 + $0x2c] sm:$0xf]
      %v371 = vld [vmem:[%s245 + $0x30] sm:$0xf]
      %v372 = vld [vmem:[%s245 + $0x34] sm:$0xf]
      %v373 = vld [vmem:[%s245 + $0x38] sm:$0xf]
      %v374 = vld [vmem:[%s245 + $0x3c] sm:$0xf]
      %v407 = vunpack.c.l.b16 %v295
      %v408 = vunpack.c.l.b16 %v296
      %v409 = vunpack.c.l.b16 %v297
      %v410 = vunpack.c.l.b16 %v298
      %v411 = vunpack.c.l.b16 %v299
      %v412 = vunpack.c.l.b16 %v300
      %v413 = vunpack.c.l.b16 %v301
      %v414 = vunpack.c.l.b16 %v302
      %v415 = vunpack.c.l.b16 %v303
      %v416 = vunpack.c.l.b16 %v304
      %v417 = vunpack.c.l.b16 %v305
      %v418 = vunpack.c.l.b16 %v306
      %v419 = vunpack.c.l.b16 %v307
      %v420 = vunpack.c.l.b16 %v308
      %v421 = vunpack.c.l.b16 %v309
      %v422 = vunpack.c.l.b16 %v310
      %v423 = vunpack.c.l.b16 %v311
      %v424 = vunpack.c.l.b16 %v312
      %v425 = vunpack.c.l.b16 %v313
      %v426 = vunpack.c.l.b16 %v314
      %v427 = vunpack.c.l.b16 %v315
      %v428 = vunpack.c.l.b16 %v316
      %v429 = vunpack.c.l.b16 %v317
      %v430 = vunpack.c.l.b16 %v318
      %v431 = vunpack.c.l.b16 %v319
      %v432 = vunpack.c.l.b16 %v320
      %v433 = vunpack.c.l.b16 %v321
      %v434 = vunpack.c.l.b16 %v322
      %v435 = vunpack.c.l.b16 %v323
      %v436 = vunpack.c.l.b16 %v324
      %v437 = vunpack.c.l.b16 %v325
      %v438 = vunpack.c.l.b16 %v326
      %v439 = vpack.c.b16 %v408, %v407
      %v440 = vpack.c.b16 %v410, %v409
      %v441 = vpack.c.b16 %v412, %v411
      %v442 = vpack.c.b16 %v414, %v413
      %v443 = vpack.c.b16 %v416, %v415
      %v444 = vpack.c.b16 %v418, %v417
      %v445 = vpack.c.b16 %v420, %v419
      %v446 = vpack.c.b16 %v422, %v421
      %v447 = vpack.c.b16 %v424, %v423
      %v448 = vpack.c.b16 %v426, %v425
      %v449 = vpack.c.b16 %v428, %v427
      %v450 = vpack.c.b16 %v430, %v429
      %v451 = vpack.c.b16 %v432, %v431
      %v452 = vpack.c.b16 %v434, %v433
      %v453 = vpack.c.b16 %v436, %v435
      %v454 = vpack.c.b16 %v438, %v437
      %v487 = vunpack.c.l.b16 %v359
      %v488 = vunpack.c.l.b16 %v360
      %v489 = vunpack.c.l.b16 %v361
      %v490 = vunpack.c.l.b16 %v362
      %v491 = vunpack.c.l.b16 %v363
      %v492 = vunpack.c.l.b16 %v364
      %v493 = vunpack.c.l.b16 %v365
      %v494 = vunpack.c.l.b16 %v366
      %v495 = vunpack.c.l.b16 %v367
      %v496 = vunpack.c.l.b16 %v368
      %v497 = vunpack.c.l.b16 %v369
      %v498 = vunpack.c.l.b16 %v370
      %v499 = vunpack.c.l.b16 %v371
      %v500 = vunpack.c.l.b16 %v372
      %v501 = vunpack.c.l.b16 %v373
      %v502 = vunpack.c.l.b16 %v374
      %v503 = vpack.c.b16 %v488, %v487
      %v504 = vpack.c.b16 %v490, %v489
      %v505 = vpack.c.b16 %v492, %v491
      %v506 = vpack.c.b16 %v494, %v493
      %v507 = vpack.c.b16 %v496, %v495
      %v508 = vpack.c.b16 %v498, %v497
      %v509 = vpack.c.b16 %v500, %v499
      %v510 = vpack.c.b16 %v502, %v501
      %519 = vmatpush.bf16.msra.mxu0 %v510
      %520 = vmatpush.bf16.msra.mxu0 %v509
      %521 = vmatpush.bf16.msra.mxu0 %v508
      %522 = vmatpush.bf16.msra.mxu0 %v507
      %523 = vmatpush.bf16.msra.mxu0 %v506
      %524 = vmatpush.bf16.msra.mxu0 %v505
      %525 = vmatpush.bf16.msra.mxu0 %v504
      %526 = vmatpush.bf16.msra.mxu0 %v503
      %527 = vmatmul.bf16.gmra.mxu0 %v439
      %v528 = vpop.f32.mrf.mxu0
      %v529 = vadd.f32 0.0, %v528
      %v530 = vpop.f32.mrf.mxu0
      %v531 = vadd.f32 0.0, %v530
      %532 = vmatmul.bf16.gmra.mxu0 %v440
      %v533 = vpop.f32.mrf.mxu0
      %v534 = vadd.f32 0.0, %v533
      %v535 = vpop.f32.mrf.mxu0
      %v536 = vadd.f32 0.0, %v535
      %537 = vmatmul.bf16.gmra.mxu0 %v441
      %v538 = vpop.f32.mrf.mxu0
      %v539 = vadd.f32 0.0, %v538
      %v540 = vpop.f32.mrf.mxu0
      %v541 = vadd.f32 0.0, %v540
      %542 = vmatmul.bf16.gmra.mxu0 %v442
      %v543 = vpop.f32.mrf.mxu0
      %v544 = vadd.f32 0.0, %v543
      %v545 = vpop.f32.mrf.mxu0
      %v546 = vadd.f32 0.0, %v545
      %547 = vmatmul.bf16.gmra.mxu0 %v443
      %v548 = vpop.f32.mrf.mxu0
      %v549 = vadd.f32 0.0, %v548
      %v550 = vpop.f32.mrf.mxu0
      %v551 = vadd.f32 0.0, %v550
      %552 = vmatmul.bf16.gmra.mxu0 %v444
      %v553 = vpop.f32.mrf.mxu0
      %v554 = vadd.f32 0.0, %v553
      %v555 = vpop.f32.mrf.mxu0
      %v556 = vadd.f32 0.0, %v555
      %557 = vmatmul.bf16.gmra.mxu0 %v445
      %v558 = vpop.f32.mrf.mxu0
      %v559 = vadd.f32 0.0, %v558
      %v560 = vpop.f32.mrf.mxu0
      %v561 = vadd.f32 0.0, %v560
      %562 = vmatmul.bf16.gmra.mxu0 %v446
      %v563 = vpop.f32.mrf.mxu0
      %v564 = vadd.f32 0.0, %v563
      %v565 = vpop.f32.mrf.mxu0
      %v566 = vadd.f32 0.0, %v565
      %567 = vmatmul.bf16.gmra.mxu0 %v447
      %v568 = vpop.f32.mrf.mxu0
      %v569 = vadd.f32 0.0, %v568
      %v570 = vpop.f32.mrf.mxu0
      %v571 = vadd.f32 0.0, %v570
      %572 = vmatmul.bf16.gmra.mxu0 %v448
      %v573 = vpop.f32.mrf.mxu0
      %v574 = vadd.f32 0.0, %v573
      %v575 = vpop.f32.mrf.mxu0
      %v576 = vadd.f32 0.0, %v575
      %577 = vmatmul.bf16.gmra.mxu0 %v449
      %v578 = vpop.f32.mrf.mxu0
      %v579 = vadd.f32 0.0, %v578
      %v580 = vpop.f32.mrf.mxu0
      %v581 = vadd.f32 0.0, %v580
      %582 = vmatmul.bf16.gmra.mxu0 %v450
      %v583 = vpop.f32.mrf.mxu0
      %v584 = vadd.f32 0.0, %v583
      %v585 = vpop.f32.mrf.mxu0
      %v586 = vadd.f32 0.0, %v585
      %587 = vmatmul.bf16.gmra.mxu0 %v451
      %v588 = vpop.f32.mrf.mxu0
      %v589 = vadd.f32 0.0, %v588
      %v590 = vpop.f32.mrf.mxu0
      %v591 = vadd.f32 0.0, %v590
      %592 = vmatmul.bf16.gmra.mxu0 %v452
      %v593 = vpop.f32.mrf.mxu0
      %v594 = vadd.f32 0.0, %v593
      %v595 = vpop.f32.mrf.mxu0
      %v596 = vadd.f32 0.0, %v595
      %597 = vmatmul.bf16.gmra.mxu0 %v453
      %v598 = vpop.f32.mrf.mxu0
      %v599 = vadd.f32 0.0, %v598
      %v600 = vpop.f32.mrf.mxu0
      %v601 = vadd.f32 0.0, %v600
      %602 = vmatmul.bf16.gmra.mxu0 %v454
      %v603 = vpop.f32.mrf.mxu0
      %v604 = vadd.f32 0.0, %v603
      %v605 = vpop.f32.mrf.mxu0
      %v606 = vadd.f32 0.0, %v605
      %607 = vdwg.mxu0
      %v608 = vadd.f32 %v327, %v529
      %v609 = vadd.f32 %v328, %v531
      %v610 = vadd.f32 %v329, %v534
      %v611 = vadd.f32 %v330, %v536
      %v612 = vadd.f32 %v331, %v539
      %v613 = vadd.f32 %v332, %v541
      %v614 = vadd.f32 %v333, %v544
      %v615 = vadd.f32 %v334, %v546
      %v616 = vadd.f32 %v335, %v549
      %v617 = vadd.f32 %v336, %v551
      %v618 = vadd.f32 %v337, %v554
      %v619 = vadd.f32 %v338, %v556
      %v620 = vadd.f32 %v339, %v559
      %v621 = vadd.f32 %v340, %v561
      %v622 = vadd.f32 %v341, %v564
      %v623 = vadd.f32 %v342, %v566
      %v624 = vadd.f32 %v343, %v569
      %v625 = vadd.f32 %v344, %v571
      %v626 = vadd.f32 %v345, %v574
      %v627 = vadd.f32 %v346, %v576
      %v628 = vadd.f32 %v347, %v579
      %v629 = vadd.f32 %v348, %v581
      %v630 = vadd.f32 %v349, %v584
      %v631 = vadd.f32 %v350, %v586
      %v632 = vadd.f32 %v351, %v589
      %v633 = vadd.f32 %v352, %v591
      %v634 = vadd.f32 %v353, %v594
      %v635 = vadd.f32 %v354, %v596
      %v636 = vadd.f32 %v355, %v599
      %v637 = vadd.f32 %v356, %v601
      %v638 = vadd.f32 %v357, %v604
      %v639 = vadd.f32 %v358, %v606
      %640 = vst [vmem:[#allocation2] sm:$0xff] %v608
      %641 = vst [vmem:[#allocation2 + $0x8] sm:$0xff] %v609
      %642 = vst [vmem:[#allocation2 + $0x10] sm:$0xff] %v610
      %643 = vst [vmem:[#allocation2 + $0x18] sm:$0xff] %v611
      %644 = vst [vmem:[#allocation2 + $0x20] sm:$0xff] %v612
      %645 = vst [vmem:[#allocation2 + $0x28] sm:$0xff] %v613
      %646 = vst [vmem:[#allocation2 + $0x30] sm:$0xff] %v614
      %647 = vst [vmem:[#allocation2 + $0x38] sm:$0xff] %v615
      %648 = vst [vmem:[#allocation2 + $0x40] sm:$0xff] %v616
      %649 = vst [vmem:[#allocation2 + $0x48] sm:$0xff] %v617
      %650 = vst [vmem:[#allocation2 + $0x50] sm:$0xff] %v618
      %651 = vst [vmem:[#allocation2 + $0x58] sm:$0xff] %v619
      %652 = vst [vmem:[#allocation2 + $0x60] sm:$0xff] %v620
      %653 = vst [vmem:[#allocation2 + $0x68] sm:$0xff] %v621
      %654 = vst [vmem:[#allocation2 + $0x70] sm:$0xff] %v622
      %655 = vst [vmem:[#allocation2 + $0x78] sm:$0xff] %v623
      %656 = vst [vmem:[#allocation2 + $0x80] sm:$0xff] %v624
      %657 = vst [vmem:[#allocation2 + $0x88] sm:$0xff] %v625
      %658 = vst [vmem:[#allocation2 + $0x90] sm:$0xff] %v626
      %659 = vst [vmem:[#allocation2 + $0x98] sm:$0xff] %v627
      %660 = vst [vmem:[#allocation2 + $0xa0] sm:$0xff] %v628
      %661 = vst [vmem:[#allocation2 + $0xa8] sm:$0xff] %v629
      %662 = vst [vmem:[#allocation2 + $0xb0] sm:$0xff] %v630
      %663 = vst [vmem:[#allocation2 + $0xb8] sm:$0xff] %v631
      %664 = vst [vmem:[#allocation2 + $0xc0] sm:$0xff] %v632
      %665 = vst [vmem:[#allocation2 + $0xc8] sm:$0xff] %v633
      %666 = vst [vmem:[#allocation2 + $0xd0] sm:$0xff] %v634
      %667 = vst [vmem:[#allocation2 + $0xd8] sm:$0xff] %v635
      %668 = vst [vmem:[#allocation2 + $0xe0] sm:$0xff] %v636
      %669 = vst [vmem:[#allocation2 + $0xe8] sm:$0xff] %v637
      %670 = vst [vmem:[#allocation2 + $0xf0] sm:$0xff] %v638
      %671 = vst [vmem:[#allocation2 + $0xf8] sm:$0xff] %v639
      // Predicated region
      $region37: #{resnet_forward.43} parent=31 // pred_check
        %p672 = pneg %p259
      $region38: #{resnet_forward.43} parent=31 // pred_check_branch
        %674 = sbr.rel (%p672) target = $region40
      $region39: #{resnet_forward.43} parent=31 // pred_region
        %v675 = vld [vmem:[#allocation2] sm:$0xff]
        %v676 = vld [vmem:[#allocation2 + $0x8] sm:$0xff]
        %v677 = vld [vmem:[#allocation2 + $0x10] sm:$0xff]
        %v678 = vld [vmem:[#allocation2 + $0x18] sm:$0xff]
        %v679 = vld [vmem:[#allocation2 + $0x20] sm:$0xff]
        %v680 = vld [vmem:[#allocation2 + $0x28] sm:$0xff]
        %v681 = vld [vmem:[#allocation2 + $0x30] sm:$0xff]
        %v682 = vld [vmem:[#allocation2 + $0x38] sm:$0xff]
        %v683 = vld [vmem:[#allocation2 + $0x40] sm:$0xff]
        %v684 = vld [vmem:[#allocation2 + $0x48] sm:$0xff]
        %v685 = vld [vmem:[#allocation2 + $0x50] sm:$0xff]
        %v686 = vld [vmem:[#allocation2 + $0x58] sm:$0xff]
        %v687 = vld [vmem:[#allocation2 + $0x60] sm:$0xff]
        %v688 = vld [vmem:[#allocation2 + $0x68] sm:$0xff]
        %v689 = vld [vmem:[#allocation2 + $0x70] sm:$0xff]
        %v690 = vld [vmem:[#allocation2 + $0x78] sm:$0xff]
        %v691 = vld [vmem:[#allocation2 + $0x80] sm:$0xff]
        %v692 = vld [vmem:[#allocation2 + $0x88] sm:$0xff]
        %v693 = vld [vmem:[#allocation2 + $0x90] sm:$0xff]
        %v694 = vld [vmem:[#allocation2 + $0x98] sm:$0xff]
        %v695 = vld [vmem:[#allocation2 + $0xa0] sm:$0xff]
        %v696 = vld [vmem:[#allocation2 + $0xa8] sm:$0xff]
        %v697 = vld [vmem:[#allocation2 + $0xb0] sm:$0xff]
        %v698 = vld [vmem:[#allocation2 + $0xb8] sm:$0xff]
        %v699 = vld [vmem:[#allocation2 + $0xc0] sm:$0xff]
        %v700 = vld [vmem:[#allocation2 + $0xc8] sm:$0xff]
        %v701 = vld [vmem:[#allocation2 + $0xd0] sm:$0xff]
        %v702 = vld [vmem:[#allocation2 + $0xd8] sm:$0xff]
        %v703 = vld [vmem:[#allocation2 + $0xe0] sm:$0xff]
        %v704 = vld [vmem:[#allocation2 + $0xe8] sm:$0xff]
        %v705 = vld [vmem:[#allocation2 + $0xf0] sm:$0xff]
        %v706 = vld [vmem:[#allocation2 + $0xf8] sm:$0xff]
        %v707 = vld [vmem:[%s249] sm:$0x1]
        %v709 = vperm.slane %v707, 0
        %v711 = vadd.f32 %v675, %v709
        %v712 = vadd.f32 %v676, %v709
        %v713 = vadd.f32 %v677, %v709
        %v714 = vadd.f32 %v678, %v709
        %v715 = vadd.f32 %v679, %v709
        %v716 = vadd.f32 %v680, %v709
        %v717 = vadd.f32 %v681, %v709
        %v718 = vadd.f32 %v682, %v709
        %v719 = vadd.f32 %v683, %v709
        %v720 = vadd.f32 %v684, %v709
        %v721 = vadd.f32 %v685, %v709
        %v722 = vadd.f32 %v686, %v709
        %v723 = vadd.f32 %v687, %v709
        %v724 = vadd.f32 %v688, %v709
        %v725 = vadd.f32 %v689, %v709
        %v726 = vadd.f32 %v690, %v709
        %v727 = vadd.f32 %v691, %v709
        %v728 = vadd.f32 %v692, %v709
        %v729 = vadd.f32 %v693, %v709
        %v730 = vadd.f32 %v694, %v709
        %v731 = vadd.f32 %v695, %v709
        %v732 = vadd.f32 %v696, %v709
        %v733 = vadd.f32 %v697, %v709
        %v734 = vadd.f32 %v698, %v709
        %v735 = vadd.f32 %v699, %v709
        %v736 = vadd.f32 %v700, %v709
        %v737 = vadd.f32 %v701, %v709
        %v738 = vadd.f32 %v702, %v709
        %v739 = vadd.f32 %v703, %v709
        %v740 = vadd.f32 %v704, %v709
        %v741 = vadd.f32 %v705, %v709
        %v742 = vadd.f32 %v706, %v709
        %743 = vst [vmem:[%s257] sm:$0xff] %v711
        %744 = vst [vmem:[%s257 + $0x8] sm:$0xff] %v712
        %745 = vst [vmem:[%s257 + $0x10] sm:$0xff] %v713
        %746 = vst [vmem:[%s257 + $0x18] sm:$0xff] %v714
        %747 = vst [vmem:[%s257 + $0x20] sm:$0xff] %v715
        %748 = vst [vmem:[%s257 + $0x28] sm:$0xff] %v716
        %749 = vst [vmem:[%s257 + $0x30] sm:$0xff] %v717
        %750 = vst [vmem:[%s257 + $0x38] sm:$0xff] %v718
        %751 = vst [vmem:[%s257 + $0x40] sm:$0xff] %v719
        %752 = vst [vmem:[%s257 + $0x48] sm:$0xff] %v720
        %753 = vst [vmem:[%s257 + $0x50] sm:$0xff] %v721
        %754 = vst [vmem:[%s257 + $0x58] sm:$0xff] %v722
        %755 = vst [vmem:[%s257 + $0x60] sm:$0xff] %v723
        %756 = vst [vmem:[%s257 + $0x68] sm:$0xff] %v724
        %757 = vst [vmem:[%s257 + $0x70] sm:$0xff] %v725
        %758 = vst [vmem:[%s257 + $0x78] sm:$0xff] %v726
        %759 = vst [vmem:[%s257 + $0x80] sm:$0xff] %v727
        %760 = vst [vmem:[%s257 + $0x88] sm:$0xff] %v728
        %761 = vst [vmem:[%s257 + $0x90] sm:$0xff] %v729
        %762 = vst [vmem:[%s257 + $0x98] sm:$0xff] %v730
        %763 = vst [vmem:[%s257 + $0xa0] sm:$0xff] %v731
        %764 = vst [vmem:[%s257 + $0xa8] sm:$0xff] %v732
        %765 = vst [vmem:[%s257 + $0xb0] sm:$0xff] %v733
        %766 = vst [vmem:[%s257 + $0xb8] sm:$0xff] %v734
        %767 = vst [vmem:[%s257 + $0xc0] sm:$0xff] %v735
        %768 = vst [vmem:[%s257 + $0xc8] sm:$0xff] %v736
        %769 = vst [vmem:[%s257 + $0xd0] sm:$0xff] %v737
        %770 = vst [vmem:[%s257 + $0xd8] sm:$0xff] %v738
        %771 = vst [vmem:[%s257 + $0xe0] sm:$0xff] %v739
        %772 = vst [vmem:[%s257 + $0xe8] sm:$0xff] %v740
        %773 = vst [vmem:[%s257 + $0xf0] sm:$0xff] %v741
        %774 = vst [vmem:[%s257 + $0xf8] sm:$0xff] %v742
      $region40: #{resnet_forward.43} parent=31 // pred_fallthru
        _
      %s775 = smul.u32 32, %s19
      %p776 = scmp.lt.s32.totalorder %s775, 63
      %s777 = scalar_select %p776, %s775, 63
      %p778 = scmp.lt.s32.totalorder %s20, 0
      %s779 = scalar_select %p778, %s20, 0
      %s780 = sadd.s32 %s779, %s777
      %s781 = smul.addr %s780, 8
      %s782 = scalar_lea.vmem %s3, %s781
      // Predicated region
      $region41: #{resnet_forward.43} parent=31 // pred_check
        %p783 = pneg %p135
      $region42: #{resnet_forward.43} parent=31 // pred_check_branch
        %785 = sbr.rel (%p783) target = $region44
      $region43: #{resnet_forward.43} parent=31 // pred_region
        %s786 = smul.u32 32, %s19
      $region44: #{resnet_forward.43} parent=31 // pred_fallthru
        _
    $region32: #{resnet_forward.43} parent=5 // pred_fallthru
      _
    %p787 = scmp.le.s32.totalorder 2, %s9
    // Predicated region
    $region45: #{resnet_forward.43} parent=5 // pred_check
      %p788 = pneg %p787
    $region46: #{resnet_forward.43} parent=5 // pred_check_branch
      %790 = sbr.rel (%p788) target = $region48
    $region47: #{resnet_forward.43} parent=5 // pred_region
      %s791 = ssub.s32 %s9, 2
      // Predicated region
      $region49: #{resnet_forward.43} parent=47 // pred_check
        %p792 = pneg %p141
      $region50: #{resnet_forward.43} parent=47 // pred_check_branch
        %794 = sbr.rel (%p792) target = $region52
      $region51: #{resnet_forward.43} parent=47 // pred_region
        %s795 = smul.u32 32, %s22
        %p796 = scmp.lt.s32.totalorder %s795, 63
        %s797 = scalar_select %p796, %s795, 63
        %p798 = scmp.lt.s32.totalorder %s23, 0
        %s799 = scalar_select %p798, %s23, 0
        %s800 = sadd.s32 %s799, %s797
        %s801 = smul.addr %s800, 8
        %s802 = scalar_lea.vmem %s3, %s801
      $region52: #{resnet_forward.43} parent=47 // pred_fallthru
        _
    $region48: #{resnet_forward.43} parent=5 // pred_fallthru
      _
  $region6: #{resnet_forward.43} parent=0 // loop_footer
    %s13 = sadd.s32 1, %s9
  $region7: #{resnet_forward.43} parent=0 // loop_footer_branch
    %8 = sbr.rel target = $region3
  $region8: #{resnet_forward.43} parent=0 // loop_exit
    _

// kernel: tile.163
$region0: #{tile.163}
  #allocation0 [shape = 's32[1]{0}', space=sflag, size = 0x4, scoped, tag = 'scoped memory for tile.163']
  %s0 = inlined_call_operand.vmem [shape: f32[4], index: 0, kind: input, shape index: {}]
  %s1 = inlined_call_operand.vmem [shape: f32[9,4], index: 1, kind: output, shape index: {}]
  // Predicated region
  $region2: #{tile.163} parent=0 // pred_check
    _
  $region3: #{tile.163} parent=0 // pred_check_branch
    %3 = sbr.rel (0) target = $region5
  $region4: #{tile.163} parent=0 // pred_region
    _
  $region5: #{tile.163} parent=0 // pred_fallthru
    _
  %v4 = vld [vmem:[%s0] ss:$0 sm:$0xff]
  %5 = vst [vmem:[%s1] sm:$0xff] %v4
  %s6 = scalar_lea.vmem %s1, 8
  %7 = vst [vmem:[%s6] sm:$0xff] %v4

// kernel: tile.168
$region0: #{tile.168}
  %s0 = inlined_call_operand.vmem [shape: f32[9,4], index: 0, kind: input, shape index: {}]
  %s1 = inlined_call_operand.vmem [shape: f32[1,36], index: 1, kind: output, shape index: {}]
  $region1: #{tile.168} parent=0
    #allocation0 [shape = 'u8[4096]{0}', space=vmem, size = 0x1000, scoped, tag = 'scoped mem for output reshape']
    %v2 = vld [vmem:[%s0] sm:$0x1]
    %vm3 = vcmask 31744
    %4 = vst.msk [vmem:[#allocation0] sm:$0x1] %vm3, %v2
    %s5 = scalar_lea.vmem %s0, 8
    %v6 = vld [vmem:[%s5] sm:$0x1]
    %7 = vrot.lane.b32.xlu0 %v6, 32
    %v8 = vpop.permute.xlu0 %7
    %vm9 = vcmask 294144
    %10 = vst.msk [vmem:[#allocation0] sm:$0x1] %vm9, %v8
    %s11 = scalar_lea.vmem %s0, 7
    %v12 = vld [vmem:[%s11] sm:$0x1]
    %13 = vrot.lane.b32.xlu0 %v12, 28
    %v14 = vpop.permute.xlu0 %13
    %vm15 = vcmask 261344
    %16 = vst.msk [vmem:[#allocation0] sm:$0x1] %vm15, %v14
    %s17 = scalar_lea.vmem %s0, 6
    %v18 = vld [vmem:[%s17] sm:$0x1]
    %19 = vrot.lane.b32.xlu0 %v18, 24
    %v20 = vpop.permute.xlu0 %19
    %vm21 = vcmask 228544
    %22 = vst.msk [vmem:[#allocation0] sm:$0x1] %vm21, %v20
    %s23 = scalar_lea.vmem %s0, 5
    %v24 = vld [vmem:[%s23] sm:$0x1]
    %25 = vrot.lane.b32.xlu0 %v24, 20
    %v26 = vpop.permute.xlu0 %25
    %vm27 = vcmask 195744
    %28 = vst.msk [vmem:[#allocation0] sm:$0x1] %vm27, %v26
    %s29 = scalar_lea.vmem %s0, 4
    %v30 = vld [vmem:[%s29] sm:$0x1]
    %31 = vrot.lane.b32.xlu0 %v30, 16
    %v32 = vpop.permute.xlu0 %31
    %vm33 = vcmask 162944
    %34 = vst.msk [vmem:[#allocation0] sm:$0x1] %vm33, %v32
    %s35 = scalar_lea.vmem %s0, 3
    %v36 = vld [vmem:[%s35] sm:$0x1]
    %37 = vrot.lane.b32.xlu0 %v36, 12
    %v38 = vpop.permute.xlu0 %37
    %vm39 = vcmask 130144
    %40 = vst.msk [vmem:[#allocation0] sm:$0x1] %vm39, %v38
    %s41 = scalar_lea.vmem %s0, 2
    %v42 = vld [vmem:[%s41] sm:$0x1]
    %43 = vrot.lane.b32.xlu0 %v42, 8
    %v44 = vpop.permute.xlu0 %43
    %vm45 = vcmask 97344
    %46 = vst.msk [vmem:[#allocation0] sm:$0x1] %vm45, %v44
    %s47 = scalar_lea.vmem %s0, 1
    %v48 = vld [vmem:[%s47] sm:$0x1]
    %49 = vrot.lane.b32.xlu0 %v48, 4
    %v50 = vpop.permute.xlu0 %49
    %vm51 = vcmask 64544
    %52 = vst.msk [vmem:[#allocation0] sm:$0x1] %vm51, %v50
    %s54 = ssub.s32 2, 1
    %v55 = vld [vmem:[#allocation0] sm:%s54]
    %s57 = ssub.s32 2, 1
    %58 = vst [vmem:[%s1] sm:%s57] %v55

// kernel: resnet_forward.45
$region0: #{resnet_forward.45}
  #allocation0 [shape = 'u32[]', space=smem, size = 0x4, offset = 0x4, fixed_abs, tag = 'smem constant byte address 0x4 - core index']
  #allocation1 [shape = 'u32[72,128]{1,0:T(1,128)}', space=vmem, size = 0x9000, scoped, tag = 'internal scratch']
  %s0 = inlined_call_operand.vmem [shape: f32[128,4], index: 0, kind: input, shape index: {}]
  %s1 = inlined_call_operand.vmem [shape: f32[128,4], index: 1, kind: input, shape index: {}]
  %s2 = inlined_call_operand.vmem [shape: f32[128,4], index: 2, kind: input, shape index: {}]
  %s3 = inlined_call_operand.vmem [shape: f32[128,4], index: 3, kind: input, shape index: {}]
  %s4 = inlined_call_operand.vmem [shape: f32[1,4], index: 4, kind: input, shape index: {}]
  %s5 = inlined_call_operand.vmem [shape: f32[1,4], index: 5, kind: input, shape index: {}]
  %s6 = inlined_call_operand.vmem [shape: f32[128,4], index: 6, kind: output, shape index: {}]
  %s7 = sld [smem:[#allocation0]]
  $region34: #{resnet_forward.45} parent=0
    _
  %s9 = ssub.s32 1, %s7
  %s10 = scalar_select 0, %s9, %s7
  // Predicated region
  $region2: #{resnet_forward.45} parent=0 // pred_check
    _
  $region3: #{resnet_forward.45} parent=0 // pred_check_branch
    %12 = sbr.rel (0) target = $region5
  $region4: #{resnet_forward.45} parent=0 // pred_region
    _
  $region5: #{resnet_forward.45} parent=0 // pred_fallthru
    _
  // Predicated region
  $region6: #{resnet_forward.45} parent=0 // pred_check
    _
  $region7: #{resnet_forward.45} parent=0 // pred_check_branch
    %14 = sbr.rel (0) target = $region9
  $region8: #{resnet_forward.45} parent=0 // pred_region
    _
  $region9: #{resnet_forward.45} parent=0 // pred_fallthru
    _
  // Predicated region
  $region10: #{resnet_forward.45} parent=0 // pred_check
    _
  $region11: #{resnet_forward.45} parent=0 // pred_check_branch
    %16 = sbr.rel (0) target = $region13
  $region12: #{resnet_forward.45} parent=0 // pred_region
    _
  $region13: #{resnet_forward.45} parent=0 // pred_fallthru
    _
  // Predicated region
  $region14: #{resnet_forward.45} parent=0 // pred_check
    _
  $region15: #{resnet_forward.45} parent=0 // pred_check_branch
    %18 = sbr.rel (0) target = $region17
  $region16: #{resnet_forward.45} parent=0 // pred_region
    _
  $region17: #{resnet_forward.45} parent=0 // pred_fallthru
    _
  // Predicated region
  $region18: #{resnet_forward.45} parent=0 // pred_check
    _
  $region19: #{resnet_forward.45} parent=0 // pred_check_branch
    %20 = sbr.rel (0) target = $region21
  $region20: #{resnet_forward.45} parent=0 // pred_region
    _
  $region21: #{resnet_forward.45} parent=0 // pred_fallthru
    _
  // Predicated region
  $region22: #{resnet_forward.45} parent=0 // pred_check
    _
  $region23: #{resnet_forward.45} parent=0 // pred_check_branch
    %22 = sbr.rel (0) target = $region25
  $region24: #{resnet_forward.45} parent=0 // pred_region
    _
  $region25: #{resnet_forward.45} parent=0 // pred_fallthru
    _
  %v23 = vld [vmem:[%s4] sm:$0x1]
  %v24 = vld [vmem:[%s5] sm:$0x1]
  %v25 = vld [vmem:[%s0] sm:$0xff]
  %v26 = vld [vmem:[%s0 + $0x8] sm:$0xff]
  %v27 = vld [vmem:[%s0 + $0x10] sm:$0xff]
  %v28 = vld [vmem:[%s0 + $0x18] sm:$0xff]
  %v29 = vld [vmem:[%s0 + $0x20] sm:$0xff]
  %v30 = vld [vmem:[%s0 + $0x28] sm:$0xff]
  %v31 = vld [vmem:[%s0 + $0x30] sm:$0xff]
  %v32 = vld [vmem:[%s0 + $0x38] sm:$0xff]
  %v33 = vld [vmem:[%s0 + $0x40] sm:$0xff]
  %v34 = vld [vmem:[%s0 + $0x48] sm:$0xff]
  %v35 = vld [vmem:[%s0 + $0x50] sm:$0xff]
  %v36 = vld [vmem:[%s0 + $0x58] sm:$0xff]
  %v37 = vld [vmem:[%s0 + $0x60] sm:$0xff]
  %v38 = vld [vmem:[%s0 + $0x68] sm:$0xff]
  %v39 = vld [vmem:[%s0 + $0x70] sm:$0xff]
  %v40 = vld [vmem:[%s0 + $0x78] sm:$0xff]
  %v42 = vperm.slane %v23, 0
  %v44 = vmul.f32 %v25, %v42
  %v45 = vmul.f32 %v26, %v42
  %v46 = vmul.f32 %v27, %v42
  %v47 = vmul.f32 %v28, %v42
  %v48 = vmul.f32 %v29, %v42
  %v49 = vmul.f32 %v30, %v42
  %v50 = vmul.f32 %v31, %v42
  %v51 = vmul.f32 %v32, %v42
  %v52 = vmul.f32 %v33, %v42
  %v53 = vmul.f32 %v34, %v42
  %v54 = vmul.f32 %v35, %v42
  %v55 = vmul.f32 %v36, %v42
  %v56 = vmul.f32 %v37, %v42
  %v57 = vmul.f32 %v38, %v42
  %v58 = vmul.f32 %v39, %v42
  %v59 = vmul.f32 %v40, %v42
  %v61 = vperm.slane %v24, 0
  %v63 = vadd.f32 %v44, %v61
  %v64 = vadd.f32 %v45, %v61
  %v65 = vadd.f32 %v46, %v61
  %v66 = vadd.f32 %v47, %v61
  %v67 = vadd.f32 %v48, %v61
  %v68 = vadd.f32 %v49, %v61
  %v69 = vadd.f32 %v50, %v61
  %v70 = vadd.f32 %v51, %v61
  %v71 = vadd.f32 %v52, %v61
  %v72 = vadd.f32 %v53, %v61
  %v73 = vadd.f32 %v54, %v61
  %v74 = vadd.f32 %v55, %v61
  %v75 = vadd.f32 %v56, %v61
  %v76 = vadd.f32 %v57, %v61
  %v77 = vadd.f32 %v58, %v61
  %v78 = vadd.f32 %v59, %v61
  %v79 = vld [vmem:[%s1] sm:$0xff]
  %v80 = vld [vmem:[%s1 + $0x8] sm:$0xff]
  %v81 = vld [vmem:[%s1 + $0x10] sm:$0xff]
  %v82 = vld [vmem:[%s1 + $0x18] sm:$0xff]
  %v83 = vld [vmem:[%s1 + $0x20] sm:$0xff]
  %v84 = vld [vmem:[%s1 + $0x28] sm:$0xff]
  %v85 = vld [vmem:[%s1 + $0x30] sm:$0xff]
  %v86 = vld [vmem:[%s1 + $0x38] sm:$0xff]
  %v87 = vld [vmem:[%s1 + $0x40] sm:$0xff]
  %v88 = vld [vmem:[%s1 + $0x48] sm:$0xff]
  %v89 = vld [vmem:[%s1 + $0x50] sm:$0xff]
  %v90 = vld [vmem:[%s1 + $0x58] sm:$0xff]
  %v91 = vld [vmem:[%s1 + $0x60] sm:$0xff]
  %v92 = vld [vmem:[%s1 + $0x68] sm:$0xff]
  %v93 = vld [vmem:[%s1 + $0x70] sm:$0xff]
  %v94 = vld [vmem:[%s1 + $0x78] sm:$0xff]
  %v95 = vmul.f32 %v79, %v42
  %v96 = vmul.f32 %v80, %v42
  %v97 = vmul.f32 %v81, %v42
  %v98 = vmul.f32 %v82, %v42
  %v99 = vmul.f32 %v83, %v42
  %v100 = vmul.f32 %v84, %v42
  %v101 = vmul.f32 %v85, %v42
  %v102 = vmul.f32 %v86, %v42
  %v103 = vmul.f32 %v87, %v42
  %v104 = vmul.f32 %v88, %v42
  %v105 = vmul.f32 %v89, %v42
  %v106 = vmul.f32 %v90, %v42
  %v107 = vmul.f32 %v91, %v42
  %v108 = vmul.f32 %v92, %v42
  %v109 = vmul.f32 %v93, %v42
  %v110 = vmul.f32 %v94, %v42
  %v111 = vadd.f32 %v95, %v61
  %v112 = vadd.f32 %v96, %v61
  %v113 = vadd.f32 %v97, %v61
  %v114 = vadd.f32 %v98, %v61
  %v115 = vadd.f32 %v99, %v61
  %v116 = vadd.f32 %v100, %v61
  %v117 = vadd.f32 %v101, %v61
  %v118 = vadd.f32 %v102, %v61
  %v119 = vadd.f32 %v103, %v61
  %v120 = vadd.f32 %v104, %v61
  %v121 = vadd.f32 %v105, %v61
  %v122 = vadd.f32 %v106, %v61
  %v123 = vadd.f32 %v107, %v61
  %v124 = vadd.f32 %v108, %v61
  %v125 = vadd.f32 %v109, %v61
  %v126 = vadd.f32 %v110, %v61
  %v127 = vmax.f32 %v63, %v111
  %v128 = vmax.f32 %v64, %v112
  %v129 = vmax.f32 %v65, %v113
  %v130 = vmax.f32 %v66, %v114
  %v131 = vmax.f32 %v67, %v115
  %v132 = vmax.f32 %v68, %v116
  %v133 = vmax.f32 %v69, %v117
  %v134 = vmax.f32 %v70, %v118
  %v135 = vmax.f32 %v71, %v119
  %v136 = vmax.f32 %v72, %v120
  %v137 = vmax.f32 %v73, %v121
  %v138 = vmax.f32 %v74, %v122
  %v139 = vmax.f32 %v75, %v123
  %v140 = vmax.f32 %v76, %v124
  %v141 = vmax.f32 %v77, %v125
  %v142 = vmax.f32 %v78, %v126
  %v143 = vld [vmem:[%s2] sm:$0xff]
  %v144 = vld [vmem:[%s2 + $0x8] sm:$0xff]
  %v145 = vld [vmem:[%s2 + $0x10] sm:$0xff]
  %v146 = vld [vmem:[%s2 + $0x18] sm:$0xff]
  %v147 = vld [vmem:[%s2 + $0x20] sm:$0xff]
  %v148 = vld [vmem:[%s2 + $0x28] sm:$0xff]
  %v149 = vld [vmem:[%s2 + $0x30] sm:$0xff]
  %v150 = vld [vmem:[%s2 + $0x38] sm:$0xff]
  %v151 = vld [vmem:[%s2 + $0x40] sm:$0xff]
  %v152 = vld [vmem:[%s2 + $0x48] sm:$0xff]
  %v153 = vld [vmem:[%s2 + $0x50] sm:$0xff]
  %v154 = vld [vmem:[%s2 + $0x58] sm:$0xff]
  %v155 = vld [vmem:[%s2 + $0x60] sm:$0xff]
  %v156 = vld [vmem:[%s2 + $0x68] sm:$0xff]
  %v157 = vld [vmem:[%s2 + $0x70] sm:$0xff]
  %v158 = vld [vmem:[%s2 + $0x78] sm:$0xff]
  %v159 = vmul.f32 %v143, %v42
  %v160 = vmul.f32 %v144, %v42
  %v161 = vmul.f32 %v145, %v42
  %v162 = vmul.f32 %v146, %v42
  %v163 = vmul.f32 %v147, %v42
  %v164 = vmul.f32 %v148, %v42
  %v165 = vmul.f32 %v149, %v42
  %v166 = vmul.f32 %v150, %v42
  %v167 = vmul.f32 %v151, %v42
  %v168 = vmul.f32 %v152, %v42
  %v169 = vmul.f32 %v153, %v42
  %v170 = vmul.f32 %v154, %v42
  %v171 = vmul.f32 %v155, %v42
  %v172 = vmul.f32 %v156, %v42
  %v173 = vmul.f32 %v157, %v42
  %v174 = vmul.f32 %v158, %v42
  %v175 = vadd.f32 %v159, %v61
  %v176 = vadd.f32 %v160, %v61
  %v177 = vadd.f32 %v161, %v61
  %v178 = vadd.f32 %v162, %v61
  %v179 = vadd.f32 %v163, %v61
  %v180 = vadd.f32 %v164, %v61
  %v181 = vadd.f32 %v165, %v61
  %v182 = vadd.f32 %v166, %v61
  %v183 = vadd.f32 %v167, %v61
  %v184 = vadd.f32 %v168, %v61
  %v185 = vadd.f32 %v169, %v61
  %v186 = vadd.f32 %v170, %v61
  %v187 = vadd.f32 %v171, %v61
  %v188 = vadd.f32 %v172, %v61
  %v189 = vadd.f32 %v173, %v61
  %v190 = vadd.f32 %v174, %v61
  %v191 = vld [vmem:[%s3] sm:$0xff]
  %v192 = vld [vmem:[%s3 + $0x8] sm:$0xff]
  %v193 = vld [vmem:[%s3 + $0x10] sm:$0xff]
  %v194 = vld [vmem:[%s3 + $0x18] sm:$0xff]
  %v195 = vld [vmem:[%s3 + $0x20] sm:$0xff]
  %v196 = vld [vmem:[%s3 + $0x28] sm:$0xff]
  %v197 = vld [vmem:[%s3 + $0x30] sm:$0xff]
  %v198 = vld [vmem:[%s3 + $0x38] sm:$0xff]
  %v199 = vld [vmem:[%s3 + $0x40] sm:$0xff]
  %v200 = vld [vmem:[%s3 + $0x48] sm:$0xff]
  %v201 = vld [vmem:[%s3 + $0x50] sm:$0xff]
  %v202 = vld [vmem:[%s3 + $0x58] sm:$0xff]
  %v203 = vld [vmem:[%s3 + $0x60] sm:$0xff]
  %v204 = vld [vmem:[%s3 + $0x68] sm:$0xff]
  %v205 = vld [vmem:[%s3 + $0x70] sm:$0xff]
  %v206 = vld [vmem:[%s3 + $0x78] sm:$0xff]
  %v207 = vmul.f32 %v191, %v42
  %v208 = vmul.f32 %v192, %v42
  %v209 = vmul.f32 %v193, %v42
  %v210 = vmul.f32 %v194, %v42
  %v211 = vmul.f32 %v195, %v42
  %v212 = vmul.f32 %v196, %v42
  %v213 = vmul.f32 %v197, %v42
  %v214 = vmul.f32 %v198, %v42
  %v215 = vmul.f32 %v199, %v42
  %v216 = vmul.f32 %v200, %v42
  %v217 = vmul.f32 %v201, %v42
  %v218 = vmul.f32 %v202, %v42
  %v219 = vmul.f32 %v203, %v42
  %v220 = vmul.f32 %v204, %v42
  %v221 = vmul.f32 %v205, %v42
  %v222 = vmul.f32 %v206, %v42
  %v223 = vadd.f32 %v207, %v61
  %v224 = vadd.f32 %v208, %v61
  %v225 = vadd.f32 %v209, %v61
  %v226 = vadd.f32 %v210, %v61
  %v227 = vadd.f32 %v211, %v61
  %v228 = vadd.f32 %v212, %v61
  %v229 = vadd.f32 %v213, %v61
  %v230 = vadd.f32 %v214, %v61
  %v231 = vadd.f32 %v215, %v61
  %v232 = vadd.f32 %v216, %v61
  %v233 = vadd.f32 %v217, %v61
  %v234 = vadd.f32 %v218, %v61
  %v235 = vadd.f32 %v219, %v61
  %v236 = vadd.f32 %v220, %v61
  %v237 = vadd.f32 %v221, %v61
  %v238 = vadd.f32 %v222, %v61
  %v239 = vmax.f32 %v175, %v223
  %v240 = vmax.f32 %v176, %v224
  %v241 = vmax.f32 %v177, %v225
  %v242 = vmax.f32 %v178, %v226
  %v243 = vmax.f32 %v179, %v227
  %v244 = vmax.f32 %v180, %v228
  %v245 = vmax.f32 %v181, %v229
  %v246 = vmax.f32 %v182, %v230
  %v247 = vmax.f32 %v183, %v231
  %v248 = vmax.f32 %v184, %v232
  %v249 = vmax.f32 %v185, %v233
  %v250 = vmax.f32 %v186, %v234
  %v251 = vmax.f32 %v187, %v235
  %v252 = vmax.f32 %v188, %v236
  %v253 = vmax.f32 %v189, %v237
  %v254 = vmax.f32 %v190, %v238
  %v255 = vmax.f32 %v127, %v239
  %v256 = vmax.f32 %v128, %v240
  %v257 = vmax.f32 %v129, %v241
  %v258 = vmax.f32 %v130, %v242
  %v259 = vmax.f32 %v131, %v243
  %v260 = vmax.f32 %v132, %v244
  %v261 = vmax.f32 %v133, %v245
  %v262 = vmax.f32 %v134, %v246
  %v263 = vmax.f32 %v135, %v247
  %v264 = vmax.f32 %v136, %v248
  %v265 = vmax.f32 %v137, %v249
  %v266 = vmax.f32 %v138, %v250
  %v267 = vmax.f32 %v139, %v251
  %v268 = vmax.f32 %v140, %v252
  %v269 = vmax.f32 %v141, %v253
  %v270 = vmax.f32 %v142, %v254
  %vm271 = vcmask 31744
  %272 = vst.msk [vmem:[%s6] sm:$0xff] %vm271, %v255
  %273 = vst.msk [vmem:[%s6 + $0x8] sm:$0xff] %vm271, %v256
  %274 = vst.msk [vmem:[%s6 + $0x10] sm:$0xff] %vm271, %v257
  %275 = vst.msk [vmem:[%s6 + $0x18] sm:$0xff] %vm271, %v258
  %276 = vst.msk [vmem:[%s6 + $0x20] sm:$0xff] %vm271, %v259
  %277 = vst.msk [vmem:[%s6 + $0x28] sm:$0xff] %vm271, %v260
  %278 = vst.msk [vmem:[%s6 + $0x30] sm:$0xff] %vm271, %v261
  %279 = vst.msk [vmem:[%s6 + $0x38] sm:$0xff] %vm271, %v262
  %280 = vst.msk [vmem:[%s6 + $0x40] sm:$0xff] %vm271, %v263
  %281 = vst.msk [vmem:[%s6 + $0x48] sm:$0xff] %vm271, %v264
  %282 = vst.msk [vmem:[%s6 + $0x50] sm:$0xff] %vm271, %v265
  %283 = vst.msk [vmem:[%s6 + $0x58] sm:$0xff] %vm271, %v266
  %284 = vst.msk [vmem:[%s6 + $0x60] sm:$0xff] %vm271, %v267
  %285 = vst.msk [vmem:[%s6 + $0x68] sm:$0xff] %vm271, %v268
  %286 = vst.msk [vmem:[%s6 + $0x70] sm:$0xff] %vm271, %v269
  %287 = vst.msk [vmem:[%s6 + $0x78] sm:$0xff] %vm271, %v270
  // Predicated region
  $region26: #{resnet_forward.45} parent=0 // pred_check
    _
  $region27: #{resnet_forward.45} parent=0 // pred_check_branch
    %289 = sbr.rel (0) target = $region29
  $region28: #{resnet_forward.45} parent=0 // pred_region
    _
  $region29: #{resnet_forward.45} parent=0 // pred_fallthru
    _
  // Predicated region
  $region30: #{resnet_forward.45} parent=0 // pred_check
    _
  $region31: #{resnet_forward.45} parent=0 // pred_check_branch
    %291 = sbr.rel (0) target = $region33
  $region32: #{resnet_forward.45} parent=0 // pred_region
    _
  $region33: #{resnet_forward.45} parent=0 // pred_fallthru
    _

// kernel: resnet_forward.46
$region0: #{resnet_forward.46}
  #allocation0 [shape = 'u32[]', space=smem, size = 0x4, offset = 0x4, fixed_abs, tag = 'smem constant byte address 0x4 - core index']
  #allocation1 [shape = 'u32[72,128]{1,0:T(1,128)}', space=vmem, size = 0x9000, scoped, tag = 'internal scratch']
  %s0 = inlined_call_operand.vmem [shape: f32[128,4], index: 0, kind: input, shape index: {}]
  %s1 = inlined_call_operand.vmem [shape: f32[1,4], index: 1, kind: output, shape index: {0}]
  %s2 = inlined_call_operand.vmem [shape: f32[1,4], index: 2, kind: output, shape index: {1}]
  %3 = xla_tuple %s1, %s2
  %s4 = sld [smem:[#allocation0]]
  $region26: #{resnet_forward.46} parent=0
    _
  %s6 = ssub.s32 1, %s4
  %s7 = scalar_select 0, %s6, %s4
  // Predicated region
  $region2: #{resnet_forward.46} parent=0 // pred_check
    _
  $region3: #{resnet_forward.46} parent=0 // pred_check_branch
    %9 = sbr.rel (0) target = $region5
  $region4: #{resnet_forward.46} parent=0 // pred_region
    _
  $region5: #{resnet_forward.46} parent=0 // pred_fallthru
    _
  %p10 = scmp.eq.s32.totalorder 0, 0
  // Predicated region
  $region6: #{resnet_forward.46} parent=0 // pred_check
    %p11 = pneg %p10
  $region7: #{resnet_forward.46} parent=0 // pred_check_branch
    %13 = sbr.rel (%p11) target = $region9
  $region8: #{resnet_forward.46} parent=0 // pred_region
    %vm14 = vcmask 24576
    %15 = vst.msk [vmem:[%s1] sm:$0x1] %vm14, 0.0
    %16 = vst.msk [vmem:[%s2] sm:$0x1] %vm14, 0.0
  $region9: #{resnet_forward.46} parent=0 // pred_fallthru
    _
  %v17 = vld [vmem:[%s0] sm:$0xff]
  %v18 = vld [vmem:[%s0 + $0x8] sm:$0xff]
  %v19 = vld [vmem:[%s0 + $0x10] sm:$0xff]
  %v20 = vld [vmem:[%s0 + $0x18] sm:$0xff]
  %v21 = vld [vmem:[%s0 + $0x20] sm:$0xff]
  %v22 = vld [vmem:[%s0 + $0x28] sm:$0xff]
  %v23 = vld [vmem:[%s0 + $0x30] sm:$0xff]
  %v24 = vld [vmem:[%s0 + $0x38] sm:$0xff]
  %v25 = vld [vmem:[%s0 + $0x40] sm:$0xff]
  %v26 = vld [vmem:[%s0 + $0x48] sm:$0xff]
  %v27 = vld [vmem:[%s0 + $0x50] sm:$0xff]
  %v28 = vld [vmem:[%s0 + $0x58] sm:$0xff]
  %v29 = vld [vmem:[%s0 + $0x60] sm:$0xff]
  %v30 = vld [vmem:[%s0 + $0x68] sm:$0xff]
  %v31 = vld [vmem:[%s0 + $0x70] sm:$0xff]
  %v32 = vld [vmem:[%s0 + $0x78] sm:$0xff]
  %v33 = vld [vmem:[%s1] sm:$0x1]
  %vm34 = vcmask 31744
  %v35 = vsel %vm34, %v17, 0.0
  %v36 = vsel %vm34, %v18, 0.0
  %v37 = vadd.f32 %v35, %v36
  %v38 = vsel %vm34, %v19, 0.0
  %v39 = vadd.f32 %v37, %v38
  %v40 = vsel %vm34, %v20, 0.0
  %v41 = vadd.f32 %v39, %v40
  %v42 = vsel %vm34, %v21, 0.0
  %v43 = vadd.f32 %v41, %v42
  %v44 = vsel %vm34, %v22, 0.0
  %v45 = vadd.f32 %v43, %v44
  %v46 = vsel %vm34, %v23, 0.0
  %v47 = vadd.f32 %v45, %v46
  %v48 = vsel %vm34, %v24, 0.0
  %v49 = vadd.f32 %v47, %v48
  %v50 = vsel %vm34, %v25, 0.0
  %v51 = vadd.f32 %v49, %v50
  %v52 = vsel %vm34, %v26, 0.0
  %v53 = vadd.f32 %v51, %v52
  %v54 = vsel %vm34, %v27, 0.0
  %v55 = vadd.f32 %v53, %v54
  %v56 = vsel %vm34, %v28, 0.0
  %v57 = vadd.f32 %v55, %v56
  %v58 = vsel %vm34, %v29, 0.0
  %v59 = vadd.f32 %v57, %v58
  %v60 = vsel %vm34, %v30, 0.0
  %v61 = vadd.f32 %v59, %v60
  %v62 = vsel %vm34, %v31, 0.0
  %v63 = vadd.f32 %v61, %v62
  %v64 = vsel %vm34, %v32, 0.0
  %v65 = vadd.f32 %v63, %v64
  %v66 = vrot.slane %v65, 4
  %v67 = vadd.f32 %v65, %v66
  %v68 = vrot.slane %v67, 2
  %v69 = vadd.f32 %v67, %v68
  %v70 = vrot.slane %v69, 1
  %v71 = vadd.f32 %v69, %v70
  %v72 = vadd.f32 %v33, %v71
  %vm73 = vcmask 24576
  %74 = vst.msk [vmem:[%s1] sm:$0x1] %vm73, %v72
  %v75 = vld [vmem:[%s2] sm:$0x1]
  %v76 = vmul.f32 %v17, %v17
  %v77 = vmul.f32 %v18, %v18
  %v78 = vmul.f32 %v19, %v19
  %v79 = vmul.f32 %v20, %v20
  %v80 = vmul.f32 %v21, %v21
  %v81 = vmul.f32 %v22, %v22
  %v82 = vmul.f32 %v23, %v23
  %v83 = vmul.f32 %v24, %v24
  %v84 = vmul.f32 %v25, %v25
  %v85 = vmul.f32 %v26, %v26
  %v86 = vmul.f32 %v27, %v27
  %v87 = vmul.f32 %v28, %v28
  %v88 = vmul.f32 %v29, %v29
  %v89 = vmul.f32 %v30, %v30
  %v90 = vmul.f32 %v31, %v31
  %v91 = vmul.f32 %v32, %v32
  %v92 = vsel %vm34, %v76, 0.0
  %v93 = vsel %vm34, %v77, 0.0
  %v94 = vadd.f32 %v92, %v93
  %v95 = vsel %vm34, %v78, 0.0
  %v96 = vadd.f32 %v94, %v95
  %v97 = vsel %vm34, %v79, 0.0
  %v98 = vadd.f32 %v96, %v97
  %v99 = vsel %vm34, %v80, 0.0
  %v100 = vadd.f32 %v98, %v99
  %v101 = vsel %vm34, %v81, 0.0
  %v102 = vadd.f32 %v100, %v101
  %v103 = vsel %vm34, %v82, 0.0
  %v104 = vadd.f32 %v102, %v103
  %v105 = vsel %vm34, %v83, 0.0
  %v106 = vadd.f32 %v104, %v105
  %v107 = vsel %vm34, %v84, 0.0
  %v108 = vadd.f32 %v106, %v107
  %v109 = vsel %vm34, %v85, 0.0
  %v110 = vadd.f32 %v108, %v109
  %v111 = vsel %vm34, %v86, 0.0
  %v112 = vadd.f32 %v110, %v111
  %v113 = vsel %vm34, %v87, 0.0
  %v114 = vadd.f32 %v112, %v113
  %v115 = vsel %vm34, %v88, 0.0
  %v116 = vadd.f32 %v114, %v115
  %v117 = vsel %vm34, %v89, 0.0
  %v118 = vadd.f32 %v116, %v117
  %v119 = vsel %vm34, %v90, 0.0
  %v120 = vadd.f32 %v118, %v119
  %v121 = vsel %vm34, %v91, 0.0
  %v122 = vadd.f32 %v120, %v121
  %v123 = vrot.slane %v122, 4
  %v124 = vadd.f32 %v122, %v123
  %v125 = vrot.slane %v124, 2
  %v126 = vadd.f32 %v124, %v125
  %v127 = vrot.slane %v126, 1
  %v128 = vadd.f32 %v126, %v127
  %v129 = vadd.f32 %v75, %v128
  %130 = vst.msk [vmem:[%s2] sm:$0x1] %vm73, %v129
  // Predicated region
  $region10: #{resnet_forward.46} parent=0 // pred_check
    _
  $region11: #{resnet_forward.46} parent=0 // pred_check_branch
    %132 = sbr.rel (0) target = $region13
  $region12: #{resnet_forward.46} parent=0 // pred_region
    _
  $region13: #{resnet_forward.46} parent=0 // pred_fallthru
    _
  // Predicated region
  $region14: #{resnet_forward.46} parent=0 // pred_check
    _
  $region15: #{resnet_forward.46} parent=0 // pred_check_branch
    %134 = sbr.rel (0) target = $region17
  $region16: #{resnet_forward.46} parent=0 // pred_region
    _
  $region17: #{resnet_forward.46} parent=0 // pred_fallthru
    _
  // Predicated region
  $region18: #{resnet_forward.46} parent=0 // pred_check
    _
  $region19: #{resnet_forward.46} parent=0 // pred_check_branch
    %136 = sbr.rel (0) target = $region21
  $region20: #{resnet_forward.46} parent=0 // pred_region
    _
  $region21: #{resnet_forward.46} parent=0 // pred_fallthru
    _
  // Predicated region
  $region22: #{resnet_forward.46} parent=0 // pred_check
    _
  $region23: #{resnet_forward.46} parent=0 // pred_check_branch
    %138 = sbr.rel (0) target = $region25
  $region24: #{resnet_forward.46} parent=0 // pred_region
    _
  $region25: #{resnet_forward.46} parent=0 // pred_fallthru
    _

// kernel: resnet_forward.47
$region0: #{resnet_forward.47}
  #allocation0 [shape = 'u32[]', space=smem, size = 0x4, offset = 0x4, fixed_abs, tag = 'smem constant byte address 0x4 - core index']
  #allocation1 [shape = 'u32[72,128]{1,0:T(1,128)}', space=vmem, size = 0x9000, scoped, tag = 'internal scratch']
  #allocation2 [shape = 'f32[128,128]{1,0:T(8,128)}', space=vmem, size = 0x10000, scoped, tag = 'scratch operand']
  %s0 = inlined_call_operand.vmem [shape: bf16[128,128], index: 0, kind: input, shape index: {}]
  %s1 = inlined_call_operand.vmem [shape: bf16[128,128], index: 1, kind: input, shape index: {}]
  %s2 = inlined_call_operand.vmem [shape: f32[1,128], index: 2, kind: input, shape index: {}]
  %s3 = inlined_call_operand.vmem [shape: f32[1,128], index: 3, kind: input, shape index: {}]
  %s4 = inlined_call_operand.vmem [shape: f32[128,128], index: 4, kind: output, shape index: {}]
  %s5 = sld [smem:[#allocation0]]
  $region34: #{resnet_forward.47} parent=0
    _
  %s7 = ssub.s32 1, %s5
  %s8 = scalar_select 0, %s7, %s5
  // Predicated region
  $region2: #{resnet_forward.47} parent=0 // pred_check
    _
  $region3: #{resnet_forward.47} parent=0 // pred_check_branch
    %10 = sbr.rel (0) target = $region5
  $region4: #{resnet_forward.47} parent=0 // pred_region
    _
  $region5: #{resnet_forward.47} parent=0 // pred_fallthru
    _
  // Predicated region
  $region6: #{resnet_forward.47} parent=0 // pred_check
    _
  $region7: #{resnet_forward.47} parent=0 // pred_check_branch
    %12 = sbr.rel (0) target = $region9
  $region8: #{resnet_forward.47} parent=0 // pred_region
    _
  $region9: #{resnet_forward.47} parent=0 // pred_fallthru
    _
  // Predicated region
  $region10: #{resnet_forward.47} parent=0 // pred_check
    _
  $region11: #{resnet_forward.47} parent=0 // pred_check_branch
    %14 = sbr.rel (0) target = $region13
  $region12: #{resnet_forward.47} parent=0 // pred_region
    _
  $region13: #{resnet_forward.47} parent=0 // pred_fallthru
    _
  // Predicated region
  $region14: #{resnet_forward.47} parent=0 // pred_check
    _
  $region15: #{resnet_forward.47} parent=0 // pred_check_branch
    %16 = sbr.rel (0) target = $region17
  $region16: #{resnet_forward.47} parent=0 // pred_region
    _
  $region17: #{resnet_forward.47} parent=0 // pred_fallthru
    _
  %p17 = scmp.eq.s32.totalorder 0, 0
  // Predicated region
  $region18: #{resnet_forward.47} parent=0 // pred_check
    %p18 = pneg %p17
  $region19: #{resnet_forward.47} parent=0 // pred_check_branch
    %20 = sbr.rel (%p18) target = $region21
  $region20: #{resnet_forward.47} parent=0 // pred_region
    %21 = vst [vmem:[#allocation2] sm:$0xff] 0.0
    %22 = vst [vmem:[#allocation2 + $0x8] sm:$0xff] 0.0
    %23 = vst [vmem:[#allocation2 + $0x10] sm:$0xff] 0.0
    %24 = vst [vmem:[#allocation2 + $0x18] sm:$0xff] 0.0
    %25 = vst [vmem:[#allocation2 + $0x20] sm:$0xff] 0.0
    %26 = vst [vmem:[#allocation2 + $0x28] sm:$0xff] 0.0
    %27 = vst [vmem:[#allocation2 + $0x30] sm:$0xff] 0.0
    %28 = vst [vmem:[#allocation2 + $0x38] sm:$0xff] 0.0
    %29 = vst [vmem:[#allocation2 + $0x40] sm:$0xff] 0.0
    %30 = vst [vmem:[#allocation2 + $0x48] sm:$0xff] 0.0
    %31 = vst [vmem:[#allocation2 + $0x50] sm:$0xff] 0.0
    %32 = vst [vmem:[#allocation2 + $0x58] sm:$0xff] 0.0
    %33 = vst [vmem:[#allocation2 + $0x60] sm:$0xff] 0.0
    %34 = vst [vmem:[#allocation2 + $0x68] sm:$0xff] 0.0
    %35 = vst [vmem:[#allocation2 + $0x70] sm:$0xff] 0.0
    %36 = vst [vmem:[#allocation2 + $0x78] sm:$0xff] 0.0
  $region21: #{resnet_forward.47} parent=0 // pred_fallthru
    _
  %v37 = vld [vmem:[%s0] sm:$0xf]
  %v38 = vld [vmem:[%s0 + $0x4] sm:$0xf]
  %v39 = vld [vmem:[%s0 + $0x8] sm:$0xf]
  %v40 = vld [vmem:[%s0 + $0xc] sm:$0xf]
  %v41 = vld [vmem:[%s0 + $0x10] sm:$0xf]
  %v42 = vld [vmem:[%s0 + $0x14] sm:$0xf]
  %v43 = vld [vmem:[%s0 + $0x18] sm:$0xf]
  %v44 = vld [vmem:[%s0 + $0x1c] sm:$0xf]
  %v45 = vld [vmem:[%s0 + $0x20] sm:$0xf]
  %v46 = vld [vmem:[%s0 + $0x24] sm:$0xf]
  %v47 = vld [vmem:[%s0 + $0x28] sm:$0xf]
  %v48 = vld [vmem:[%s0 + $0x2c] sm:$0xf]
  %v49 = vld [vmem:[%s0 + $0x30] sm:$0xf]
  %v50 = vld [vmem:[%s0 + $0x34] sm:$0xf]
  %v51 = vld [vmem:[%s0 + $0x38] sm:$0xf]
  %v52 = vld [vmem:[%s0 + $0x3c] sm:$0xf]
  %v53 = vunpack.c.l.bf16 %v37
  %v54 = vunpack.c.l.bf16 %v38
  %v55 = vunpack.c.l.bf16 %v39
  %v56 = vunpack.c.l.bf16 %v40
  %v57 = vunpack.c.l.bf16 %v41
  %v58 = vunpack.c.l.bf16 %v42
  %v59 = vunpack.c.l.bf16 %v43
  %v60 = vunpack.c.l.bf16 %v44
  %v61 = vunpack.c.l.bf16 %v45
  %v62 = vunpack.c.l.bf16 %v46
  %v63 = vunpack.c.l.bf16 %v47
  %v64 = vunpack.c.l.bf16 %v48
  %v65 = vunpack.c.l.bf16 %v49
  %v66 = vunpack.c.l.bf16 %v50
  %v67 = vunpack.c.l.bf16 %v51
  %v68 = vunpack.c.l.bf16 %v52
  %v69 = vld [vmem:[%s2] sm:$0x1]
  %v71 = vperm.slane %v69, 0
  %v73 = vmul.f32 %v53, %v71
  %v74 = vmul.f32 %v54, %v71
  %v75 = vmul.f32 %v55, %v71
  %v76 = vmul.f32 %v56, %v71
  %v77 = vmul.f32 %v57, %v71
  %v78 = vmul.f32 %v58, %v71
  %v79 = vmul.f32 %v59, %v71
  %v80 = vmul.f32 %v60, %v71
  %v81 = vmul.f32 %v61, %v71
  %v82 = vmul.f32 %v62, %v71
  %v83 = vmul.f32 %v63, %v71
  %v84 = vmul.f32 %v64, %v71
  %v85 = vmul.f32 %v65, %v71
  %v86 = vmul.f32 %v66, %v71
  %v87 = vmul.f32 %v67, %v71
  %v88 = vmul.f32 %v68, %v71
  %v89 = vld [vmem:[%s3] sm:$0x1]
  %v91 = vperm.slane %v89, 0
  %v93 = vadd.f32 %v73, %v91
  %v94 = vadd.f32 %v74, %v91
  %v95 = vadd.f32 %v75, %v91
  %v96 = vadd.f32 %v76, %v91
  %v97 = vadd.f32 %v77, %v91
  %v98 = vadd.f32 %v78, %v91
  %v99 = vadd.f32 %v79, %v91
  %v100 = vadd.f32 %v80, %v91
  %v101 = vadd.f32 %v81, %v91
  %v102 = vadd.f32 %v82, %v91
  %v103 = vadd.f32 %v83, %v91
  %v104 = vadd.f32 %v84, %v91
  %v105 = vadd.f32 %v85, %v91
  %v106 = vadd.f32 %v86, %v91
  %v107 = vadd.f32 %v87, %v91
  %v108 = vadd.f32 %v88, %v91
  %v109 = vmax.f32 %v93, 0.0
  %v110 = vmax.f32 %v94, 0.0
  %v111 = vmax.f32 %v95, 0.0
  %v112 = vmax.f32 %v96, 0.0
  %v113 = vmax.f32 %v97, 0.0
  %v114 = vmax.f32 %v98, 0.0
  %v115 = vmax.f32 %v99, 0.0
  %v116 = vmax.f32 %v100, 0.0
  %v117 = vmax.f32 %v101, 0.0
  %v118 = vmax.f32 %v102, 0.0
  %v119 = vmax.f32 %v103, 0.0
  %v120 = vmax.f32 %v104, 0.0
  %v121 = vmax.f32 %v105, 0.0
  %v122 = vmax.f32 %v106, 0.0
  %v123 = vmax.f32 %v107, 0.0
  %v124 = vmax.f32 %v108, 0.0
  %v125 = vpack.c.bf16 %v110, %v109
  %v126 = vpack.c.bf16 %v112, %v111
  %v127 = vpack.c.bf16 %v114, %v113
  %v128 = vpack.c.bf16 %v116, %v115
  %v129 = vpack.c.bf16 %v118, %v117
  %v130 = vpack.c.bf16 %v120, %v119
  %v131 = vpack.c.bf16 %v122, %v121
  %v132 = vpack.c.bf16 %v124, %v123
  %v133 = vld [vmem:[#allocation2] sm:$0xff]
  %v134 = vld [vmem:[#allocation2 + $0x8] sm:$0xff]
  %v135 = vld [vmem:[#allocation2 + $0x10] sm:$0xff]
  %v136 = vld [vmem:[#allocation2 + $0x18] sm:$0xff]
  %v137 = vld [vmem:[#allocation2 + $0x20] sm:$0xff]
  %v138 = vld [vmem:[#allocation2 + $0x28] sm:$0xff]
  %v139 = vld [vmem:[#allocation2 + $0x30] sm:$0xff]
  %v140 = vld [vmem:[#allocation2 + $0x38] sm:$0xff]
  %v141 = vld [vmem:[#allocation2 + $0x40] sm:$0xff]
  %v142 = vld [vmem:[#allocation2 + $0x48] sm:$0xff]
  %v143 = vld [vmem:[#allocation2 + $0x50] sm:$0xff]
  %v144 = vld [vmem:[#allocation2 + $0x58] sm:$0xff]
  %v145 = vld [vmem:[#allocation2 + $0x60] sm:$0xff]
  %v146 = vld [vmem:[#allocation2 + $0x68] sm:$0xff]
  %v147 = vld [vmem:[#allocation2 + $0x70] sm:$0xff]
  %v148 = vld [vmem:[#allocation2 + $0x78] sm:$0xff]
  %v149 = vld [vmem:[%s1] sm:$0xf]
  %v150 = vld [vmem:[%s1 + $0x4] sm:$0xf]
  %v151 = vld [vmem:[%s1 + $0x8] sm:$0xf]
  %v152 = vld [vmem:[%s1 + $0xc] sm:$0xf]
  %v153 = vld [vmem:[%s1 + $0x10] sm:$0xf]
  %v154 = vld [vmem:[%s1 + $0x14] sm:$0xf]
  %v155 = vld [vmem:[%s1 + $0x18] sm:$0xf]
  %v156 = vld [vmem:[%s1 + $0x1c] sm:$0xf]
  %v157 = vld [vmem:[%s1 + $0x20] sm:$0xf]
  %v158 = vld [vmem:[%s1 + $0x24] sm:$0xf]
  %v159 = vld [vmem:[%s1 + $0x28] sm:$0xf]
  %v160 = vld [vmem:[%s1 + $0x2c] sm:$0xf]
  %v161 = vld [vmem:[%s1 + $0x30] sm:$0xf]
  %v162 = vld [vmem:[%s1 + $0x34] sm:$0xf]
  %v163 = vld [vmem:[%s1 + $0x38] sm:$0xf]
  %v164 = vld [vmem:[%s1 + $0x3c] sm:$0xf]
  %v181 = vunpack.c.l.b16 %v149
  %v182 = vunpack.c.l.b16 %v150
  %v183 = vunpack.c.l.b16 %v151
  %v184 = vunpack.c.l.b16 %v152
  %v185 = vunpack.c.l.b16 %v153
  %v186 = vunpack.c.l.b16 %v154
  %v187 = vunpack.c.l.b16 %v155
  %v188 = vunpack.c.l.b16 %v156
  %v189 = vunpack.c.l.b16 %v157
  %v190 = vunpack.c.l.b16 %v158
  %v191 = vunpack.c.l.b16 %v159
  %v192 = vunpack.c.l.b16 %v160
  %v193 = vunpack.c.l.b16 %v161
  %v194 = vunpack.c.l.b16 %v162
  %v195 = vunpack.c.l.b16 %v163
  %v196 = vunpack.c.l.b16 %v164
  %v197 = vpack.c.b16 %v182, %v181
  %v198 = vpack.c.b16 %v184, %v183
  %v199 = vpack.c.b16 %v186, %v185
  %v200 = vpack.c.b16 %v188, %v187
  %v201 = vpack.c.b16 %v190, %v189
  %v202 = vpack.c.b16 %v192, %v191
  %v203 = vpack.c.b16 %v194, %v193
  %v204 = vpack.c.b16 %v196, %v195
  %213 = vmatpush.bf16.msra.mxu0 %v204
  %214 = vmatpush.bf16.msra.mxu0 %v203
  %215 = vmatpush.bf16.msra.mxu0 %v202
  %216 = vmatpush.bf16.msra.mxu0 %v201
  %217 = vmatpush.bf16.msra.mxu0 %v200
  %218 = vmatpush.bf16.msra.mxu0 %v199
  %219 = vmatpush.bf16.msra.mxu0 %v198
  %220 = vmatpush.bf16.msra.mxu0 %v197
  %221 = vmatmul.bf16.gmra.mxu0 %v125
  %v222 = vpop.f32.mrf.mxu0
  %v223 = vadd.f32 0.0, %v222
  %v224 = vpop.f32.mrf.mxu0
  %v225 = vadd.f32 0.0, %v224
  %226 = vmatmul.bf16.gmra.mxu0 %v126
  %v227 = vpop.f32.mrf.mxu0
  %v228 = vadd.f32 0.0, %v227
  %v229 = vpop.f32.mrf.mxu0
  %v230 = vadd.f32 0.0, %v229
  %231 = vmatmul.bf16.gmra.mxu0 %v127
  %v232 = vpop.f32.mrf.mxu0
  %v233 = vadd.f32 0.0, %v232
  %v234 = vpop.f32.mrf.mxu0
  %v235 = vadd.f32 0.0, %v234
  %236 = vmatmul.bf16.gmra.mxu0 %v128
  %v237 = vpop.f32.mrf.mxu0
  %v238 = vadd.f32 0.0, %v237
  %v239 = vpop.f32.mrf.mxu0
  %v240 = vadd.f32 0.0, %v239
  %241 = vmatmul.bf16.gmra.mxu0 %v129
  %v242 = vpop.f32.mrf.mxu0
  %v243 = vadd.f32 0.0, %v242
  %v244 = vpop.f32.mrf.mxu0
  %v245 = vadd.f32 0.0, %v244
  %246 = vmatmul.bf16.gmra.mxu0 %v130
  %v247 = vpop.f32.mrf.mxu0
  %v248 = vadd.f32 0.0, %v247
  %v249 = vpop.f32.mrf.mxu0
  %v250 = vadd.f32 0.0, %v249
  %251 = vmatmul.bf16.gmra.mxu0 %v131
  %v252 = vpop.f32.mrf.mxu0
  %v253 = vadd.f32 0.0, %v252
  %v254 = vpop.f32.mrf.mxu0
  %v255 = vadd.f32 0.0, %v254
  %256 = vmatmul.bf16.gmra.mxu0 %v132
  %v257 = vpop.f32.mrf.mxu0
  %v258 = vadd.f32 0.0, %v257
  %v259 = vpop.f32.mrf.mxu0
  %v260 = vadd.f32 0.0, %v259
  %261 = vdwg.mxu0
  %v262 = vadd.f32 %v133, %v223
  %v263 = vadd.f32 %v134, %v225
  %v264 = vadd.f32 %v135, %v228
  %v265 = vadd.f32 %v136, %v230
  %v266 = vadd.f32 %v137, %v233
  %v267 = vadd.f32 %v138, %v235
  %v268 = vadd.f32 %v139, %v238
  %v269 = vadd.f32 %v140, %v240
  %v270 = vadd.f32 %v141, %v243
  %v271 = vadd.f32 %v142, %v245
  %v272 = vadd.f32 %v143, %v248
  %v273 = vadd.f32 %v144, %v250
  %v274 = vadd.f32 %v145, %v253
  %v275 = vadd.f32 %v146, %v255
  %v276 = vadd.f32 %v147, %v258
  %v277 = vadd.f32 %v148, %v260
  %278 = vst [vmem:[#allocation2] sm:$0xff] %v262
  %279 = vst [vmem:[#allocation2 + $0x8] sm:$0xff] %v263
  %280 = vst [vmem:[#allocation2 + $0x10] sm:$0xff] %v264
  %281 = vst [vmem:[#allocation2 + $0x18] sm:$0xff] %v265
  %282 = vst [vmem:[#allocation2 + $0x20] sm:$0xff] %v266
  %283 = vst [vmem:[#allocation2 + $0x28] sm:$0xff] %v267
  %284 = vst [vmem:[#allocation2 + $0x30] sm:$0xff] %v268
  %285 = vst [vmem:[#allocation2 + $0x38] sm:$0xff] %v269
  %286 = vst [vmem:[#allocation2 + $0x40] sm:$0xff] %v270
  %287 = vst [vmem:[#allocation2 + $0x48] sm:$0xff] %v271
  %288 = vst [vmem:[#allocation2 + $0x50] sm:$0xff] %v272
  %289 = vst [vmem:[#allocation2 + $0x58] sm:$0xff] %v273
  %290 = vst [vmem:[#allocation2 + $0x60] sm:$0xff] %v274
  %291 = vst [vmem:[#allocation2 + $0x68] sm:$0xff] %v275
  %292 = vst [vmem:[#allocation2 + $0x70] sm:$0xff] %v276
  %293 = vst [vmem:[#allocation2 + $0x78] sm:$0xff] %v277
  // Predicated region
  $region22: #{resnet_forward.47} parent=0 // pred_check
    %p294 = pneg %p17
  $region23: #{resnet_forward.47} parent=0 // pred_check_branch
    %296 = sbr.rel (%p294) target = $region25
  $region24: #{resnet_forward.47} parent=0 // pred_region
    %v297 = vld [vmem:[#allocation2] sm:$0xff]
    %v298 = vld [vmem:[#allocation2 + $0x8] sm:$0xff]
    %v299 = vld [vmem:[#allocation2 + $0x10] sm:$0xff]
    %v300 = vld [vmem:[#allocation2 + $0x18] sm:$0xff]
    %v301 = vld [vmem:[#allocation2 + $0x20] sm:$0xff]
    %v302 = vld [vmem:[#allocation2 + $0x28] sm:$0xff]
    %v303 = vld [vmem:[#allocation2 + $0x30] sm:$0xff]
    %v304 = vld [vmem:[#allocation2 + $0x38] sm:$0xff]
    %v305 = vld [vmem:[#allocation2 + $0x40] sm:$0xff]
    %v306 = vld [vmem:[#allocation2 + $0x48] sm:$0xff]
    %v307 = vld [vmem:[#allocation2 + $0x50] sm:$0xff]
    %v308 = vld [vmem:[#allocation2 + $0x58] sm:$0xff]
    %v309 = vld [vmem:[#allocation2 + $0x60] sm:$0xff]
    %v310 = vld [vmem:[#allocation2 + $0x68] sm:$0xff]
    %v311 = vld [vmem:[#allocation2 + $0x70] sm:$0xff]
    %v312 = vld [vmem:[#allocation2 + $0x78] sm:$0xff]
    %313 = vst [vmem:[%s4] sm:$0xff] %v297
    %314 = vst [vmem:[%s4 + $0x8] sm:$0xff] %v298
    %315 = vst [vmem:[%s4 + $0x10] sm:$0xff] %v299
    %316 = vst [vmem:[%s4 + $0x18] sm:$0xff] %v300
    %317 = vst [vmem:[%s4 + $0x20] sm:$0xff] %v301
    %318 = vst [vmem:[%s4 + $0x28] sm:$0xff] %v302
    %319 = vst [vmem:[%s4 + $0x30] sm:$0xff] %v303
    %320 = vst [vmem:[%s4 + $0x38] sm:$0xff] %v304
    %321 = vst [vmem:[%s4 + $0x40] sm:$0xff] %v305
    %322 = vst [vmem:[%s4 + $0x48] sm:$0xff] %v306
    %323 = vst [vmem:[%s4 + $0x50] sm:$0xff] %v307
    %324 = vst [vmem:[%s4 + $0x58] sm:$0xff] %v308
    %325 = vst [vmem:[%s4 + $0x60] sm:$0xff] %v309
    %326 = vst [vmem:[%s4 + $0x68] sm:$0xff] %v310
    %327 = vst [vmem:[%s4 + $0x70] sm:$0xff] %v311
    %328 = vst [vmem:[%s4 + $0x78] sm:$0xff] %v312
  $region25: #{resnet_forward.47} parent=0 // pred_fallthru
    _
  // Predicated region
  $region26: #{resnet_forward.47} parent=0 // pred_check
    _
  $region27: #{resnet_forward.47} parent=0 // pred_check_branch
    %330 = sbr.rel (0) target = $region29
  $region28: #{resnet_forward.47} parent=0 // pred_region
    _
  $region29: #{resnet_forward.47} parent=0 // pred_fallthru
    _
  // Predicated region
  $region30: #{resnet_forward.47} parent=0 // pred_check
    _
  $region31: #{resnet_forward.47} parent=0 // pred_check_branch
    %332 = sbr.rel (0) target = $region33
  $region32: #{resnet_forward.47} parent=0 // pred_region
    _
  $region33: #{resnet_forward.47} parent=0 // pred_fallthru
    _

// kernel: resnet_forward.55
$region0: #{resnet_forward.55}
  #allocation0 [shape = 'u32[]', space=smem, size = 0x4, offset = 0x4, fixed_abs, tag = 'smem constant byte address 0x4 - core index']
  #allocation1 [shape = 'u32[72,128]{1,0:T(1,128)}', space=vmem, size = 0x9000, scoped, tag = 'internal scratch']
  %s0 = inlined_call_operand.vmem [shape: f32[128,8], index: 0, kind: input, shape index: {}]
  %s1 = inlined_call_operand.vmem [shape: f32[1,8], index: 1, kind: output, shape index: {0}]
  %s2 = inlined_call_operand.vmem [shape: f32[1,8], index: 2, kind: output, shape index: {1}]
  %3 = xla_tuple %s1, %s2
  %s4 = sld [smem:[#allocation0]]
  $region26: #{resnet_forward.55} parent=0
    _
  %s6 = ssub.s32 1, %s4
  %s7 = scalar_select 0, %s6, %s4
  // Predicated region
  $region2: #{resnet_forward.55} parent=0 // pred_check
    _
  $region3: #{resnet_forward.55} parent=0 // pred_check_branch
    %9 = sbr.rel (0) target = $region5
  $region4: #{resnet_forward.55} parent=0 // pred_region
    _
  $region5: #{resnet_forward.55} parent=0 // pred_fallthru
    _
  %p10 = scmp.eq.s32.totalorder 0, 0
  // Predicated region
  $region6: #{resnet_forward.55} parent=0 // pred_check
    %p11 = pneg %p10
  $region7: #{resnet_forward.55} parent=0 // pred_check_branch
    %13 = sbr.rel (%p11) target = $region9
  $region8: #{resnet_forward.55} parent=0 // pred_region
    %vm14 = vcmask 57344
    %15 = vst.msk [vmem:[%s1] sm:$0x1] %vm14, 0.0
    %16 = vst.msk [vmem:[%s2] sm:$0x1] %vm14, 0.0
  $region9: #{resnet_forward.55} parent=0 // pred_fallthru
    _
  %v17 = vld [vmem:[%s0] sm:$0xff]
  %v18 = vld [vmem:[%s0 + $0x8] sm:$0xff]
  %v19 = vld [vmem:[%s0 + $0x10] sm:$0xff]
  %v20 = vld [vmem:[%s0 + $0x18] sm:$0xff]
  %v21 = vld [vmem:[%s0 + $0x20] sm:$0xff]
  %v22 = vld [vmem:[%s0 + $0x28] sm:$0xff]
  %v23 = vld [vmem:[%s0 + $0x30] sm:$0xff]
  %v24 = vld [vmem:[%s0 + $0x38] sm:$0xff]
  %v25 = vld [vmem:[%s0 + $0x40] sm:$0xff]
  %v26 = vld [vmem:[%s0 + $0x48] sm:$0xff]
  %v27 = vld [vmem:[%s0 + $0x50] sm:$0xff]
  %v28 = vld [vmem:[%s0 + $0x58] sm:$0xff]
  %v29 = vld [vmem:[%s0 + $0x60] sm:$0xff]
  %v30 = vld [vmem:[%s0 + $0x68] sm:$0xff]
  %v31 = vld [vmem:[%s0 + $0x70] sm:$0xff]
  %v32 = vld [vmem:[%s0 + $0x78] sm:$0xff]
  %v33 = vld [vmem:[%s1] sm:$0x1]
  %vm34 = vcmask 64512
  %v35 = vsel %vm34, %v17, 0.0
  %v36 = vsel %vm34, %v18, 0.0
  %v37 = vadd.f32 %v35, %v36
  %v38 = vsel %vm34, %v19, 0.0
  %v39 = vadd.f32 %v37, %v38
  %v40 = vsel %vm34, %v20, 0.0
  %v41 = vadd.f32 %v39, %v40
  %v42 = vsel %vm34, %v21, 0.0
  %v43 = vadd.f32 %v41, %v42
  %v44 = vsel %vm34, %v22, 0.0
  %v45 = vadd.f32 %v43, %v44
  %v46 = vsel %vm34, %v23, 0.0
  %v47 = vadd.f32 %v45, %v46
  %v48 = vsel %vm34, %v24, 0.0
  %v49 = vadd.f32 %v47, %v48
  %v50 = vsel %vm34, %v25, 0.0
  %v51 = vadd.f32 %v49, %v50
  %v52 = vsel %vm34, %v26, 0.0
  %v53 = vadd.f32 %v51, %v52
  %v54 = vsel %vm34, %v27, 0.0
  %v55 = vadd.f32 %v53, %v54
  %v56 = vsel %vm34, %v28, 0.0
  %v57 = vadd.f32 %v55, %v56
  %v58 = vsel %vm34, %v29, 0.0
  %v59 = vadd.f32 %v57, %v58
  %v60 = vsel %vm34, %v30, 0.0
  %v61 = vadd.f32 %v59, %v60
  %v62 = vsel %vm34, %v31, 0.0
  %v63 = vadd.f32 %v61, %v62
  %v64 = vsel %vm34, %v32, 0.0
  %v65 = vadd.f32 %v63, %v64
  %v66 = vrot.slane %v65, 4
  %v67 = vadd.f32 %v65, %v66
  %v68 = vrot.slane %v67, 2
  %v69 = vadd.f32 %v67, %v68
  %v70 = vrot.slane %v69, 1
  %v71 = vadd.f32 %v69, %v70
  %v72 = vadd.f32 %v33, %v71
  %vm73 = vcmask 57344
  %74 = vst.msk [vmem:[%s1] sm:$0x1] %vm73, %v72
  %v75 = vld [vmem:[%s2] sm:$0x1]
  %v76 = vmul.f32 %v17, %v17
  %v77 = vmul.f32 %v18, %v18
  %v78 = vmul.f32 %v19, %v19
  %v79 = vmul.f32 %v20, %v20
  %v80 = vmul.f32 %v21, %v21
  %v81 = vmul.f32 %v22, %v22
  %v82 = vmul.f32 %v23, %v23
  %v83 = vmul.f32 %v24, %v24
  %v84 = vmul.f32 %v25, %v25
  %v85 = vmul.f32 %v26, %v26
  %v86 = vmul.f32 %v27, %v27
  %v87 = vmul.f32 %v28, %v28
  %v88 = vmul.f32 %v29, %v29
  %v89 = vmul.f32 %v30, %v30
  %v90 = vmul.f32 %v31, %v31
  %v91 = vmul.f32 %v32, %v32
  %v92 = vsel %vm34, %v76, 0.0
  %v93 = vsel %vm34, %v77, 0.0
  %v94 = vadd.f32 %v92, %v93
  %v95 = vsel %vm34, %v78, 0.0
  %v96 = vadd.f32 %v94, %v95
  %v97 = vsel %vm34, %v79, 0.0
  %v98 = vadd.f32 %v96, %v97
  %v99 = vsel %vm34, %v80, 0.0
  %v100 = vadd.f32 %v98, %v99
  %v101 = vsel %vm34, %v81, 0.0
  %v102 = vadd.f32 %v100, %v101
  %v103 = vsel %vm34, %v82, 0.0
  %v104 = vadd.f32 %v102, %v103
  %v105 = vsel %vm34, %v83, 0.0
  %v106 = vadd.f32 %v104, %v105
  %v107 = vsel %vm34, %v84, 0.0
  %v108 = vadd.f32 %v106, %v107
  %v109 = vsel %vm34, %v85, 0.0
  %v110 = vadd.f32 %v108, %v109
  %v111 = vsel %vm34, %v86, 0.0
  %v112 = vadd.f32 %v110, %v111
  %v113 = vsel %vm34, %v87, 0.0
  %v114 = vadd.f32 %v112, %v113
  %v115 = vsel %vm34, %v88, 0.0
  %v116 = vadd.f32 %v114, %v115
  %v117 = vsel %vm34, %v89, 0.0
  %v118 = vadd.f32 %v116, %v117
  %v119 = vsel %vm34, %v90, 0.0
  %v120 = vadd.f32 %v118, %v119
  %v121 = vsel %vm34, %v91, 0.0
  %v122 = vadd.f32 %v120, %v121
  %v123 = vrot.slane %v122, 4
  %v124 = vadd.f32 %v122, %v123
  %v125 = vrot.slane %v124, 2
  %v126 = vadd.f32 %v124, %v125
  %v127 = vrot.slane %v126, 1
  %v128 = vadd.f32 %v126, %v127
  %v129 = vadd.f32 %v75, %v128
  %130 = vst.msk [vmem:[%s2] sm:$0x1] %vm73, %v129
  // Predicated region
  $region10: #{resnet_forward.55} parent=0 // pred_check
    _
  $region11: #{resnet_forward.55} parent=0 // pred_check_branch
    %132 = sbr.rel (0) target = $region13
  $region12: #{resnet_forward.55} parent=0 // pred_region
    _
  $region13: #{resnet_forward.55} parent=0 // pred_fallthru
    _
  // Predicated region
  $region14: #{resnet_forward.55} parent=0 // pred_check
    _
  $region15: #{resnet_forward.55} parent=0 // pred_check_branch
    %134 = sbr.rel (0) target = $region17
  $region16: #{resnet_forward.55} parent=0 // pred_region
    _
  $region17: #{resnet_forward.55} parent=0 // pred_fallthru
    _
  // Predicated region
  $region18: #{resnet_forward.55} parent=0 // pred_check
    _
  $region19: #{resnet_forward.55} parent=0 // pred_check_branch
    %136 = sbr.rel (0) target = $region21
  $region20: #{resnet_forward.55} parent=0 // pred_region
    _
  $region21: #{resnet_forward.55} parent=0 // pred_fallthru
    _
  // Predicated region
  $region22: #{resnet_forward.55} parent=0 // pred_check
    _
  $region23: #{resnet_forward.55} parent=0 // pred_check_branch
    %138 = sbr.rel (0) target = $region25
  $region24: #{resnet_forward.55} parent=0 // pred_region
    _
  $region25: #{resnet_forward.55} parent=0 // pred_fallthru
    _

// kernel: tile.213
$region0: #{tile.213}
  #allocation0 [shape = 's32[1]{0}', space=sflag, size = 0x4, scoped, tag = 'scoped memory for tile.213']
  %s0 = inlined_call_operand.vmem [shape: f32[8], index: 0, kind: input, shape index: {}]
  %s1 = inlined_call_operand.vmem [shape: f32[9,8], index: 1, kind: output, shape index: {}]
  // Predicated region
  $region2: #{tile.213} parent=0 // pred_check
    _
  $region3: #{tile.213} parent=0 // pred_check_branch
    %3 = sbr.rel (0) target = $region5
  $region4: #{tile.213} parent=0 // pred_region
    _
  $region5: #{tile.213} parent=0 // pred_fallthru
    _
  %v4 = vld [vmem:[%s0] ss:$0 sm:$0xff]
  %5 = vst [vmem:[%s1] sm:$0xff] %v4
  %s6 = scalar_lea.vmem %s1, 8
  %7 = vst [vmem:[%s6] sm:$0xff] %v4

// kernel: tile.218
$region0: #{tile.218}
  %s0 = inlined_call_operand.vmem [shape: f32[9,8], index: 0, kind: input, shape index: {}]
  %s1 = inlined_call_operand.vmem [shape: f32[1,72], index: 1, kind: output, shape index: {}]
  $region1: #{tile.218} parent=0
    #allocation0 [shape = 'u8[4096]{0}', space=vmem, size = 0x1000, scoped, tag = 'scoped mem for output reshape']
    %v2 = vld [vmem:[%s0] sm:$0x1]
    %vm3 = vcmask 64512
    %4 = vst.msk [vmem:[#allocation0] sm:$0x1] %vm3, %v2
    %s5 = scalar_lea.vmem %s0, 8
    %v6 = vld [vmem:[%s5] sm:$0x1]
    %7 = vrot.lane.b32.xlu0 %v6, 64
    %v8 = vpop.permute.xlu0 %7
    %vm9 = vcmask 589312
    %10 = vst.msk [vmem:[#allocation0] sm:$0x1] %vm9, %v8
    %s11 = scalar_lea.vmem %s0, 7
    %v12 = vld [vmem:[%s11] sm:$0x1]
    %13 = vrot.lane.b32.xlu0 %v12, 56
    %v14 = vpop.permute.xlu0 %13
    %vm15 = vcmask 523712
    %16 = vst.msk [vmem:[#allocation0] sm:$0x1] %vm15, %v14
    %s17 = scalar_lea.vmem %s0, 6
    %v18 = vld [vmem:[%s17] sm:$0x1]
    %19 = vrot.lane.b32.xlu0 %v18, 48
    %v20 = vpop.permute.xlu0 %19
    %vm21 = vcmask 458112
    %22 = vst.msk [vmem:[#allocation0] sm:$0x1] %vm21, %v20
    %s23 = scalar_lea.vmem %s0, 5
    %v24 = vld [vmem:[%s23] sm:$0x1]
    %25 = vrot.lane.b32.xlu0 %v24, 40
    %v26 = vpop.permute.xlu0 %25
    %vm27 = vcmask 392512
    %28 = vst.msk [vmem:[#allocation0] sm:$0x1] %vm27, %v26
    %s29 = scalar_lea.vmem %s0, 4
    %v30 = vld [vmem:[%s29] sm:$0x1]
    %31 = vrot.lane.b32.xlu0 %v30, 32
    %v32 = vpop.permute.xlu0 %31
    %vm33 = vcmask 326912
    %34 = vst.msk [vmem:[#allocation0] sm:$0x1] %vm33, %v32
    %s35 = scalar_lea.vmem %s0, 3
    %v36 = vld [vmem:[%s35] sm:$0x1]
    %37 = vrot.lane.b32.xlu0 %v36, 24
    %v38 = vpop.permute.xlu0 %37
    %vm39 = vcmask 261312
    %40 = vst.msk [vmem:[#allocation0] sm:$0x1] %vm39, %v38
    %s41 = scalar_lea.vmem %s0, 2
    %v42 = vld [vmem:[%s41] sm:$0x1]
    %43 = vrot.lane.b32.xlu0 %v42, 16
    %v44 = vpop.permute.xlu0 %43
    %vm45 = vcmask 195712
    %46 = vst.msk [vmem:[#allocation0] sm:$0x1] %vm45, %v44
    %s47 = scalar_lea.vmem %s0, 1
    %v48 = vld [vmem:[%s47] sm:$0x1]
    %49 = vrot.lane.b32.xlu0 %v48, 8
    %v50 = vpop.permute.xlu0 %49
    %vm51 = vcmask 130112
    %52 = vst.msk [vmem:[#allocation0] sm:$0x1] %vm51, %v50
    %s54 = ssub.s32 2, 1
    %v55 = vld [vmem:[#allocation0] sm:%s54]
    %s57 = ssub.s32 2, 1
    %58 = vst [vmem:[%s1] sm:%s57] %v55

// kernel: resnet_forward.54
$region0: #{resnet_forward.54}
  #allocation0 [shape = 'u32[]', space=smem, size = 0x4, offset = 0x4, fixed_abs, tag = 'smem constant byte address 0x4 - core index']
  #allocation1 [shape = 'u32[72,128]{1,0:T(1,128)}', space=vmem, size = 0x9000, scoped, tag = 'internal scratch']
  #allocation2 [shape = 'f32[128,128]{1,0:T(8,128)}', space=vmem, size = 0x10000, scoped, tag = 'scratch operand']
  %s0 = inlined_call_operand.vmem [shape: bf16[128,128], index: 0, kind: input, shape index: {}]
  %s1 = inlined_call_operand.vmem [shape: bf16[128,128], index: 1, kind: input, shape index: {}]
  %s2 = inlined_call_operand.vmem [shape: f32[128,128], index: 2, kind: output, shape index: {}]
  %s3 = sld [smem:[#allocation0]]
  $region26: #{resnet_forward.54} parent=0
    _
  %s5 = ssub.s32 1, %s3
  %s6 = scalar_select 0, %s5, %s3
  // Predicated region
  $region2: #{resnet_forward.54} parent=0 // pred_check
    _
  $region3: #{resnet_forward.54} parent=0 // pred_check_branch
    %8 = sbr.rel (0) target = $region5
  $region4: #{resnet_forward.54} parent=0 // pred_region
    _
  $region5: #{resnet_forward.54} parent=0 // pred_fallthru
    _
  // Predicated region
  $region6: #{resnet_forward.54} parent=0 // pred_check
    _
  $region7: #{resnet_forward.54} parent=0 // pred_check_branch
    %10 = sbr.rel (0) target = $region9
  $region8: #{resnet_forward.54} parent=0 // pred_region
    _
  $region9: #{resnet_forward.54} parent=0 // pred_fallthru
    _
  %p11 = scmp.eq.s32.totalorder 0, 0
  // Predicated region
  $region10: #{resnet_forward.54} parent=0 // pred_check
    %p12 = pneg %p11
  $region11: #{resnet_forward.54} parent=0 // pred_check_branch
    %14 = sbr.rel (%p12) target = $region13
  $region12: #{resnet_forward.54} parent=0 // pred_region
    %15 = vst [vmem:[#allocation2] sm:$0xff] 0.0
    %16 = vst [vmem:[#allocation2 + $0x8] sm:$0xff] 0.0
    %17 = vst [vmem:[#allocation2 + $0x10] sm:$0xff] 0.0
    %18 = vst [vmem:[#allocation2 + $0x18] sm:$0xff] 0.0
    %19 = vst [vmem:[#allocation2 + $0x20] sm:$0xff] 0.0
    %20 = vst [vmem:[#allocation2 + $0x28] sm:$0xff] 0.0
    %21 = vst [vmem:[#allocation2 + $0x30] sm:$0xff] 0.0
    %22 = vst [vmem:[#allocation2 + $0x38] sm:$0xff] 0.0
    %23 = vst [vmem:[#allocation2 + $0x40] sm:$0xff] 0.0
    %24 = vst [vmem:[#allocation2 + $0x48] sm:$0xff] 0.0
    %25 = vst [vmem:[#allocation2 + $0x50] sm:$0xff] 0.0
    %26 = vst [vmem:[#allocation2 + $0x58] sm:$0xff] 0.0
    %27 = vst [vmem:[#allocation2 + $0x60] sm:$0xff] 0.0
    %28 = vst [vmem:[#allocation2 + $0x68] sm:$0xff] 0.0
    %29 = vst [vmem:[#allocation2 + $0x70] sm:$0xff] 0.0
    %30 = vst [vmem:[#allocation2 + $0x78] sm:$0xff] 0.0
  $region13: #{resnet_forward.54} parent=0 // pred_fallthru
    _
  %v31 = vld [vmem:[%s0] sm:$0xf]
  %v32 = vld [vmem:[%s0 + $0x4] sm:$0xf]
  %v33 = vld [vmem:[%s0 + $0x8] sm:$0xf]
  %v34 = vld [vmem:[%s0 + $0xc] sm:$0xf]
  %v35 = vld [vmem:[%s0 + $0x10] sm:$0xf]
  %v36 = vld [vmem:[%s0 + $0x14] sm:$0xf]
  %v37 = vld [vmem:[%s0 + $0x18] sm:$0xf]
  %v38 = vld [vmem:[%s0 + $0x1c] sm:$0xf]
  %v39 = vld [vmem:[%s0 + $0x20] sm:$0xf]
  %v40 = vld [vmem:[%s0 + $0x24] sm:$0xf]
  %v41 = vld [vmem:[%s0 + $0x28] sm:$0xf]
  %v42 = vld [vmem:[%s0 + $0x2c] sm:$0xf]
  %v43 = vld [vmem:[%s0 + $0x30] sm:$0xf]
  %v44 = vld [vmem:[%s0 + $0x34] sm:$0xf]
  %v45 = vld [vmem:[%s0 + $0x38] sm:$0xf]
  %v46 = vld [vmem:[%s0 + $0x3c] sm:$0xf]
  %v47 = vld [vmem:[#allocation2] sm:$0xff]
  %v48 = vld [vmem:[#allocation2 + $0x8] sm:$0xff]
  %v49 = vld [vmem:[#allocation2 + $0x10] sm:$0xff]
  %v50 = vld [vmem:[#allocation2 + $0x18] sm:$0xff]
  %v51 = vld [vmem:[#allocation2 + $0x20] sm:$0xff]
  %v52 = vld [vmem:[#allocation2 + $0x28] sm:$0xff]
  %v53 = vld [vmem:[#allocation2 + $0x30] sm:$0xff]
  %v54 = vld [vmem:[#allocation2 + $0x38] sm:$0xff]
  %v55 = vld [vmem:[#allocation2 + $0x40] sm:$0xff]
  %v56 = vld [vmem:[#allocation2 + $0x48] sm:$0xff]
  %v57 = vld [vmem:[#allocation2 + $0x50] sm:$0xff]
  %v58 = vld [vmem:[#allocation2 + $0x58] sm:$0xff]
  %v59 = vld [vmem:[#allocation2 + $0x60] sm:$0xff]
  %v60 = vld [vmem:[#allocation2 + $0x68] sm:$0xff]
  %v61 = vld [vmem:[#allocation2 + $0x70] sm:$0xff]
  %v62 = vld [vmem:[#allocation2 + $0x78] sm:$0xff]
  %v63 = vld [vmem:[%s1] sm:$0xf]
  %v64 = vld [vmem:[%s1 + $0x4] sm:$0xf]
  %v65 = vld [vmem:[%s1 + $0x8] sm:$0xf]
  %v66 = vld [vmem:[%s1 + $0xc] sm:$0xf]
  %v67 = vld [vmem:[%s1 + $0x10] sm:$0xf]
  %v68 = vld [vmem:[%s1 + $0x14] sm:$0xf]
  %v69 = vld [vmem:[%s1 + $0x18] sm:$0xf]
  %v70 = vld [vmem:[%s1 + $0x1c] sm:$0xf]
  %v71 = vld [vmem:[%s1 + $0x20] sm:$0xf]
  %v72 = vld [vmem:[%s1 + $0x24] sm:$0xf]
  %v73 = vld [vmem:[%s1 + $0x28] sm:$0xf]
  %v74 = vld [vmem:[%s1 + $0x2c] sm:$0xf]
  %v75 = vld [vmem:[%s1 + $0x30] sm:$0xf]
  %v76 = vld [vmem:[%s1 + $0x34] sm:$0xf]
  %v77 = vld [vmem:[%s1 + $0x38] sm:$0xf]
  %v78 = vld [vmem:[%s1 + $0x3c] sm:$0xf]
  %v95 = vunpack.c.l.b16 %v31
  %v96 = vunpack.c.l.b16 %v32
  %v97 = vunpack.c.l.b16 %v33
  %v98 = vunpack.c.l.b16 %v34
  %v99 = vunpack.c.l.b16 %v35
  %v100 = vunpack.c.l.b16 %v36
  %v101 = vunpack.c.l.b16 %v37
  %v102 = vunpack.c.l.b16 %v38
  %v103 = vunpack.c.l.b16 %v39
  %v104 = vunpack.c.l.b16 %v40
  %v105 = vunpack.c.l.b16 %v41
  %v106 = vunpack.c.l.b16 %v42
  %v107 = vunpack.c.l.b16 %v43
  %v108 = vunpack.c.l.b16 %v44
  %v109 = vunpack.c.l.b16 %v45
  %v110 = vunpack.c.l.b16 %v46
  %v111 = vpack.c.b16 %v96, %v95
  %v112 = vpack.c.b16 %v98, %v97
  %v113 = vpack.c.b16 %v100, %v99
  %v114 = vpack.c.b16 %v102, %v101
  %v115 = vpack.c.b16 %v104, %v103
  %v116 = vpack.c.b16 %v106, %v105
  %v117 = vpack.c.b16 %v108, %v107
  %v118 = vpack.c.b16 %v110, %v109
  %v143 = vunpack.c.l.b16 %v63
  %v144 = vunpack.c.l.b16 %v64
  %v145 = vunpack.c.l.b16 %v65
  %v146 = vunpack.c.l.b16 %v66
  %v147 = vunpack.c.l.b16 %v67
  %v148 = vunpack.c.l.b16 %v68
  %v149 = vunpack.c.l.b16 %v69
  %v150 = vunpack.c.l.b16 %v70
  %v151 = vunpack.c.l.b16 %v71
  %v152 = vunpack.c.l.b16 %v72
  %v153 = vunpack.c.l.b16 %v73
  %v154 = vunpack.c.l.b16 %v74
  %v155 = vunpack.c.l.b16 %v75
  %v156 = vunpack.c.l.b16 %v76
  %v157 = vunpack.c.l.b16 %v77
  %v158 = vunpack.c.l.b16 %v78
  %v159 = vpack.c.b16 %v144, %v143
  %v160 = vpack.c.b16 %v146, %v145
  %v161 = vpack.c.b16 %v148, %v147
  %v162 = vpack.c.b16 %v150, %v149
  %v163 = vpack.c.b16 %v152, %v151
  %v164 = vpack.c.b16 %v154, %v153
  %v165 = vpack.c.b16 %v156, %v155
  %v166 = vpack.c.b16 %v158, %v157
  %175 = vmatpush.bf16.msra.mxu0 %v166
  %176 = vmatpush.bf16.msra.mxu0 %v165
  %177 = vmatpush.bf16.msra.mxu0 %v164
  %178 = vmatpush.bf16.msra.mxu0 %v163
  %179 = vmatpush.bf16.msra.mxu0 %v162
  %180 = vmatpush.bf16.msra.mxu0 %v161
  %181 = vmatpush.bf16.msra.mxu0 %v160
  %182 = vmatpush.bf16.msra.mxu0 %v159
  %183 = vmatmul.bf16.gmra.mxu0 %v111
  %v184 = vpop.f32.mrf.mxu0
  %v185 = vadd.f32 0.0, %v184
  %v186 = vpop.f32.mrf.mxu0
  %v187 = vadd.f32 0.0, %v186
  %188 = vmatmul.bf16.gmra.mxu0 %v112
  %v189 = vpop.f32.mrf.mxu0
  %v190 = vadd.f32 0.0, %v189
  %v191 = vpop.f32.mrf.mxu0
  %v192 = vadd.f32 0.0, %v191
  %193 = vmatmul.bf16.gmra.mxu0 %v113
  %v194 = vpop.f32.mrf.mxu0
  %v195 = vadd.f32 0.0, %v194
  %v196 = vpop.f32.mrf.mxu0
  %v197 = vadd.f32 0.0, %v196
  %198 = vmatmul.bf16.gmra.mxu0 %v114
  %v199 = vpop.f32.mrf.mxu0
  %v200 = vadd.f32 0.0, %v199
  %v201 = vpop.f32.mrf.mxu0
  %v202 = vadd.f32 0.0, %v201
  %203 = vmatmul.bf16.gmra.mxu0 %v115
  %v204 = vpop.f32.mrf.mxu0
  %v205 = vadd.f32 0.0, %v204
  %v206 = vpop.f32.mrf.mxu0
  %v207 = vadd.f32 0.0, %v206
  %208 = vmatmul.bf16.gmra.mxu0 %v116
  %v209 = vpop.f32.mrf.mxu0
  %v210 = vadd.f32 0.0, %v209
  %v211 = vpop.f32.mrf.mxu0
  %v212 = vadd.f32 0.0, %v211
  %213 = vmatmul.bf16.gmra.mxu0 %v117
  %v214 = vpop.f32.mrf.mxu0
  %v215 = vadd.f32 0.0, %v214
  %v216 = vpop.f32.mrf.mxu0
  %v217 = vadd.f32 0.0, %v216
  %218 = vmatmul.bf16.gmra.mxu0 %v118
  %v219 = vpop.f32.mrf.mxu0
  %v220 = vadd.f32 0.0, %v219
  %v221 = vpop.f32.mrf.mxu0
  %v222 = vadd.f32 0.0, %v221
  %223 = vdwg.mxu0
  %v224 = vadd.f32 %v47, %v185
  %v225 = vadd.f32 %v48, %v187
  %v226 = vadd.f32 %v49, %v190
  %v227 = vadd.f32 %v50, %v192
  %v228 = vadd.f32 %v51, %v195
  %v229 = vadd.f32 %v52, %v197
  %v230 = vadd.f32 %v53, %v200
  %v231 = vadd.f32 %v54, %v202
  %v232 = vadd.f32 %v55, %v205
  %v233 = vadd.f32 %v56, %v207
  %v234 = vadd.f32 %v57, %v210
  %v235 = vadd.f32 %v58, %v212
  %v236 = vadd.f32 %v59, %v215
  %v237 = vadd.f32 %v60, %v217
  %v238 = vadd.f32 %v61, %v220
  %v239 = vadd.f32 %v62, %v222
  %240 = vst [vmem:[#allocation2] sm:$0xff] %v224
  %241 = vst [vmem:[#allocation2 + $0x8] sm:$0xff] %v225
  %242 = vst [vmem:[#allocation2 + $0x10] sm:$0xff] %v226
  %243 = vst [vmem:[#allocation2 + $0x18] sm:$0xff] %v227
  %244 = vst [vmem:[#allocation2 + $0x20] sm:$0xff] %v228
  %245 = vst [vmem:[#allocation2 + $0x28] sm:$0xff] %v229
  %246 = vst [vmem:[#allocation2 + $0x30] sm:$0xff] %v230
  %247 = vst [vmem:[#allocation2 + $0x38] sm:$0xff] %v231
  %248 = vst [vmem:[#allocation2 + $0x40] sm:$0xff] %v232
  %249 = vst [vmem:[#allocation2 + $0x48] sm:$0xff] %v233
  %250 = vst [vmem:[#allocation2 + $0x50] sm:$0xff] %v234
  %251 = vst [vmem:[#allocation2 + $0x58] sm:$0xff] %v235
  %252 = vst [vmem:[#allocation2 + $0x60] sm:$0xff] %v236
  %253 = vst [vmem:[#allocation2 + $0x68] sm:$0xff] %v237
  %254 = vst [vmem:[#allocation2 + $0x70] sm:$0xff] %v238
  %255 = vst [vmem:[#allocation2 + $0x78] sm:$0xff] %v239
  // Predicated region
  $region14: #{resnet_forward.54} parent=0 // pred_check
    %p256 = pneg %p11
  $region15: #{resnet_forward.54} parent=0 // pred_check_branch
    %258 = sbr.rel (%p256) target = $region17
  $region16: #{resnet_forward.54} parent=0 // pred_region
    %v259 = vld [vmem:[#allocation2] sm:$0xff]
    %v260 = vld [vmem:[#allocation2 + $0x8] sm:$0xff]
    %v261 = vld [vmem:[#allocation2 + $0x10] sm:$0xff]
    %v262 = vld [vmem:[#allocation2 + $0x18] sm:$0xff]
    %v263 = vld [vmem:[#allocation2 + $0x20] sm:$0xff]
    %v264 = vld [vmem:[#allocation2 + $0x28] sm:$0xff]
    %v265 = vld [vmem:[#allocation2 + $0x30] sm:$0xff]
    %v266 = vld [vmem:[#allocation2 + $0x38] sm:$0xff]
    %v267 = vld [vmem:[#allocation2 + $0x40] sm:$0xff]
    %v268 = vld [vmem:[#allocation2 + $0x48] sm:$0xff]
    %v269 = vld [vmem:[#allocation2 + $0x50] sm:$0xff]
    %v270 = vld [vmem:[#allocation2 + $0x58] sm:$0xff]
    %v271 = vld [vmem:[#allocation2 + $0x60] sm:$0xff]
    %v272 = vld [vmem:[#allocation2 + $0x68] sm:$0xff]
    %v273 = vld [vmem:[#allocation2 + $0x70] sm:$0xff]
    %v274 = vld [vmem:[#allocation2 + $0x78] sm:$0xff]
    %275 = vst [vmem:[%s2] sm:$0xff] %v259
    %276 = vst [vmem:[%s2 + $0x8] sm:$0xff] %v260
    %277 = vst [vmem:[%s2 + $0x10] sm:$0xff] %v261
    %278 = vst [vmem:[%s2 + $0x18] sm:$0xff] %v262
    %279 = vst [vmem:[%s2 + $0x20] sm:$0xff] %v263
    %280 = vst [vmem:[%s2 + $0x28] sm:$0xff] %v264
    %281 = vst [vmem:[%s2 + $0x30] sm:$0xff] %v265
    %282 = vst [vmem:[%s2 + $0x38] sm:$0xff] %v266
    %283 = vst [vmem:[%s2 + $0x40] sm:$0xff] %v267
    %284 = vst [vmem:[%s2 + $0x48] sm:$0xff] %v268
    %285 = vst [vmem:[%s2 + $0x50] sm:$0xff] %v269
    %286 = vst [vmem:[%s2 + $0x58] sm:$0xff] %v270
    %287 = vst [vmem:[%s2 + $0x60] sm:$0xff] %v271
    %288 = vst [vmem:[%s2 + $0x68] sm:$0xff] %v272
    %289 = vst [vmem:[%s2 + $0x70] sm:$0xff] %v273
    %290 = vst [vmem:[%s2 + $0x78] sm:$0xff] %v274
  $region17: #{resnet_forward.54} parent=0 // pred_fallthru
    _
  // Predicated region
  $region18: #{resnet_forward.54} parent=0 // pred_check
    _
  $region19: #{resnet_forward.54} parent=0 // pred_check_branch
    %292 = sbr.rel (0) target = $region21
  $region20: #{resnet_forward.54} parent=0 // pred_region
    _
  $region21: #{resnet_forward.54} parent=0 // pred_fallthru
    _
  // Predicated region
  $region22: #{resnet_forward.54} parent=0 // pred_check
    _
  $region23: #{resnet_forward.54} parent=0 // pred_check_branch
    %294 = sbr.rel (0) target = $region25
  $region24: #{resnet_forward.54} parent=0 // pred_region
    _
  $region25: #{resnet_forward.54} parent=0 // pred_fallthru
    _

// kernel: resnet_forward.49
$region0: #{resnet_forward.49}
  #allocation0 [shape = 'u32[]', space=smem, size = 0x4, offset = 0x4, fixed_abs, tag = 'smem constant byte address 0x4 - core index']
  #allocation1 [shape = 'u32[72,128]{1,0:T(1,128)}', space=vmem, size = 0x9000, scoped, tag = 'internal scratch']
  #allocation2 [shape = 'f32[128,128]{1,0:T(8,128)}', space=vmem, size = 0x10000, scoped, tag = 'scratch operand']
  %s0 = inlined_call_operand.vmem [shape: bf16[128,128], index: 0, kind: input, shape index: {}]
  %s1 = inlined_call_operand.vmem [shape: bf16[128,128], index: 1, kind: input, shape index: {}]
  %s2 = inlined_call_operand.vmem [shape: f32[1,128], index: 2, kind: input, shape index: {}]
  %s3 = inlined_call_operand.vmem [shape: f32[1,128], index: 3, kind: input, shape index: {}]
  %s4 = inlined_call_operand.vmem [shape: f32[128,128], index: 4, kind: input, shape index: {}]
  %s5 = inlined_call_operand.vmem [shape: f32[1,128], index: 5, kind: input, shape index: {}]
  %s6 = inlined_call_operand.vmem [shape: f32[1,128], index: 6, kind: input, shape index: {}]
  %s7 = inlined_call_operand.vmem [shape: f32[128,128], index: 7, kind: output, shape index: {}]
  %s8 = sld [smem:[#allocation0]]
  $region46: #{resnet_forward.49} parent=0
    _
  %s10 = ssub.s32 1, %s8
  %s11 = scalar_select 0, %s10, %s8
  // Predicated region
  $region2: #{resnet_forward.49} parent=0 // pred_check
    _
  $region3: #{resnet_forward.49} parent=0 // pred_check_branch
    %13 = sbr.rel (0) target = $region5
  $region4: #{resnet_forward.49} parent=0 // pred_region
    _
  $region5: #{resnet_forward.49} parent=0 // pred_fallthru
    _
  // Predicated region
  $region6: #{resnet_forward.49} parent=0 // pred_check
    _
  $region7: #{resnet_forward.49} parent=0 // pred_check_branch
    %15 = sbr.rel (0) target = $region9
  $region8: #{resnet_forward.49} parent=0 // pred_region
    _
  $region9: #{resnet_forward.49} parent=0 // pred_fallthru
    _
  // Predicated region
  $region10: #{resnet_forward.49} parent=0 // pred_check
    _
  $region11: #{resnet_forward.49} parent=0 // pred_check_branch
    %17 = sbr.rel (0) target = $region13
  $region12: #{resnet_forward.49} parent=0 // pred_region
    _
  $region13: #{resnet_forward.49} parent=0 // pred_fallthru
    _
  // Predicated region
  $region14: #{resnet_forward.49} parent=0 // pred_check
    _
  $region15: #{resnet_forward.49} parent=0 // pred_check_branch
    %19 = sbr.rel (0) target = $region17
  $region16: #{resnet_forward.49} parent=0 // pred_region
    _
  $region17: #{resnet_forward.49} parent=0 // pred_fallthru
    _
  // Predicated region
  $region18: #{resnet_forward.49} parent=0 // pred_check
    _
  $region19: #{resnet_forward.49} parent=0 // pred_check_branch
    %21 = sbr.rel (0) target = $region21
  $region20: #{resnet_forward.49} parent=0 // pred_region
    _
  $region21: #{resnet_forward.49} parent=0 // pred_fallthru
    _
  // Predicated region
  $region22: #{resnet_forward.49} parent=0 // pred_check
    _
  $region23: #{resnet_forward.49} parent=0 // pred_check_branch
    %23 = sbr.rel (0) target = $region25
  $region24: #{resnet_forward.49} parent=0 // pred_region
    _
  $region25: #{resnet_forward.49} parent=0 // pred_fallthru
    _
  // Predicated region
  $region26: #{resnet_forward.49} parent=0 // pred_check
    _
  $region27: #{resnet_forward.49} parent=0 // pred_check_branch
    %25 = sbr.rel (0) target = $region29
  $region28: #{resnet_forward.49} parent=0 // pred_region
    _
  $region29: #{resnet_forward.49} parent=0 // pred_fallthru
    _
  %p26 = scmp.eq.s32.totalorder 0, 0
  // Predicated region
  $region30: #{resnet_forward.49} parent=0 // pred_check
    %p27 = pneg %p26
  $region31: #{resnet_forward.49} parent=0 // pred_check_branch
    %29 = sbr.rel (%p27) target = $region33
  $region32: #{resnet_forward.49} parent=0 // pred_region
    %30 = vst [vmem:[#allocation2] sm:$0xff] 0.0
    %31 = vst [vmem:[#allocation2 + $0x8] sm:$0xff] 0.0
    %32 = vst [vmem:[#allocation2 + $0x10] sm:$0xff] 0.0
    %33 = vst [vmem:[#allocation2 + $0x18] sm:$0xff] 0.0
    %34 = vst [vmem:[#allocation2 + $0x20] sm:$0xff] 0.0
    %35 = vst [vmem:[#allocation2 + $0x28] sm:$0xff] 0.0
    %36 = vst [vmem:[#allocation2 + $0x30] sm:$0xff] 0.0
    %37 = vst [vmem:[#allocation2 + $0x38] sm:$0xff] 0.0
    %38 = vst [vmem:[#allocation2 + $0x40] sm:$0xff] 0.0
    %39 = vst [vmem:[#allocation2 + $0x48] sm:$0xff] 0.0
    %40 = vst [vmem:[#allocation2 + $0x50] sm:$0xff] 0.0
    %41 = vst [vmem:[#allocation2 + $0x58] sm:$0xff] 0.0
    %42 = vst [vmem:[#allocation2 + $0x60] sm:$0xff] 0.0
    %43 = vst [vmem:[#allocation2 + $0x68] sm:$0xff] 0.0
    %44 = vst [vmem:[#allocation2 + $0x70] sm:$0xff] 0.0
    %45 = vst [vmem:[#allocation2 + $0x78] sm:$0xff] 0.0
  $region33: #{resnet_forward.49} parent=0 // pred_fallthru
    _
  %v46 = vld [vmem:[%s0] sm:$0xf]
  %v47 = vld [vmem:[%s0 + $0x4] sm:$0xf]
  %v48 = vld [vmem:[%s0 + $0x8] sm:$0xf]
  %v49 = vld [vmem:[%s0 + $0xc] sm:$0xf]
  %v50 = vld [vmem:[%s0 + $0x10] sm:$0xf]
  %v51 = vld [vmem:[%s0 + $0x14] sm:$0xf]
  %v52 = vld [vmem:[%s0 + $0x18] sm:$0xf]
  %v53 = vld [vmem:[%s0 + $0x1c] sm:$0xf]
  %v54 = vld [vmem:[%s0 + $0x20] sm:$0xf]
  %v55 = vld [vmem:[%s0 + $0x24] sm:$0xf]
  %v56 = vld [vmem:[%s0 + $0x28] sm:$0xf]
  %v57 = vld [vmem:[%s0 + $0x2c] sm:$0xf]
  %v58 = vld [vmem:[%s0 + $0x30] sm:$0xf]
  %v59 = vld [vmem:[%s0 + $0x34] sm:$0xf]
  %v60 = vld [vmem:[%s0 + $0x38] sm:$0xf]
  %v61 = vld [vmem:[%s0 + $0x3c] sm:$0xf]
  %v62 = vunpack.c.l.bf16 %v46
  %v63 = vunpack.c.l.bf16 %v47
  %v64 = vunpack.c.l.bf16 %v48
  %v65 = vunpack.c.l.bf16 %v49
  %v66 = vunpack.c.l.bf16 %v50
  %v67 = vunpack.c.l.bf16 %v51
  %v68 = vunpack.c.l.bf16 %v52
  %v69 = vunpack.c.l.bf16 %v53
  %v70 = vunpack.c.l.bf16 %v54
  %v71 = vunpack.c.l.bf16 %v55
  %v72 = vunpack.c.l.bf16 %v56
  %v73 = vunpack.c.l.bf16 %v57
  %v74 = vunpack.c.l.bf16 %v58
  %v75 = vunpack.c.l.bf16 %v59
  %v76 = vunpack.c.l.bf16 %v60
  %v77 = vunpack.c.l.bf16 %v61
  %v78 = vld [vmem:[%s2] sm:$0x1]
  %v80 = vperm.slane %v78, 0
  %v82 = vmul.f32 %v62, %v80
  %v83 = vmul.f32 %v63, %v80
  %v84 = vmul.f32 %v64, %v80
  %v85 = vmul.f32 %v65, %v80
  %v86 = vmul.f32 %v66, %v80
  %v87 = vmul.f32 %v67, %v80
  %v88 = vmul.f32 %v68, %v80
  %v89 = vmul.f32 %v69, %v80
  %v90 = vmul.f32 %v70, %v80
  %v91 = vmul.f32 %v71, %v80
  %v92 = vmul.f32 %v72, %v80
  %v93 = vmul.f32 %v73, %v80
  %v94 = vmul.f32 %v74, %v80
  %v95 = vmul.f32 %v75, %v80
  %v96 = vmul.f32 %v76, %v80
  %v97 = vmul.f32 %v77, %v80
  %v98 = vld [vmem:[%s3] sm:$0x1]
  %v100 = vperm.slane %v98, 0
  %v102 = vadd.f32 %v82, %v100
  %v103 = vadd.f32 %v83, %v100
  %v104 = vadd.f32 %v84, %v100
  %v105 = vadd.f32 %v85, %v100
  %v106 = vadd.f32 %v86, %v100
  %v107 = vadd.f32 %v87, %v100
  %v108 = vadd.f32 %v88, %v100
  %v109 = vadd.f32 %v89, %v100
  %v110 = vadd.f32 %v90, %v100
  %v111 = vadd.f32 %v91, %v100
  %v112 = vadd.f32 %v92, %v100
  %v113 = vadd.f32 %v93, %v100
  %v114 = vadd.f32 %v94, %v100
  %v115 = vadd.f32 %v95, %v100
  %v116 = vadd.f32 %v96, %v100
  %v117 = vadd.f32 %v97, %v100
  %v118 = vmax.f32 %v102, 0.0
  %v119 = vmax.f32 %v103, 0.0
  %v120 = vmax.f32 %v104, 0.0
  %v121 = vmax.f32 %v105, 0.0
  %v122 = vmax.f32 %v106, 0.0
  %v123 = vmax.f32 %v107, 0.0
  %v124 = vmax.f32 %v108, 0.0
  %v125 = vmax.f32 %v109, 0.0
  %v126 = vmax.f32 %v110, 0.0
  %v127 = vmax.f32 %v111, 0.0
  %v128 = vmax.f32 %v112, 0.0
  %v129 = vmax.f32 %v113, 0.0
  %v130 = vmax.f32 %v114, 0.0
  %v131 = vmax.f32 %v115, 0.0
  %v132 = vmax.f32 %v116, 0.0
  %v133 = vmax.f32 %v117, 0.0
  %v134 = vpack.c.bf16 %v119, %v118
  %v135 = vpack.c.bf16 %v121, %v120
  %v136 = vpack.c.bf16 %v123, %v122
  %v137 = vpack.c.bf16 %v125, %v124
  %v138 = vpack.c.bf16 %v127, %v126
  %v139 = vpack.c.bf16 %v129, %v128
  %v140 = vpack.c.bf16 %v131, %v130
  %v141 = vpack.c.bf16 %v133, %v132
  %v142 = vld [vmem:[#allocation2] sm:$0xff]
  %v143 = vld [vmem:[#allocation2 + $0x8] sm:$0xff]
  %v144 = vld [vmem:[#allocation2 + $0x10] sm:$0xff]
  %v145 = vld [vmem:[#allocation2 + $0x18] sm:$0xff]
  %v146 = vld [vmem:[#allocation2 + $0x20] sm:$0xff]
  %v147 = vld [vmem:[#allocation2 + $0x28] sm:$0xff]
  %v148 = vld [vmem:[#allocation2 + $0x30] sm:$0xff]
  %v149 = vld [vmem:[#allocation2 + $0x38] sm:$0xff]
  %v150 = vld [vmem:[#allocation2 + $0x40] sm:$0xff]
  %v151 = vld [vmem:[#allocation2 + $0x48] sm:$0xff]
  %v152 = vld [vmem:[#allocation2 + $0x50] sm:$0xff]
  %v153 = vld [vmem:[#allocation2 + $0x58] sm:$0xff]
  %v154 = vld [vmem:[#allocation2 + $0x60] sm:$0xff]
  %v155 = vld [vmem:[#allocation2 + $0x68] sm:$0xff]
  %v156 = vld [vmem:[#allocation2 + $0x70] sm:$0xff]
  %v157 = vld [vmem:[#allocation2 + $0x78] sm:$0xff]
  %v158 = vld [vmem:[%s1] sm:$0xf]
  %v159 = vld [vmem:[%s1 + $0x4] sm:$0xf]
  %v160 = vld [vmem:[%s1 + $0x8] sm:$0xf]
  %v161 = vld [vmem:[%s1 + $0xc] sm:$0xf]
  %v162 = vld [vmem:[%s1 + $0x10] sm:$0xf]
  %v163 = vld [vmem:[%s1 + $0x14] sm:$0xf]
  %v164 = vld [vmem:[%s1 + $0x18] sm:$0xf]
  %v165 = vld [vmem:[%s1 + $0x1c] sm:$0xf]
  %v166 = vld [vmem:[%s1 + $0x20] sm:$0xf]
  %v167 = vld [vmem:[%s1 + $0x24] sm:$0xf]
  %v168 = vld [vmem:[%s1 + $0x28] sm:$0xf]
  %v169 = vld [vmem:[%s1 + $0x2c] sm:$0xf]
  %v170 = vld [vmem:[%s1 + $0x30] sm:$0xf]
  %v171 = vld [vmem:[%s1 + $0x34] sm:$0xf]
  %v172 = vld [vmem:[%s1 + $0x38] sm:$0xf]
  %v173 = vld [vmem:[%s1 + $0x3c] sm:$0xf]
  %v190 = vunpack.c.l.b16 %v158
  %v191 = vunpack.c.l.b16 %v159
  %v192 = vunpack.c.l.b16 %v160
  %v193 = vunpack.c.l.b16 %v161
  %v194 = vunpack.c.l.b16 %v162
  %v195 = vunpack.c.l.b16 %v163
  %v196 = vunpack.c.l.b16 %v164
  %v197 = vunpack.c.l.b16 %v165
  %v198 = vunpack.c.l.b16 %v166
  %v199 = vunpack.c.l.b16 %v167
  %v200 = vunpack.c.l.b16 %v168
  %v201 = vunpack.c.l.b16 %v169
  %v202 = vunpack.c.l.b16 %v170
  %v203 = vunpack.c.l.b16 %v171
  %v204 = vunpack.c.l.b16 %v172
  %v205 = vunpack.c.l.b16 %v173
  %v206 = vpack.c.b16 %v191, %v190
  %v207 = vpack.c.b16 %v193, %v192
  %v208 = vpack.c.b16 %v195, %v194
  %v209 = vpack.c.b16 %v197, %v196
  %v210 = vpack.c.b16 %v199, %v198
  %v211 = vpack.c.b16 %v201, %v200
  %v212 = vpack.c.b16 %v203, %v202
  %v213 = vpack.c.b16 %v205, %v204
  %222 = vmatpush.bf16.msra.mxu0 %v213
  %223 = vmatpush.bf16.msra.mxu0 %v212
  %224 = vmatpush.bf16.msra.mxu0 %v211
  %225 = vmatpush.bf16.msra.mxu0 %v210
  %226 = vmatpush.bf16.msra.mxu0 %v209
  %227 = vmatpush.bf16.msra.mxu0 %v208
  %228 = vmatpush.bf16.msra.mxu0 %v207
  %229 = vmatpush.bf16.msra.mxu0 %v206
  %230 = vmatmul.bf16.gmra.mxu0 %v134
  %v231 = vpop.f32.mrf.mxu0
  %v232 = vadd.f32 0.0, %v231
  %v233 = vpop.f32.mrf.mxu0
  %v234 = vadd.f32 0.0, %v233
  %235 = vmatmul.bf16.gmra.mxu0 %v135
  %v236 = vpop.f32.mrf.mxu0
  %v237 = vadd.f32 0.0, %v236
  %v238 = vpop.f32.mrf.mxu0
  %v239 = vadd.f32 0.0, %v238
  %240 = vmatmul.bf16.gmra.mxu0 %v136
  %v241 = vpop.f32.mrf.mxu0
  %v242 = vadd.f32 0.0, %v241
  %v243 = vpop.f32.mrf.mxu0
  %v244 = vadd.f32 0.0, %v243
  %245 = vmatmul.bf16.gmra.mxu0 %v137
  %v246 = vpop.f32.mrf.mxu0
  %v247 = vadd.f32 0.0, %v246
  %v248 = vpop.f32.mrf.mxu0
  %v249 = vadd.f32 0.0, %v248
  %250 = vmatmul.bf16.gmra.mxu0 %v138
  %v251 = vpop.f32.mrf.mxu0
  %v252 = vadd.f32 0.0, %v251
  %v253 = vpop.f32.mrf.mxu0
  %v254 = vadd.f32 0.0, %v253
  %255 = vmatmul.bf16.gmra.mxu0 %v139
  %v256 = vpop.f32.mrf.mxu0
  %v257 = vadd.f32 0.0, %v256
  %v258 = vpop.f32.mrf.mxu0
  %v259 = vadd.f32 0.0, %v258
  %260 = vmatmul.bf16.gmra.mxu0 %v140
  %v261 = vpop.f32.mrf.mxu0
  %v262 = vadd.f32 0.0, %v261
  %v263 = vpop.f32.mrf.mxu0
  %v264 = vadd.f32 0.0, %v263
  %265 = vmatmul.bf16.gmra.mxu0 %v141
  %v266 = vpop.f32.mrf.mxu0
  %v267 = vadd.f32 0.0, %v266
  %v268 = vpop.f32.mrf.mxu0
  %v269 = vadd.f32 0.0, %v268
  %270 = vdwg.mxu0
  %v271 = vadd.f32 %v142, %v232
  %v272 = vadd.f32 %v143, %v234
  %v273 = vadd.f32 %v144, %v237
  %v274 = vadd.f32 %v145, %v239
  %v275 = vadd.f32 %v146, %v242
  %v276 = vadd.f32 %v147, %v244
  %v277 = vadd.f32 %v148, %v247
  %v278 = vadd.f32 %v149, %v249
  %v279 = vadd.f32 %v150, %v252
  %v280 = vadd.f32 %v151, %v254
  %v281 = vadd.f32 %v152, %v257
  %v282 = vadd.f32 %v153, %v259
  %v283 = vadd.f32 %v154, %v262
  %v284 = vadd.f32 %v155, %v264
  %v285 = vadd.f32 %v156, %v267
  %v286 = vadd.f32 %v157, %v269
  %287 = vst [vmem:[#allocation2] sm:$0xff] %v271
  %288 = vst [vmem:[#allocation2 + $0x8] sm:$0xff] %v272
  %289 = vst [vmem:[#allocation2 + $0x10] sm:$0xff] %v273
  %290 = vst [vmem:[#allocation2 + $0x18] sm:$0xff] %v274
  %291 = vst [vmem:[#allocation2 + $0x20] sm:$0xff] %v275
  %292 = vst [vmem:[#allocation2 + $0x28] sm:$0xff] %v276
  %293 = vst [vmem:[#allocation2 + $0x30] sm:$0xff] %v277
  %294 = vst [vmem:[#allocation2 + $0x38] sm:$0xff] %v278
  %295 = vst [vmem:[#allocation2 + $0x40] sm:$0xff] %v279
  %296 = vst [vmem:[#allocation2 + $0x48] sm:$0xff] %v280
  %297 = vst [vmem:[#allocation2 + $0x50] sm:$0xff] %v281
  %298 = vst [vmem:[#allocation2 + $0x58] sm:$0xff] %v282
  %299 = vst [vmem:[#allocation2 + $0x60] sm:$0xff] %v283
  %300 = vst [vmem:[#allocation2 + $0x68] sm:$0xff] %v284
  %301 = vst [vmem:[#allocation2 + $0x70] sm:$0xff] %v285
  %302 = vst [vmem:[#allocation2 + $0x78] sm:$0xff] %v286
  // Predicated region
  $region34: #{resnet_forward.49} parent=0 // pred_check
    %p303 = pneg %p26
  $region35: #{resnet_forward.49} parent=0 // pred_check_branch
    %305 = sbr.rel (%p303) target = $region37
  $region36: #{resnet_forward.49} parent=0 // pred_region
    %v306 = vld [vmem:[#allocation2] sm:$0xff]
    %v307 = vld [vmem:[#allocation2 + $0x8] sm:$0xff]
    %v308 = vld [vmem:[#allocation2 + $0x10] sm:$0xff]
    %v309 = vld [vmem:[#allocation2 + $0x18] sm:$0xff]
    %v310 = vld [vmem:[#allocation2 + $0x20] sm:$0xff]
    %v311 = vld [vmem:[#allocation2 + $0x28] sm:$0xff]
    %v312 = vld [vmem:[#allocation2 + $0x30] sm:$0xff]
    %v313 = vld [vmem:[#allocation2 + $0x38] sm:$0xff]
    %v314 = vld [vmem:[#allocation2 + $0x40] sm:$0xff]
    %v315 = vld [vmem:[#allocation2 + $0x48] sm:$0xff]
    %v316 = vld [vmem:[#allocation2 + $0x50] sm:$0xff]
    %v317 = vld [vmem:[#allocation2 + $0x58] sm:$0xff]
    %v318 = vld [vmem:[#allocation2 + $0x60] sm:$0xff]
    %v319 = vld [vmem:[#allocation2 + $0x68] sm:$0xff]
    %v320 = vld [vmem:[#allocation2 + $0x70] sm:$0xff]
    %v321 = vld [vmem:[#allocation2 + $0x78] sm:$0xff]
    %v322 = vld [vmem:[%s4] sm:$0xff]
    %v323 = vld [vmem:[%s4 + $0x8] sm:$0xff]
    %v324 = vld [vmem:[%s4 + $0x10] sm:$0xff]
    %v325 = vld [vmem:[%s4 + $0x18] sm:$0xff]
    %v326 = vld [vmem:[%s4 + $0x20] sm:$0xff]
    %v327 = vld [vmem:[%s4 + $0x28] sm:$0xff]
    %v328 = vld [vmem:[%s4 + $0x30] sm:$0xff]
    %v329 = vld [vmem:[%s4 + $0x38] sm:$0xff]
    %v330 = vld [vmem:[%s4 + $0x40] sm:$0xff]
    %v331 = vld [vmem:[%s4 + $0x48] sm:$0xff]
    %v332 = vld [vmem:[%s4 + $0x50] sm:$0xff]
    %v333 = vld [vmem:[%s4 + $0x58] sm:$0xff]
    %v334 = vld [vmem:[%s4 + $0x60] sm:$0xff]
    %v335 = vld [vmem:[%s4 + $0x68] sm:$0xff]
    %v336 = vld [vmem:[%s4 + $0x70] sm:$0xff]
    %v337 = vld [vmem:[%s4 + $0x78] sm:$0xff]
    %v338 = vld [vmem:[%s5] sm:$0x1]
    %v340 = vperm.slane %v338, 0
    %v342 = vmul.f32 %v322, %v340
    %v343 = vmul.f32 %v323, %v340
    %v344 = vmul.f32 %v324, %v340
    %v345 = vmul.f32 %v325, %v340
    %v346 = vmul.f32 %v326, %v340
    %v347 = vmul.f32 %v327, %v340
    %v348 = vmul.f32 %v328, %v340
    %v349 = vmul.f32 %v329, %v340
    %v350 = vmul.f32 %v330, %v340
    %v351 = vmul.f32 %v331, %v340
    %v352 = vmul.f32 %v332, %v340
    %v353 = vmul.f32 %v333, %v340
    %v354 = vmul.f32 %v334, %v340
    %v355 = vmul.f32 %v335, %v340
    %v356 = vmul.f32 %v336, %v340
    %v357 = vmul.f32 %v337, %v340
    %v358 = vadd.f32 %v306, %v342
    %v359 = vadd.f32 %v307, %v343
    %v360 = vadd.f32 %v308, %v344
    %v361 = vadd.f32 %v309, %v345
    %v362 = vadd.f32 %v310, %v346
    %v363 = vadd.f32 %v311, %v347
    %v364 = vadd.f32 %v312, %v348
    %v365 = vadd.f32 %v313, %v349
    %v366 = vadd.f32 %v314, %v350
    %v367 = vadd.f32 %v315, %v351
    %v368 = vadd.f32 %v316, %v352
    %v369 = vadd.f32 %v317, %v353
    %v370 = vadd.f32 %v318, %v354
    %v371 = vadd.f32 %v319, %v355
    %v372 = vadd.f32 %v320, %v356
    %v373 = vadd.f32 %v321, %v357
    %v374 = vld [vmem:[%s6] sm:$0x1]
    %v376 = vperm.slane %v374, 0
    %v378 = vadd.f32 %v358, %v376
    %v379 = vadd.f32 %v359, %v376
    %v380 = vadd.f32 %v360, %v376
    %v381 = vadd.f32 %v361, %v376
    %v382 = vadd.f32 %v362, %v376
    %v383 = vadd.f32 %v363, %v376
    %v384 = vadd.f32 %v364, %v376
    %v385 = vadd.f32 %v365, %v376
    %v386 = vadd.f32 %v366, %v376
    %v387 = vadd.f32 %v367, %v376
    %v388 = vadd.f32 %v368, %v376
    %v389 = vadd.f32 %v369, %v376
    %v390 = vadd.f32 %v370, %v376
    %v391 = vadd.f32 %v371, %v376
    %v392 = vadd.f32 %v372, %v376
    %v393 = vadd.f32 %v373, %v376
    %v394 = vmax.f32 %v378, 0.0
    %v395 = vmax.f32 %v379, 0.0
    %v396 = vmax.f32 %v380, 0.0
    %v397 = vmax.f32 %v381, 0.0
    %v398 = vmax.f32 %v382, 0.0
    %v399 = vmax.f32 %v383, 0.0
    %v400 = vmax.f32 %v384, 0.0
    %v401 = vmax.f32 %v385, 0.0
    %v402 = vmax.f32 %v386, 0.0
    %v403 = vmax.f32 %v387, 0.0
    %v404 = vmax.f32 %v388, 0.0
    %v405 = vmax.f32 %v389, 0.0
    %v406 = vmax.f32 %v390, 0.0
    %v407 = vmax.f32 %v391, 0.0
    %v408 = vmax.f32 %v392, 0.0
    %v409 = vmax.f32 %v393, 0.0
    %410 = vst [vmem:[%s7] sm:$0xff] %v394
    %411 = vst [vmem:[%s7 + $0x8] sm:$0xff] %v395
    %412 = vst [vmem:[%s7 + $0x10] sm:$0xff] %v396
    %413 = vst [vmem:[%s7 + $0x18] sm:$0xff] %v397
    %414 = vst [vmem:[%s7 + $0x20] sm:$0xff] %v398
    %415 = vst [vmem:[%s7 + $0x28] sm:$0xff] %v399
    %416 = vst [vmem:[%s7 + $0x30] sm:$0xff] %v400
    %417 = vst [vmem:[%s7 + $0x38] sm:$0xff] %v401
    %418 = vst [vmem:[%s7 + $0x40] sm:$0xff] %v402
    %419 = vst [vmem:[%s7 + $0x48] sm:$0xff] %v403
    %420 = vst [vmem:[%s7 + $0x50] sm:$0xff] %v404
    %421 = vst [vmem:[%s7 + $0x58] sm:$0xff] %v405
    %422 = vst [vmem:[%s7 + $0x60] sm:$0xff] %v406
    %423 = vst [vmem:[%s7 + $0x68] sm:$0xff] %v407
    %424 = vst [vmem:[%s7 + $0x70] sm:$0xff] %v408
    %425 = vst [vmem:[%s7 + $0x78] sm:$0xff] %v409
  $region37: #{resnet_forward.49} parent=0 // pred_fallthru
    _
  // Predicated region
  $region38: #{resnet_forward.49} parent=0 // pred_check
    _
  $region39: #{resnet_forward.49} parent=0 // pred_check_branch
    %427 = sbr.rel (0) target = $region41
  $region40: #{resnet_forward.49} parent=0 // pred_region
    _
  $region41: #{resnet_forward.49} parent=0 // pred_fallthru
    _
  // Predicated region
  $region42: #{resnet_forward.49} parent=0 // pred_check
    _
  $region43: #{resnet_forward.49} parent=0 // pred_check_branch
    %429 = sbr.rel (0) target = $region45
  $region44: #{resnet_forward.49} parent=0 // pred_region
    _
  $region45: #{resnet_forward.49} parent=0 // pred_fallthru
    _

// kernel: tile.253
$region0: #{tile.253}
  #allocation0 [shape = 's32[1]{0}', space=sflag, size = 0x4, scoped, tag = 'scoped memory for tile.253']
  %s0 = inlined_call_operand.vmem [shape: f32[16], index: 0, kind: input, shape index: {}]
  %s1 = inlined_call_operand.vmem [shape: f32[9,16], index: 1, kind: output, shape index: {}]
  // Predicated region
  $region2: #{tile.253} parent=0 // pred_check
    _
  $region3: #{tile.253} parent=0 // pred_check_branch
    %3 = sbr.rel (0) target = $region5
  $region4: #{tile.253} parent=0 // pred_region
    _
  $region5: #{tile.253} parent=0 // pred_fallthru
    _
  %v4 = vld [vmem:[%s0] ss:$0 sm:$0xff]
  %5 = vst [vmem:[%s1] sm:$0xff] %v4
  %s6 = scalar_lea.vmem %s1, 8
  %7 = vst [vmem:[%s6] sm:$0xff] %v4

// kernel: tile.258
$region0: #{tile.258}
  %s0 = inlined_call_operand.vmem [shape: f32[9,16], index: 0, kind: input, shape index: {}]
  %s1 = inlined_call_operand.vmem [shape: f32[1,144], index: 1, kind: output, shape index: {}]
  $region1: #{tile.258} parent=0
    #allocation0 [shape = 'u8[8192]{0}', space=vmem, size = 0x2000, scoped, tag = 'scoped mem for output reshape']
    %s2 = smov 3
    %v3 = vld [vmem:[%s0] ss:$8 sm:%s2]
    %vm4 = vcmask 130048
    %5 = vst.msk [vmem:[#allocation0] ss:$8 sm:$0x3] %vm4, %v3
    %s6 = scalar_lea.vmem %s0, 7
    %v7 = vld [vmem:[%s6] sm:$0x1]
    %8 = vrot.lane.b32.xlu0 %v7, 112
    %v9 = vpop.permute.xlu0 %8
    %vm10 = vcmask 1048448
    %11 = vst.msk [vmem:[#allocation0] sm:$0x1] %vm10, %v9
    %s12 = scalar_lea.vmem %s0, 6
    %v13 = vld [vmem:[%s12] sm:$0x1]
    %14 = vrot.lane.b32.xlu0 %v13, 96
    %v15 = vpop.permute.xlu0 %14
    %vm16 = vcmask 917248
    %17 = vst.msk [vmem:[#allocation0] sm:$0x1] %vm16, %v15
    %s18 = scalar_lea.vmem %s0, 5
    %v19 = vld [vmem:[%s18] sm:$0x1]
    %20 = vrot.lane.b32.xlu0 %v19, 80
    %v21 = vpop.permute.xlu0 %20
    %vm22 = vcmask 786048
    %23 = vst.msk [vmem:[#allocation0] sm:$0x1] %vm22, %v21
    %s24 = scalar_lea.vmem %s0, 4
    %v25 = vld [vmem:[%s24] sm:$0x1]
    %26 = vrot.lane.b32.xlu0 %v25, 64
    %v27 = vpop.permute.xlu0 %26
    %vm28 = vcmask 654848
    %29 = vst.msk [vmem:[#allocation0] sm:$0x1] %vm28, %v27
    %s30 = scalar_lea.vmem %s0, 3
    %v31 = vld [vmem:[%s30] sm:$0x1]
    %32 = vrot.lane.b32.xlu0 %v31, 48
    %v33 = vpop.permute.xlu0 %32
    %vm34 = vcmask 523648
    %35 = vst.msk [vmem:[#allocation0] sm:$0x1] %vm34, %v33
    %s36 = scalar_lea.vmem %s0, 2
    %v37 = vld [vmem:[%s36] sm:$0x1]
    %38 = vrot.lane.b32.xlu0 %v37, 32
    %v39 = vpop.permute.xlu0 %38
    %vm40 = vcmask 392448
    %41 = vst.msk [vmem:[#allocation0] sm:$0x1] %vm40, %v39
    %s42 = scalar_lea.vmem %s0, 1
    %v43 = vld [vmem:[%s42] sm:$0x1]
    %44 = vrot.lane.b32.xlu0 %v43, 16
    %v45 = vpop.permute.xlu0 %44
    %vm46 = vcmask 261248
    %47 = vst.msk [vmem:[#allocation0] sm:$0x1] %vm46, %v45
    %s49 = ssub.s32 2, 1
    %v50 = vld [vmem:[#allocation0] sm:%s49]
    %s52 = ssub.s32 2, 1
    %53 = vst [vmem:[%s1] sm:%s52] %v50
    %s54 = scalar_lea.vmem [#allocation0], 8
    %v55 = vld [vmem:[%s54] sm:%s49]
    %s57 = ssub.s32 2, 1
    %s58 = scalar_lea.vmem %s1, 1
    %59 = vst [vmem:[%s58] sm:%s57] %v55

// kernel: resnet_forward.65
$region0: #{resnet_forward.65}
  #allocation0 [shape = 'u32[]', space=smem, size = 0x4, offset = 0x4, fixed_abs, tag = 'smem constant byte address 0x4 - core index']
  #allocation1 [shape = 'u32[72,128]{1,0:T(1,128)}', space=vmem, size = 0x9000, scoped, tag = 'internal scratch']
  %s0 = inlined_call_operand.vmem [shape: f32[128,16], index: 0, kind: input, shape index: {}]
  %s1 = inlined_call_operand.vmem [shape: f32[1,16], index: 1, kind: output, shape index: {0}]
  %s2 = inlined_call_operand.vmem [shape: f32[1,16], index: 2, kind: output, shape index: {1}]
  %3 = xla_tuple %s1, %s2
  %s4 = sld [smem:[#allocation0]]
  $region26: #{resnet_forward.65} parent=0
    _
  %s6 = ssub.s32 1, %s4
  %s7 = scalar_select 0, %s6, %s4
  // Predicated region
  $region2: #{resnet_forward.65} parent=0 // pred_check
    _
  $region3: #{resnet_forward.65} parent=0 // pred_check_branch
    %9 = sbr.rel (0) target = $region5
  $region4: #{resnet_forward.65} parent=0 // pred_region
    _
  $region5: #{resnet_forward.65} parent=0 // pred_fallthru
    _
  %p10 = scmp.eq.s32.totalorder 0, 0
  // Predicated region
  $region6: #{resnet_forward.65} parent=0 // pred_check
    %p11 = pneg %p10
  $region7: #{resnet_forward.65} parent=0 // pred_check_branch
    %13 = sbr.rel (%p11) target = $region9
  $region8: #{resnet_forward.65} parent=0 // pred_region
    %vm14 = vcmask 122880
    %15 = vst.msk [vmem:[%s1] sm:$0x1] %vm14, 0.0
    %16 = vst.msk [vmem:[%s2] sm:$0x1] %vm14, 0.0
  $region9: #{resnet_forward.65} parent=0 // pred_fallthru
    _
  %v17 = vld [vmem:[%s0] sm:$0xff]
  %v18 = vld [vmem:[%s0 + $0x8] sm:$0xff]
  %v19 = vld [vmem:[%s0 + $0x10] sm:$0xff]
  %v20 = vld [vmem:[%s0 + $0x18] sm:$0xff]
  %v21 = vld [vmem:[%s0 + $0x20] sm:$0xff]
  %v22 = vld [vmem:[%s0 + $0x28] sm:$0xff]
  %v23 = vld [vmem:[%s0 + $0x30] sm:$0xff]
  %v24 = vld [vmem:[%s0 + $0x38] sm:$0xff]
  %v25 = vld [vmem:[%s0 + $0x40] sm:$0xff]
  %v26 = vld [vmem:[%s0 + $0x48] sm:$0xff]
  %v27 = vld [vmem:[%s0 + $0x50] sm:$0xff]
  %v28 = vld [vmem:[%s0 + $0x58] sm:$0xff]
  %v29 = vld [vmem:[%s0 + $0x60] sm:$0xff]
  %v30 = vld [vmem:[%s0 + $0x68] sm:$0xff]
  %v31 = vld [vmem:[%s0 + $0x70] sm:$0xff]
  %v32 = vld [vmem:[%s0 + $0x78] sm:$0xff]
  %v33 = vld [vmem:[%s1] sm:$0x1]
  %vm34 = vcmask 130048
  %v35 = vsel %vm34, %v17, 0.0
  %v36 = vsel %vm34, %v18, 0.0
  %v37 = vadd.f32 %v35, %v36
  %v38 = vsel %vm34, %v19, 0.0
  %v39 = vadd.f32 %v37, %v38
  %v40 = vsel %vm34, %v20, 0.0
  %v41 = vadd.f32 %v39, %v40
  %v42 = vsel %vm34, %v21, 0.0
  %v43 = vadd.f32 %v41, %v42
  %v44 = vsel %vm34, %v22, 0.0
  %v45 = vadd.f32 %v43, %v44
  %v46 = vsel %vm34, %v23, 0.0
  %v47 = vadd.f32 %v45, %v46
  %v48 = vsel %vm34, %v24, 0.0
  %v49 = vadd.f32 %v47, %v48
  %v50 = vsel %vm34, %v25, 0.0
  %v51 = vadd.f32 %v49, %v50
  %v52 = vsel %vm34, %v26, 0.0
  %v53 = vadd.f32 %v51, %v52
  %v54 = vsel %vm34, %v27, 0.0
  %v55 = vadd.f32 %v53, %v54
  %v56 = vsel %vm34, %v28, 0.0
  %v57 = vadd.f32 %v55, %v56
  %v58 = vsel %vm34, %v29, 0.0
  %v59 = vadd.f32 %v57, %v58
  %v60 = vsel %vm34, %v30, 0.0
  %v61 = vadd.f32 %v59, %v60
  %v62 = vsel %vm34, %v31, 0.0
  %v63 = vadd.f32 %v61, %v62
  %v64 = vsel %vm34, %v32, 0.0
  %v65 = vadd.f32 %v63, %v64
  %v66 = vrot.slane %v65, 4
  %v67 = vadd.f32 %v65, %v66
  %v68 = vrot.slane %v67, 2
  %v69 = vadd.f32 %v67, %v68
  %v70 = vrot.slane %v69, 1
  %v71 = vadd.f32 %v69, %v70
  %v72 = vadd.f32 %v33, %v71
  %vm73 = vcmask 122880
  %74 = vst.msk [vmem:[%s1] sm:$0x1] %vm73, %v72
  %v75 = vld [vmem:[%s2] sm:$0x1]
  %v76 = vmul.f32 %v17, %v17
  %v77 = vmul.f32 %v18, %v18
  %v78 = vmul.f32 %v19, %v19
  %v79 = vmul.f32 %v20, %v20
  %v80 = vmul.f32 %v21, %v21
  %v81 = vmul.f32 %v22, %v22
  %v82 = vmul.f32 %v23, %v23
  %v83 = vmul.f32 %v24, %v24
  %v84 = vmul.f32 %v25, %v25
  %v85 = vmul.f32 %v26, %v26
  %v86 = vmul.f32 %v27, %v27
  %v87 = vmul.f32 %v28, %v28
  %v88 = vmul.f32 %v29, %v29
  %v89 = vmul.f32 %v30, %v30
  %v90 = vmul.f32 %v31, %v31
  %v91 = vmul.f32 %v32, %v32
  %v92 = vsel %vm34, %v76, 0.0
  %v93 = vsel %vm34, %v77, 0.0
  %v94 = vadd.f32 %v92, %v93
  %v95 = vsel %vm34, %v78, 0.0
  %v96 = vadd.f32 %v94, %v95
  %v97 = vsel %vm34, %v79, 0.0
  %v98 = vadd.f32 %v96, %v97
  %v99 = vsel %vm34, %v80, 0.0
  %v100 = vadd.f32 %v98, %v99
  %v101 = vsel %vm34, %v81, 0.0
  %v102 = vadd.f32 %v100, %v101
  %v103 = vsel %vm34, %v82, 0.0
  %v104 = vadd.f32 %v102, %v103
  %v105 = vsel %vm34, %v83, 0.0
  %v106 = vadd.f32 %v104, %v105
  %v107 = vsel %vm34, %v84, 0.0
  %v108 = vadd.f32 %v106, %v107
  %v109 = vsel %vm34, %v85, 0.0
  %v110 = vadd.f32 %v108, %v109
  %v111 = vsel %vm34, %v86, 0.0
  %v112 = vadd.f32 %v110, %v111
  %v113 = vsel %vm34, %v87, 0.0
  %v114 = vadd.f32 %v112, %v113
  %v115 = vsel %vm34, %v88, 0.0
  %v116 = vadd.f32 %v114, %v115
  %v117 = vsel %vm34, %v89, 0.0
  %v118 = vadd.f32 %v116, %v117
  %v119 = vsel %vm34, %v90, 0.0
  %v120 = vadd.f32 %v118, %v119
  %v121 = vsel %vm34, %v91, 0.0
  %v122 = vadd.f32 %v120, %v121
  %v123 = vrot.slane %v122, 4
  %v124 = vadd.f32 %v122, %v123
  %v125 = vrot.slane %v124, 2
  %v126 = vadd.f32 %v124, %v125
  %v127 = vrot.slane %v126, 1
  %v128 = vadd.f32 %v126, %v127
  %v129 = vadd.f32 %v75, %v128
  %130 = vst.msk [vmem:[%s2] sm:$0x1] %vm73, %v129
  // Predicated region
  $region10: #{resnet_forward.65} parent=0 // pred_check
    _
  $region11: #{resnet_forward.65} parent=0 // pred_check_branch
    %132 = sbr.rel (0) target = $region13
  $region12: #{resnet_forward.65} parent=0 // pred_region
    _
  $region13: #{resnet_forward.65} parent=0 // pred_fallthru
    _
  // Predicated region
  $region14: #{resnet_forward.65} parent=0 // pred_check
    _
  $region15: #{resnet_forward.65} parent=0 // pred_check_branch
    %134 = sbr.rel (0) target = $region17
  $region16: #{resnet_forward.65} parent=0 // pred_region
    _
  $region17: #{resnet_forward.65} parent=0 // pred_fallthru
    _
  // Predicated region
  $region18: #{resnet_forward.65} parent=0 // pred_check
    _
  $region19: #{resnet_forward.65} parent=0 // pred_check_branch
    %136 = sbr.rel (0) target = $region21
  $region20: #{resnet_forward.65} parent=0 // pred_region
    _
  $region21: #{resnet_forward.65} parent=0 // pred_fallthru
    _
  // Predicated region
  $region22: #{resnet_forward.65} parent=0 // pred_check
    _
  $region23: #{resnet_forward.65} parent=0 // pred_check_branch
    %138 = sbr.rel (0) target = $region25
  $region24: #{resnet_forward.65} parent=0 // pred_region
    _
  $region25: #{resnet_forward.65} parent=0 // pred_fallthru
    _

// kernel: resnet_forward.71
$region0: #{resnet_forward.71}
  #allocation0 [shape = 'u32[]', space=smem, size = 0x4, offset = 0x4, fixed_abs, tag = 'smem constant byte address 0x4 - core index']
  #allocation1 [shape = 'u32[72,128]{1,0:T(1,128)}', space=vmem, size = 0x9000, scoped, tag = 'internal scratch']
  #allocation2 [shape = 'f32[128,128]{1,0:T(8,128)}', space=vmem, size = 0x10000, scoped, tag = 'scratch operand']
  %s0 = inlined_call_operand.vmem [shape: bf16[128,256], index: 0, kind: input, shape index: {}]
  %s1 = inlined_call_operand.vmem [shape: bf16[256,128], index: 1, kind: input, shape index: {}]
  %s2 = inlined_call_operand.vmem [shape: f32[1,256], index: 2, kind: input, shape index: {}]
  %s3 = inlined_call_operand.vmem [shape: f32[1,256], index: 3, kind: input, shape index: {}]
  %s4 = inlined_call_operand.vmem [shape: f32[128,128], index: 4, kind: output, shape index: {}]
  %s5 = sld [smem:[#allocation0]]
  $region98: #{resnet_forward.71} parent=0
    _
  %s7 = ssub.s32 1, %s5
  %s8 = scalar_select 0, %s7, %s5
  $region1: #{resnet_forward.71} parent=0
    #allocation3 [shape = 'u8[65536]{0}', space=vmem, size = 0x10000, scoped, tag = 'input window, operand 0']
    loop: start=0, step=1, limit=4
    $region2: #{resnet_forward.71} parent=1 // loop_pre_header
      _
    $region3: #{resnet_forward.71} parent=1 // loop_header
      %s10 = sphi 0, %s14
      %p11 = scmp.ge.s32.totalorder %s10, 4
      %s17 = sphi 0, %s36
      %s18 = sphi 0, %s32
      %s19 = sphi 0, %s28
      %s20 = sphi 0, %s17
      %s21 = sphi 0, %s18
      %s22 = sphi 0, %s19
      %s23 = sphi 0, %s20
      %s24 = sphi 0, %s21
      %s25 = sphi 0, %s22
      %s41 = sphi 0, %s43
      %s44 = sphi 0, %s41
      %s45 = sphi 0, %s44
      %s61 = sphi 0, %s45
      %s69 = sphi 0, %s71
      %s72 = sphi 0, %s69
      %s73 = sphi 0, %s72
      %s89 = sphi 0, %s73
      %s95 = sphi 0, %s97
      %s98 = sphi 0, %s95
      %s99 = sphi 0, %s98
      %s115 = sphi 0, %s99
      %s121 = sphi 0, %s123
      %s124 = sphi 0, %s121
      %s125 = sphi 0, %s124
      %s141 = sphi 0, %s125
      %s149 = sphi 0, %s151
      %s152 = sphi 0, %s149
      %s153 = sphi 0, %s152
      %s169 = sphi 0, %s153
    $region4: #{resnet_forward.71} parent=1 // loop_header_branch
      %13 = sbr.rel (%p11) target = $region8
    $region5: #{resnet_forward.71} parent=1 // loop_body
      %s15 = ssub.s32 %s10, 1
      %s16 = ssub.s32 %s10, 2
      %s26 = sadd.s32 1, %s19
      %p27 = scmp.ge.s32.totalorder %s26, 2
      %s28 = scalar_select %p27, 0, %s26
      %s29 = sadd.s32 1, %s18
      %s30 = scalar_select %p27, %s29, %s18
      %p31 = scmp.ge.s32.totalorder %s30, 1
      %s32 = scalar_select %p31, 0, %s30
      %s33 = sadd.s32 1, %s17
      %s34 = scalar_select %p31, %s33, %s17
      %p35 = scmp.ge.s32.totalorder %s34, 1
      %s36 = scalar_select %p35, 0, %s34
      %s37 = ssub.s32 %s17, %s36
      %s38 = ssub.s32 %s19, %s28
      %s39 = sor.u32 %s37, %s38
      %p40 = scmp.eq.s32.totalorder %s39, 0
      %s42 = sadd.s32 %s41, 1
      %s43 = scalar_select %p40, %s41, %s42
      %p46 = pneg %p40
      %p47 = scmp.eq.s32.totalorder %s10, 1
      %p48 = por %p46, %p47
      %p49 = scmp.ne.s32.totalorder %s41, %s44
      %p50 = scmp.eq.s32.totalorder %s10, 0
      %p51 = por %p49, %p50
      %p52 = scmp.ne.s32.totalorder %s41, %s44
      %p53 = scmp.eq.s32.totalorder %s15, 1
      %p54 = por %p52, %p53
      %p55 = scmp.ne.s32.totalorder %s44, %s45
      %p56 = scmp.eq.s32.totalorder %s15, 0
      %p57 = por %p55, %p56
      %p58 = scmp.ne.s32.totalorder %s44, %s45
      %p59 = scmp.eq.s32.totalorder %s16, 1
      %p60 = por %p58, %p59
      %p62 = scmp.ne.s32.totalorder %s45, %s61
      %p63 = scmp.eq.s32.totalorder %s16, 0
      %p64 = por %p62, %p63
      %s65 = ssub.s32 %s19, %s28
      %s66 = ssub.s32 %s18, %s32
      %s67 = sor.u32 %s65, %s66
      %p68 = scmp.eq.s32.totalorder %s67, 0
      %s70 = sadd.s32 %s69, 1
      %s71 = scalar_select %p68, %s69, %s70
      %p74 = pneg %p68
      %p75 = scmp.eq.s32.totalorder %s10, 1
      %p76 = por %p74, %p75
      %p77 = scmp.ne.s32.totalorder %s69, %s72
      %p78 = scmp.eq.s32.totalorder %s10, 0
      %p79 = por %p77, %p78
      %p80 = scmp.ne.s32.totalorder %s69, %s72
      %p81 = scmp.eq.s32.totalorder %s15, 1
      %p82 = por %p80, %p81
      %p83 = scmp.ne.s32.totalorder %s72, %s73
      %p84 = scmp.eq.s32.totalorder %s15, 0
      %p85 = por %p83, %p84
      %p86 = scmp.ne.s32.totalorder %s72, %s73
      %p87 = scmp.eq.s32.totalorder %s16, 1
      %p88 = por %p86, %p87
      %p90 = scmp.ne.s32.totalorder %s73, %s89
      %p91 = scmp.eq.s32.totalorder %s16, 0
      %p92 = por %p90, %p91
      %s93 = ssub.s32 %s19, %s28
      %p94 = scmp.eq.s32.totalorder %s93, 0
      %s96 = sadd.s32 %s95, 1
      %s97 = scalar_select %p94, %s95, %s96
      %p100 = pneg %p94
      %p101 = scmp.eq.s32.totalorder %s10, 1
      %p102 = por %p100, %p101
      %p103 = scmp.ne.s32.totalorder %s95, %s98
      %p104 = scmp.eq.s32.totalorder %s10, 0
      %p105 = por %p103, %p104
      %p106 = scmp.ne.s32.totalorder %s95, %s98
      %p107 = scmp.eq.s32.totalorder %s15, 1
      %p108 = por %p106, %p107
      %p109 = scmp.ne.s32.totalorder %s98, %s99
      %p110 = scmp.eq.s32.totalorder %s15, 0
      %p111 = por %p109, %p110
      %p112 = scmp.ne.s32.totalorder %s98, %s99
      %p113 = scmp.eq.s32.totalorder %s16, 1
      %p114 = por %p112, %p113
      %p116 = scmp.ne.s32.totalorder %s99, %s115
      %p117 = scmp.eq.s32.totalorder %s16, 0
      %p118 = por %p116, %p117
      %s119 = ssub.s32 %s19, %s28
      %p120 = scmp.eq.s32.totalorder %s119, 0
      %s122 = sadd.s32 %s121, 1
      %s123 = scalar_select %p120, %s121, %s122
      %p126 = pneg %p120
      %p127 = scmp.eq.s32.totalorder %s10, 1
      %p128 = por %p126, %p127
      %p129 = scmp.ne.s32.totalorder %s121, %s124
      %p130 = scmp.eq.s32.totalorder %s10, 0
      %p131 = por %p129, %p130
      %p132 = scmp.ne.s32.totalorder %s121, %s124
      %p133 = scmp.eq.s32.totalorder %s15, 1
      %p134 = por %p132, %p133
      %p135 = scmp.ne.s32.totalorder %s124, %s125
      %p136 = scmp.eq.s32.totalorder %s15, 0
      %p137 = por %p135, %p136
      %p138 = scmp.ne.s32.totalorder %s124, %s125
      %p139 = scmp.eq.s32.totalorder %s16, 1
      %p140 = por %p138, %p139
      %p142 = scmp.ne.s32.totalorder %s125, %s141
      %p143 = scmp.eq.s32.totalorder %s16, 0
      %p144 = por %p142, %p143
      %s145 = ssub.s32 %s17, %s36
      %s146 = ssub.s32 %s18, %s32
      %s147 = sor.u32 %s145, %s146
      %p148 = scmp.eq.s32.totalorder %s147, 0
      %s150 = sadd.s32 %s149, 1
      %s151 = scalar_select %p148, %s149, %s150
      %p154 = pneg %p148
      %p155 = scmp.eq.s32.totalorder %s10, 1
      %p156 = por %p154, %p155
      %p157 = scmp.ne.s32.totalorder %s149, %s152
      %p158 = scmp.eq.s32.totalorder %s10, 0
      %p159 = por %p157, %p158
      %p160 = scmp.ne.s32.totalorder %s149, %s152
      %p161 = scmp.eq.s32.totalorder %s15, 1
      %p162 = por %p160, %p161
      %p163 = scmp.ne.s32.totalorder %s152, %s153
      %p164 = scmp.eq.s32.totalorder %s15, 0
      %p165 = por %p163, %p164
      %p166 = scmp.ne.s32.totalorder %s152, %s153
      %p167 = scmp.eq.s32.totalorder %s16, 1
      %p168 = por %p166, %p167
      %p170 = scmp.ne.s32.totalorder %s153, %s169
      %p171 = scmp.eq.s32.totalorder %s16, 0
      %p172 = por %p170, %p171
      %p173 = scmp.le.s32.totalorder 1, %s10
      %p174 = scmp.lt.s32.totalorder %s10, 3
      %p175 = pnand %p173, %p174
      %p176 = pneg %p175
      // Predicated region
      $region9: #{resnet_forward.71} parent=5 // pred_check
        _
      $region10: #{resnet_forward.71} parent=5 // pred_check_branch
        %178 = sbr.rel (%p175) target = $region12
      $region11: #{resnet_forward.71} parent=5 // pred_region
        %s179 = ssub.s32 %s10, 1
      $region12: #{resnet_forward.71} parent=5 // pred_fallthru
        _
      %p180 = scmp.lt.s32.totalorder %s10, 2
      // Predicated region
      $region13: #{resnet_forward.71} parent=5 // pred_check
        %p181 = pneg %p180
      $region14: #{resnet_forward.71} parent=5 // pred_check_branch
        %183 = sbr.rel (%p181) target = $region16
      $region15: #{resnet_forward.71} parent=5 // pred_region
        // Predicated region
        $region17: #{resnet_forward.71} parent=15 // pred_check
          %p184 = pneg %p51
        $region18: #{resnet_forward.71} parent=15 // pred_check_branch
          %186 = sbr.rel (%p184) target = $region20
        $region19: #{resnet_forward.71} parent=15 // pred_region
          %s187 = sand.u32 %s41, 1
          %s188 = sand.u32 %s41, 1
          %s189 = smul.addr %s188, 64
          %s190 = scalar_lea.vmem [#allocation3], %s189
          %s191 = smul.u32 16, %s17
          %s192 = smul.addr %s191, 2
          %s193 = sadd.s32 %s19, %s192
          %s194 = smul.addr %s193, 4
          %s195 = scalar_lea.vmem %s0, %s194
          // Predicated region
          $region21: #{resnet_forward.71} parent=19 // pred_check
            _
          $region22: #{resnet_forward.71} parent=19 // pred_check_branch
            %197 = sbr.rel (0) target = $region24
          $region23: #{resnet_forward.71} parent=19 // pred_region
            // Predicated region
            $region25: #{resnet_forward.71} parent=23 // pred_check
              _
            $region26: #{resnet_forward.71} parent=23 // pred_check_branch
              %199 = sbr.rel target = $region28
            $region27: #{resnet_forward.71} parent=23 // pred_region
              // Predicated region
              $region40: #{resnet_forward.71} parent=27 // pred_check
                _
              $region41: #{resnet_forward.71} parent=27 // pred_check_branch
                %245 = sbr.rel (0) target = $region43
              $region42: #{resnet_forward.71} parent=27 // pred_region
                loop: start=0, step=1, limit=1
                $region44: #{resnet_forward.71} parent=42 // loop_pre_header
                  _
                $region45: #{resnet_forward.71} parent=42 // loop_header
                  %s247 = sphi 0, %s251
                  %p248 = scmp.ge.s32.totalorder %s247, 1
                  %s252 = sphi %s195, %s195
                  %s253 = sphi %s190, %s190
                $region46: #{resnet_forward.71} parent=42 // loop_header_branch
                  %250 = sbr.rel (%p248) target = $region50
                $region47: #{resnet_forward.71} parent=42 // loop_body
                  _
                $region48: #{resnet_forward.71} parent=42 // loop_footer
                  %s251 = sadd.s32 1, %s247
                $region49: #{resnet_forward.71} parent=42 // loop_footer_branch
                  %246 = sbr.rel target = $region45
                $region50: #{resnet_forward.71} parent=42 // loop_exit
                  _
                %s255 = ssub.s32 16, 1
                loop: start=0, step=1, limit=1
                $region51: #{resnet_forward.71} parent=42 // loop_pre_header
                  _
                $region52: #{resnet_forward.71} parent=42 // loop_header
                  %s257 = sphi 0, %s261
                  %p258 = scmp.ge.s32.totalorder %s257, 1
                  %s262 = sphi %s195, %s195
                  %s263 = sphi %s190, %s190
                $region53: #{resnet_forward.71} parent=42 // loop_header_branch
                  %260 = sbr.rel (%p258) target = $region57
                $region54: #{resnet_forward.71} parent=42 // loop_body
                  %v264 = vld [vmem:[%s262] sm:%s255]
                  %265 = vst [vmem:[%s263] sm:%s255] %v264
                  %v266 = vld [vmem:[%s262 + $0x8] sm:%s255]
                  %267 = vst [vmem:[%s263 + $0x4] sm:%s255] %v266
                  %v268 = vld [vmem:[%s262 + $0x10] sm:%s255]
                  %269 = vst [vmem:[%s263 + $0x8] sm:%s255] %v268
                  %v270 = vld [vmem:[%s262 + $0x18] sm:%s255]
                  %271 = vst [vmem:[%s263 + $0xc] sm:%s255] %v270
                  %v272 = vld [vmem:[%s262 + $0x20] sm:%s255]
                  %273 = vst [vmem:[%s263 + $0x10] sm:%s255] %v272
                  %v274 = vld [vmem:[%s262 + $0x28] sm:%s255]
                  %275 = vst [vmem:[%s263 + $0x14] sm:%s255] %v274
                  %v276 = vld [vmem:[%s262 + $0x30] sm:%s255]
                  %277 = vst [vmem:[%s263 + $0x18] sm:%s255] %v276
                  %v278 = vld [vmem:[%s262 + $0x38] sm:%s255]
                  %279 = vst [vmem:[%s263 + $0x1c] sm:%s255] %v278
                  %v280 = vld [vmem:[%s262 + $0x40] sm:%s255]
                  %281 = vst [vmem:[%s263 + $0x20] sm:%s255] %v280
                  %v282 = vld [vmem:[%s262 + $0x48] sm:%s255]
                  %283 = vst [vmem:[%s263 + $0x24] sm:%s255] %v282
                  %v284 = vld [vmem:[%s262 + $0x50] sm:%s255]
                  %285 = vst [vmem:[%s263 + $0x28] sm:%s255] %v284
                  %v286 = vld [vmem:[%s262 + $0x58] sm:%s255]
                  %287 = vst [vmem:[%s263 + $0x2c] sm:%s255] %v286
                  %v288 = vld [vmem:[%s262 + $0x60] sm:%s255]
                  %289 = vst [vmem:[%s263 + $0x30] sm:%s255] %v288
                  %v290 = vld [vmem:[%s262 + $0x68] sm:%s255]
                  %291 = vst [vmem:[%s263 + $0x34] sm:%s255] %v290
                  %v292 = vld [vmem:[%s262 + $0x70] sm:%s255]
                  %293 = vst [vmem:[%s263 + $0x38] sm:%s255] %v292
                  %v294 = vld [vmem:[%s262 + $0x78] sm:%s255]
                  %295 = vst [vmem:[%s263 + $0x3c] sm:%s255] %v294
                $region55: #{resnet_forward.71} parent=42 // loop_footer
                  %s261 = sadd.s32 1, %s257
                $region56: #{resnet_forward.71} parent=42 // loop_footer_branch
                  %256 = sbr.rel target = $region52
                $region57: #{resnet_forward.71} parent=42 // loop_exit
                  _
              $region43: #{resnet_forward.71} parent=27 // pred_fallthru
                _
            $region28: #{resnet_forward.71} parent=23 // pred_fallthru
              _
            // Predicated region
            $region29: #{resnet_forward.71} parent=23 // pred_check
              _
            $region30: #{resnet_forward.71} parent=23 // pred_check_branch
              %201 = sbr.rel (0) target = $region32
            $region31: #{resnet_forward.71} parent=23 // pred_region
              %s203 = ssub.s32 16, 1
              loop: start=0, step=1, limit=1
              $region33: #{resnet_forward.71} parent=31 // loop_pre_header
                _
              $region34: #{resnet_forward.71} parent=31 // loop_header
                %s205 = sphi 0, %s209
                %p206 = scmp.ge.s32.totalorder %s205, 1
                %s210 = sphi %s195, %s195
                %s211 = sphi %s190, %s190
              $region35: #{resnet_forward.71} parent=31 // loop_header_branch
                %208 = sbr.rel (%p206) target = $region39
              $region36: #{resnet_forward.71} parent=31 // loop_body
                %v212 = vld [vmem:[%s210] sm:%s203]
                %213 = vst [vmem:[%s211] sm:%s203] %v212
                %v214 = vld [vmem:[%s210 + $0x8] sm:%s203]
                %215 = vst [vmem:[%s211 + $0x4] sm:%s203] %v214
                %v216 = vld [vmem:[%s210 + $0x10] sm:%s203]
                %217 = vst [vmem:[%s211 + $0x8] sm:%s203] %v216
                %v218 = vld [vmem:[%s210 + $0x18] sm:%s203]
                %219 = vst [vmem:[%s211 + $0xc] sm:%s203] %v218
                %v220 = vld [vmem:[%s210 + $0x20] sm:%s203]
                %221 = vst [vmem:[%s211 + $0x10] sm:%s203] %v220
                %v222 = vld [vmem:[%s210 + $0x28] sm:%s203]
                %223 = vst [vmem:[%s211 + $0x14] sm:%s203] %v222
                %v224 = vld [vmem:[%s210 + $0x30] sm:%s203]
                %225 = vst [vmem:[%s211 + $0x18] sm:%s203] %v224
                %v226 = vld [vmem:[%s210 + $0x38] sm:%s203]
                %227 = vst [vmem:[%s211 + $0x1c] sm:%s203] %v226
                %v228 = vld [vmem:[%s210 + $0x40] sm:%s203]
                %229 = vst [vmem:[%s211 + $0x20] sm:%s203] %v228
                %v230 = vld [vmem:[%s210 + $0x48] sm:%s203]
                %231 = vst [vmem:[%s211 + $0x24] sm:%s203] %v230
                %v232 = vld [vmem:[%s210 + $0x50] sm:%s203]
                %233 = vst [vmem:[%s211 + $0x28] sm:%s203] %v232
                %v234 = vld [vmem:[%s210 + $0x58] sm:%s203]
                %235 = vst [vmem:[%s211 + $0x2c] sm:%s203] %v234
                %v236 = vld [vmem:[%s210 + $0x60] sm:%s203]
                %237 = vst [vmem:[%s211 + $0x30] sm:%s203] %v236
                %v238 = vld [vmem:[%s210 + $0x68] sm:%s203]
                %239 = vst [vmem:[%s211 + $0x34] sm:%s203] %v238
                %v240 = vld [vmem:[%s210 + $0x70] sm:%s203]
                %241 = vst [vmem:[%s211 + $0x38] sm:%s203] %v240
                %v242 = vld [vmem:[%s210 + $0x78] sm:%s203]
                %243 = vst [vmem:[%s211 + $0x3c] sm:%s203] %v242
              $region37: #{resnet_forward.71} parent=31 // loop_footer
                %s209 = sadd.s32 1, %s205
              $region38: #{resnet_forward.71} parent=31 // loop_footer_branch
                %204 = sbr.rel target = $region34
              $region39: #{resnet_forward.71} parent=31 // loop_exit
                _
            $region32: #{resnet_forward.71} parent=23 // pred_fallthru
              _
          $region24: #{resnet_forward.71} parent=19 // pred_fallthru
            _
          %296 = vnop
        $region20: #{resnet_forward.71} parent=15 // pred_fallthru
          _
        // Predicated region
        $region58: #{resnet_forward.71} parent=15 // pred_check
          %p297 = pneg %p79
        $region59: #{resnet_forward.71} parent=15 // pred_check_branch
          %299 = sbr.rel (%p297) target = $region61
        $region60: #{resnet_forward.71} parent=15 // pred_region
          %s300 = smul.u32 16, %s19
          %p301 = scmp.lt.s32.totalorder %s300, 31
          %s302 = scalar_select %p301, %s300, 31
          %p303 = scmp.lt.s32.totalorder %s18, 0
          %s304 = scalar_select %p303, %s18, 0
          %s305 = sadd.s32 %s304, %s302
          %s306 = smul.addr %s305, 4
          %s307 = scalar_lea.vmem %s1, %s306
          %s308 = smul.u32 16, %s19
        $region61: #{resnet_forward.71} parent=15 // pred_fallthru
          _
        // Predicated region
        $region62: #{resnet_forward.71} parent=15 // pred_check
          %p309 = pneg %p105
        $region63: #{resnet_forward.71} parent=15 // pred_check_branch
          %311 = sbr.rel (%p309) target = $region65
        $region64: #{resnet_forward.71} parent=15 // pred_region
          %p312 = scmp.lt.s32.totalorder %s19, 1
          %s313 = scalar_select %p312, %s19, 1
          %s314 = scalar_lea.vmem %s2, %s313
        $region65: #{resnet_forward.71} parent=15 // pred_fallthru
          _
        // Predicated region
        $region66: #{resnet_forward.71} parent=15 // pred_check
          %p315 = pneg %p131
        $region67: #{resnet_forward.71} parent=15 // pred_check_branch
          %317 = sbr.rel (%p315) target = $region69
        $region68: #{resnet_forward.71} parent=15 // pred_region
          %p318 = scmp.lt.s32.totalorder %s19, 1
          %s319 = scalar_select %p318, %s19, 1
          %s320 = scalar_lea.vmem %s3, %s319
        $region69: #{resnet_forward.71} parent=15 // pred_fallthru
          _
      $region16: #{resnet_forward.71} parent=5 // pred_fallthru
        _
      %p321 = scmp.le.s32.totalorder 1, %s10
      %p322 = scmp.lt.s32.totalorder %s10, 3
      %p323 = pnand %p321, %p322
      %p324 = pneg %p323
      // Predicated region
      $region70: #{resnet_forward.71} parent=5 // pred_check
        _
      $region71: #{resnet_forward.71} parent=5 // pred_check_branch
        %326 = sbr.rel (%p323) target = $region73
      $region72: #{resnet_forward.71} parent=5 // pred_region
        %s327 = ssub.s32 %s10, 1
        %s328 = sand.u32 %s44, 1
        %s329 = sand.u32 %s44, 1
        %s330 = smul.addr %s329, 64
        %s331 = scalar_lea.vmem [#allocation3], %s330
        // Predicated region
        $region74: #{resnet_forward.71} parent=72 // pred_check
          %p332 = pneg %p57
        $region75: #{resnet_forward.71} parent=72 // pred_check_branch
          %334 = sbr.rel (%p332) target = $region77
        $region76: #{resnet_forward.71} parent=72 // pred_region
          _
        $region77: #{resnet_forward.71} parent=72 // pred_fallthru
          _
        %s335 = sand.u32 %s44, 1
        %s336 = sand.u32 %s44, 1
        %s337 = smul.addr %s336, 64
        %s338 = scalar_lea.vmem [#allocation3], %s337
        %p339 = pneg %p57
        %p340 = pneg %p54
        %s341 = smul.u32 16, %s22
        %p342 = scmp.lt.s32.totalorder %s341, 31
        %s343 = scalar_select %p342, %s341, 31
        %p344 = scmp.lt.s32.totalorder %s21, 0
        %s345 = scalar_select %p344, %s21, 0
        %s346 = sadd.s32 %s345, %s343
        %s347 = smul.addr %s346, 4
        %s348 = scalar_lea.vmem %s1, %s347
        %p349 = pneg %p85
        %p350 = pneg %p82
        %p351 = scmp.lt.s32.totalorder %s22, 1
        %s352 = scalar_select %p351, %s22, 1
        %s353 = scalar_lea.vmem %s2, %s352
        %p354 = pneg %p111
        %p355 = pneg %p108
        %p356 = scmp.lt.s32.totalorder %s22, 1
        %s357 = scalar_select %p356, %s22, 1
        %s358 = scalar_lea.vmem %s3, %s357
        %p359 = pneg %p137
        %p360 = pneg %p134
        %p361 = pneg %p165
        %p362 = pneg %p162
        %s363 = smul.u32 16, %s20
        %p364 = scmp.lt.s32.totalorder %s363, 15
        %s365 = scalar_select %p364, %s363, 15
        %p366 = scmp.lt.s32.totalorder %s21, 0
        %s367 = scalar_select %p366, %s21, 0
        %s368 = sadd.s32 %s367, %s365
        %s369 = smul.addr %s368, 8
        %s370 = scalar_lea.vmem %s4, %s369
        %s371 = smul.u32 16, %s20
        %s372 = smul.u32 16, %s22
        %p373 = scmp.lt.s32.totalorder %s372, 31
        %s374 = scalar_select %p373, %s372, 31
        %p375 = scmp.lt.s32.totalorder %s21, 0
        %s376 = scalar_select %p375, %s21, 0
        %s377 = sadd.s32 %s376, %s374
        %s378 = smul.addr %s377, 4
        %s379 = scalar_lea.vmem %s1, %s378
        %s380 = smul.u32 16, %s22
        %p381 = scmp.lt.s32.totalorder %s22, 1
        %s382 = scalar_select %p381, %s22, 1
        %s383 = scalar_lea.vmem %s2, %s382
        %p384 = scmp.lt.s32.totalorder %s22, 1
        %s385 = scalar_select %p384, %s22, 1
        %s386 = scalar_lea.vmem %s3, %s385
        %s387 = smul.u32 16, %s20
        %p388 = scmp.lt.s32.totalorder %s387, 15
        %s389 = scalar_select %p388, %s387, 15
        %p390 = scmp.lt.s32.totalorder %s21, 0
        %s391 = scalar_select %p390, %s21, 0
        %s392 = sadd.s32 %s391, %s389
        %s393 = smul.addr %s392, 8
        %s394 = scalar_lea.vmem %s4, %s393
        %s395 = smul.u32 16, %s20
        %p396 = scmp.eq.s32.totalorder %s22, 0
        // Predicated region
        $region78: #{resnet_forward.71} parent=72 // pred_check
          %p397 = pneg %p396
        $region79: #{resnet_forward.71} parent=72 // pred_check_branch
          %399 = sbr.rel (%p397) target = $region81
        $region80: #{resnet_forward.71} parent=72 // pred_region
          %400 = vst [vmem:[#allocation2] sm:$0xff] 0.0
          %401 = vst [vmem:[#allocation2 + $0x8] sm:$0xff] 0.0
          %402 = vst [vmem:[#allocation2 + $0x10] sm:$0xff] 0.0
          %403 = vst [vmem:[#allocation2 + $0x18] sm:$0xff] 0.0
          %404 = vst [vmem:[#allocation2 + $0x20] sm:$0xff] 0.0
          %405 = vst [vmem:[#allocation2 + $0x28] sm:$0xff] 0.0
          %406 = vst [vmem:[#allocation2 + $0x30] sm:$0xff] 0.0
          %407 = vst [vmem:[#allocation2 + $0x38] sm:$0xff] 0.0
          %408 = vst [vmem:[#allocation2 + $0x40] sm:$0xff] 0.0
          %409 = vst [vmem:[#allocation2 + $0x48] sm:$0xff] 0.0
          %410 = vst [vmem:[#allocation2 + $0x50] sm:$0xff] 0.0
          %411 = vst [vmem:[#allocation2 + $0x58] sm:$0xff] 0.0
          %412 = vst [vmem:[#allocation2 + $0x60] sm:$0xff] 0.0
          %413 = vst [vmem:[#allocation2 + $0x68] sm:$0xff] 0.0
          %414 = vst [vmem:[#allocation2 + $0x70] sm:$0xff] 0.0
          %415 = vst [vmem:[#allocation2 + $0x78] sm:$0xff] 0.0
        $region81: #{resnet_forward.71} parent=72 // pred_fallthru
          _
        %v416 = vld [vmem:[%s331] sm:$0xf]
        %v417 = vld [vmem:[%s331 + $0x4] sm:$0xf]
        %v418 = vld [vmem:[%s331 + $0x8] sm:$0xf]
        %v419 = vld [vmem:[%s331 + $0xc] sm:$0xf]
        %v420 = vld [vmem:[%s331 + $0x10] sm:$0xf]
        %v421 = vld [vmem:[%s331 + $0x14] sm:$0xf]
        %v422 = vld [vmem:[%s331 + $0x18] sm:$0xf]
        %v423 = vld [vmem:[%s331 + $0x1c] sm:$0xf]
        %v424 = vld [vmem:[%s331 + $0x20] sm:$0xf]
        %v425 = vld [vmem:[%s331 + $0x24] sm:$0xf]
        %v426 = vld [vmem:[%s331 + $0x28] sm:$0xf]
        %v427 = vld [vmem:[%s331 + $0x2c] sm:$0xf]
        %v428 = vld [vmem:[%s331 + $0x30] sm:$0xf]
        %v429 = vld [vmem:[%s331 + $0x34] sm:$0xf]
        %v430 = vld [vmem:[%s331 + $0x38] sm:$0xf]
        %v431 = vld [vmem:[%s331 + $0x3c] sm:$0xf]
        %v432 = vunpack.c.l.bf16 %v416
        %v433 = vunpack.c.l.bf16 %v417
        %v434 = vunpack.c.l.bf16 %v418
        %v435 = vunpack.c.l.bf16 %v419
        %v436 = vunpack.c.l.bf16 %v420
        %v437 = vunpack.c.l.bf16 %v421
        %v438 = vunpack.c.l.bf16 %v422
        %v439 = vunpack.c.l.bf16 %v423
        %v440 = vunpack.c.l.bf16 %v424
        %v441 = vunpack.c.l.bf16 %v425
        %v442 = vunpack.c.l.bf16 %v426
        %v443 = vunpack.c.l.bf16 %v427
        %v444 = vunpack.c.l.bf16 %v428
        %v445 = vunpack.c.l.bf16 %v429
        %v446 = vunpack.c.l.bf16 %v430
        %v447 = vunpack.c.l.bf16 %v431
        %v448 = vld [vmem:[%s383] sm:$0x1]
        %v450 = vperm.slane %v448, 0
        %v452 = vmul.f32 %v432, %v450
        %v453 = vmul.f32 %v433, %v450
        %v454 = vmul.f32 %v434, %v450
        %v455 = vmul.f32 %v435, %v450
        %v456 = vmul.f32 %v436, %v450
        %v457 = vmul.f32 %v437, %v450
        %v458 = vmul.f32 %v438, %v450
        %v459 = vmul.f32 %v439, %v450
        %v460 = vmul.f32 %v440, %v450
        %v461 = vmul.f32 %v441, %v450
        %v462 = vmul.f32 %v442, %v450
        %v463 = vmul.f32 %v443, %v450
        %v464 = vmul.f32 %v444, %v450
        %v465 = vmul.f32 %v445, %v450
        %v466 = vmul.f32 %v446, %v450
        %v467 = vmul.f32 %v447, %v450
        %v468 = vld [vmem:[%s386] sm:$0x1]
        %v470 = vperm.slane %v468, 0
        %v472 = vadd.f32 %v452, %v470
        %v473 = vadd.f32 %v453, %v470
        %v474 = vadd.f32 %v454, %v470
        %v475 = vadd.f32 %v455, %v470
        %v476 = vadd.f32 %v456, %v470
        %v477 = vadd.f32 %v457, %v470
        %v478 = vadd.f32 %v458, %v470
        %v479 = vadd.f32 %v459, %v470
        %v480 = vadd.f32 %v460, %v470
        %v481 = vadd.f32 %v461, %v470
        %v482 = vadd.f32 %v462, %v470
        %v483 = vadd.f32 %v463, %v470
        %v484 = vadd.f32 %v464, %v470
        %v485 = vadd.f32 %v465, %v470
        %v486 = vadd.f32 %v466, %v470
        %v487 = vadd.f32 %v467, %v470
        %v488 = vmax.f32 %v472, 0.0
        %v489 = vmax.f32 %v473, 0.0
        %v490 = vmax.f32 %v474, 0.0
        %v491 = vmax.f32 %v475, 0.0
        %v492 = vmax.f32 %v476, 0.0
        %v493 = vmax.f32 %v477, 0.0
        %v494 = vmax.f32 %v478, 0.0
        %v495 = vmax.f32 %v479, 0.0
        %v496 = vmax.f32 %v480, 0.0
        %v497 = vmax.f32 %v481, 0.0
        %v498 = vmax.f32 %v482, 0.0
        %v499 = vmax.f32 %v483, 0.0
        %v500 = vmax.f32 %v484, 0.0
        %v501 = vmax.f32 %v485, 0.0
        %v502 = vmax.f32 %v486, 0.0
        %v503 = vmax.f32 %v487, 0.0
        %v504 = vpack.c.bf16 %v489, %v488
        %v505 = vpack.c.bf16 %v491, %v490
        %v506 = vpack.c.bf16 %v493, %v492
        %v507 = vpack.c.bf16 %v495, %v494
        %v508 = vpack.c.bf16 %v497, %v496
        %v509 = vpack.c.bf16 %v499, %v498
        %v510 = vpack.c.bf16 %v501, %v500
        %v511 = vpack.c.bf16 %v503, %v502
        %v512 = vld [vmem:[#allocation2] sm:$0xff]
        %v513 = vld [vmem:[#allocation2 + $0x8] sm:$0xff]
        %v514 = vld [vmem:[#allocation2 + $0x10] sm:$0xff]
        %v515 = vld [vmem:[#allocation2 + $0x18] sm:$0xff]
        %v516 = vld [vmem:[#allocation2 + $0x20] sm:$0xff]
        %v517 = vld [vmem:[#allocation2 + $0x28] sm:$0xff]
        %v518 = vld [vmem:[#allocation2 + $0x30] sm:$0xff]
        %v519 = vld [vmem:[#allocation2 + $0x38] sm:$0xff]
        %v520 = vld [vmem:[#allocation2 + $0x40] sm:$0xff]
        %v521 = vld [vmem:[#allocation2 + $0x48] sm:$0xff]
        %v522 = vld [vmem:[#allocation2 + $0x50] sm:$0xff]
        %v523 = vld [vmem:[#allocation2 + $0x58] sm:$0xff]
        %v524 = vld [vmem:[#allocation2 + $0x60] sm:$0xff]
        %v525 = vld [vmem:[#allocation2 + $0x68] sm:$0xff]
        %v526 = vld [vmem:[#allocation2 + $0x70] sm:$0xff]
        %v527 = vld [vmem:[#allocation2 + $0x78] sm:$0xff]
        %v528 = vld [vmem:[%s379] sm:$0xf]
        %v529 = vld [vmem:[%s379 + $0x4] sm:$0xf]
        %v530 = vld [vmem:[%s379 + $0x8] sm:$0xf]
        %v531 = vld [vmem:[%s379 + $0xc] sm:$0xf]
        %v532 = vld [vmem:[%s379 + $0x10] sm:$0xf]
        %v533 = vld [vmem:[%s379 + $0x14] sm:$0xf]
        %v534 = vld [vmem:[%s379 + $0x18] sm:$0xf]
        %v535 = vld [vmem:[%s379 + $0x1c] sm:$0xf]
        %v536 = vld [vmem:[%s379 + $0x20] sm:$0xf]
        %v537 = vld [vmem:[%s379 + $0x24] sm:$0xf]
        %v538 = vld [vmem:[%s379 + $0x28] sm:$0xf]
        %v539 = vld [vmem:[%s379 + $0x2c] sm:$0xf]
        %v540 = vld [vmem:[%s379 + $0x30] sm:$0xf]
        %v541 = vld [vmem:[%s379 + $0x34] sm:$0xf]
        %v542 = vld [vmem:[%s379 + $0x38] sm:$0xf]
        %v543 = vld [vmem:[%s379 + $0x3c] sm:$0xf]
        %v560 = vunpack.c.l.b16 %v528
        %v561 = vunpack.c.l.b16 %v529
        %v562 = vunpack.c.l.b16 %v530
        %v563 = vunpack.c.l.b16 %v531
        %v564 = vunpack.c.l.b16 %v532
        %v565 = vunpack.c.l.b16 %v533
        %v566 = vunpack.c.l.b16 %v534
        %v567 = vunpack.c.l.b16 %v535
        %v568 = vunpack.c.l.b16 %v536
        %v569 = vunpack.c.l.b16 %v537
        %v570 = vunpack.c.l.b16 %v538
        %v571 = vunpack.c.l.b16 %v539
        %v572 = vunpack.c.l.b16 %v540
        %v573 = vunpack.c.l.b16 %v541
        %v574 = vunpack.c.l.b16 %v542
        %v575 = vunpack.c.l.b16 %v543
        %v576 = vpack.c.b16 %v561, %v560
        %v577 = vpack.c.b16 %v563, %v562
        %v578 = vpack.c.b16 %v565, %v564
        %v579 = vpack.c.b16 %v567, %v566
        %v580 = vpack.c.b16 %v569, %v568
        %v581 = vpack.c.b16 %v571, %v570
        %v582 = vpack.c.b16 %v573, %v572
        %v583 = vpack.c.b16 %v575, %v574
        %592 = vmatpush.bf16.msra.mxu0 %v583
        %593 = vmatpush.bf16.msra.mxu0 %v582
        %594 = vmatpush.bf16.msra.mxu0 %v581
        %595 = vmatpush.bf16.msra.mxu0 %v580
        %596 = vmatpush.bf16.msra.mxu0 %v579
        %597 = vmatpush.bf16.msra.mxu0 %v578
        %598 = vmatpush.bf16.msra.mxu0 %v577
        %599 = vmatpush.bf16.msra.mxu0 %v576
        %600 = vmatmul.bf16.gmra.mxu0 %v504
        %v601 = vpop.f32.mrf.mxu0
        %v602 = vadd.f32 0.0, %v601
        %v603 = vpop.f32.mrf.mxu0
        %v604 = vadd.f32 0.0, %v603
        %605 = vmatmul.bf16.gmra.mxu0 %v505
        %v606 = vpop.f32.mrf.mxu0
        %v607 = vadd.f32 0.0, %v606
        %v608 = vpop.f32.mrf.mxu0
        %v609 = vadd.f32 0.0, %v608
        %610 = vmatmul.bf16.gmra.mxu0 %v506
        %v611 = vpop.f32.mrf.mxu0
        %v612 = vadd.f32 0.0, %v611
        %v613 = vpop.f32.mrf.mxu0
        %v614 = vadd.f32 0.0, %v613
        %615 = vmatmul.bf16.gmra.mxu0 %v507
        %v616 = vpop.f32.mrf.mxu0
        %v617 = vadd.f32 0.0, %v616
        %v618 = vpop.f32.mrf.mxu0
        %v619 = vadd.f32 0.0, %v618
        %620 = vmatmul.bf16.gmra.mxu0 %v508
        %v621 = vpop.f32.mrf.mxu0
        %v622 = vadd.f32 0.0, %v621
        %v623 = vpop.f32.mrf.mxu0
        %v624 = vadd.f32 0.0, %v623
        %625 = vmatmul.bf16.gmra.mxu0 %v509
        %v626 = vpop.f32.mrf.mxu0
        %v627 = vadd.f32 0.0, %v626
        %v628 = vpop.f32.mrf.mxu0
        %v629 = vadd.f32 0.0, %v628
        %630 = vmatmul.bf16.gmra.mxu0 %v510
        %v631 = vpop.f32.mrf.mxu0
        %v632 = vadd.f32 0.0, %v631
        %v633 = vpop.f32.mrf.mxu0
        %v634 = vadd.f32 0.0, %v633
        %635 = vmatmul.bf16.gmra.mxu0 %v511
        %v636 = vpop.f32.mrf.mxu0
        %v637 = vadd.f32 0.0, %v636
        %v638 = vpop.f32.mrf.mxu0
        %v639 = vadd.f32 0.0, %v638
        %640 = vdwg.mxu0
        %v641 = vadd.f32 %v512, %v602
        %v642 = vadd.f32 %v513, %v604
        %v643 = vadd.f32 %v514, %v607
        %v644 = vadd.f32 %v515, %v609
        %v645 = vadd.f32 %v516, %v612
        %v646 = vadd.f32 %v517, %v614
        %v647 = vadd.f32 %v518, %v617
        %v648 = vadd.f32 %v519, %v619
        %v649 = vadd.f32 %v520, %v622
        %v650 = vadd.f32 %v521, %v624
        %v651 = vadd.f32 %v522, %v627
        %v652 = vadd.f32 %v523, %v629
        %v653 = vadd.f32 %v524, %v632
        %v654 = vadd.f32 %v525, %v634
        %v655 = vadd.f32 %v526, %v637
        %v656 = vadd.f32 %v527, %v639
        %657 = vst [vmem:[#allocation2] sm:$0xff] %v641
        %658 = vst [vmem:[#allocation2 + $0x8] sm:$0xff] %v642
        %659 = vst [vmem:[#allocation2 + $0x10] sm:$0xff] %v643
        %660 = vst [vmem:[#allocation2 + $0x18] sm:$0xff] %v644
        %661 = vst [vmem:[#allocation2 + $0x20] sm:$0xff] %v645
        %662 = vst [vmem:[#allocation2 + $0x28] sm:$0xff] %v646
        %663 = vst [vmem:[#allocation2 + $0x30] sm:$0xff] %v647
        %664 = vst [vmem:[#allocation2 + $0x38] sm:$0xff] %v648
        %665 = vst [vmem:[#allocation2 + $0x40] sm:$0xff] %v649
        %666 = vst [vmem:[#allocation2 + $0x48] sm:$0xff] %v650
        %667 = vst [vmem:[#allocation2 + $0x50] sm:$0xff] %v651
        %668 = vst [vmem:[#allocation2 + $0x58] sm:$0xff] %v652
        %669 = vst [vmem:[#allocation2 + $0x60] sm:$0xff] %v653
        %670 = vst [vmem:[#allocation2 + $0x68] sm:$0xff] %v654
        %671 = vst [vmem:[#allocation2 + $0x70] sm:$0xff] %v655
        %672 = vst [vmem:[#allocation2 + $0x78] sm:$0xff] %v656
        %p673 = scmp.eq.s32.totalorder %s22, 1
        // Predicated region
        $region82: #{resnet_forward.71} parent=72 // pred_check
          %p674 = pneg %p673
        $region83: #{resnet_forward.71} parent=72 // pred_check_branch
          %676 = sbr.rel (%p674) target = $region85
        $region84: #{resnet_forward.71} parent=72 // pred_region
          %v677 = vld [vmem:[#allocation2] sm:$0xff]
          %v678 = vld [vmem:[#allocation2 + $0x8] sm:$0xff]
          %v679 = vld [vmem:[#allocation2 + $0x10] sm:$0xff]
          %v680 = vld [vmem:[#allocation2 + $0x18] sm:$0xff]
          %v681 = vld [vmem:[#allocation2 + $0x20] sm:$0xff]
          %v682 = vld [vmem:[#allocation2 + $0x28] sm:$0xff]
          %v683 = vld [vmem:[#allocation2 + $0x30] sm:$0xff]
          %v684 = vld [vmem:[#allocation2 + $0x38] sm:$0xff]
          %v685 = vld [vmem:[#allocation2 + $0x40] sm:$0xff]
          %v686 = vld [vmem:[#allocation2 + $0x48] sm:$0xff]
          %v687 = vld [vmem:[#allocation2 + $0x50] sm:$0xff]
          %v688 = vld [vmem:[#allocation2 + $0x58] sm:$0xff]
          %v689 = vld [vmem:[#allocation2 + $0x60] sm:$0xff]
          %v690 = vld [vmem:[#allocation2 + $0x68] sm:$0xff]
          %v691 = vld [vmem:[#allocation2 + $0x70] sm:$0xff]
          %v692 = vld [vmem:[#allocation2 + $0x78] sm:$0xff]
          %693 = vst [vmem:[%s394] sm:$0xff] %v677
          %694 = vst [vmem:[%s394 + $0x8] sm:$0xff] %v678
          %695 = vst [vmem:[%s394 + $0x10] sm:$0xff] %v679
          %696 = vst [vmem:[%s394 + $0x18] sm:$0xff] %v680
          %697 = vst [vmem:[%s394 + $0x20] sm:$0xff] %v681
          %698 = vst [vmem:[%s394 + $0x28] sm:$0xff] %v682
          %699 = vst [vmem:[%s394 + $0x30] sm:$0xff] %v683
          %700 = vst [vmem:[%s394 + $0x38] sm:$0xff] %v684
          %701 = vst [vmem:[%s394 + $0x40] sm:$0xff] %v685
          %702 = vst [vmem:[%s394 + $0x48] sm:$0xff] %v686
          %703 = vst [vmem:[%s394 + $0x50] sm:$0xff] %v687
          %704 = vst [vmem:[%s394 + $0x58] sm:$0xff] %v688
          %705 = vst [vmem:[%s394 + $0x60] sm:$0xff] %v689
          %706 = vst [vmem:[%s394 + $0x68] sm:$0xff] %v690
          %707 = vst [vmem:[%s394 + $0x70] sm:$0xff] %v691
          %708 = vst [vmem:[%s394 + $0x78] sm:$0xff] %v692
        $region85: #{resnet_forward.71} parent=72 // pred_fallthru
          _
        %s709 = smul.u32 16, %s20
        %p710 = scmp.lt.s32.totalorder %s709, 15
        %s711 = scalar_select %p710, %s709, 15
        %p712 = scmp.lt.s32.totalorder %s21, 0
        %s713 = scalar_select %p712, %s21, 0
        %s714 = sadd.s32 %s713, %s711
        %s715 = smul.addr %s714, 8
        %s716 = scalar_lea.vmem %s4, %s715
        // Predicated region
        $region86: #{resnet_forward.71} parent=72 // pred_check
          %p717 = pneg %p162
        $region87: #{resnet_forward.71} parent=72 // pred_check_branch
          %719 = sbr.rel (%p717) target = $region89
        $region88: #{resnet_forward.71} parent=72 // pred_region
          %s720 = smul.u32 16, %s20
        $region89: #{resnet_forward.71} parent=72 // pred_fallthru
          _
        // Predicated region
        $region90: #{resnet_forward.71} parent=72 // pred_check
          %p721 = pneg %p162
        $region91: #{resnet_forward.71} parent=72 // pred_check_branch
          %723 = sbr.rel (%p721) target = $region93
        $region92: #{resnet_forward.71} parent=72 // pred_region
          %s724 = smul.u32 16, %s20
          %p725 = scmp.lt.s32.totalorder %s724, 15
          %s726 = scalar_select %p725, %s724, 15
          %p727 = scmp.lt.s32.totalorder %s21, 0
          %s728 = scalar_select %p727, %s21, 0
          %s729 = sadd.s32 %s728, %s726
          %s730 = smul.addr %s729, 8
          %s731 = scalar_lea.vmem %s4, %s730
        $region93: #{resnet_forward.71} parent=72 // pred_fallthru
          _
      $region73: #{resnet_forward.71} parent=5 // pred_fallthru
        _
      %p732 = scmp.le.s32.totalorder 2, %s10
      // Predicated region
      $region94: #{resnet_forward.71} parent=5 // pred_check
        %p733 = pneg %p732
      $region95: #{resnet_forward.71} parent=5 // pred_check_branch
        %735 = sbr.rel (%p733) target = $region97
      $region96: #{resnet_forward.71} parent=5 // pred_region
        %s736 = ssub.s32 %s10, 2
      $region97: #{resnet_forward.71} parent=5 // pred_fallthru
        _
    $region6: #{resnet_forward.71} parent=1 // loop_footer
      %s14 = sadd.s32 1, %s10
    $region7: #{resnet_forward.71} parent=1 // loop_footer_branch
      %9 = sbr.rel target = $region3
    $region8: #{resnet_forward.71} parent=1 // loop_exit
      _

// kernel: resnet_forward.69
$region0: #{resnet_forward.69}
  #allocation0 [shape = 'u32[]', space=smem, size = 0x4, offset = 0x4, fixed_abs, tag = 'smem constant byte address 0x4 - core index']
  #allocation1 [shape = 'u32[72,128]{1,0:T(1,128)}', space=vmem, size = 0x9000, scoped, tag = 'internal scratch']
  #allocation2 [shape = 'f32[128,128]{1,0:T(8,128)}', space=vmem, size = 0x10000, scoped, tag = 'scratch operand']
  %s0 = inlined_call_operand.vmem [shape: bf16[128,256], index: 0, kind: input, shape index: {}]
  %s1 = inlined_call_operand.vmem [shape: bf16[256,128], index: 1, kind: input, shape index: {}]
  %s2 = inlined_call_operand.vmem [shape: f32[1,256], index: 2, kind: input, shape index: {}]
  %s3 = inlined_call_operand.vmem [shape: f32[1,256], index: 3, kind: input, shape index: {}]
  %s4 = inlined_call_operand.vmem [shape: f32[128,128], index: 4, kind: input, shape index: {}]
  %s5 = inlined_call_operand.vmem [shape: f32[1,128], index: 5, kind: input, shape index: {}]
  %s6 = inlined_call_operand.vmem [shape: f32[1,128], index: 6, kind: input, shape index: {}]
  %s7 = inlined_call_operand.vmem [shape: f32[128,128], index: 7, kind: output, shape index: {}]
  %s8 = sld [smem:[#allocation0]]
  $region110: #{resnet_forward.69} parent=0
    _
  %s10 = ssub.s32 1, %s8
  %s11 = scalar_select 0, %s10, %s8
  $region1: #{resnet_forward.69} parent=0
    #allocation3 [shape = 'u8[65536]{0}', space=vmem, size = 0x10000, scoped, tag = 'input window, operand 0']
    loop: start=0, step=1, limit=4
    $region2: #{resnet_forward.69} parent=1 // loop_pre_header
      _
    $region3: #{resnet_forward.69} parent=1 // loop_header
      %s13 = sphi 0, %s17
      %p14 = scmp.ge.s32.totalorder %s13, 4
      %s20 = sphi 0, %s39
      %s21 = sphi 0, %s35
      %s22 = sphi 0, %s31
      %s23 = sphi 0, %s20
      %s24 = sphi 0, %s21
      %s25 = sphi 0, %s22
      %s26 = sphi 0, %s23
      %s27 = sphi 0, %s24
      %s28 = sphi 0, %s25
      %s44 = sphi 0, %s46
      %s47 = sphi 0, %s44
      %s48 = sphi 0, %s47
      %s64 = sphi 0, %s48
      %s72 = sphi 0, %s74
      %s75 = sphi 0, %s72
      %s76 = sphi 0, %s75
      %s92 = sphi 0, %s76
      %s98 = sphi 0, %s100
      %s101 = sphi 0, %s98
      %s102 = sphi 0, %s101
      %s118 = sphi 0, %s102
      %s124 = sphi 0, %s126
      %s127 = sphi 0, %s124
      %s128 = sphi 0, %s127
      %s144 = sphi 0, %s128
      %s152 = sphi 0, %s154
      %s155 = sphi 0, %s152
      %s156 = sphi 0, %s155
      %s172 = sphi 0, %s156
      %s178 = sphi 0, %s180
      %s181 = sphi 0, %s178
      %s182 = sphi 0, %s181
      %s198 = sphi 0, %s182
      %s204 = sphi 0, %s206
      %s207 = sphi 0, %s204
      %s208 = sphi 0, %s207
      %s224 = sphi 0, %s208
      %s232 = sphi 0, %s234
      %s235 = sphi 0, %s232
      %s236 = sphi 0, %s235
      %s252 = sphi 0, %s236
    $region4: #{resnet_forward.69} parent=1 // loop_header_branch
      %16 = sbr.rel (%p14) target = $region8
    $region5: #{resnet_forward.69} parent=1 // loop_body
      %s18 = ssub.s32 %s13, 1
      %s19 = ssub.s32 %s13, 2
      %s29 = sadd.s32 1, %s22
      %p30 = scmp.ge.s32.totalorder %s29, 2
      %s31 = scalar_select %p30, 0, %s29
      %s32 = sadd.s32 1, %s21
      %s33 = scalar_select %p30, %s32, %s21
      %p34 = scmp.ge.s32.totalorder %s33, 1
      %s35 = scalar_select %p34, 0, %s33
      %s36 = sadd.s32 1, %s20
      %s37 = scalar_select %p34, %s36, %s20
      %p38 = scmp.ge.s32.totalorder %s37, 1
      %s39 = scalar_select %p38, 0, %s37
      %s40 = ssub.s32 %s20, %s39
      %s41 = ssub.s32 %s22, %s31
      %s42 = sor.u32 %s40, %s41
      %p43 = scmp.eq.s32.totalorder %s42, 0
      %s45 = sadd.s32 %s44, 1
      %s46 = scalar_select %p43, %s44, %s45
      %p49 = pneg %p43
      %p50 = scmp.eq.s32.totalorder %s13, 1
      %p51 = por %p49, %p50
      %p52 = scmp.ne.s32.totalorder %s44, %s47
      %p53 = scmp.eq.s32.totalorder %s13, 0
      %p54 = por %p52, %p53
      %p55 = scmp.ne.s32.totalorder %s44, %s47
      %p56 = scmp.eq.s32.totalorder %s18, 1
      %p57 = por %p55, %p56
      %p58 = scmp.ne.s32.totalorder %s47, %s48
      %p59 = scmp.eq.s32.totalorder %s18, 0
      %p60 = por %p58, %p59
      %p61 = scmp.ne.s32.totalorder %s47, %s48
      %p62 = scmp.eq.s32.totalorder %s19, 1
      %p63 = por %p61, %p62
      %p65 = scmp.ne.s32.totalorder %s48, %s64
      %p66 = scmp.eq.s32.totalorder %s19, 0
      %p67 = por %p65, %p66
      %s68 = ssub.s32 %s22, %s31
      %s69 = ssub.s32 %s21, %s35
      %s70 = sor.u32 %s68, %s69
      %p71 = scmp.eq.s32.totalorder %s70, 0
      %s73 = sadd.s32 %s72, 1
      %s74 = scalar_select %p71, %s72, %s73
      %p77 = pneg %p71
      %p78 = scmp.eq.s32.totalorder %s13, 1
      %p79 = por %p77, %p78
      %p80 = scmp.ne.s32.totalorder %s72, %s75
      %p81 = scmp.eq.s32.totalorder %s13, 0
      %p82 = por %p80, %p81
      %p83 = scmp.ne.s32.totalorder %s72, %s75
      %p84 = scmp.eq.s32.totalorder %s18, 1
      %p85 = por %p83, %p84
      %p86 = scmp.ne.s32.totalorder %s75, %s76
      %p87 = scmp.eq.s32.totalorder %s18, 0
      %p88 = por %p86, %p87
      %p89 = scmp.ne.s32.totalorder %s75, %s76
      %p90 = scmp.eq.s32.totalorder %s19, 1
      %p91 = por %p89, %p90
      %p93 = scmp.ne.s32.totalorder %s76, %s92
      %p94 = scmp.eq.s32.totalorder %s19, 0
      %p95 = por %p93, %p94
      %s96 = ssub.s32 %s22, %s31
      %p97 = scmp.eq.s32.totalorder %s96, 0
      %s99 = sadd.s32 %s98, 1
      %s100 = scalar_select %p97, %s98, %s99
      %p103 = pneg %p97
      %p104 = scmp.eq.s32.totalorder %s13, 1
      %p105 = por %p103, %p104
      %p106 = scmp.ne.s32.totalorder %s98, %s101
      %p107 = scmp.eq.s32.totalorder %s13, 0
      %p108 = por %p106, %p107
      %p109 = scmp.ne.s32.totalorder %s98, %s101
      %p110 = scmp.eq.s32.totalorder %s18, 1
      %p111 = por %p109, %p110
      %p112 = scmp.ne.s32.totalorder %s101, %s102
      %p113 = scmp.eq.s32.totalorder %s18, 0
      %p114 = por %p112, %p113
      %p115 = scmp.ne.s32.totalorder %s101, %s102
      %p116 = scmp.eq.s32.totalorder %s19, 1
      %p117 = por %p115, %p116
      %p119 = scmp.ne.s32.totalorder %s102, %s118
      %p120 = scmp.eq.s32.totalorder %s19, 0
      %p121 = por %p119, %p120
      %s122 = ssub.s32 %s22, %s31
      %p123 = scmp.eq.s32.totalorder %s122, 0
      %s125 = sadd.s32 %s124, 1
      %s126 = scalar_select %p123, %s124, %s125
      %p129 = pneg %p123
      %p130 = scmp.eq.s32.totalorder %s13, 1
      %p131 = por %p129, %p130
      %p132 = scmp.ne.s32.totalorder %s124, %s127
      %p133 = scmp.eq.s32.totalorder %s13, 0
      %p134 = por %p132, %p133
      %p135 = scmp.ne.s32.totalorder %s124, %s127
      %p136 = scmp.eq.s32.totalorder %s18, 1
      %p137 = por %p135, %p136
      %p138 = scmp.ne.s32.totalorder %s127, %s128
      %p139 = scmp.eq.s32.totalorder %s18, 0
      %p140 = por %p138, %p139
      %p141 = scmp.ne.s32.totalorder %s127, %s128
      %p142 = scmp.eq.s32.totalorder %s19, 1
      %p143 = por %p141, %p142
      %p145 = scmp.ne.s32.totalorder %s128, %s144
      %p146 = scmp.eq.s32.totalorder %s19, 0
      %p147 = por %p145, %p146
      %s148 = ssub.s32 %s20, %s39
      %s149 = ssub.s32 %s21, %s35
      %s150 = sor.u32 %s148, %s149
      %p151 = scmp.eq.s32.totalorder %s150, 0
      %s153 = sadd.s32 %s152, 1
      %s154 = scalar_select %p151, %s152, %s153
      %p157 = pneg %p151
      %p158 = scmp.eq.s32.totalorder %s13, 1
      %p159 = por %p157, %p158
      %p160 = scmp.ne.s32.totalorder %s152, %s155
      %p161 = scmp.eq.s32.totalorder %s13, 0
      %p162 = por %p160, %p161
      %p163 = scmp.ne.s32.totalorder %s152, %s155
      %p164 = scmp.eq.s32.totalorder %s18, 1
      %p165 = por %p163, %p164
      %p166 = scmp.ne.s32.totalorder %s155, %s156
      %p167 = scmp.eq.s32.totalorder %s18, 0
      %p168 = por %p166, %p167
      %p169 = scmp.ne.s32.totalorder %s155, %s156
      %p170 = scmp.eq.s32.totalorder %s19, 1
      %p171 = por %p169, %p170
      %p173 = scmp.ne.s32.totalorder %s156, %s172
      %p174 = scmp.eq.s32.totalorder %s19, 0
      %p175 = por %p173, %p174
      %s176 = ssub.s32 %s21, %s35
      %p177 = scmp.eq.s32.totalorder %s176, 0
      %s179 = sadd.s32 %s178, 1
      %s180 = scalar_select %p177, %s178, %s179
      %p183 = pneg %p177
      %p184 = scmp.eq.s32.totalorder %s13, 1
      %p185 = por %p183, %p184
      %p186 = scmp.ne.s32.totalorder %s178, %s181
      %p187 = scmp.eq.s32.totalorder %s13, 0
      %p188 = por %p186, %p187
      %p189 = scmp.ne.s32.totalorder %s178, %s181
      %p190 = scmp.eq.s32.totalorder %s18, 1
      %p191 = por %p189, %p190
      %p192 = scmp.ne.s32.totalorder %s181, %s182
      %p193 = scmp.eq.s32.totalorder %s18, 0
      %p194 = por %p192, %p193
      %p195 = scmp.ne.s32.totalorder %s181, %s182
      %p196 = scmp.eq.s32.totalorder %s19, 1
      %p197 = por %p195, %p196
      %p199 = scmp.ne.s32.totalorder %s182, %s198
      %p200 = scmp.eq.s32.totalorder %s19, 0
      %p201 = por %p199, %p200
      %s202 = ssub.s32 %s21, %s35
      %p203 = scmp.eq.s32.totalorder %s202, 0
      %s205 = sadd.s32 %s204, 1
      %s206 = scalar_select %p203, %s204, %s205
      %p209 = pneg %p203
      %p210 = scmp.eq.s32.totalorder %s13, 1
      %p211 = por %p209, %p210
      %p212 = scmp.ne.s32.totalorder %s204, %s207
      %p213 = scmp.eq.s32.totalorder %s13, 0
      %p214 = por %p212, %p213
      %p215 = scmp.ne.s32.totalorder %s204, %s207
      %p216 = scmp.eq.s32.totalorder %s18, 1
      %p217 = por %p215, %p216
      %p218 = scmp.ne.s32.totalorder %s207, %s208
      %p219 = scmp.eq.s32.totalorder %s18, 0
      %p220 = por %p218, %p219
      %p221 = scmp.ne.s32.totalorder %s207, %s208
      %p222 = scmp.eq.s32.totalorder %s19, 1
      %p223 = por %p221, %p222
      %p225 = scmp.ne.s32.totalorder %s208, %s224
      %p226 = scmp.eq.s32.totalorder %s19, 0
      %p227 = por %p225, %p226
      %s228 = ssub.s32 %s20, %s39
      %s229 = ssub.s32 %s21, %s35
      %s230 = sor.u32 %s228, %s229
      %p231 = scmp.eq.s32.totalorder %s230, 0
      %s233 = sadd.s32 %s232, 1
      %s234 = scalar_select %p231, %s232, %s233
      %p237 = pneg %p231
      %p238 = scmp.eq.s32.totalorder %s13, 1
      %p239 = por %p237, %p238
      %p240 = scmp.ne.s32.totalorder %s232, %s235
      %p241 = scmp.eq.s32.totalorder %s13, 0
      %p242 = por %p240, %p241
      %p243 = scmp.ne.s32.totalorder %s232, %s235
      %p244 = scmp.eq.s32.totalorder %s18, 1
      %p245 = por %p243, %p244
      %p246 = scmp.ne.s32.totalorder %s235, %s236
      %p247 = scmp.eq.s32.totalorder %s18, 0
      %p248 = por %p246, %p247
      %p249 = scmp.ne.s32.totalorder %s235, %s236
      %p250 = scmp.eq.s32.totalorder %s19, 1
      %p251 = por %p249, %p250
      %p253 = scmp.ne.s32.totalorder %s236, %s252
      %p254 = scmp.eq.s32.totalorder %s19, 0
      %p255 = por %p253, %p254
      %p256 = scmp.le.s32.totalorder 1, %s13
      %p257 = scmp.lt.s32.totalorder %s13, 3
      %p258 = pnand %p256, %p257
      %p259 = pneg %p258
      // Predicated region
      $region9: #{resnet_forward.69} parent=5 // pred_check
        _
      $region10: #{resnet_forward.69} parent=5 // pred_check_branch
        %261 = sbr.rel (%p258) target = $region12
      $region11: #{resnet_forward.69} parent=5 // pred_region
        %s262 = ssub.s32 %s13, 1
        // Predicated region
        $region13: #{resnet_forward.69} parent=11 // pred_check
          %p263 = pneg %p168
        $region14: #{resnet_forward.69} parent=11 // pred_check_branch
          %265 = sbr.rel (%p263) target = $region16
        $region15: #{resnet_forward.69} parent=11 // pred_region
          %s266 = smul.u32 16, %s23
          %p267 = scmp.lt.s32.totalorder %s266, 15
          %s268 = scalar_select %p267, %s266, 15
          %p269 = scmp.lt.s32.totalorder %s24, 0
          %s270 = scalar_select %p269, %s24, 0
          %s271 = sadd.s32 %s270, %s268
          %s272 = smul.addr %s271, 8
          %s273 = scalar_lea.vmem %s4, %s272
          %s274 = smul.u32 16, %s23
        $region16: #{resnet_forward.69} parent=11 // pred_fallthru
          _
        // Predicated region
        $region17: #{resnet_forward.69} parent=11 // pred_check
          %p275 = pneg %p194
        $region18: #{resnet_forward.69} parent=11 // pred_check_branch
          %277 = sbr.rel (%p275) target = $region20
        $region19: #{resnet_forward.69} parent=11 // pred_region
          %p278 = scmp.lt.s32.totalorder %s24, 0
          %s279 = scalar_select %p278, %s24, 0
          %s280 = scalar_lea.vmem %s5, %s279
        $region20: #{resnet_forward.69} parent=11 // pred_fallthru
          _
        // Predicated region
        $region21: #{resnet_forward.69} parent=11 // pred_check
          %p281 = pneg %p220
        $region22: #{resnet_forward.69} parent=11 // pred_check_branch
          %283 = sbr.rel (%p281) target = $region24
        $region23: #{resnet_forward.69} parent=11 // pred_region
          %p284 = scmp.lt.s32.totalorder %s24, 0
          %s285 = scalar_select %p284, %s24, 0
          %s286 = scalar_lea.vmem %s6, %s285
        $region24: #{resnet_forward.69} parent=11 // pred_fallthru
          _
      $region12: #{resnet_forward.69} parent=5 // pred_fallthru
        _
      %p287 = scmp.lt.s32.totalorder %s13, 2
      // Predicated region
      $region25: #{resnet_forward.69} parent=5 // pred_check
        %p288 = pneg %p287
      $region26: #{resnet_forward.69} parent=5 // pred_check_branch
        %290 = sbr.rel (%p288) target = $region28
      $region27: #{resnet_forward.69} parent=5 // pred_region
        // Predicated region
        $region29: #{resnet_forward.69} parent=27 // pred_check
          %p291 = pneg %p54
        $region30: #{resnet_forward.69} parent=27 // pred_check_branch
          %293 = sbr.rel (%p291) target = $region32
        $region31: #{resnet_forward.69} parent=27 // pred_region
          %s294 = sand.u32 %s44, 1
          %s295 = sand.u32 %s44, 1
          %s296 = smul.addr %s295, 64
          %s297 = scalar_lea.vmem [#allocation3], %s296
          %s298 = smul.u32 16, %s20
          %s299 = smul.addr %s298, 2
          %s300 = sadd.s32 %s22, %s299
          %s301 = smul.addr %s300, 4
          %s302 = scalar_lea.vmem %s0, %s301
          // Predicated region
          $region33: #{resnet_forward.69} parent=31 // pred_check
            _
          $region34: #{resnet_forward.69} parent=31 // pred_check_branch
            %304 = sbr.rel (0) target = $region36
          $region35: #{resnet_forward.69} parent=31 // pred_region
            // Predicated region
            $region37: #{resnet_forward.69} parent=35 // pred_check
              _
            $region38: #{resnet_forward.69} parent=35 // pred_check_branch
              %306 = sbr.rel target = $region40
            $region39: #{resnet_forward.69} parent=35 // pred_region
              // Predicated region
              $region52: #{resnet_forward.69} parent=39 // pred_check
                _
              $region53: #{resnet_forward.69} parent=39 // pred_check_branch
                %352 = sbr.rel (0) target = $region55
              $region54: #{resnet_forward.69} parent=39 // pred_region
                loop: start=0, step=1, limit=1
                $region56: #{resnet_forward.69} parent=54 // loop_pre_header
                  _
                $region57: #{resnet_forward.69} parent=54 // loop_header
                  %s354 = sphi 0, %s358
                  %p355 = scmp.ge.s32.totalorder %s354, 1
                  %s359 = sphi %s302, %s302
                  %s360 = sphi %s297, %s297
                $region58: #{resnet_forward.69} parent=54 // loop_header_branch
                  %357 = sbr.rel (%p355) target = $region62
                $region59: #{resnet_forward.69} parent=54 // loop_body
                  _
                $region60: #{resnet_forward.69} parent=54 // loop_footer
                  %s358 = sadd.s32 1, %s354
                $region61: #{resnet_forward.69} parent=54 // loop_footer_branch
                  %353 = sbr.rel target = $region57
                $region62: #{resnet_forward.69} parent=54 // loop_exit
                  _
                %s362 = ssub.s32 16, 1
                loop: start=0, step=1, limit=1
                $region63: #{resnet_forward.69} parent=54 // loop_pre_header
                  _
                $region64: #{resnet_forward.69} parent=54 // loop_header
                  %s364 = sphi 0, %s368
                  %p365 = scmp.ge.s32.totalorder %s364, 1
                  %s369 = sphi %s302, %s302
                  %s370 = sphi %s297, %s297
                $region65: #{resnet_forward.69} parent=54 // loop_header_branch
                  %367 = sbr.rel (%p365) target = $region69
                $region66: #{resnet_forward.69} parent=54 // loop_body
                  %v371 = vld [vmem:[%s369] sm:%s362]
                  %372 = vst [vmem:[%s370] sm:%s362] %v371
                  %v373 = vld [vmem:[%s369 + $0x8] sm:%s362]
                  %374 = vst [vmem:[%s370 + $0x4] sm:%s362] %v373
                  %v375 = vld [vmem:[%s369 + $0x10] sm:%s362]
                  %376 = vst [vmem:[%s370 + $0x8] sm:%s362] %v375
                  %v377 = vld [vmem:[%s369 + $0x18] sm:%s362]
                  %378 = vst [vmem:[%s370 + $0xc] sm:%s362] %v377
                  %v379 = vld [vmem:[%s369 + $0x20] sm:%s362]
                  %380 = vst [vmem:[%s370 + $0x10] sm:%s362] %v379
                  %v381 = vld [vmem:[%s369 + $0x28] sm:%s362]
                  %382 = vst [vmem:[%s370 + $0x14] sm:%s362] %v381
                  %v383 = vld [vmem:[%s369 + $0x30] sm:%s362]
                  %384 = vst [vmem:[%s370 + $0x18] sm:%s362] %v383
                  %v385 = vld [vmem:[%s369 + $0x38] sm:%s362]
                  %386 = vst [vmem:[%s370 + $0x1c] sm:%s362] %v385
                  %v387 = vld [vmem:[%s369 + $0x40] sm:%s362]
                  %388 = vst [vmem:[%s370 + $0x20] sm:%s362] %v387
                  %v389 = vld [vmem:[%s369 + $0x48] sm:%s362]
                  %390 = vst [vmem:[%s370 + $0x24] sm:%s362] %v389
                  %v391 = vld [vmem:[%s369 + $0x50] sm:%s362]
                  %392 = vst [vmem:[%s370 + $0x28] sm:%s362] %v391
                  %v393 = vld [vmem:[%s369 + $0x58] sm:%s362]
                  %394 = vst [vmem:[%s370 + $0x2c] sm:%s362] %v393
                  %v395 = vld [vmem:[%s369 + $0x60] sm:%s362]
                  %396 = vst [vmem:[%s370 + $0x30] sm:%s362] %v395
                  %v397 = vld [vmem:[%s369 + $0x68] sm:%s362]
                  %398 = vst [vmem:[%s370 + $0x34] sm:%s362] %v397
                  %v399 = vld [vmem:[%s369 + $0x70] sm:%s362]
                  %400 = vst [vmem:[%s370 + $0x38] sm:%s362] %v399
                  %v401 = vld [vmem:[%s369 + $0x78] sm:%s362]
                  %402 = vst [vmem:[%s370 + $0x3c] sm:%s362] %v401
                $region67: #{resnet_forward.69} parent=54 // loop_footer
                  %s368 = sadd.s32 1, %s364
                $region68: #{resnet_forward.69} parent=54 // loop_footer_branch
                  %363 = sbr.rel target = $region64
                $region69: #{resnet_forward.69} parent=54 // loop_exit
                  _
              $region55: #{resnet_forward.69} parent=39 // pred_fallthru
                _
            $region40: #{resnet_forward.69} parent=35 // pred_fallthru
              _
            // Predicated region
            $region41: #{resnet_forward.69} parent=35 // pred_check
              _
            $region42: #{resnet_forward.69} parent=35 // pred_check_branch
              %308 = sbr.rel (0) target = $region44
            $region43: #{resnet_forward.69} parent=35 // pred_region
              %s310 = ssub.s32 16, 1
              loop: start=0, step=1, limit=1
              $region45: #{resnet_forward.69} parent=43 // loop_pre_header
                _
              $region46: #{resnet_forward.69} parent=43 // loop_header
                %s312 = sphi 0, %s316
                %p313 = scmp.ge.s32.totalorder %s312, 1
                %s317 = sphi %s302, %s302
                %s318 = sphi %s297, %s297
              $region47: #{resnet_forward.69} parent=43 // loop_header_branch
                %315 = sbr.rel (%p313) target = $region51
              $region48: #{resnet_forward.69} parent=43 // loop_body
                %v319 = vld [vmem:[%s317] sm:%s310]
                %320 = vst [vmem:[%s318] sm:%s310] %v319
                %v321 = vld [vmem:[%s317 + $0x8] sm:%s310]
                %322 = vst [vmem:[%s318 + $0x4] sm:%s310] %v321
                %v323 = vld [vmem:[%s317 + $0x10] sm:%s310]
                %324 = vst [vmem:[%s318 + $0x8] sm:%s310] %v323
                %v325 = vld [vmem:[%s317 + $0x18] sm:%s310]
                %326 = vst [vmem:[%s318 + $0xc] sm:%s310] %v325
                %v327 = vld [vmem:[%s317 + $0x20] sm:%s310]
                %328 = vst [vmem:[%s318 + $0x10] sm:%s310] %v327
                %v329 = vld [vmem:[%s317 + $0x28] sm:%s310]
                %330 = vst [vmem:[%s318 + $0x14] sm:%s310] %v329
                %v331 = vld [vmem:[%s317 + $0x30] sm:%s310]
                %332 = vst [vmem:[%s318 + $0x18] sm:%s310] %v331
                %v333 = vld [vmem:[%s317 + $0x38] sm:%s310]
                %334 = vst [vmem:[%s318 + $0x1c] sm:%s310] %v333
                %v335 = vld [vmem:[%s317 + $0x40] sm:%s310]
                %336 = vst [vmem:[%s318 + $0x20] sm:%s310] %v335
                %v337 = vld [vmem:[%s317 + $0x48] sm:%s310]
                %338 = vst [vmem:[%s318 + $0x24] sm:%s310] %v337
                %v339 = vld [vmem:[%s317 + $0x50] sm:%s310]
                %340 = vst [vmem:[%s318 + $0x28] sm:%s310] %v339
                %v341 = vld [vmem:[%s317 + $0x58] sm:%s310]
                %342 = vst [vmem:[%s318 + $0x2c] sm:%s310] %v341
                %v343 = vld [vmem:[%s317 + $0x60] sm:%s310]
                %344 = vst [vmem:[%s318 + $0x30] sm:%s310] %v343
                %v345 = vld [vmem:[%s317 + $0x68] sm:%s310]
                %346 = vst [vmem:[%s318 + $0x34] sm:%s310] %v345
                %v347 = vld [vmem:[%s317 + $0x70] sm:%s310]
                %348 = vst [vmem:[%s318 + $0x38] sm:%s310] %v347
                %v349 = vld [vmem:[%s317 + $0x78] sm:%s310]
                %350 = vst [vmem:[%s318 + $0x3c] sm:%s310] %v349
              $region49: #{resnet_forward.69} parent=43 // loop_footer
                %s316 = sadd.s32 1, %s312
              $region50: #{resnet_forward.69} parent=43 // loop_footer_branch
                %311 = sbr.rel target = $region46
              $region51: #{resnet_forward.69} parent=43 // loop_exit
                _
            $region44: #{resnet_forward.69} parent=35 // pred_fallthru
              _
          $region36: #{resnet_forward.69} parent=31 // pred_fallthru
            _
          %403 = vnop
        $region32: #{resnet_forward.69} parent=27 // pred_fallthru
          _
        // Predicated region
        $region70: #{resnet_forward.69} parent=27 // pred_check
          %p404 = pneg %p82
        $region71: #{resnet_forward.69} parent=27 // pred_check_branch
          %406 = sbr.rel (%p404) target = $region73
        $region72: #{resnet_forward.69} parent=27 // pred_region
          %s407 = smul.u32 16, %s22
          %p408 = scmp.lt.s32.totalorder %s407, 31
          %s409 = scalar_select %p408, %s407, 31
          %p410 = scmp.lt.s32.totalorder %s21, 0
          %s411 = scalar_select %p410, %s21, 0
          %s412 = sadd.s32 %s411, %s409
          %s413 = smul.addr %s412, 4
          %s414 = scalar_lea.vmem %s1, %s413
          %s415 = smul.u32 16, %s22
        $region73: #{resnet_forward.69} parent=27 // pred_fallthru
          _
        // Predicated region
        $region74: #{resnet_forward.69} parent=27 // pred_check
          %p416 = pneg %p108
        $region75: #{resnet_forward.69} parent=27 // pred_check_branch
          %418 = sbr.rel (%p416) target = $region77
        $region76: #{resnet_forward.69} parent=27 // pred_region
          %p419 = scmp.lt.s32.totalorder %s22, 1
          %s420 = scalar_select %p419, %s22, 1
          %s421 = scalar_lea.vmem %s2, %s420
        $region77: #{resnet_forward.69} parent=27 // pred_fallthru
          _
        // Predicated region
        $region78: #{resnet_forward.69} parent=27 // pred_check
          %p422 = pneg %p134
        $region79: #{resnet_forward.69} parent=27 // pred_check_branch
          %424 = sbr.rel (%p422) target = $region81
        $region80: #{resnet_forward.69} parent=27 // pred_region
          %p425 = scmp.lt.s32.totalorder %s22, 1
          %s426 = scalar_select %p425, %s22, 1
          %s427 = scalar_lea.vmem %s3, %s426
        $region81: #{resnet_forward.69} parent=27 // pred_fallthru
          _
      $region28: #{resnet_forward.69} parent=5 // pred_fallthru
        _
      %p428 = scmp.le.s32.totalorder 1, %s13
      %p429 = scmp.lt.s32.totalorder %s13, 3
      %p430 = pnand %p428, %p429
      %p431 = pneg %p430
      // Predicated region
      $region82: #{resnet_forward.69} parent=5 // pred_check
        _
      $region83: #{resnet_forward.69} parent=5 // pred_check_branch
        %433 = sbr.rel (%p430) target = $region85
      $region84: #{resnet_forward.69} parent=5 // pred_region
        %s434 = ssub.s32 %s13, 1
        %s435 = sand.u32 %s47, 1
        %s436 = sand.u32 %s47, 1
        %s437 = smul.addr %s436, 64
        %s438 = scalar_lea.vmem [#allocation3], %s437
        // Predicated region
        $region86: #{resnet_forward.69} parent=84 // pred_check
          %p439 = pneg %p60
        $region87: #{resnet_forward.69} parent=84 // pred_check_branch
          %441 = sbr.rel (%p439) target = $region89
        $region88: #{resnet_forward.69} parent=84 // pred_region
          _
        $region89: #{resnet_forward.69} parent=84 // pred_fallthru
          _
        %s442 = sand.u32 %s47, 1
        %s443 = sand.u32 %s47, 1
        %s444 = smul.addr %s443, 64
        %s445 = scalar_lea.vmem [#allocation3], %s444
        %p446 = pneg %p60
        %p447 = pneg %p57
        %s448 = smul.u32 16, %s25
        %p449 = scmp.lt.s32.totalorder %s448, 31
        %s450 = scalar_select %p449, %s448, 31
        %p451 = scmp.lt.s32.totalorder %s24, 0
        %s452 = scalar_select %p451, %s24, 0
        %s453 = sadd.s32 %s452, %s450
        %s454 = smul.addr %s453, 4
        %s455 = scalar_lea.vmem %s1, %s454
        %p456 = pneg %p88
        %p457 = pneg %p85
        %p458 = scmp.lt.s32.totalorder %s25, 1
        %s459 = scalar_select %p458, %s25, 1
        %s460 = scalar_lea.vmem %s2, %s459
        %p461 = pneg %p114
        %p462 = pneg %p111
        %p463 = scmp.lt.s32.totalorder %s25, 1
        %s464 = scalar_select %p463, %s25, 1
        %s465 = scalar_lea.vmem %s3, %s464
        %p466 = pneg %p140
        %p467 = pneg %p137
        %s468 = smul.u32 16, %s23
        %p469 = scmp.lt.s32.totalorder %s468, 15
        %s470 = scalar_select %p469, %s468, 15
        %p471 = scmp.lt.s32.totalorder %s24, 0
        %s472 = scalar_select %p471, %s24, 0
        %s473 = sadd.s32 %s472, %s470
        %s474 = smul.addr %s473, 8
        %s475 = scalar_lea.vmem %s4, %s474
        %p476 = pneg %p168
        %p477 = pneg %p165
        %p478 = scmp.lt.s32.totalorder %s24, 0
        %s479 = scalar_select %p478, %s24, 0
        %s480 = scalar_lea.vmem %s5, %s479
        %p481 = pneg %p194
        %p482 = pneg %p191
        %p483 = scmp.lt.s32.totalorder %s24, 0
        %s484 = scalar_select %p483, %s24, 0
        %s485 = scalar_lea.vmem %s6, %s484
        %p486 = pneg %p220
        %p487 = pneg %p217
        %p488 = pneg %p248
        %p489 = pneg %p245
        %s490 = smul.u32 16, %s23
        %p491 = scmp.lt.s32.totalorder %s490, 15
        %s492 = scalar_select %p491, %s490, 15
        %p493 = scmp.lt.s32.totalorder %s24, 0
        %s494 = scalar_select %p493, %s24, 0
        %s495 = sadd.s32 %s494, %s492
        %s496 = smul.addr %s495, 8
        %s497 = scalar_lea.vmem %s7, %s496
        %s498 = smul.u32 16, %s23
        %s499 = smul.u32 16, %s25
        %p500 = scmp.lt.s32.totalorder %s499, 31
        %s501 = scalar_select %p500, %s499, 31
        %p502 = scmp.lt.s32.totalorder %s24, 0
        %s503 = scalar_select %p502, %s24, 0
        %s504 = sadd.s32 %s503, %s501
        %s505 = smul.addr %s504, 4
        %s506 = scalar_lea.vmem %s1, %s505
        %s507 = smul.u32 16, %s25
        %p508 = scmp.lt.s32.totalorder %s25, 1
        %s509 = scalar_select %p508, %s25, 1
        %s510 = scalar_lea.vmem %s2, %s509
        %p511 = scmp.lt.s32.totalorder %s25, 1
        %s512 = scalar_select %p511, %s25, 1
        %s513 = scalar_lea.vmem %s3, %s512
        %s514 = smul.u32 16, %s23
        %p515 = scmp.lt.s32.totalorder %s514, 15
        %s516 = scalar_select %p515, %s514, 15
        %p517 = scmp.lt.s32.totalorder %s24, 0
        %s518 = scalar_select %p517, %s24, 0
        %s519 = sadd.s32 %s518, %s516
        %s520 = smul.addr %s519, 8
        %s521 = scalar_lea.vmem %s4, %s520
        %s522 = smul.u32 16, %s23
        %p523 = scmp.lt.s32.totalorder %s24, 0
        %s524 = scalar_select %p523, %s24, 0
        %s525 = scalar_lea.vmem %s5, %s524
        %p526 = scmp.lt.s32.totalorder %s24, 0
        %s527 = scalar_select %p526, %s24, 0
        %s528 = scalar_lea.vmem %s6, %s527
        %s529 = smul.u32 16, %s23
        %p530 = scmp.lt.s32.totalorder %s529, 15
        %s531 = scalar_select %p530, %s529, 15
        %p532 = scmp.lt.s32.totalorder %s24, 0
        %s533 = scalar_select %p532, %s24, 0
        %s534 = sadd.s32 %s533, %s531
        %s535 = smul.addr %s534, 8
        %s536 = scalar_lea.vmem %s7, %s535
        %s537 = smul.u32 16, %s23
        %p538 = scmp.eq.s32.totalorder %s25, 0
        // Predicated region
        $region90: #{resnet_forward.69} parent=84 // pred_check
          %p539 = pneg %p538
        $region91: #{resnet_forward.69} parent=84 // pred_check_branch
          %541 = sbr.rel (%p539) target = $region93
        $region92: #{resnet_forward.69} parent=84 // pred_region
          %542 = vst [vmem:[#allocation2] sm:$0xff] 0.0
          %543 = vst [vmem:[#allocation2 + $0x8] sm:$0xff] 0.0
          %544 = vst [vmem:[#allocation2 + $0x10] sm:$0xff] 0.0
          %545 = vst [vmem:[#allocation2 + $0x18] sm:$0xff] 0.0
          %546 = vst [vmem:[#allocation2 + $0x20] sm:$0xff] 0.0
          %547 = vst [vmem:[#allocation2 + $0x28] sm:$0xff] 0.0
          %548 = vst [vmem:[#allocation2 + $0x30] sm:$0xff] 0.0
          %549 = vst [vmem:[#allocation2 + $0x38] sm:$0xff] 0.0
          %550 = vst [vmem:[#allocation2 + $0x40] sm:$0xff] 0.0
          %551 = vst [vmem:[#allocation2 + $0x48] sm:$0xff] 0.0
          %552 = vst [vmem:[#allocation2 + $0x50] sm:$0xff] 0.0
          %553 = vst [vmem:[#allocation2 + $0x58] sm:$0xff] 0.0
          %554 = vst [vmem:[#allocation2 + $0x60] sm:$0xff] 0.0
          %555 = vst [vmem:[#allocation2 + $0x68] sm:$0xff] 0.0
          %556 = vst [vmem:[#allocation2 + $0x70] sm:$0xff] 0.0
          %557 = vst [vmem:[#allocation2 + $0x78] sm:$0xff] 0.0
        $region93: #{resnet_forward.69} parent=84 // pred_fallthru
          _
        %v558 = vld [vmem:[%s438] sm:$0xf]
        %v559 = vld [vmem:[%s438 + $0x4] sm:$0xf]
        %v560 = vld [vmem:[%s438 + $0x8] sm:$0xf]
        %v561 = vld [vmem:[%s438 + $0xc] sm:$0xf]
        %v562 = vld [vmem:[%s438 + $0x10] sm:$0xf]
        %v563 = vld [vmem:[%s438 + $0x14] sm:$0xf]
        %v564 = vld [vmem:[%s438 + $0x18] sm:$0xf]
        %v565 = vld [vmem:[%s438 + $0x1c] sm:$0xf]
        %v566 = vld [vmem:[%s438 + $0x20] sm:$0xf]
        %v567 = vld [vmem:[%s438 + $0x24] sm:$0xf]
        %v568 = vld [vmem:[%s438 + $0x28] sm:$0xf]
        %v569 = vld [vmem:[%s438 + $0x2c] sm:$0xf]
        %v570 = vld [vmem:[%s438 + $0x30] sm:$0xf]
        %v571 = vld [vmem:[%s438 + $0x34] sm:$0xf]
        %v572 = vld [vmem:[%s438 + $0x38] sm:$0xf]
        %v573 = vld [vmem:[%s438 + $0x3c] sm:$0xf]
        %v574 = vunpack.c.l.bf16 %v558
        %v575 = vunpack.c.l.bf16 %v559
        %v576 = vunpack.c.l.bf16 %v560
        %v577 = vunpack.c.l.bf16 %v561
        %v578 = vunpack.c.l.bf16 %v562
        %v579 = vunpack.c.l.bf16 %v563
        %v580 = vunpack.c.l.bf16 %v564
        %v581 = vunpack.c.l.bf16 %v565
        %v582 = vunpack.c.l.bf16 %v566
        %v583 = vunpack.c.l.bf16 %v567
        %v584 = vunpack.c.l.bf16 %v568
        %v585 = vunpack.c.l.bf16 %v569
        %v586 = vunpack.c.l.bf16 %v570
        %v587 = vunpack.c.l.bf16 %v571
        %v588 = vunpack.c.l.bf16 %v572
        %v589 = vunpack.c.l.bf16 %v573
        %v590 = vld [vmem:[%s510] sm:$0x1]
        %v592 = vperm.slane %v590, 0
        %v594 = vmul.f32 %v574, %v592
        %v595 = vmul.f32 %v575, %v592
        %v596 = vmul.f32 %v576, %v592
        %v597 = vmul.f32 %v577, %v592
        %v598 = vmul.f32 %v578, %v592
        %v599 = vmul.f32 %v579, %v592
        %v600 = vmul.f32 %v580, %v592
        %v601 = vmul.f32 %v581, %v592
        %v602 = vmul.f32 %v582, %v592
        %v603 = vmul.f32 %v583, %v592
        %v604 = vmul.f32 %v584, %v592
        %v605 = vmul.f32 %v585, %v592
        %v606 = vmul.f32 %v586, %v592
        %v607 = vmul.f32 %v587, %v592
        %v608 = vmul.f32 %v588, %v592
        %v609 = vmul.f32 %v589, %v592
        %v610 = vld [vmem:[%s513] sm:$0x1]
        %v612 = vperm.slane %v610, 0
        %v614 = vadd.f32 %v594, %v612
        %v615 = vadd.f32 %v595, %v612
        %v616 = vadd.f32 %v596, %v612
        %v617 = vadd.f32 %v597, %v612
        %v618 = vadd.f32 %v598, %v612
        %v619 = vadd.f32 %v599, %v612
        %v620 = vadd.f32 %v600, %v612
        %v621 = vadd.f32 %v601, %v612
        %v622 = vadd.f32 %v602, %v612
        %v623 = vadd.f32 %v603, %v612
        %v624 = vadd.f32 %v604, %v612
        %v625 = vadd.f32 %v605, %v612
        %v626 = vadd.f32 %v606, %v612
        %v627 = vadd.f32 %v607, %v612
        %v628 = vadd.f32 %v608, %v612
        %v629 = vadd.f32 %v609, %v612
        %v630 = vmax.f32 %v614, 0.0
        %v631 = vmax.f32 %v615, 0.0
        %v632 = vmax.f32 %v616, 0.0
        %v633 = vmax.f32 %v617, 0.0
        %v634 = vmax.f32 %v618, 0.0
        %v635 = vmax.f32 %v619, 0.0
        %v636 = vmax.f32 %v620, 0.0
        %v637 = vmax.f32 %v621, 0.0
        %v638 = vmax.f32 %v622, 0.0
        %v639 = vmax.f32 %v623, 0.0
        %v640 = vmax.f32 %v624, 0.0
        %v641 = vmax.f32 %v625, 0.0
        %v642 = vmax.f32 %v626, 0.0
        %v643 = vmax.f32 %v627, 0.0
        %v644 = vmax.f32 %v628, 0.0
        %v645 = vmax.f32 %v629, 0.0
        %v646 = vpack.c.bf16 %v631, %v630
        %v647 = vpack.c.bf16 %v633, %v632
        %v648 = vpack.c.bf16 %v635, %v634
        %v649 = vpack.c.bf16 %v637, %v636
        %v650 = vpack.c.bf16 %v639, %v638
        %v651 = vpack.c.bf16 %v641, %v640
        %v652 = vpack.c.bf16 %v643, %v642
        %v653 = vpack.c.bf16 %v645, %v644
        %v654 = vld [vmem:[#allocation2] sm:$0xff]
        %v655 = vld [vmem:[#allocation2 + $0x8] sm:$0xff]
        %v656 = vld [vmem:[#allocation2 + $0x10] sm:$0xff]
        %v657 = vld [vmem:[#allocation2 + $0x18] sm:$0xff]
        %v658 = vld [vmem:[#allocation2 + $0x20] sm:$0xff]
        %v659 = vld [vmem:[#allocation2 + $0x28] sm:$0xff]
        %v660 = vld [vmem:[#allocation2 + $0x30] sm:$0xff]
        %v661 = vld [vmem:[#allocation2 + $0x38] sm:$0xff]
        %v662 = vld [vmem:[#allocation2 + $0x40] sm:$0xff]
        %v663 = vld [vmem:[#allocation2 + $0x48] sm:$0xff]
        %v664 = vld [vmem:[#allocation2 + $0x50] sm:$0xff]
        %v665 = vld [vmem:[#allocation2 + $0x58] sm:$0xff]
        %v666 = vld [vmem:[#allocation2 + $0x60] sm:$0xff]
        %v667 = vld [vmem:[#allocation2 + $0x68] sm:$0xff]
        %v668 = vld [vmem:[#allocation2 + $0x70] sm:$0xff]
        %v669 = vld [vmem:[#allocation2 + $0x78] sm:$0xff]
        %v670 = vld [vmem:[%s506] sm:$0xf]
        %v671 = vld [vmem:[%s506 + $0x4] sm:$0xf]
        %v672 = vld [vmem:[%s506 + $0x8] sm:$0xf]
        %v673 = vld [vmem:[%s506 + $0xc] sm:$0xf]
        %v674 = vld [vmem:[%s506 + $0x10] sm:$0xf]
        %v675 = vld [vmem:[%s506 + $0x14] sm:$0xf]
        %v676 = vld [vmem:[%s506 + $0x18] sm:$0xf]
        %v677 = vld [vmem:[%s506 + $0x1c] sm:$0xf]
        %v678 = vld [vmem:[%s506 + $0x20] sm:$0xf]
        %v679 = vld [vmem:[%s506 + $0x24] sm:$0xf]
        %v680 = vld [vmem:[%s506 + $0x28] sm:$0xf]
        %v681 = vld [vmem:[%s506 + $0x2c] sm:$0xf]
        %v682 = vld [vmem:[%s506 + $0x30] sm:$0xf]
        %v683 = vld [vmem:[%s506 + $0x34] sm:$0xf]
        %v684 = vld [vmem:[%s506 + $0x38] sm:$0xf]
        %v685 = vld [vmem:[%s506 + $0x3c] sm:$0xf]
        %v702 = vunpack.c.l.b16 %v670
        %v703 = vunpack.c.l.b16 %v671
        %v704 = vunpack.c.l.b16 %v672
        %v705 = vunpack.c.l.b16 %v673
        %v706 = vunpack.c.l.b16 %v674
        %v707 = vunpack.c.l.b16 %v675
        %v708 = vunpack.c.l.b16 %v676
        %v709 = vunpack.c.l.b16 %v677
        %v710 = vunpack.c.l.b16 %v678
        %v711 = vunpack.c.l.b16 %v679
        %v712 = vunpack.c.l.b16 %v680
        %v713 = vunpack.c.l.b16 %v681
        %v714 = vunpack.c.l.b16 %v682
        %v715 = vunpack.c.l.b16 %v683
        %v716 = vunpack.c.l.b16 %v684
        %v717 = vunpack.c.l.b16 %v685
        %v718 = vpack.c.b16 %v703, %v702
        %v719 = vpack.c.b16 %v705, %v704
        %v720 = vpack.c.b16 %v707, %v706
        %v721 = vpack.c.b16 %v709, %v708
        %v722 = vpack.c.b16 %v711, %v710
        %v723 = vpack.c.b16 %v713, %v712
        %v724 = vpack.c.b16 %v715, %v714
        %v725 = vpack.c.b16 %v717, %v716
        %734 = vmatpush.bf16.msra.mxu0 %v725
        %735 = vmatpush.bf16.msra.mxu0 %v724
        %736 = vmatpush.bf16.msra.mxu0 %v723
        %737 = vmatpush.bf16.msra.mxu0 %v722
        %738 = vmatpush.bf16.msra.mxu0 %v721
        %739 = vmatpush.bf16.msra.mxu0 %v720
        %740 = vmatpush.bf16.msra.mxu0 %v719
        %741 = vmatpush.bf16.msra.mxu0 %v718
        %742 = vmatmul.bf16.gmra.mxu0 %v646
        %v743 = vpop.f32.mrf.mxu0
        %v744 = vadd.f32 0.0, %v743
        %v745 = vpop.f32.mrf.mxu0
        %v746 = vadd.f32 0.0, %v745
        %747 = vmatmul.bf16.gmra.mxu0 %v647
        %v748 = vpop.f32.mrf.mxu0
        %v749 = vadd.f32 0.0, %v748
        %v750 = vpop.f32.mrf.mxu0
        %v751 = vadd.f32 0.0, %v750
        %752 = vmatmul.bf16.gmra.mxu0 %v648
        %v753 = vpop.f32.mrf.mxu0
        %v754 = vadd.f32 0.0, %v753
        %v755 = vpop.f32.mrf.mxu0
        %v756 = vadd.f32 0.0, %v755
        %757 = vmatmul.bf16.gmra.mxu0 %v649
        %v758 = vpop.f32.mrf.mxu0
        %v759 = vadd.f32 0.0, %v758
        %v760 = vpop.f32.mrf.mxu0
        %v761 = vadd.f32 0.0, %v760
        %762 = vmatmul.bf16.gmra.mxu0 %v650
        %v763 = vpop.f32.mrf.mxu0
        %v764 = vadd.f32 0.0, %v763
        %v765 = vpop.f32.mrf.mxu0
        %v766 = vadd.f32 0.0, %v765
        %767 = vmatmul.bf16.gmra.mxu0 %v651
        %v768 = vpop.f32.mrf.mxu0
        %v769 = vadd.f32 0.0, %v768
        %v770 = vpop.f32.mrf.mxu0
        %v771 = vadd.f32 0.0, %v770
        %772 = vmatmul.bf16.gmra.mxu0 %v652
        %v773 = vpop.f32.mrf.mxu0
        %v774 = vadd.f32 0.0, %v773
        %v775 = vpop.f32.mrf.mxu0
        %v776 = vadd.f32 0.0, %v775
        %777 = vmatmul.bf16.gmra.mxu0 %v653
        %v778 = vpop.f32.mrf.mxu0
        %v779 = vadd.f32 0.0, %v778
        %v780 = vpop.f32.mrf.mxu0
        %v781 = vadd.f32 0.0, %v780
        %782 = vdwg.mxu0
        %v783 = vadd.f32 %v654, %v744
        %v784 = vadd.f32 %v655, %v746
        %v785 = vadd.f32 %v656, %v749
        %v786 = vadd.f32 %v657, %v751
        %v787 = vadd.f32 %v658, %v754
        %v788 = vadd.f32 %v659, %v756
        %v789 = vadd.f32 %v660, %v759
        %v790 = vadd.f32 %v661, %v761
        %v791 = vadd.f32 %v662, %v764
        %v792 = vadd.f32 %v663, %v766
        %v793 = vadd.f32 %v664, %v769
        %v794 = vadd.f32 %v665, %v771
        %v795 = vadd.f32 %v666, %v774
        %v796 = vadd.f32 %v667, %v776
        %v797 = vadd.f32 %v668, %v779
        %v798 = vadd.f32 %v669, %v781
        %799 = vst [vmem:[#allocation2] sm:$0xff] %v783
        %800 = vst [vmem:[#allocation2 + $0x8] sm:$0xff] %v784
        %801 = vst [vmem:[#allocation2 + $0x10] sm:$0xff] %v785
        %802 = vst [vmem:[#allocation2 + $0x18] sm:$0xff] %v786
        %803 = vst [vmem:[#allocation2 + $0x20] sm:$0xff] %v787
        %804 = vst [vmem:[#allocation2 + $0x28] sm:$0xff] %v788
        %805 = vst [vmem:[#allocation2 + $0x30] sm:$0xff] %v789
        %806 = vst [vmem:[#allocation2 + $0x38] sm:$0xff] %v790
        %807 = vst [vmem:[#allocation2 + $0x40] sm:$0xff] %v791
        %808 = vst [vmem:[#allocation2 + $0x48] sm:$0xff] %v792
        %809 = vst [vmem:[#allocation2 + $0x50] sm:$0xff] %v793
        %810 = vst [vmem:[#allocation2 + $0x58] sm:$0xff] %v794
        %811 = vst [vmem:[#allocation2 + $0x60] sm:$0xff] %v795
        %812 = vst [vmem:[#allocation2 + $0x68] sm:$0xff] %v796
        %813 = vst [vmem:[#allocation2 + $0x70] sm:$0xff] %v797
        %814 = vst [vmem:[#allocation2 + $0x78] sm:$0xff] %v798
        %p815 = scmp.eq.s32.totalorder %s25, 1
        // Predicated region
        $region94: #{resnet_forward.69} parent=84 // pred_check
          %p816 = pneg %p815
        $region95: #{resnet_forward.69} parent=84 // pred_check_branch
          %818 = sbr.rel (%p816) target = $region97
        $region96: #{resnet_forward.69} parent=84 // pred_region
          %v819 = vld [vmem:[#allocation2] sm:$0xff]
          %v820 = vld [vmem:[#allocation2 + $0x8] sm:$0xff]
          %v821 = vld [vmem:[#allocation2 + $0x10] sm:$0xff]
          %v822 = vld [vmem:[#allocation2 + $0x18] sm:$0xff]
          %v823 = vld [vmem:[#allocation2 + $0x20] sm:$0xff]
          %v824 = vld [vmem:[#allocation2 + $0x28] sm:$0xff]
          %v825 = vld [vmem:[#allocation2 + $0x30] sm:$0xff]
          %v826 = vld [vmem:[#allocation2 + $0x38] sm:$0xff]
          %v827 = vld [vmem:[#allocation2 + $0x40] sm:$0xff]
          %v828 = vld [vmem:[#allocation2 + $0x48] sm:$0xff]
          %v829 = vld [vmem:[#allocation2 + $0x50] sm:$0xff]
          %v830 = vld [vmem:[#allocation2 + $0x58] sm:$0xff]
          %v831 = vld [vmem:[#allocation2 + $0x60] sm:$0xff]
          %v832 = vld [vmem:[#allocation2 + $0x68] sm:$0xff]
          %v833 = vld [vmem:[#allocation2 + $0x70] sm:$0xff]
          %v834 = vld [vmem:[#allocation2 + $0x78] sm:$0xff]
          %v835 = vld [vmem:[%s521] sm:$0xff]
          %v836 = vld [vmem:[%s521 + $0x8] sm:$0xff]
          %v837 = vld [vmem:[%s521 + $0x10] sm:$0xff]
          %v838 = vld [vmem:[%s521 + $0x18] sm:$0xff]
          %v839 = vld [vmem:[%s521 + $0x20] sm:$0xff]
          %v840 = vld [vmem:[%s521 + $0x28] sm:$0xff]
          %v841 = vld [vmem:[%s521 + $0x30] sm:$0xff]
          %v842 = vld [vmem:[%s521 + $0x38] sm:$0xff]
          %v843 = vld [vmem:[%s521 + $0x40] sm:$0xff]
          %v844 = vld [vmem:[%s521 + $0x48] sm:$0xff]
          %v845 = vld [vmem:[%s521 + $0x50] sm:$0xff]
          %v846 = vld [vmem:[%s521 + $0x58] sm:$0xff]
          %v847 = vld [vmem:[%s521 + $0x60] sm:$0xff]
          %v848 = vld [vmem:[%s521 + $0x68] sm:$0xff]
          %v849 = vld [vmem:[%s521 + $0x70] sm:$0xff]
          %v850 = vld [vmem:[%s521 + $0x78] sm:$0xff]
          %v851 = vld [vmem:[%s525] sm:$0x1]
          %v853 = vperm.slane %v851, 0
          %v855 = vmul.f32 %v835, %v853
          %v856 = vmul.f32 %v836, %v853
          %v857 = vmul.f32 %v837, %v853
          %v858 = vmul.f32 %v838, %v853
          %v859 = vmul.f32 %v839, %v853
          %v860 = vmul.f32 %v840, %v853
          %v861 = vmul.f32 %v841, %v853
          %v862 = vmul.f32 %v842, %v853
          %v863 = vmul.f32 %v843, %v853
          %v864 = vmul.f32 %v844, %v853
          %v865 = vmul.f32 %v845, %v853
          %v866 = vmul.f32 %v846, %v853
          %v867 = vmul.f32 %v847, %v853
          %v868 = vmul.f32 %v848, %v853
          %v869 = vmul.f32 %v849, %v853
          %v870 = vmul.f32 %v850, %v853
          %v871 = vadd.f32 %v819, %v855
          %v872 = vadd.f32 %v820, %v856
          %v873 = vadd.f32 %v821, %v857
          %v874 = vadd.f32 %v822, %v858
          %v875 = vadd.f32 %v823, %v859
          %v876 = vadd.f32 %v824, %v860
          %v877 = vadd.f32 %v825, %v861
          %v878 = vadd.f32 %v826, %v862
          %v879 = vadd.f32 %v827, %v863
          %v880 = vadd.f32 %v828, %v864
          %v881 = vadd.f32 %v829, %v865
          %v882 = vadd.f32 %v830, %v866
          %v883 = vadd.f32 %v831, %v867
          %v884 = vadd.f32 %v832, %v868
          %v885 = vadd.f32 %v833, %v869
          %v886 = vadd.f32 %v834, %v870
          %v887 = vld [vmem:[%s528] sm:$0x1]
          %v889 = vperm.slane %v887, 0
          %v891 = vadd.f32 %v871, %v889
          %v892 = vadd.f32 %v872, %v889
          %v893 = vadd.f32 %v873, %v889
          %v894 = vadd.f32 %v874, %v889
          %v895 = vadd.f32 %v875, %v889
          %v896 = vadd.f32 %v876, %v889
          %v897 = vadd.f32 %v877, %v889
          %v898 = vadd.f32 %v878, %v889
          %v899 = vadd.f32 %v879, %v889
          %v900 = vadd.f32 %v880, %v889
          %v901 = vadd.f32 %v881, %v889
          %v902 = vadd.f32 %v882, %v889
          %v903 = vadd.f32 %v883, %v889
          %v904 = vadd.f32 %v884, %v889
          %v905 = vadd.f32 %v885, %v889
          %v906 = vadd.f32 %v886, %v889
          %v907 = vmax.f32 %v891, 0.0
          %v908 = vmax.f32 %v892, 0.0
          %v909 = vmax.f32 %v893, 0.0
          %v910 = vmax.f32 %v894, 0.0
          %v911 = vmax.f32 %v895, 0.0
          %v912 = vmax.f32 %v896, 0.0
          %v913 = vmax.f32 %v897, 0.0
          %v914 = vmax.f32 %v898, 0.0
          %v915 = vmax.f32 %v899, 0.0
          %v916 = vmax.f32 %v900, 0.0
          %v917 = vmax.f32 %v901, 0.0
          %v918 = vmax.f32 %v902, 0.0
          %v919 = vmax.f32 %v903, 0.0
          %v920 = vmax.f32 %v904, 0.0
          %v921 = vmax.f32 %v905, 0.0
          %v922 = vmax.f32 %v906, 0.0
          %923 = vst [vmem:[%s536] sm:$0xff] %v907
          %924 = vst [vmem:[%s536 + $0x8] sm:$0xff] %v908
          %925 = vst [vmem:[%s536 + $0x10] sm:$0xff] %v909
          %926 = vst [vmem:[%s536 + $0x18] sm:$0xff] %v910
          %927 = vst [vmem:[%s536 + $0x20] sm:$0xff] %v911
          %928 = vst [vmem:[%s536 + $0x28] sm:$0xff] %v912
          %929 = vst [vmem:[%s536 + $0x30] sm:$0xff] %v913
          %930 = vst [vmem:[%s536 + $0x38] sm:$0xff] %v914
          %931 = vst [vmem:[%s536 + $0x40] sm:$0xff] %v915
          %932 = vst [vmem:[%s536 + $0x48] sm:$0xff] %v916
          %933 = vst [vmem:[%s536 + $0x50] sm:$0xff] %v917
          %934 = vst [vmem:[%s536 + $0x58] sm:$0xff] %v918
          %935 = vst [vmem:[%s536 + $0x60] sm:$0xff] %v919
          %936 = vst [vmem:[%s536 + $0x68] sm:$0xff] %v920
          %937 = vst [vmem:[%s536 + $0x70] sm:$0xff] %v921
          %938 = vst [vmem:[%s536 + $0x78] sm:$0xff] %v922
        $region97: #{resnet_forward.69} parent=84 // pred_fallthru
          _
        %s939 = smul.u32 16, %s23
        %p940 = scmp.lt.s32.totalorder %s939, 15
        %s941 = scalar_select %p940, %s939, 15
        %p942 = scmp.lt.s32.totalorder %s24, 0
        %s943 = scalar_select %p942, %s24, 0
        %s944 = sadd.s32 %s943, %s941
        %s945 = smul.addr %s944, 8
        %s946 = scalar_lea.vmem %s7, %s945
        // Predicated region
        $region98: #{resnet_forward.69} parent=84 // pred_check
          %p947 = pneg %p245
        $region99: #{resnet_forward.69} parent=84 // pred_check_branch
          %949 = sbr.rel (%p947) target = $region101
        $region100: #{resnet_forward.69} parent=84 // pred_region
          %s950 = smul.u32 16, %s23
        $region101: #{resnet_forward.69} parent=84 // pred_fallthru
          _
        // Predicated region
        $region102: #{resnet_forward.69} parent=84 // pred_check
          %p951 = pneg %p245
        $region103: #{resnet_forward.69} parent=84 // pred_check_branch
          %953 = sbr.rel (%p951) target = $region105
        $region104: #{resnet_forward.69} parent=84 // pred_region
          %s954 = smul.u32 16, %s23
          %p955 = scmp.lt.s32.totalorder %s954, 15
          %s956 = scalar_select %p955, %s954, 15
          %p957 = scmp.lt.s32.totalorder %s24, 0
          %s958 = scalar_select %p957, %s24, 0
          %s959 = sadd.s32 %s958, %s956
          %s960 = smul.addr %s959, 8
          %s961 = scalar_lea.vmem %s7, %s960
        $region105: #{resnet_forward.69} parent=84 // pred_fallthru
          _
      $region85: #{resnet_forward.69} parent=5 // pred_fallthru
        _
      %p962 = scmp.le.s32.totalorder 2, %s13
      // Predicated region
      $region106: #{resnet_forward.69} parent=5 // pred_check
        %p963 = pneg %p962
      $region107: #{resnet_forward.69} parent=5 // pred_check_branch
        %965 = sbr.rel (%p963) target = $region109
      $region108: #{resnet_forward.69} parent=5 // pred_region
        %s966 = ssub.s32 %s13, 2
      $region109: #{resnet_forward.69} parent=5 // pred_fallthru
        _
    $region6: #{resnet_forward.69} parent=1 // loop_footer
      %s17 = sadd.s32 1, %s13
    $region7: #{resnet_forward.69} parent=1 // loop_footer_branch
      %12 = sbr.rel target = $region3
    $region8: #{resnet_forward.69} parent=1 // loop_exit
      _

// kernel: tile.293
$region0: #{tile.293}
  #allocation0 [shape = 's32[1]{0}', space=sflag, size = 0x4, scoped, tag = 'scoped memory for tile.293']
  %s0 = inlined_call_operand.vmem [shape: f32[32], index: 0, kind: input, shape index: {}]
  %s1 = inlined_call_operand.vmem [shape: f32[9,32], index: 1, kind: output, shape index: {}]
  // Predicated region
  $region2: #{tile.293} parent=0 // pred_check
    _
  $region3: #{tile.293} parent=0 // pred_check_branch
    %3 = sbr.rel (0) target = $region5
  $region4: #{tile.293} parent=0 // pred_region
    _
  $region5: #{tile.293} parent=0 // pred_fallthru
    _
  %v4 = vld [vmem:[%s0] ss:$0 sm:$0xff]
  %5 = vst [vmem:[%s1] sm:$0xff] %v4
  %s6 = scalar_lea.vmem %s1, 8
  %7 = vst [vmem:[%s6] sm:$0xff] %v4

// kernel: resnet_forward.75
$region0: #{resnet_forward.75}
  #allocation0 [shape = 'u32[]', space=smem, size = 0x4, offset = 0x4, fixed_abs, tag = 'smem constant byte address 0x4 - core index']
  #allocation1 [shape = 'u32[72,128]{1,0:T(1,128)}', space=vmem, size = 0x9000, scoped, tag = 'internal scratch']
  %s0 = inlined_call_operand.vmem [shape: f32[128,32], index: 0, kind: input, shape index: {}]
  %s1 = inlined_call_operand.vmem [shape: f32[1,32], index: 1, kind: output, shape index: {0}]
  %s2 = inlined_call_operand.vmem [shape: f32[1,32], index: 2, kind: output, shape index: {1}]
  %3 = xla_tuple %s1, %s2
  %s4 = sld [smem:[#allocation0]]
  $region26: #{resnet_forward.75} parent=0
    _
  %s6 = ssub.s32 1, %s4
  %s7 = scalar_select 0, %s6, %s4
  // Predicated region
  $region2: #{resnet_forward.75} parent=0 // pred_check
    _
  $region3: #{resnet_forward.75} parent=0 // pred_check_branch
    %9 = sbr.rel (0) target = $region5
  $region4: #{resnet_forward.75} parent=0 // pred_region
    _
  $region5: #{resnet_forward.75} parent=0 // pred_fallthru
    _
  %p10 = scmp.eq.s32.totalorder 0, 0
  // Predicated region
  $region6: #{resnet_forward.75} parent=0 // pred_check
    %p11 = pneg %p10
  $region7: #{resnet_forward.75} parent=0 // pred_check_branch
    %13 = sbr.rel (%p11) target = $region9
  $region8: #{resnet_forward.75} parent=0 // pred_region
    %vm14 = vcmask 253952
    %15 = vst.msk [vmem:[%s1] sm:$0x1] %vm14, 0.0
    %16 = vst.msk [vmem:[%s2] sm:$0x1] %vm14, 0.0
  $region9: #{resnet_forward.75} parent=0 // pred_fallthru
    _
  %v17 = vld [vmem:[%s0] sm:$0xff]
  %v18 = vld [vmem:[%s0 + $0x8] sm:$0xff]
  %v19 = vld [vmem:[%s0 + $0x10] sm:$0xff]
  %v20 = vld [vmem:[%s0 + $0x18] sm:$0xff]
  %v21 = vld [vmem:[%s0 + $0x20] sm:$0xff]
  %v22 = vld [vmem:[%s0 + $0x28] sm:$0xff]
  %v23 = vld [vmem:[%s0 + $0x30] sm:$0xff]
  %v24 = vld [vmem:[%s0 + $0x38] sm:$0xff]
  %v25 = vld [vmem:[%s0 + $0x40] sm:$0xff]
  %v26 = vld [vmem:[%s0 + $0x48] sm:$0xff]
  %v27 = vld [vmem:[%s0 + $0x50] sm:$0xff]
  %v28 = vld [vmem:[%s0 + $0x58] sm:$0xff]
  %v29 = vld [vmem:[%s0 + $0x60] sm:$0xff]
  %v30 = vld [vmem:[%s0 + $0x68] sm:$0xff]
  %v31 = vld [vmem:[%s0 + $0x70] sm:$0xff]
  %v32 = vld [vmem:[%s0 + $0x78] sm:$0xff]
  %v33 = vld [vmem:[%s1] sm:$0x1]
  %vm34 = vcmask 261120
  %v35 = vsel %vm34, %v17, 0.0
  %v36 = vsel %vm34, %v18, 0.0
  %v37 = vadd.f32 %v35, %v36
  %v38 = vsel %vm34, %v19, 0.0
  %v39 = vadd.f32 %v37, %v38
  %v40 = vsel %vm34, %v20, 0.0
  %v41 = vadd.f32 %v39, %v40
  %v42 = vsel %vm34, %v21, 0.0
  %v43 = vadd.f32 %v41, %v42
  %v44 = vsel %vm34, %v22, 0.0
  %v45 = vadd.f32 %v43, %v44
  %v46 = vsel %vm34, %v23, 0.0
  %v47 = vadd.f32 %v45, %v46
  %v48 = vsel %vm34, %v24, 0.0
  %v49 = vadd.f32 %v47, %v48
  %v50 = vsel %vm34, %v25, 0.0
  %v51 = vadd.f32 %v49, %v50
  %v52 = vsel %vm34, %v26, 0.0
  %v53 = vadd.f32 %v51, %v52
  %v54 = vsel %vm34, %v27, 0.0
  %v55 = vadd.f32 %v53, %v54
  %v56 = vsel %vm34, %v28, 0.0
  %v57 = vadd.f32 %v55, %v56
  %v58 = vsel %vm34, %v29, 0.0
  %v59 = vadd.f32 %v57, %v58
  %v60 = vsel %vm34, %v30, 0.0
  %v61 = vadd.f32 %v59, %v60
  %v62 = vsel %vm34, %v31, 0.0
  %v63 = vadd.f32 %v61, %v62
  %v64 = vsel %vm34, %v32, 0.0
  %v65 = vadd.f32 %v63, %v64
  %v66 = vrot.slane %v65, 4
  %v67 = vadd.f32 %v65, %v66
  %v68 = vrot.slane %v67, 2
  %v69 = vadd.f32 %v67, %v68
  %v70 = vrot.slane %v69, 1
  %v71 = vadd.f32 %v69, %v70
  %v72 = vadd.f32 %v33, %v71
  %vm73 = vcmask 253952
  %74 = vst.msk [vmem:[%s1] sm:$0x1] %vm73, %v72
  %v75 = vld [vmem:[%s2] sm:$0x1]
  %v76 = vmul.f32 %v17, %v17
  %v77 = vmul.f32 %v18, %v18
  %v78 = vmul.f32 %v19, %v19
  %v79 = vmul.f32 %v20, %v20
  %v80 = vmul.f32 %v21, %v21
  %v81 = vmul.f32 %v22, %v22
  %v82 = vmul.f32 %v23, %v23
  %v83 = vmul.f32 %v24, %v24
  %v84 = vmul.f32 %v25, %v25
  %v85 = vmul.f32 %v26, %v26
  %v86 = vmul.f32 %v27, %v27
  %v87 = vmul.f32 %v28, %v28
  %v88 = vmul.f32 %v29, %v29
  %v89 = vmul.f32 %v30, %v30
  %v90 = vmul.f32 %v31, %v31
  %v91 = vmul.f32 %v32, %v32
  %v92 = vsel %vm34, %v76, 0.0
  %v93 = vsel %vm34, %v77, 0.0
  %v94 = vadd.f32 %v92, %v93
  %v95 = vsel %vm34, %v78, 0.0
  %v96 = vadd.f32 %v94, %v95
  %v97 = vsel %vm34, %v79, 0.0
  %v98 = vadd.f32 %v96, %v97
  %v99 = vsel %vm34, %v80, 0.0
  %v100 = vadd.f32 %v98, %v99
  %v101 = vsel %vm34, %v81, 0.0
  %v102 = vadd.f32 %v100, %v101
  %v103 = vsel %vm34, %v82, 0.0
  %v104 = vadd.f32 %v102, %v103
  %v105 = vsel %vm34, %v83, 0.0
  %v106 = vadd.f32 %v104, %v105
  %v107 = vsel %vm34, %v84, 0.0
  %v108 = vadd.f32 %v106, %v107
  %v109 = vsel %vm34, %v85, 0.0
  %v110 = vadd.f32 %v108, %v109
  %v111 = vsel %vm34, %v86, 0.0
  %v112 = vadd.f32 %v110, %v111
  %v113 = vsel %vm34, %v87, 0.0
  %v114 = vadd.f32 %v112, %v113
  %v115 = vsel %vm34, %v88, 0.0
  %v116 = vadd.f32 %v114, %v115
  %v117 = vsel %vm34, %v89, 0.0
  %v118 = vadd.f32 %v116, %v117
  %v119 = vsel %vm34, %v90, 0.0
  %v120 = vadd.f32 %v118, %v119
  %v121 = vsel %vm34, %v91, 0.0
  %v122 = vadd.f32 %v120, %v121
  %v123 = vrot.slane %v122, 4
  %v124 = vadd.f32 %v122, %v123
  %v125 = vrot.slane %v124, 2
  %v126 = vadd.f32 %v124, %v125
  %v127 = vrot.slane %v126, 1
  %v128 = vadd.f32 %v126, %v127
  %v129 = vadd.f32 %v75, %v128
  %130 = vst.msk [vmem:[%s2] sm:$0x1] %vm73, %v129
  // Predicated region
  $region10: #{resnet_forward.75} parent=0 // pred_check
    _
  $region11: #{resnet_forward.75} parent=0 // pred_check_branch
    %132 = sbr.rel (0) target = $region13
  $region12: #{resnet_forward.75} parent=0 // pred_region
    _
  $region13: #{resnet_forward.75} parent=0 // pred_fallthru
    _
  // Predicated region
  $region14: #{resnet_forward.75} parent=0 // pred_check
    _
  $region15: #{resnet_forward.75} parent=0 // pred_check_branch
    %134 = sbr.rel (0) target = $region17
  $region16: #{resnet_forward.75} parent=0 // pred_region
    _
  $region17: #{resnet_forward.75} parent=0 // pred_fallthru
    _
  // Predicated region
  $region18: #{resnet_forward.75} parent=0 // pred_check
    _
  $region19: #{resnet_forward.75} parent=0 // pred_check_branch
    %136 = sbr.rel (0) target = $region21
  $region20: #{resnet_forward.75} parent=0 // pred_region
    _
  $region21: #{resnet_forward.75} parent=0 // pred_fallthru
    _
  // Predicated region
  $region22: #{resnet_forward.75} parent=0 // pred_check
    _
  $region23: #{resnet_forward.75} parent=0 // pred_check_branch
    %138 = sbr.rel (0) target = $region25
  $region24: #{resnet_forward.75} parent=0 // pred_region
    _
  $region25: #{resnet_forward.75} parent=0 // pred_fallthru
    _

// kernel: tile.298
$region0: #{tile.298}
  %s0 = inlined_call_operand.vmem [shape: f32[9,32], index: 0, kind: input, shape index: {}]
  %s1 = inlined_call_operand.vmem [shape: f32[1,288], index: 1, kind: output, shape index: {}]
  $region1: #{tile.298} parent=0
    #allocation0 [shape = 'u8[12288]{0}', space=vmem, size = 0x3000, scoped, tag = 'scoped mem for output reshape']
    %v2 = vld [vmem:[%s0] ss:$4 sm:$0x7]
    %vm3 = vcmask 261120
    %4 = vst.msk [vmem:[#allocation0] ss:$8 sm:$0x7] %vm3, %v2
    %s5 = scalar_lea.vmem %s0, 3
    %s6 = smov 3
    %v7 = vld [vmem:[%s5] ss:$4 sm:%s6]
    %8 = vrot.lane.b32.xlu0 %v7, 96
    %v9 = vpop.permute.xlu0 %8
    %vm10 = vcmask 1048320
    %11 = vst.msk [vmem:[#allocation0] ss:$8 sm:$0x3] %vm10, %v9
    %s12 = scalar_lea.vmem %s0, 2
    %s13 = smov 3
    %v14 = vld [vmem:[%s12] ss:$4 sm:%s13]
    %15 = vrot.lane.b32.xlu0 %v14, 64
    %v16 = vpop.permute.xlu0 %15
    %vm17 = vcmask 785920
    %18 = vst.msk [vmem:[#allocation0] ss:$8 sm:$0x3] %vm17, %v16
    %s19 = scalar_lea.vmem %s0, 1
    %s20 = smov 3
    %v21 = vld [vmem:[%s19] ss:$4 sm:%s20]
    %22 = vrot.lane.b32.xlu0 %v21, 32
    %v23 = vpop.permute.xlu0 %22
    %vm24 = vcmask 523520
    %25 = vst.msk [vmem:[#allocation0] ss:$8 sm:$0x3] %vm24, %v23
    %s27 = ssub.s32 2, 1
    %v28 = vld [vmem:[#allocation0] sm:%s27]
    %s30 = ssub.s32 2, 1
    %31 = vst [vmem:[%s1] sm:%s30] %v28
    %s32 = scalar_lea.vmem [#allocation0], 8
    %v33 = vld [vmem:[%s32] sm:%s27]
    %s35 = ssub.s32 2, 1
    %s36 = scalar_lea.vmem %s1, 1
    %37 = vst [vmem:[%s36] sm:%s35] %v33
    %s38 = scalar_lea.vmem [#allocation0], 16
    %v39 = vld [vmem:[%s38] sm:%s27]
    %s41 = ssub.s32 2, 1
    %s42 = scalar_lea.vmem %s1, 2
    %43 = vst [vmem:[%s42] sm:%s41] %v39

// kernel: resnet_forward.81
$region0: #{resnet_forward.81}
  #allocation0 [shape = 'u32[]', space=smem, size = 0x4, offset = 0x4, fixed_abs, tag = 'smem constant byte address 0x4 - core index']
  #allocation1 [shape = 'u32[72,128]{1,0:T(1,128)}', space=vmem, size = 0x9000, scoped, tag = 'internal scratch']
  #allocation2 [shape = 'f32[128,128]{1,0:T(8,128)}', space=vmem, size = 0x10000, scoped, tag = 'scratch operand']
  %s0 = inlined_call_operand.vmem [shape: bf16[128,384], index: 0, kind: input, shape index: {}]
  %s1 = inlined_call_operand.vmem [shape: bf16[384,128], index: 1, kind: input, shape index: {}]
  %s2 = inlined_call_operand.vmem [shape: f32[1,384], index: 2, kind: input, shape index: {}]
  %s3 = inlined_call_operand.vmem [shape: f32[1,384], index: 3, kind: input, shape index: {}]
  %s4 = inlined_call_operand.vmem [shape: f32[128,128], index: 4, kind: output, shape index: {}]
  %s5 = sld [smem:[#allocation0]]
  $region98: #{resnet_forward.81} parent=0
    _
  %s7 = ssub.s32 1, %s5
  %s8 = scalar_select 0, %s7, %s5
  $region1: #{resnet_forward.81} parent=0
    #allocation3 [shape = 'u8[65536]{0}', space=vmem, size = 0x10000, scoped, tag = 'input window, operand 0']
    loop: start=0, step=1, limit=5
    $region2: #{resnet_forward.81} parent=1 // loop_pre_header
      _
    $region3: #{resnet_forward.81} parent=1 // loop_header
      %s10 = sphi 0, %s14
      %p11 = scmp.ge.s32.totalorder %s10, 5
      %s17 = sphi 0, %s36
      %s18 = sphi 0, %s32
      %s19 = sphi 0, %s28
      %s20 = sphi 0, %s17
      %s21 = sphi 0, %s18
      %s22 = sphi 0, %s19
      %s23 = sphi 0, %s20
      %s24 = sphi 0, %s21
      %s25 = sphi 0, %s22
      %s41 = sphi 0, %s43
      %s44 = sphi 0, %s41
      %s45 = sphi 0, %s44
      %s61 = sphi 0, %s45
      %s69 = sphi 0, %s71
      %s72 = sphi 0, %s69
      %s73 = sphi 0, %s72
      %s89 = sphi 0, %s73
      %s95 = sphi 0, %s97
      %s98 = sphi 0, %s95
      %s99 = sphi 0, %s98
      %s115 = sphi 0, %s99
      %s121 = sphi 0, %s123
      %s124 = sphi 0, %s121
      %s125 = sphi 0, %s124
      %s141 = sphi 0, %s125
      %s149 = sphi 0, %s151
      %s152 = sphi 0, %s149
      %s153 = sphi 0, %s152
      %s169 = sphi 0, %s153
    $region4: #{resnet_forward.81} parent=1 // loop_header_branch
      %13 = sbr.rel (%p11) target = $region8
    $region5: #{resnet_forward.81} parent=1 // loop_body
      %s15 = ssub.s32 %s10, 1
      %s16 = ssub.s32 %s10, 2
      %s26 = sadd.s32 1, %s19
      %p27 = scmp.ge.s32.totalorder %s26, 3
      %s28 = scalar_select %p27, 0, %s26
      %s29 = sadd.s32 1, %s18
      %s30 = scalar_select %p27, %s29, %s18
      %p31 = scmp.ge.s32.totalorder %s30, 1
      %s32 = scalar_select %p31, 0, %s30
      %s33 = sadd.s32 1, %s17
      %s34 = scalar_select %p31, %s33, %s17
      %p35 = scmp.ge.s32.totalorder %s34, 1
      %s36 = scalar_select %p35, 0, %s34
      %s37 = ssub.s32 %s17, %s36
      %s38 = ssub.s32 %s19, %s28
      %s39 = sor.u32 %s37, %s38
      %p40 = scmp.eq.s32.totalorder %s39, 0
      %s42 = sadd.s32 %s41, 1
      %s43 = scalar_select %p40, %s41, %s42
      %p46 = pneg %p40
      %p47 = scmp.eq.s32.totalorder %s10, 2
      %p48 = por %p46, %p47
      %p49 = scmp.ne.s32.totalorder %s41, %s44
      %p50 = scmp.eq.s32.totalorder %s10, 0
      %p51 = por %p49, %p50
      %p52 = scmp.ne.s32.totalorder %s41, %s44
      %p53 = scmp.eq.s32.totalorder %s15, 2
      %p54 = por %p52, %p53
      %p55 = scmp.ne.s32.totalorder %s44, %s45
      %p56 = scmp.eq.s32.totalorder %s15, 0
      %p57 = por %p55, %p56
      %p58 = scmp.ne.s32.totalorder %s44, %s45
      %p59 = scmp.eq.s32.totalorder %s16, 2
      %p60 = por %p58, %p59
      %p62 = scmp.ne.s32.totalorder %s45, %s61
      %p63 = scmp.eq.s32.totalorder %s16, 0
      %p64 = por %p62, %p63
      %s65 = ssub.s32 %s19, %s28
      %s66 = ssub.s32 %s18, %s32
      %s67 = sor.u32 %s65, %s66
      %p68 = scmp.eq.s32.totalorder %s67, 0
      %s70 = sadd.s32 %s69, 1
      %s71 = scalar_select %p68, %s69, %s70
      %p74 = pneg %p68
      %p75 = scmp.eq.s32.totalorder %s10, 2
      %p76 = por %p74, %p75
      %p77 = scmp.ne.s32.totalorder %s69, %s72
      %p78 = scmp.eq.s32.totalorder %s10, 0
      %p79 = por %p77, %p78
      %p80 = scmp.ne.s32.totalorder %s69, %s72
      %p81 = scmp.eq.s32.totalorder %s15, 2
      %p82 = por %p80, %p81
      %p83 = scmp.ne.s32.totalorder %s72, %s73
      %p84 = scmp.eq.s32.totalorder %s15, 0
      %p85 = por %p83, %p84
      %p86 = scmp.ne.s32.totalorder %s72, %s73
      %p87 = scmp.eq.s32.totalorder %s16, 2
      %p88 = por %p86, %p87
      %p90 = scmp.ne.s32.totalorder %s73, %s89
      %p91 = scmp.eq.s32.totalorder %s16, 0
      %p92 = por %p90, %p91
      %s93 = ssub.s32 %s19, %s28
      %p94 = scmp.eq.s32.totalorder %s93, 0
      %s96 = sadd.s32 %s95, 1
      %s97 = scalar_select %p94, %s95, %s96
      %p100 = pneg %p94
      %p101 = scmp.eq.s32.totalorder %s10, 2
      %p102 = por %p100, %p101
      %p103 = scmp.ne.s32.totalorder %s95, %s98
      %p104 = scmp.eq.s32.totalorder %s10, 0
      %p105 = por %p103, %p104
      %p106 = scmp.ne.s32.totalorder %s95, %s98
      %p107 = scmp.eq.s32.totalorder %s15, 2
      %p108 = por %p106, %p107
      %p109 = scmp.ne.s32.totalorder %s98, %s99
      %p110 = scmp.eq.s32.totalorder %s15, 0
      %p111 = por %p109, %p110
      %p112 = scmp.ne.s32.totalorder %s98, %s99
      %p113 = scmp.eq.s32.totalorder %s16, 2
      %p114 = por %p112, %p113
      %p116 = scmp.ne.s32.totalorder %s99, %s115
      %p117 = scmp.eq.s32.totalorder %s16, 0
      %p118 = por %p116, %p117
      %s119 = ssub.s32 %s19, %s28
      %p120 = scmp.eq.s32.totalorder %s119, 0
      %s122 = sadd.s32 %s121, 1
      %s123 = scalar_select %p120, %s121, %s122
      %p126 = pneg %p120
      %p127 = scmp.eq.s32.totalorder %s10, 2
      %p128 = por %p126, %p127
      %p129 = scmp.ne.s32.totalorder %s121, %s124
      %p130 = scmp.eq.s32.totalorder %s10, 0
      %p131 = por %p129, %p130
      %p132 = scmp.ne.s32.totalorder %s121, %s124
      %p133 = scmp.eq.s32.totalorder %s15, 2
      %p134 = por %p132, %p133
      %p135 = scmp.ne.s32.totalorder %s124, %s125
      %p136 = scmp.eq.s32.totalorder %s15, 0
      %p137 = por %p135, %p136
      %p138 = scmp.ne.s32.totalorder %s124, %s125
      %p139 = scmp.eq.s32.totalorder %s16, 2
      %p140 = por %p138, %p139
      %p142 = scmp.ne.s32.totalorder %s125, %s141
      %p143 = scmp.eq.s32.totalorder %s16, 0
      %p144 = por %p142, %p143
      %s145 = ssub.s32 %s17, %s36
      %s146 = ssub.s32 %s18, %s32
      %s147 = sor.u32 %s145, %s146
      %p148 = scmp.eq.s32.totalorder %s147, 0
      %s150 = sadd.s32 %s149, 1
      %s151 = scalar_select %p148, %s149, %s150
      %p154 = pneg %p148
      %p155 = scmp.eq.s32.totalorder %s10, 2
      %p156 = por %p154, %p155
      %p157 = scmp.ne.s32.totalorder %s149, %s152
      %p158 = scmp.eq.s32.totalorder %s10, 0
      %p159 = por %p157, %p158
      %p160 = scmp.ne.s32.totalorder %s149, %s152
      %p161 = scmp.eq.s32.totalorder %s15, 2
      %p162 = por %p160, %p161
      %p163 = scmp.ne.s32.totalorder %s152, %s153
      %p164 = scmp.eq.s32.totalorder %s15, 0
      %p165 = por %p163, %p164
      %p166 = scmp.ne.s32.totalorder %s152, %s153
      %p167 = scmp.eq.s32.totalorder %s16, 2
      %p168 = por %p166, %p167
      %p170 = scmp.ne.s32.totalorder %s153, %s169
      %p171 = scmp.eq.s32.totalorder %s16, 0
      %p172 = por %p170, %p171
      %p173 = scmp.le.s32.totalorder 1, %s10
      %p174 = scmp.lt.s32.totalorder %s10, 4
      %p175 = pnand %p173, %p174
      %p176 = pneg %p175
      // Predicated region
      $region9: #{resnet_forward.81} parent=5 // pred_check
        _
      $region10: #{resnet_forward.81} parent=5 // pred_check_branch
        %178 = sbr.rel (%p175) target = $region12
      $region11: #{resnet_forward.81} parent=5 // pred_region
        %s179 = ssub.s32 %s10, 1
      $region12: #{resnet_forward.81} parent=5 // pred_fallthru
        _
      %p180 = scmp.lt.s32.totalorder %s10, 3
      // Predicated region
      $region13: #{resnet_forward.81} parent=5 // pred_check
        %p181 = pneg %p180
      $region14: #{resnet_forward.81} parent=5 // pred_check_branch
        %183 = sbr.rel (%p181) target = $region16
      $region15: #{resnet_forward.81} parent=5 // pred_region
        // Predicated region
        $region17: #{resnet_forward.81} parent=15 // pred_check
          %p184 = pneg %p51
        $region18: #{resnet_forward.81} parent=15 // pred_check_branch
          %186 = sbr.rel (%p184) target = $region20
        $region19: #{resnet_forward.81} parent=15 // pred_region
          %s187 = sand.u32 %s41, 1
          %s188 = sand.u32 %s41, 1
          %s189 = smul.addr %s188, 64
          %s190 = scalar_lea.vmem [#allocation3], %s189
          %s191 = smul.u32 16, %s17
          %s192 = smul.addr %s191, 3
          %s193 = sadd.s32 %s19, %s192
          %s194 = smul.addr %s193, 4
          %s195 = scalar_lea.vmem %s0, %s194
          // Predicated region
          $region21: #{resnet_forward.81} parent=19 // pred_check
            _
          $region22: #{resnet_forward.81} parent=19 // pred_check_branch
            %197 = sbr.rel (0) target = $region24
          $region23: #{resnet_forward.81} parent=19 // pred_region
            // Predicated region
            $region25: #{resnet_forward.81} parent=23 // pred_check
              _
            $region26: #{resnet_forward.81} parent=23 // pred_check_branch
              %199 = sbr.rel target = $region28
            $region27: #{resnet_forward.81} parent=23 // pred_region
              // Predicated region
              $region40: #{resnet_forward.81} parent=27 // pred_check
                _
              $region41: #{resnet_forward.81} parent=27 // pred_check_branch
                %245 = sbr.rel (0) target = $region43
              $region42: #{resnet_forward.81} parent=27 // pred_region
                loop: start=0, step=1, limit=1
                $region44: #{resnet_forward.81} parent=42 // loop_pre_header
                  _
                $region45: #{resnet_forward.81} parent=42 // loop_header
                  %s247 = sphi 0, %s251
                  %p248 = scmp.ge.s32.totalorder %s247, 1
                  %s252 = sphi %s195, %s195
                  %s253 = sphi %s190, %s190
                $region46: #{resnet_forward.81} parent=42 // loop_header_branch
                  %250 = sbr.rel (%p248) target = $region50
                $region47: #{resnet_forward.81} parent=42 // loop_body
                  _
                $region48: #{resnet_forward.81} parent=42 // loop_footer
                  %s251 = sadd.s32 1, %s247
                $region49: #{resnet_forward.81} parent=42 // loop_footer_branch
                  %246 = sbr.rel target = $region45
                $region50: #{resnet_forward.81} parent=42 // loop_exit
                  _
                %s255 = ssub.s32 16, 1
                loop: start=0, step=1, limit=1
                $region51: #{resnet_forward.81} parent=42 // loop_pre_header
                  _
                $region52: #{resnet_forward.81} parent=42 // loop_header
                  %s257 = sphi 0, %s261
                  %p258 = scmp.ge.s32.totalorder %s257, 1
                  %s262 = sphi %s195, %s195
                  %s263 = sphi %s190, %s190
                $region53: #{resnet_forward.81} parent=42 // loop_header_branch
                  %260 = sbr.rel (%p258) target = $region57
                $region54: #{resnet_forward.81} parent=42 // loop_body
                  %v264 = vld [vmem:[%s262] sm:%s255]
                  %265 = vst [vmem:[%s263] sm:%s255] %v264
                  %v266 = vld [vmem:[%s262 + $0xc] sm:%s255]
                  %267 = vst [vmem:[%s263 + $0x4] sm:%s255] %v266
                  %v268 = vld [vmem:[%s262 + $0x18] sm:%s255]
                  %269 = vst [vmem:[%s263 + $0x8] sm:%s255] %v268
                  %v270 = vld [vmem:[%s262 + $0x24] sm:%s255]
                  %271 = vst [vmem:[%s263 + $0xc] sm:%s255] %v270
                  %v272 = vld [vmem:[%s262 + $0x30] sm:%s255]
                  %273 = vst [vmem:[%s263 + $0x10] sm:%s255] %v272
                  %v274 = vld [vmem:[%s262 + $0x3c] sm:%s255]
                  %275 = vst [vmem:[%s263 + $0x14] sm:%s255] %v274
                  %v276 = vld [vmem:[%s262 + $0x48] sm:%s255]
                  %277 = vst [vmem:[%s263 + $0x18] sm:%s255] %v276
                  %v278 = vld [vmem:[%s262 + $0x54] sm:%s255]
                  %279 = vst [vmem:[%s263 + $0x1c] sm:%s255] %v278
                  %v280 = vld [vmem:[%s262 + $0x60] sm:%s255]
                  %281 = vst [vmem:[%s263 + $0x20] sm:%s255] %v280
                  %v282 = vld [vmem:[%s262 + $0x6c] sm:%s255]
                  %283 = vst [vmem:[%s263 + $0x24] sm:%s255] %v282
                  %v284 = vld [vmem:[%s262 + $0x78] sm:%s255]
                  %285 = vst [vmem:[%s263 + $0x28] sm:%s255] %v284
                  %v286 = vld [vmem:[%s262 + $0x84] sm:%s255]
                  %287 = vst [vmem:[%s263 + $0x2c] sm:%s255] %v286
                  %v288 = vld [vmem:[%s262 + $0x90] sm:%s255]
                  %289 = vst [vmem:[%s263 + $0x30] sm:%s255] %v288
                  %v290 = vld [vmem:[%s262 + $0x9c] sm:%s255]
                  %291 = vst [vmem:[%s263 + $0x34] sm:%s255] %v290
                  %v292 = vld [vmem:[%s262 + $0xa8] sm:%s255]
                  %293 = vst [vmem:[%s263 + $0x38] sm:%s255] %v292
                  %v294 = vld [vmem:[%s262 + $0xb4] sm:%s255]
                  %295 = vst [vmem:[%s263 + $0x3c] sm:%s255] %v294
                $region55: #{resnet_forward.81} parent=42 // loop_footer
                  %s261 = sadd.s32 1, %s257
                $region56: #{resnet_forward.81} parent=42 // loop_footer_branch
                  %256 = sbr.rel target = $region52
                $region57: #{resnet_forward.81} parent=42 // loop_exit
                  _
              $region43: #{resnet_forward.81} parent=27 // pred_fallthru
                _
            $region28: #{resnet_forward.81} parent=23 // pred_fallthru
              _
            // Predicated region
            $region29: #{resnet_forward.81} parent=23 // pred_check
              _
            $region30: #{resnet_forward.81} parent=23 // pred_check_branch
              %201 = sbr.rel (0) target = $region32
            $region31: #{resnet_forward.81} parent=23 // pred_region
              %s203 = ssub.s32 16, 1
              loop: start=0, step=1, limit=1
              $region33: #{resnet_forward.81} parent=31 // loop_pre_header
                _
              $region34: #{resnet_forward.81} parent=31 // loop_header
                %s205 = sphi 0, %s209
                %p206 = scmp.ge.s32.totalorder %s205, 1
                %s210 = sphi %s195, %s195
                %s211 = sphi %s190, %s190
              $region35: #{resnet_forward.81} parent=31 // loop_header_branch
                %208 = sbr.rel (%p206) target = $region39
              $region36: #{resnet_forward.81} parent=31 // loop_body
                %v212 = vld [vmem:[%s210] sm:%s203]
                %213 = vst [vmem:[%s211] sm:%s203] %v212
                %v214 = vld [vmem:[%s210 + $0xc] sm:%s203]
                %215 = vst [vmem:[%s211 + $0x4] sm:%s203] %v214
                %v216 = vld [vmem:[%s210 + $0x18] sm:%s203]
                %217 = vst [vmem:[%s211 + $0x8] sm:%s203] %v216
                %v218 = vld [vmem:[%s210 + $0x24] sm:%s203]
                %219 = vst [vmem:[%s211 + $0xc] sm:%s203] %v218
                %v220 = vld [vmem:[%s210 + $0x30] sm:%s203]
                %221 = vst [vmem:[%s211 + $0x10] sm:%s203] %v220
                %v222 = vld [vmem:[%s210 + $0x3c] sm:%s203]
                %223 = vst [vmem:[%s211 + $0x14] sm:%s203] %v222
                %v224 = vld [vmem:[%s210 + $0x48] sm:%s203]
                %225 = vst [vmem:[%s211 + $0x18] sm:%s203] %v224
                %v226 = vld [vmem:[%s210 + $0x54] sm:%s203]
                %227 = vst [vmem:[%s211 + $0x1c] sm:%s203] %v226
                %v228 = vld [vmem:[%s210 + $0x60] sm:%s203]
                %229 = vst [vmem:[%s211 + $0x20] sm:%s203] %v228
                %v230 = vld [vmem:[%s210 + $0x6c] sm:%s203]
                %231 = vst [vmem:[%s211 + $0x24] sm:%s203] %v230
                %v232 = vld [vmem:[%s210 + $0x78] sm:%s203]
                %233 = vst [vmem:[%s211 + $0x28] sm:%s203] %v232
                %v234 = vld [vmem:[%s210 + $0x84] sm:%s203]
                %235 = vst [vmem:[%s211 + $0x2c] sm:%s203] %v234
                %v236 = vld [vmem:[%s210 + $0x90] sm:%s203]
                %237 = vst [vmem:[%s211 + $0x30] sm:%s203] %v236
                %v238 = vld [vmem:[%s210 + $0x9c] sm:%s203]
                %239 = vst [vmem:[%s211 + $0x34] sm:%s203] %v238
                %v240 = vld [vmem:[%s210 + $0xa8] sm:%s203]
                %241 = vst [vmem:[%s211 + $0x38] sm:%s203] %v240
                %v242 = vld [vmem:[%s210 + $0xb4] sm:%s203]
                %243 = vst [vmem:[%s211 + $0x3c] sm:%s203] %v242
              $region37: #{resnet_forward.81} parent=31 // loop_footer
                %s209 = sadd.s32 1, %s205
              $region38: #{resnet_forward.81} parent=31 // loop_footer_branch
                %204 = sbr.rel target = $region34
              $region39: #{resnet_forward.81} parent=31 // loop_exit
                _
            $region32: #{resnet_forward.81} parent=23 // pred_fallthru
              _
          $region24: #{resnet_forward.81} parent=19 // pred_fallthru
            _
          %296 = vnop
        $region20: #{resnet_forward.81} parent=15 // pred_fallthru
          _
        // Predicated region
        $region58: #{resnet_forward.81} parent=15 // pred_check
          %p297 = pneg %p79
        $region59: #{resnet_forward.81} parent=15 // pred_check_branch
          %299 = sbr.rel (%p297) target = $region61
        $region60: #{resnet_forward.81} parent=15 // pred_region
          %s300 = smul.u32 16, %s19
          %p301 = scmp.lt.s32.totalorder %s300, 47
          %s302 = scalar_select %p301, %s300, 47
          %p303 = scmp.lt.s32.totalorder %s18, 0
          %s304 = scalar_select %p303, %s18, 0
          %s305 = sadd.s32 %s304, %s302
          %s306 = smul.addr %s305, 4
          %s307 = scalar_lea.vmem %s1, %s306
          %s308 = smul.u32 16, %s19
        $region61: #{resnet_forward.81} parent=15 // pred_fallthru
          _
        // Predicated region
        $region62: #{resnet_forward.81} parent=15 // pred_check
          %p309 = pneg %p105
        $region63: #{resnet_forward.81} parent=15 // pred_check_branch
          %311 = sbr.rel (%p309) target = $region65
        $region64: #{resnet_forward.81} parent=15 // pred_region
          %p312 = scmp.lt.s32.totalorder %s19, 2
          %s313 = scalar_select %p312, %s19, 2
          %s314 = scalar_lea.vmem %s2, %s313
        $region65: #{resnet_forward.81} parent=15 // pred_fallthru
          _
        // Predicated region
        $region66: #{resnet_forward.81} parent=15 // pred_check
          %p315 = pneg %p131
        $region67: #{resnet_forward.81} parent=15 // pred_check_branch
          %317 = sbr.rel (%p315) target = $region69
        $region68: #{resnet_forward.81} parent=15 // pred_region
          %p318 = scmp.lt.s32.totalorder %s19, 2
          %s319 = scalar_select %p318, %s19, 2
          %s320 = scalar_lea.vmem %s3, %s319
        $region69: #{resnet_forward.81} parent=15 // pred_fallthru
          _
      $region16: #{resnet_forward.81} parent=5 // pred_fallthru
        _
      %p321 = scmp.le.s32.totalorder 1, %s10
      %p322 = scmp.lt.s32.totalorder %s10, 4
      %p323 = pnand %p321, %p322
      %p324 = pneg %p323
      // Predicated region
      $region70: #{resnet_forward.81} parent=5 // pred_check
        _
      $region71: #{resnet_forward.81} parent=5 // pred_check_branch
        %326 = sbr.rel (%p323) target = $region73
      $region72: #{resnet_forward.81} parent=5 // pred_region
        %s327 = ssub.s32 %s10, 1
        %s328 = sand.u32 %s44, 1
        %s329 = sand.u32 %s44, 1
        %s330 = smul.addr %s329, 64
        %s331 = scalar_lea.vmem [#allocation3], %s330
        // Predicated region
        $region74: #{resnet_forward.81} parent=72 // pred_check
          %p332 = pneg %p57
        $region75: #{resnet_forward.81} parent=72 // pred_check_branch
          %334 = sbr.rel (%p332) target = $region77
        $region76: #{resnet_forward.81} parent=72 // pred_region
          _
        $region77: #{resnet_forward.81} parent=72 // pred_fallthru
          _
        %s335 = sand.u32 %s44, 1
        %s336 = sand.u32 %s44, 1
        %s337 = smul.addr %s336, 64
        %s338 = scalar_lea.vmem [#allocation3], %s337
        %p339 = pneg %p57
        %p340 = pneg %p54
        %s341 = smul.u32 16, %s22
        %p342 = scmp.lt.s32.totalorder %s341, 47
        %s343 = scalar_select %p342, %s341, 47
        %p344 = scmp.lt.s32.totalorder %s21, 0
        %s345 = scalar_select %p344, %s21, 0
        %s346 = sadd.s32 %s345, %s343
        %s347 = smul.addr %s346, 4
        %s348 = scalar_lea.vmem %s1, %s347
        %p349 = pneg %p85
        %p350 = pneg %p82
        %p351 = scmp.lt.s32.totalorder %s22, 2
        %s352 = scalar_select %p351, %s22, 2
        %s353 = scalar_lea.vmem %s2, %s352
        %p354 = pneg %p111
        %p355 = pneg %p108
        %p356 = scmp.lt.s32.totalorder %s22, 2
        %s357 = scalar_select %p356, %s22, 2
        %s358 = scalar_lea.vmem %s3, %s357
        %p359 = pneg %p137
        %p360 = pneg %p134
        %p361 = pneg %p165
        %p362 = pneg %p162
        %s363 = smul.u32 16, %s20
        %p364 = scmp.lt.s32.totalorder %s363, 15
        %s365 = scalar_select %p364, %s363, 15
        %p366 = scmp.lt.s32.totalorder %s21, 0
        %s367 = scalar_select %p366, %s21, 0
        %s368 = sadd.s32 %s367, %s365
        %s369 = smul.addr %s368, 8
        %s370 = scalar_lea.vmem %s4, %s369
        %s371 = smul.u32 16, %s20
        %s372 = smul.u32 16, %s22
        %p373 = scmp.lt.s32.totalorder %s372, 47
        %s374 = scalar_select %p373, %s372, 47
        %p375 = scmp.lt.s32.totalorder %s21, 0
        %s376 = scalar_select %p375, %s21, 0
        %s377 = sadd.s32 %s376, %s374
        %s378 = smul.addr %s377, 4
        %s379 = scalar_lea.vmem %s1, %s378
        %s380 = smul.u32 16, %s22
        %p381 = scmp.lt.s32.totalorder %s22, 2
        %s382 = scalar_select %p381, %s22, 2
        %s383 = scalar_lea.vmem %s2, %s382
        %p384 = scmp.lt.s32.totalorder %s22, 2
        %s385 = scalar_select %p384, %s22, 2
        %s386 = scalar_lea.vmem %s3, %s385
        %s387 = smul.u32 16, %s20
        %p388 = scmp.lt.s32.totalorder %s387, 15
        %s389 = scalar_select %p388, %s387, 15
        %p390 = scmp.lt.s32.totalorder %s21, 0
        %s391 = scalar_select %p390, %s21, 0
        %s392 = sadd.s32 %s391, %s389
        %s393 = smul.addr %s392, 8
        %s394 = scalar_lea.vmem %s4, %s393
        %s395 = smul.u32 16, %s20
        %p396 = scmp.eq.s32.totalorder %s22, 0
        // Predicated region
        $region78: #{resnet_forward.81} parent=72 // pred_check
          %p397 = pneg %p396
        $region79: #{resnet_forward.81} parent=72 // pred_check_branch
          %399 = sbr.rel (%p397) target = $region81
        $region80: #{resnet_forward.81} parent=72 // pred_region
          %400 = vst [vmem:[#allocation2] sm:$0xff] 0.0
          %401 = vst [vmem:[#allocation2 + $0x8] sm:$0xff] 0.0
          %402 = vst [vmem:[#allocation2 + $0x10] sm:$0xff] 0.0
          %403 = vst [vmem:[#allocation2 + $0x18] sm:$0xff] 0.0
          %404 = vst [vmem:[#allocation2 + $0x20] sm:$0xff] 0.0
          %405 = vst [vmem:[#allocation2 + $0x28] sm:$0xff] 0.0
          %406 = vst [vmem:[#allocation2 + $0x30] sm:$0xff] 0.0
          %407 = vst [vmem:[#allocation2 + $0x38] sm:$0xff] 0.0
          %408 = vst [vmem:[#allocation2 + $0x40] sm:$0xff] 0.0
          %409 = vst [vmem:[#allocation2 + $0x48] sm:$0xff] 0.0
          %410 = vst [vmem:[#allocation2 + $0x50] sm:$0xff] 0.0
          %411 = vst [vmem:[#allocation2 + $0x58] sm:$0xff] 0.0
          %412 = vst [vmem:[#allocation2 + $0x60] sm:$0xff] 0.0
          %413 = vst [vmem:[#allocation2 + $0x68] sm:$0xff] 0.0
          %414 = vst [vmem:[#allocation2 + $0x70] sm:$0xff] 0.0
          %415 = vst [vmem:[#allocation2 + $0x78] sm:$0xff] 0.0
        $region81: #{resnet_forward.81} parent=72 // pred_fallthru
          _
        %v416 = vld [vmem:[%s331] sm:$0xf]
        %v417 = vld [vmem:[%s331 + $0x4] sm:$0xf]
        %v418 = vld [vmem:[%s331 + $0x8] sm:$0xf]
        %v419 = vld [vmem:[%s331 + $0xc] sm:$0xf]
        %v420 = vld [vmem:[%s331 + $0x10] sm:$0xf]
        %v421 = vld [vmem:[%s331 + $0x14] sm:$0xf]
        %v422 = vld [vmem:[%s331 + $0x18] sm:$0xf]
        %v423 = vld [vmem:[%s331 + $0x1c] sm:$0xf]
        %v424 = vld [vmem:[%s331 + $0x20] sm:$0xf]
        %v425 = vld [vmem:[%s331 + $0x24] sm:$0xf]
        %v426 = vld [vmem:[%s331 + $0x28] sm:$0xf]
        %v427 = vld [vmem:[%s331 + $0x2c] sm:$0xf]
        %v428 = vld [vmem:[%s331 + $0x30] sm:$0xf]
        %v429 = vld [vmem:[%s331 + $0x34] sm:$0xf]
        %v430 = vld [vmem:[%s331 + $0x38] sm:$0xf]
        %v431 = vld [vmem:[%s331 + $0x3c] sm:$0xf]
        %v432 = vunpack.c.l.bf16 %v416
        %v433 = vunpack.c.l.bf16 %v417
        %v434 = vunpack.c.l.bf16 %v418
        %v435 = vunpack.c.l.bf16 %v419
        %v436 = vunpack.c.l.bf16 %v420
        %v437 = vunpack.c.l.bf16 %v421
        %v438 = vunpack.c.l.bf16 %v422
        %v439 = vunpack.c.l.bf16 %v423
        %v440 = vunpack.c.l.bf16 %v424
        %v441 = vunpack.c.l.bf16 %v425
        %v442 = vunpack.c.l.bf16 %v426
        %v443 = vunpack.c.l.bf16 %v427
        %v444 = vunpack.c.l.bf16 %v428
        %v445 = vunpack.c.l.bf16 %v429
        %v446 = vunpack.c.l.bf16 %v430
        %v447 = vunpack.c.l.bf16 %v431
        %v448 = vld [vmem:[%s383] sm:$0x1]
        %v450 = vperm.slane %v448, 0
        %v452 = vmul.f32 %v432, %v450
        %v453 = vmul.f32 %v433, %v450
        %v454 = vmul.f32 %v434, %v450
        %v455 = vmul.f32 %v435, %v450
        %v456 = vmul.f32 %v436, %v450
        %v457 = vmul.f32 %v437, %v450
        %v458 = vmul.f32 %v438, %v450
        %v459 = vmul.f32 %v439, %v450
        %v460 = vmul.f32 %v440, %v450
        %v461 = vmul.f32 %v441, %v450
        %v462 = vmul.f32 %v442, %v450
        %v463 = vmul.f32 %v443, %v450
        %v464 = vmul.f32 %v444, %v450
        %v465 = vmul.f32 %v445, %v450
        %v466 = vmul.f32 %v446, %v450
        %v467 = vmul.f32 %v447, %v450
        %v468 = vld [vmem:[%s386] sm:$0x1]
        %v470 = vperm.slane %v468, 0
        %v472 = vadd.f32 %v452, %v470
        %v473 = vadd.f32 %v453, %v470
        %v474 = vadd.f32 %v454, %v470
        %v475 = vadd.f32 %v455, %v470
        %v476 = vadd.f32 %v456, %v470
        %v477 = vadd.f32 %v457, %v470
        %v478 = vadd.f32 %v458, %v470
        %v479 = vadd.f32 %v459, %v470
        %v480 = vadd.f32 %v460, %v470
        %v481 = vadd.f32 %v461, %v470
        %v482 = vadd.f32 %v462, %v470
        %v483 = vadd.f32 %v463, %v470
        %v484 = vadd.f32 %v464, %v470
        %v485 = vadd.f32 %v465, %v470
        %v486 = vadd.f32 %v466, %v470
        %v487 = vadd.f32 %v467, %v470
        %v488 = vmax.f32 %v472, 0.0
        %v489 = vmax.f32 %v473, 0.0
        %v490 = vmax.f32 %v474, 0.0
        %v491 = vmax.f32 %v475, 0.0
        %v492 = vmax.f32 %v476, 0.0
        %v493 = vmax.f32 %v477, 0.0
        %v494 = vmax.f32 %v478, 0.0
        %v495 = vmax.f32 %v479, 0.0
        %v496 = vmax.f32 %v480, 0.0
        %v497 = vmax.f32 %v481, 0.0
        %v498 = vmax.f32 %v482, 0.0
        %v499 = vmax.f32 %v483, 0.0
        %v500 = vmax.f32 %v484, 0.0
        %v501 = vmax.f32 %v485, 0.0
        %v502 = vmax.f32 %v486, 0.0
        %v503 = vmax.f32 %v487, 0.0
        %v504 = vpack.c.bf16 %v489, %v488
        %v505 = vpack.c.bf16 %v491, %v490
        %v506 = vpack.c.bf16 %v493, %v492
        %v507 = vpack.c.bf16 %v495, %v494
        %v508 = vpack.c.bf16 %v497, %v496
        %v509 = vpack.c.bf16 %v499, %v498
        %v510 = vpack.c.bf16 %v501, %v500
        %v511 = vpack.c.bf16 %v503, %v502
        %v512 = vld [vmem:[#allocation2] sm:$0xff]
        %v513 = vld [vmem:[#allocation2 + $0x8] sm:$0xff]
        %v514 = vld [vmem:[#allocation2 + $0x10] sm:$0xff]
        %v515 = vld [vmem:[#allocation2 + $0x18] sm:$0xff]
        %v516 = vld [vmem:[#allocation2 + $0x20] sm:$0xff]
        %v517 = vld [vmem:[#allocation2 + $0x28] sm:$0xff]
        %v518 = vld [vmem:[#allocation2 + $0x30] sm:$0xff]
        %v519 = vld [vmem:[#allocation2 + $0x38] sm:$0xff]
        %v520 = vld [vmem:[#allocation2 + $0x40] sm:$0xff]
        %v521 = vld [vmem:[#allocation2 + $0x48] sm:$0xff]
        %v522 = vld [vmem:[#allocation2 + $0x50] sm:$0xff]
        %v523 = vld [vmem:[#allocation2 + $0x58] sm:$0xff]
        %v524 = vld [vmem:[#allocation2 + $0x60] sm:$0xff]
        %v525 = vld [vmem:[#allocation2 + $0x68] sm:$0xff]
        %v526 = vld [vmem:[#allocation2 + $0x70] sm:$0xff]
        %v527 = vld [vmem:[#allocation2 + $0x78] sm:$0xff]
        %v528 = vld [vmem:[%s379] sm:$0xf]
        %v529 = vld [vmem:[%s379 + $0x4] sm:$0xf]
        %v530 = vld [vmem:[%s379 + $0x8] sm:$0xf]
        %v531 = vld [vmem:[%s379 + $0xc] sm:$0xf]
        %v532 = vld [vmem:[%s379 + $0x10] sm:$0xf]
        %v533 = vld [vmem:[%s379 + $0x14] sm:$0xf]
        %v534 = vld [vmem:[%s379 + $0x18] sm:$0xf]
        %v535 = vld [vmem:[%s379 + $0x1c] sm:$0xf]
        %v536 = vld [vmem:[%s379 + $0x20] sm:$0xf]
        %v537 = vld [vmem:[%s379 + $0x24] sm:$0xf]
        %v538 = vld [vmem:[%s379 + $0x28] sm:$0xf]
        %v539 = vld [vmem:[%s379 + $0x2c] sm:$0xf]
        %v540 = vld [vmem:[%s379 + $0x30] sm:$0xf]
        %v541 = vld [vmem:[%s379 + $0x34] sm:$0xf]
        %v542 = vld [vmem:[%s379 + $0x38] sm:$0xf]
        %v543 = vld [vmem:[%s379 + $0x3c] sm:$0xf]
        %v560 = vunpack.c.l.b16 %v528
        %v561 = vunpack.c.l.b16 %v529
        %v562 = vunpack.c.l.b16 %v530
        %v563 = vunpack.c.l.b16 %v531
        %v564 = vunpack.c.l.b16 %v532
        %v565 = vunpack.c.l.b16 %v533
        %v566 = vunpack.c.l.b16 %v534
        %v567 = vunpack.c.l.b16 %v535
        %v568 = vunpack.c.l.b16 %v536
        %v569 = vunpack.c.l.b16 %v537
        %v570 = vunpack.c.l.b16 %v538
        %v571 = vunpack.c.l.b16 %v539
        %v572 = vunpack.c.l.b16 %v540
        %v573 = vunpack.c.l.b16 %v541
        %v574 = vunpack.c.l.b16 %v542
        %v575 = vunpack.c.l.b16 %v543
        %v576 = vpack.c.b16 %v561, %v560
        %v577 = vpack.c.b16 %v563, %v562
        %v578 = vpack.c.b16 %v565, %v564
        %v579 = vpack.c.b16 %v567, %v566
        %v580 = vpack.c.b16 %v569, %v568
        %v581 = vpack.c.b16 %v571, %v570
        %v582 = vpack.c.b16 %v573, %v572
        %v583 = vpack.c.b16 %v575, %v574
        %592 = vmatpush.bf16.msra.mxu0 %v583
        %593 = vmatpush.bf16.msra.mxu0 %v582
        %594 = vmatpush.bf16.msra.mxu0 %v581
        %595 = vmatpush.bf16.msra.mxu0 %v580
        %596 = vmatpush.bf16.msra.mxu0 %v579
        %597 = vmatpush.bf16.msra.mxu0 %v578
        %598 = vmatpush.bf16.msra.mxu0 %v577
        %599 = vmatpush.bf16.msra.mxu0 %v576
        %600 = vmatmul.bf16.gmra.mxu0 %v504
        %v601 = vpop.f32.mrf.mxu0
        %v602 = vadd.f32 0.0, %v601
        %v603 = vpop.f32.mrf.mxu0
        %v604 = vadd.f32 0.0, %v603
        %605 = vmatmul.bf16.gmra.mxu0 %v505
        %v606 = vpop.f32.mrf.mxu0
        %v607 = vadd.f32 0.0, %v606
        %v608 = vpop.f32.mrf.mxu0
        %v609 = vadd.f32 0.0, %v608
        %610 = vmatmul.bf16.gmra.mxu0 %v506
        %v611 = vpop.f32.mrf.mxu0
        %v612 = vadd.f32 0.0, %v611
        %v613 = vpop.f32.mrf.mxu0
        %v614 = vadd.f32 0.0, %v613
        %615 = vmatmul.bf16.gmra.mxu0 %v507
        %v616 = vpop.f32.mrf.mxu0
        %v617 = vadd.f32 0.0, %v616
        %v618 = vpop.f32.mrf.mxu0
        %v619 = vadd.f32 0.0, %v618
        %620 = vmatmul.bf16.gmra.mxu0 %v508
        %v621 = vpop.f32.mrf.mxu0
        %v622 = vadd.f32 0.0, %v621
        %v623 = vpop.f32.mrf.mxu0
        %v624 = vadd.f32 0.0, %v623
        %625 = vmatmul.bf16.gmra.mxu0 %v509
        %v626 = vpop.f32.mrf.mxu0
        %v627 = vadd.f32 0.0, %v626
        %v628 = vpop.f32.mrf.mxu0
        %v629 = vadd.f32 0.0, %v628
        %630 = vmatmul.bf16.gmra.mxu0 %v510
        %v631 = vpop.f32.mrf.mxu0
        %v632 = vadd.f32 0.0, %v631
        %v633 = vpop.f32.mrf.mxu0
        %v634 = vadd.f32 0.0, %v633
        %635 = vmatmul.bf16.gmra.mxu0 %v511
        %v636 = vpop.f32.mrf.mxu0
        %v637 = vadd.f32 0.0, %v636
        %v638 = vpop.f32.mrf.mxu0
        %v639 = vadd.f32 0.0, %v638
        %640 = vdwg.mxu0
        %v641 = vadd.f32 %v512, %v602
        %v642 = vadd.f32 %v513, %v604
        %v643 = vadd.f32 %v514, %v607
        %v644 = vadd.f32 %v515, %v609
        %v645 = vadd.f32 %v516, %v612
        %v646 = vadd.f32 %v517, %v614
        %v647 = vadd.f32 %v518, %v617
        %v648 = vadd.f32 %v519, %v619
        %v649 = vadd.f32 %v520, %v622
        %v650 = vadd.f32 %v521, %v624
        %v651 = vadd.f32 %v522, %v627
        %v652 = vadd.f32 %v523, %v629
        %v653 = vadd.f32 %v524, %v632
        %v654 = vadd.f32 %v525, %v634
        %v655 = vadd.f32 %v526, %v637
        %v656 = vadd.f32 %v527, %v639
        %657 = vst [vmem:[#allocation2] sm:$0xff] %v641
        %658 = vst [vmem:[#allocation2 + $0x8] sm:$0xff] %v642
        %659 = vst [vmem:[#allocation2 + $0x10] sm:$0xff] %v643
        %660 = vst [vmem:[#allocation2 + $0x18] sm:$0xff] %v644
        %661 = vst [vmem:[#allocation2 + $0x20] sm:$0xff] %v645
        %662 = vst [vmem:[#allocation2 + $0x28] sm:$0xff] %v646
        %663 = vst [vmem:[#allocation2 + $0x30] sm:$0xff] %v647
        %664 = vst [vmem:[#allocation2 + $0x38] sm:$0xff] %v648
        %665 = vst [vmem:[#allocation2 + $0x40] sm:$0xff] %v649
        %666 = vst [vmem:[#allocation2 + $0x48] sm:$0xff] %v650
        %667 = vst [vmem:[#allocation2 + $0x50] sm:$0xff] %v651
        %668 = vst [vmem:[#allocation2 + $0x58] sm:$0xff] %v652
        %669 = vst [vmem:[#allocation2 + $0x60] sm:$0xff] %v653
        %670 = vst [vmem:[#allocation2 + $0x68] sm:$0xff] %v654
        %671 = vst [vmem:[#allocation2 + $0x70] sm:$0xff] %v655
        %672 = vst [vmem:[#allocation2 + $0x78] sm:$0xff] %v656
        %p673 = scmp.eq.s32.totalorder %s22, 2
        // Predicated region
        $region82: #{resnet_forward.81} parent=72 // pred_check
          %p674 = pneg %p673
        $region83: #{resnet_forward.81} parent=72 // pred_check_branch
          %676 = sbr.rel (%p674) target = $region85
        $region84: #{resnet_forward.81} parent=72 // pred_region
          %v677 = vld [vmem:[#allocation2] sm:$0xff]
          %v678 = vld [vmem:[#allocation2 + $0x8] sm:$0xff]
          %v679 = vld [vmem:[#allocation2 + $0x10] sm:$0xff]
          %v680 = vld [vmem:[#allocation2 + $0x18] sm:$0xff]
          %v681 = vld [vmem:[#allocation2 + $0x20] sm:$0xff]
          %v682 = vld [vmem:[#allocation2 + $0x28] sm:$0xff]
          %v683 = vld [vmem:[#allocation2 + $0x30] sm:$0xff]
          %v684 = vld [vmem:[#allocation2 + $0x38] sm:$0xff]
          %v685 = vld [vmem:[#allocation2 + $0x40] sm:$0xff]
          %v686 = vld [vmem:[#allocation2 + $0x48] sm:$0xff]
          %v687 = vld [vmem:[#allocation2 + $0x50] sm:$0xff]
          %v688 = vld [vmem:[#allocation2 + $0x58] sm:$0xff]
          %v689 = vld [vmem:[#allocation2 + $0x60] sm:$0xff]
          %v690 = vld [vmem:[#allocation2 + $0x68] sm:$0xff]
          %v691 = vld [vmem:[#allocation2 + $0x70] sm:$0xff]
          %v692 = vld [vmem:[#allocation2 + $0x78] sm:$0xff]
          %693 = vst [vmem:[%s394] sm:$0xff] %v677
          %694 = vst [vmem:[%s394 + $0x8] sm:$0xff] %v678
          %695 = vst [vmem:[%s394 + $0x10] sm:$0xff] %v679
          %696 = vst [vmem:[%s394 + $0x18] sm:$0xff] %v680
          %697 = vst [vmem:[%s394 + $0x20] sm:$0xff] %v681
          %698 = vst [vmem:[%s394 + $0x28] sm:$0xff] %v682
          %699 = vst [vmem:[%s394 + $0x30] sm:$0xff] %v683
          %700 = vst [vmem:[%s394 + $0x38] sm:$0xff] %v684
          %701 = vst [vmem:[%s394 + $0x40] sm:$0xff] %v685
          %702 = vst [vmem:[%s394 + $0x48] sm:$0xff] %v686
          %703 = vst [vmem:[%s394 + $0x50] sm:$0xff] %v687
          %704 = vst [vmem:[%s394 + $0x58] sm:$0xff] %v688
          %705 = vst [vmem:[%s394 + $0x60] sm:$0xff] %v689
          %706 = vst [vmem:[%s394 + $0x68] sm:$0xff] %v690
          %707 = vst [vmem:[%s394 + $0x70] sm:$0xff] %v691
          %708 = vst [vmem:[%s394 + $0x78] sm:$0xff] %v692
        $region85: #{resnet_forward.81} parent=72 // pred_fallthru
          _
        %s709 = smul.u32 16, %s20
        %p710 = scmp.lt.s32.totalorder %s709, 15
        %s711 = scalar_select %p710, %s709, 15
        %p712 = scmp.lt.s32.totalorder %s21, 0
        %s713 = scalar_select %p712, %s21, 0
        %s714 = sadd.s32 %s713, %s711
        %s715 = smul.addr %s714, 8
        %s716 = scalar_lea.vmem %s4, %s715
        // Predicated region
        $region86: #{resnet_forward.81} parent=72 // pred_check
          %p717 = pneg %p162
        $region87: #{resnet_forward.81} parent=72 // pred_check_branch
          %719 = sbr.rel (%p717) target = $region89
        $region88: #{resnet_forward.81} parent=72 // pred_region
          %s720 = smul.u32 16, %s20
        $region89: #{resnet_forward.81} parent=72 // pred_fallthru
          _
        // Predicated region
        $region90: #{resnet_forward.81} parent=72 // pred_check
          %p721 = pneg %p162
        $region91: #{resnet_forward.81} parent=72 // pred_check_branch
          %723 = sbr.rel (%p721) target = $region93
        $region92: #{resnet_forward.81} parent=72 // pred_region
          %s724 = smul.u32 16, %s20
          %p725 = scmp.lt.s32.totalorder %s724, 15
          %s726 = scalar_select %p725, %s724, 15
          %p727 = scmp.lt.s32.totalorder %s21, 0
          %s728 = scalar_select %p727, %s21, 0
          %s729 = sadd.s32 %s728, %s726
          %s730 = smul.addr %s729, 8
          %s731 = scalar_lea.vmem %s4, %s730
        $region93: #{resnet_forward.81} parent=72 // pred_fallthru
          _
      $region73: #{resnet_forward.81} parent=5 // pred_fallthru
        _
      %p732 = scmp.le.s32.totalorder 2, %s10
      // Predicated region
      $region94: #{resnet_forward.81} parent=5 // pred_check
        %p733 = pneg %p732
      $region95: #{resnet_forward.81} parent=5 // pred_check_branch
        %735 = sbr.rel (%p733) target = $region97
      $region96: #{resnet_forward.81} parent=5 // pred_region
        %s736 = ssub.s32 %s10, 2
      $region97: #{resnet_forward.81} parent=5 // pred_fallthru
        _
    $region6: #{resnet_forward.81} parent=1 // loop_footer
      %s14 = sadd.s32 1, %s10
    $region7: #{resnet_forward.81} parent=1 // loop_footer_branch
      %9 = sbr.rel target = $region3
    $region8: #{resnet_forward.81} parent=1 // loop_exit
      _

// kernel: resnet_forward.79
$region0: #{resnet_forward.79}
  #allocation0 [shape = 'u32[]', space=smem, size = 0x4, offset = 0x4, fixed_abs, tag = 'smem constant byte address 0x4 - core index']
  #allocation1 [shape = 'u32[72,128]{1,0:T(1,128)}', space=vmem, size = 0x9000, scoped, tag = 'internal scratch']
  #allocation2 [shape = 'f32[128,128]{1,0:T(8,128)}', space=vmem, size = 0x10000, scoped, tag = 'scratch operand']
  %s0 = inlined_call_operand.vmem [shape: bf16[128,384], index: 0, kind: input, shape index: {}]
  %s1 = inlined_call_operand.vmem [shape: bf16[384,128], index: 1, kind: input, shape index: {}]
  %s2 = inlined_call_operand.vmem [shape: f32[1,384], index: 2, kind: input, shape index: {}]
  %s3 = inlined_call_operand.vmem [shape: f32[1,384], index: 3, kind: input, shape index: {}]
  %s4 = inlined_call_operand.vmem [shape: f32[128,128], index: 4, kind: input, shape index: {}]
  %s5 = inlined_call_operand.vmem [shape: f32[1,128], index: 5, kind: input, shape index: {}]
  %s6 = inlined_call_operand.vmem [shape: f32[1,128], index: 6, kind: input, shape index: {}]
  %s7 = inlined_call_operand.vmem [shape: f32[128,128], index: 7, kind: output, shape index: {}]
  %s8 = sld [smem:[#allocation0]]
  $region110: #{resnet_forward.79} parent=0
    _
  %s10 = ssub.s32 1, %s8
  %s11 = scalar_select 0, %s10, %s8
  $region1: #{resnet_forward.79} parent=0
    #allocation3 [shape = 'u8[65536]{0}', space=vmem, size = 0x10000, scoped, tag = 'input window, operand 0']
    loop: start=0, step=1, limit=5
    $region2: #{resnet_forward.79} parent=1 // loop_pre_header
      _
    $region3: #{resnet_forward.79} parent=1 // loop_header
      %s13 = sphi 0, %s17
      %p14 = scmp.ge.s32.totalorder %s13, 5
      %s20 = sphi 0, %s39
      %s21 = sphi 0, %s35
      %s22 = sphi 0, %s31
      %s23 = sphi 0, %s20
      %s24 = sphi 0, %s21
      %s25 = sphi 0, %s22
      %s26 = sphi 0, %s23
      %s27 = sphi 0, %s24
      %s28 = sphi 0, %s25
      %s44 = sphi 0, %s46
      %s47 = sphi 0, %s44
      %s48 = sphi 0, %s47
      %s64 = sphi 0, %s48
      %s72 = sphi 0, %s74
      %s75 = sphi 0, %s72
      %s76 = sphi 0, %s75
      %s92 = sphi 0, %s76
      %s98 = sphi 0, %s100
      %s101 = sphi 0, %s98
      %s102 = sphi 0, %s101
      %s118 = sphi 0, %s102
      %s124 = sphi 0, %s126
      %s127 = sphi 0, %s124
      %s128 = sphi 0, %s127
      %s144 = sphi 0, %s128
      %s152 = sphi 0, %s154
      %s155 = sphi 0, %s152
      %s156 = sphi 0, %s155
      %s172 = sphi 0, %s156
      %s178 = sphi 0, %s180
      %s181 = sphi 0, %s178
      %s182 = sphi 0, %s181
      %s198 = sphi 0, %s182
      %s204 = sphi 0, %s206
      %s207 = sphi 0, %s204
      %s208 = sphi 0, %s207
      %s224 = sphi 0, %s208
      %s232 = sphi 0, %s234
      %s235 = sphi 0, %s232
      %s236 = sphi 0, %s235
      %s252 = sphi 0, %s236
    $region4: #{resnet_forward.79} parent=1 // loop_header_branch
      %16 = sbr.rel (%p14) target = $region8
    $region5: #{resnet_forward.79} parent=1 // loop_body
      %s18 = ssub.s32 %s13, 1
      %s19 = ssub.s32 %s13, 2
      %s29 = sadd.s32 1, %s22
      %p30 = scmp.ge.s32.totalorder %s29, 3
      %s31 = scalar_select %p30, 0, %s29
      %s32 = sadd.s32 1, %s21
      %s33 = scalar_select %p30, %s32, %s21
      %p34 = scmp.ge.s32.totalorder %s33, 1
      %s35 = scalar_select %p34, 0, %s33
      %s36 = sadd.s32 1, %s20
      %s37 = scalar_select %p34, %s36, %s20
      %p38 = scmp.ge.s32.totalorder %s37, 1
      %s39 = scalar_select %p38, 0, %s37
      %s40 = ssub.s32 %s20, %s39
      %s41 = ssub.s32 %s22, %s31
      %s42 = sor.u32 %s40, %s41
      %p43 = scmp.eq.s32.totalorder %s42, 0
      %s45 = sadd.s32 %s44, 1
      %s46 = scalar_select %p43, %s44, %s45
      %p49 = pneg %p43
      %p50 = scmp.eq.s32.totalorder %s13, 2
      %p51 = por %p49, %p50
      %p52 = scmp.ne.s32.totalorder %s44, %s47
      %p53 = scmp.eq.s32.totalorder %s13, 0
      %p54 = por %p52, %p53
      %p55 = scmp.ne.s32.totalorder %s44, %s47
      %p56 = scmp.eq.s32.totalorder %s18, 2
      %p57 = por %p55, %p56
      %p58 = scmp.ne.s32.totalorder %s47, %s48
      %p59 = scmp.eq.s32.totalorder %s18, 0
      %p60 = por %p58, %p59
      %p61 = scmp.ne.s32.totalorder %s47, %s48
      %p62 = scmp.eq.s32.totalorder %s19, 2
      %p63 = por %p61, %p62
      %p65 = scmp.ne.s32.totalorder %s48, %s64
      %p66 = scmp.eq.s32.totalorder %s19, 0
      %p67 = por %p65, %p66
      %s68 = ssub.s32 %s22, %s31
      %s69 = ssub.s32 %s21, %s35
      %s70 = sor.u32 %s68, %s69
      %p71 = scmp.eq.s32.totalorder %s70, 0
      %s73 = sadd.s32 %s72, 1
      %s74 = scalar_select %p71, %s72, %s73
      %p77 = pneg %p71
      %p78 = scmp.eq.s32.totalorder %s13, 2
      %p79 = por %p77, %p78
      %p80 = scmp.ne.s32.totalorder %s72, %s75
      %p81 = scmp.eq.s32.totalorder %s13, 0
      %p82 = por %p80, %p81
      %p83 = scmp.ne.s32.totalorder %s72, %s75
      %p84 = scmp.eq.s32.totalorder %s18, 2
      %p85 = por %p83, %p84
      %p86 = scmp.ne.s32.totalorder %s75, %s76
      %p87 = scmp.eq.s32.totalorder %s18, 0
      %p88 = por %p86, %p87
      %p89 = scmp.ne.s32.totalorder %s75, %s76
      %p90 = scmp.eq.s32.totalorder %s19, 2
      %p91 = por %p89, %p90
      %p93 = scmp.ne.s32.totalorder %s76, %s92
      %p94 = scmp.eq.s32.totalorder %s19, 0
      %p95 = por %p93, %p94
      %s96 = ssub.s32 %s22, %s31
      %p97 = scmp.eq.s32.totalorder %s96, 0
      %s99 = sadd.s32 %s98, 1
      %s100 = scalar_select %p97, %s98, %s99
      %p103 = pneg %p97
      %p104 = scmp.eq.s32.totalorder %s13, 2
      %p105 = por %p103, %p104
      %p106 = scmp.ne.s32.totalorder %s98, %s101
      %p107 = scmp.eq.s32.totalorder %s13, 0
      %p108 = por %p106, %p107
      %p109 = scmp.ne.s32.totalorder %s98, %s101
      %p110 = scmp.eq.s32.totalorder %s18, 2
      %p111 = por %p109, %p110
      %p112 = scmp.ne.s32.totalorder %s101, %s102
      %p113 = scmp.eq.s32.totalorder %s18, 0
      %p114 = por %p112, %p113
      %p115 = scmp.ne.s32.totalorder %s101, %s102
      %p116 = scmp.eq.s32.totalorder %s19, 2
      %p117 = por %p115, %p116
      %p119 = scmp.ne.s32.totalorder %s102, %s118
      %p120 = scmp.eq.s32.totalorder %s19, 0
      %p121 = por %p119, %p120
      %s122 = ssub.s32 %s22, %s31
      %p123 = scmp.eq.s32.totalorder %s122, 0
      %s125 = sadd.s32 %s124, 1
      %s126 = scalar_select %p123, %s124, %s125
      %p129 = pneg %p123
      %p130 = scmp.eq.s32.totalorder %s13, 2
      %p131 = por %p129, %p130
      %p132 = scmp.ne.s32.totalorder %s124, %s127
      %p133 = scmp.eq.s32.totalorder %s13, 0
      %p134 = por %p132, %p133
      %p135 = scmp.ne.s32.totalorder %s124, %s127
      %p136 = scmp.eq.s32.totalorder %s18, 2
      %p137 = por %p135, %p136
      %p138 = scmp.ne.s32.totalorder %s127, %s128
      %p139 = scmp.eq.s32.totalorder %s18, 0
      %p140 = por %p138, %p139
      %p141 = scmp.ne.s32.totalorder %s127, %s128
      %p142 = scmp.eq.s32.totalorder %s19, 2
      %p143 = por %p141, %p142
      %p145 = scmp.ne.s32.totalorder %s128, %s144
      %p146 = scmp.eq.s32.totalorder %s19, 0
      %p147 = por %p145, %p146
      %s148 = ssub.s32 %s20, %s39
      %s149 = ssub.s32 %s21, %s35
      %s150 = sor.u32 %s148, %s149
      %p151 = scmp.eq.s32.totalorder %s150, 0
      %s153 = sadd.s32 %s152, 1
      %s154 = scalar_select %p151, %s152, %s153
      %p157 = pneg %p151
      %p158 = scmp.eq.s32.totalorder %s13, 2
      %p159 = por %p157, %p158
      %p160 = scmp.ne.s32.totalorder %s152, %s155
      %p161 = scmp.eq.s32.totalorder %s13, 0
      %p162 = por %p160, %p161
      %p163 = scmp.ne.s32.totalorder %s152, %s155
      %p164 = scmp.eq.s32.totalorder %s18, 2
      %p165 = por %p163, %p164
      %p166 = scmp.ne.s32.totalorder %s155, %s156
      %p167 = scmp.eq.s32.totalorder %s18, 0
      %p168 = por %p166, %p167
      %p169 = scmp.ne.s32.totalorder %s155, %s156
      %p170 = scmp.eq.s32.totalorder %s19, 2
      %p171 = por %p169, %p170
      %p173 = scmp.ne.s32.totalorder %s156, %s172
      %p174 = scmp.eq.s32.totalorder %s19, 0
      %p175 = por %p173, %p174
      %s176 = ssub.s32 %s21, %s35
      %p177 = scmp.eq.s32.totalorder %s176, 0
      %s179 = sadd.s32 %s178, 1
      %s180 = scalar_select %p177, %s178, %s179
      %p183 = pneg %p177
      %p184 = scmp.eq.s32.totalorder %s13, 2
      %p185 = por %p183, %p184
      %p186 = scmp.ne.s32.totalorder %s178, %s181
      %p187 = scmp.eq.s32.totalorder %s13, 0
      %p188 = por %p186, %p187
      %p189 = scmp.ne.s32.totalorder %s178, %s181
      %p190 = scmp.eq.s32.totalorder %s18, 2
      %p191 = por %p189, %p190
      %p192 = scmp.ne.s32.totalorder %s181, %s182
      %p193 = scmp.eq.s32.totalorder %s18, 0
      %p194 = por %p192, %p193
      %p195 = scmp.ne.s32.totalorder %s181, %s182
      %p196 = scmp.eq.s32.totalorder %s19, 2
      %p197 = por %p195, %p196
      %p199 = scmp.ne.s32.totalorder %s182, %s198
      %p200 = scmp.eq.s32.totalorder %s19, 0
      %p201 = por %p199, %p200
      %s202 = ssub.s32 %s21, %s35
      %p203 = scmp.eq.s32.totalorder %s202, 0
      %s205 = sadd.s32 %s204, 1
      %s206 = scalar_select %p203, %s204, %s205
      %p209 = pneg %p203
      %p210 = scmp.eq.s32.totalorder %s13, 2
      %p211 = por %p209, %p210
      %p212 = scmp.ne.s32.totalorder %s204, %s207
      %p213 = scmp.eq.s32.totalorder %s13, 0
      %p214 = por %p212, %p213
      %p215 = scmp.ne.s32.totalorder %s204, %s207
      %p216 = scmp.eq.s32.totalorder %s18, 2
      %p217 = por %p215, %p216
      %p218 = scmp.ne.s32.totalorder %s207, %s208
      %p219 = scmp.eq.s32.totalorder %s18, 0
      %p220 = por %p218, %p219
      %p221 = scmp.ne.s32.totalorder %s207, %s208
      %p222 = scmp.eq.s32.totalorder %s19, 2
      %p223 = por %p221, %p222
      %p225 = scmp.ne.s32.totalorder %s208, %s224
      %p226 = scmp.eq.s32.totalorder %s19, 0
      %p227 = por %p225, %p226
      %s228 = ssub.s32 %s20, %s39
      %s229 = ssub.s32 %s21, %s35
      %s230 = sor.u32 %s228, %s229
      %p231 = scmp.eq.s32.totalorder %s230, 0
      %s233 = sadd.s32 %s232, 1
      %s234 = scalar_select %p231, %s232, %s233
      %p237 = pneg %p231
      %p238 = scmp.eq.s32.totalorder %s13, 2
      %p239 = por %p237, %p238
      %p240 = scmp.ne.s32.totalorder %s232, %s235
      %p241 = scmp.eq.s32.totalorder %s13, 0
      %p242 = por %p240, %p241
      %p243 = scmp.ne.s32.totalorder %s232, %s235
      %p244 = scmp.eq.s32.totalorder %s18, 2
      %p245 = por %p243, %p244
      %p246 = scmp.ne.s32.totalorder %s235, %s236
      %p247 = scmp.eq.s32.totalorder %s18, 0
      %p248 = por %p246, %p247
      %p249 = scmp.ne.s32.totalorder %s235, %s236
      %p250 = scmp.eq.s32.totalorder %s19, 2
      %p251 = por %p249, %p250
      %p253 = scmp.ne.s32.totalorder %s236, %s252
      %p254 = scmp.eq.s32.totalorder %s19, 0
      %p255 = por %p253, %p254
      %p256 = scmp.le.s32.totalorder 1, %s13
      %p257 = scmp.lt.s32.totalorder %s13, 4
      %p258 = pnand %p256, %p257
      %p259 = pneg %p258
      // Predicated region
      $region9: #{resnet_forward.79} parent=5 // pred_check
        _
      $region10: #{resnet_forward.79} parent=5 // pred_check_branch
        %261 = sbr.rel (%p258) target = $region12
      $region11: #{resnet_forward.79} parent=5 // pred_region
        %s262 = ssub.s32 %s13, 1
        // Predicated region
        $region13: #{resnet_forward.79} parent=11 // pred_check
          %p263 = pneg %p168
        $region14: #{resnet_forward.79} parent=11 // pred_check_branch
          %265 = sbr.rel (%p263) target = $region16
        $region15: #{resnet_forward.79} parent=11 // pred_region
          %s266 = smul.u32 16, %s23
          %p267 = scmp.lt.s32.totalorder %s266, 15
          %s268 = scalar_select %p267, %s266, 15
          %p269 = scmp.lt.s32.totalorder %s24, 0
          %s270 = scalar_select %p269, %s24, 0
          %s271 = sadd.s32 %s270, %s268
          %s272 = smul.addr %s271, 8
          %s273 = scalar_lea.vmem %s4, %s272
          %s274 = smul.u32 16, %s23
        $region16: #{resnet_forward.79} parent=11 // pred_fallthru
          _
        // Predicated region
        $region17: #{resnet_forward.79} parent=11 // pred_check
          %p275 = pneg %p194
        $region18: #{resnet_forward.79} parent=11 // pred_check_branch
          %277 = sbr.rel (%p275) target = $region20
        $region19: #{resnet_forward.79} parent=11 // pred_region
          %p278 = scmp.lt.s32.totalorder %s24, 0
          %s279 = scalar_select %p278, %s24, 0
          %s280 = scalar_lea.vmem %s5, %s279
        $region20: #{resnet_forward.79} parent=11 // pred_fallthru
          _
        // Predicated region
        $region21: #{resnet_forward.79} parent=11 // pred_check
          %p281 = pneg %p220
        $region22: #{resnet_forward.79} parent=11 // pred_check_branch
          %283 = sbr.rel (%p281) target = $region24
        $region23: #{resnet_forward.79} parent=11 // pred_region
          %p284 = scmp.lt.s32.totalorder %s24, 0
          %s285 = scalar_select %p284, %s24, 0
          %s286 = scalar_lea.vmem %s6, %s285
        $region24: #{resnet_forward.79} parent=11 // pred_fallthru
          _
      $region12: #{resnet_forward.79} parent=5 // pred_fallthru
        _
      %p287 = scmp.lt.s32.totalorder %s13, 3
      // Predicated region
      $region25: #{resnet_forward.79} parent=5 // pred_check
        %p288 = pneg %p287
      $region26: #{resnet_forward.79} parent=5 // pred_check_branch
        %290 = sbr.rel (%p288) target = $region28
      $region27: #{resnet_forward.79} parent=5 // pred_region
        // Predicated region
        $region29: #{resnet_forward.79} parent=27 // pred_check
          %p291 = pneg %p54
        $region30: #{resnet_forward.79} parent=27 // pred_check_branch
          %293 = sbr.rel (%p291) target = $region32
        $region31: #{resnet_forward.79} parent=27 // pred_region
          %s294 = sand.u32 %s44, 1
          %s295 = sand.u32 %s44, 1
          %s296 = smul.addr %s295, 64
          %s297 = scalar_lea.vmem [#allocation3], %s296
          %s298 = smul.u32 16, %s20
          %s299 = smul.addr %s298, 3
          %s300 = sadd.s32 %s22, %s299
          %s301 = smul.addr %s300, 4
          %s302 = scalar_lea.vmem %s0, %s301
          // Predicated region
          $region33: #{resnet_forward.79} parent=31 // pred_check
            _
          $region34: #{resnet_forward.79} parent=31 // pred_check_branch
            %304 = sbr.rel (0) target = $region36
          $region35: #{resnet_forward.79} parent=31 // pred_region
            // Predicated region
            $region37: #{resnet_forward.79} parent=35 // pred_check
              _
            $region38: #{resnet_forward.79} parent=35 // pred_check_branch
              %306 = sbr.rel target = $region40
            $region39: #{resnet_forward.79} parent=35 // pred_region
              // Predicated region
              $region52: #{resnet_forward.79} parent=39 // pred_check
                _
              $region53: #{resnet_forward.79} parent=39 // pred_check_branch
                %352 = sbr.rel (0) target = $region55
              $region54: #{resnet_forward.79} parent=39 // pred_region
                loop: start=0, step=1, limit=1
                $region56: #{resnet_forward.79} parent=54 // loop_pre_header
                  _
                $region57: #{resnet_forward.79} parent=54 // loop_header
                  %s354 = sphi 0, %s358
                  %p355 = scmp.ge.s32.totalorder %s354, 1
                  %s359 = sphi %s302, %s302
                  %s360 = sphi %s297, %s297
                $region58: #{resnet_forward.79} parent=54 // loop_header_branch
                  %357 = sbr.rel (%p355) target = $region62
                $region59: #{resnet_forward.79} parent=54 // loop_body
                  _
                $region60: #{resnet_forward.79} parent=54 // loop_footer
                  %s358 = sadd.s32 1, %s354
                $region61: #{resnet_forward.79} parent=54 // loop_footer_branch
                  %353 = sbr.rel target = $region57
                $region62: #{resnet_forward.79} parent=54 // loop_exit
                  _
                %s362 = ssub.s32 16, 1
                loop: start=0, step=1, limit=1
                $region63: #{resnet_forward.79} parent=54 // loop_pre_header
                  _
                $region64: #{resnet_forward.79} parent=54 // loop_header
                  %s364 = sphi 0, %s368
                  %p365 = scmp.ge.s32.totalorder %s364, 1
                  %s369 = sphi %s302, %s302
                  %s370 = sphi %s297, %s297
                $region65: #{resnet_forward.79} parent=54 // loop_header_branch
                  %367 = sbr.rel (%p365) target = $region69
                $region66: #{resnet_forward.79} parent=54 // loop_body
                  %v371 = vld [vmem:[%s369] sm:%s362]
                  %372 = vst [vmem:[%s370] sm:%s362] %v371
                  %v373 = vld [vmem:[%s369 + $0xc] sm:%s362]
                  %374 = vst [vmem:[%s370 + $0x4] sm:%s362] %v373
                  %v375 = vld [vmem:[%s369 + $0x18] sm:%s362]
                  %376 = vst [vmem:[%s370 + $0x8] sm:%s362] %v375
                  %v377 = vld [vmem:[%s369 + $0x24] sm:%s362]
                  %378 = vst [vmem:[%s370 + $0xc] sm:%s362] %v377
                  %v379 = vld [vmem:[%s369 + $0x30] sm:%s362]
                  %380 = vst [vmem:[%s370 + $0x10] sm:%s362] %v379
                  %v381 = vld [vmem:[%s369 + $0x3c] sm:%s362]
                  %382 = vst [vmem:[%s370 + $0x14] sm:%s362] %v381
                  %v383 = vld [vmem:[%s369 + $0x48] sm:%s362]
                  %384 = vst [vmem:[%s370 + $0x18] sm:%s362] %v383
                  %v385 = vld [vmem:[%s369 + $0x54] sm:%s362]
                  %386 = vst [vmem:[%s370 + $0x1c] sm:%s362] %v385
                  %v387 = vld [vmem:[%s369 + $0x60] sm:%s362]
                  %388 = vst [vmem:[%s370 + $0x20] sm:%s362] %v387
                  %v389 = vld [vmem:[%s369 + $0x6c] sm:%s362]
                  %390 = vst [vmem:[%s370 + $0x24] sm:%s362] %v389
                  %v391 = vld [vmem:[%s369 + $0x78] sm:%s362]
                  %392 = vst [vmem:[%s370 + $0x28] sm:%s362] %v391
                  %v393 = vld [vmem:[%s369 + $0x84] sm:%s362]
                  %394 = vst [vmem:[%s370 + $0x2c] sm:%s362] %v393
                  %v395 = vld [vmem:[%s369 + $0x90] sm:%s362]
                  %396 = vst [vmem:[%s370 + $0x30] sm:%s362] %v395
                  %v397 = vld [vmem:[%s369 + $0x9c] sm:%s362]
                  %398 = vst [vmem:[%s370 + $0x34] sm:%s362] %v397
                  %v399 = vld [vmem:[%s369 + $0xa8] sm:%s362]
                  %400 = vst [vmem:[%s370 + $0x38] sm:%s362] %v399
                  %v401 = vld [vmem:[%s369 + $0xb4] sm:%s362]
                  %402 = vst [vmem:[%s370 + $0x3c] sm:%s362] %v401
                $region67: #{resnet_forward.79} parent=54 // loop_footer
                  %s368 = sadd.s32 1, %s364
                $region68: #{resnet_forward.79} parent=54 // loop_footer_branch
                  %363 = sbr.rel target = $region64
                $region69: #{resnet_forward.79} parent=54 // loop_exit
                  _
              $region55: #{resnet_forward.79} parent=39 // pred_fallthru
                _
            $region40: #{resnet_forward.79} parent=35 // pred_fallthru
              _
            // Predicated region
            $region41: #{resnet_forward.79} parent=35 // pred_check
              _
            $region42: #{resnet_forward.79} parent=35 // pred_check_branch
              %308 = sbr.rel (0) target = $region44
            $region43: #{resnet_forward.79} parent=35 // pred_region
              %s310 = ssub.s32 16, 1
              loop: start=0, step=1, limit=1
              $region45: #{resnet_forward.79} parent=43 // loop_pre_header
                _
              $region46: #{resnet_forward.79} parent=43 // loop_header
                %s312 = sphi 0, %s316
                %p313 = scmp.ge.s32.totalorder %s312, 1
                %s317 = sphi %s302, %s302
                %s318 = sphi %s297, %s297
              $region47: #{resnet_forward.79} parent=43 // loop_header_branch
                %315 = sbr.rel (%p313) target = $region51
              $region48: #{resnet_forward.79} parent=43 // loop_body
                %v319 = vld [vmem:[%s317] sm:%s310]
                %320 = vst [vmem:[%s318] sm:%s310] %v319
                %v321 = vld [vmem:[%s317 + $0xc] sm:%s310]
                %322 = vst [vmem:[%s318 + $0x4] sm:%s310] %v321
                %v323 = vld [vmem:[%s317 + $0x18] sm:%s310]
                %324 = vst [vmem:[%s318 + $0x8] sm:%s310] %v323
                %v325 = vld [vmem:[%s317 + $0x24] sm:%s310]
                %326 = vst [vmem:[%s318 + $0xc] sm:%s310] %v325
                %v327 = vld [vmem:[%s317 + $0x30] sm:%s310]
                %328 = vst [vmem:[%s318 + $0x10] sm:%s310] %v327
                %v329 = vld [vmem:[%s317 + $0x3c] sm:%s310]
                %330 = vst [vmem:[%s318 + $0x14] sm:%s310] %v329
                %v331 = vld [vmem:[%s317 + $0x48] sm:%s310]
                %332 = vst [vmem:[%s318 + $0x18] sm:%s310] %v331
                %v333 = vld [vmem:[%s317 + $0x54] sm:%s310]
                %334 = vst [vmem:[%s318 + $0x1c] sm:%s310] %v333
                %v335 = vld [vmem:[%s317 + $0x60] sm:%s310]
                %336 = vst [vmem:[%s318 + $0x20] sm:%s310] %v335
                %v337 = vld [vmem:[%s317 + $0x6c] sm:%s310]
                %338 = vst [vmem:[%s318 + $0x24] sm:%s310] %v337
                %v339 = vld [vmem:[%s317 + $0x78] sm:%s310]
                %340 = vst [vmem:[%s318 + $0x28] sm:%s310] %v339
                %v341 = vld [vmem:[%s317 + $0x84] sm:%s310]
                %342 = vst [vmem:[%s318 + $0x2c] sm:%s310] %v341
                %v343 = vld [vmem:[%s317 + $0x90] sm:%s310]
                %344 = vst [vmem:[%s318 + $0x30] sm:%s310] %v343
                %v345 = vld [vmem:[%s317 + $0x9c] sm:%s310]
                %346 = vst [vmem:[%s318 + $0x34] sm:%s310] %v345
                %v347 = vld [vmem:[%s317 + $0xa8] sm:%s310]
                %348 = vst [vmem:[%s318 + $0x38] sm:%s310] %v347
                %v349 = vld [vmem:[%s317 + $0xb4] sm:%s310]
                %350 = vst [vmem:[%s318 + $0x3c] sm:%s310] %v349
              $region49: #{resnet_forward.79} parent=43 // loop_footer
                %s316 = sadd.s32 1, %s312
              $region50: #{resnet_forward.79} parent=43 // loop_footer_branch
                %311 = sbr.rel target = $region46
              $region51: #{resnet_forward.79} parent=43 // loop_exit
                _
            $region44: #{resnet_forward.79} parent=35 // pred_fallthru
              _
          $region36: #{resnet_forward.79} parent=31 // pred_fallthru
            _
          %403 = vnop
        $region32: #{resnet_forward.79} parent=27 // pred_fallthru
          _
        // Predicated region
        $region70: #{resnet_forward.79} parent=27 // pred_check
          %p404 = pneg %p82
        $region71: #{resnet_forward.79} parent=27 // pred_check_branch
          %406 = sbr.rel (%p404) target = $region73
        $region72: #{resnet_forward.79} parent=27 // pred_region
          %s407 = smul.u32 16, %s22
          %p408 = scmp.lt.s32.totalorder %s407, 47
          %s409 = scalar_select %p408, %s407, 47
          %p410 = scmp.lt.s32.totalorder %s21, 0
          %s411 = scalar_select %p410, %s21, 0
          %s412 = sadd.s32 %s411, %s409
          %s413 = smul.addr %s412, 4
          %s414 = scalar_lea.vmem %s1, %s413
          %s415 = smul.u32 16, %s22
        $region73: #{resnet_forward.79} parent=27 // pred_fallthru
          _
        // Predicated region
        $region74: #{resnet_forward.79} parent=27 // pred_check
          %p416 = pneg %p108
        $region75: #{resnet_forward.79} parent=27 // pred_check_branch
          %418 = sbr.rel (%p416) target = $region77
        $region76: #{resnet_forward.79} parent=27 // pred_region
          %p419 = scmp.lt.s32.totalorder %s22, 2
          %s420 = scalar_select %p419, %s22, 2
          %s421 = scalar_lea.vmem %s2, %s420
        $region77: #{resnet_forward.79} parent=27 // pred_fallthru
          _
        // Predicated region
        $region78: #{resnet_forward.79} parent=27 // pred_check
          %p422 = pneg %p134
        $region79: #{resnet_forward.79} parent=27 // pred_check_branch
          %424 = sbr.rel (%p422) target = $region81
        $region80: #{resnet_forward.79} parent=27 // pred_region
          %p425 = scmp.lt.s32.totalorder %s22, 2
          %s426 = scalar_select %p425, %s22, 2
          %s427 = scalar_lea.vmem %s3, %s426
        $region81: #{resnet_forward.79} parent=27 // pred_fallthru
          _
      $region28: #{resnet_forward.79} parent=5 // pred_fallthru
        _
      %p428 = scmp.le.s32.totalorder 1, %s13
      %p429 = scmp.lt.s32.totalorder %s13, 4
      %p430 = pnand %p428, %p429
      %p431 = pneg %p430
      // Predicated region
      $region82: #{resnet_forward.79} parent=5 // pred_check
        _
      $region83: #{resnet_forward.79} parent=5 // pred_check_branch
        %433 = sbr.rel (%p430) target = $region85
      $region84: #{resnet_forward.79} parent=5 // pred_region
        %s434 = ssub.s32 %s13, 1
        %s435 = sand.u32 %s47, 1
        %s436 = sand.u32 %s47, 1
        %s437 = smul.addr %s436, 64
        %s438 = scalar_lea.vmem [#allocation3], %s437
        // Predicated region
        $region86: #{resnet_forward.79} parent=84 // pred_check
          %p439 = pneg %p60
        $region87: #{resnet_forward.79} parent=84 // pred_check_branch
          %441 = sbr.rel (%p439) target = $region89
        $region88: #{resnet_forward.79} parent=84 // pred_region
          _
        $region89: #{resnet_forward.79} parent=84 // pred_fallthru
          _
        %s442 = sand.u32 %s47, 1
        %s443 = sand.u32 %s47, 1
        %s444 = smul.addr %s443, 64
        %s445 = scalar_lea.vmem [#allocation3], %s444
        %p446 = pneg %p60
        %p447 = pneg %p57
        %s448 = smul.u32 16, %s25
        %p449 = scmp.lt.s32.totalorder %s448, 47
        %s450 = scalar_select %p449, %s448, 47
        %p451 = scmp.lt.s32.totalorder %s24, 0
        %s452 = scalar_select %p451, %s24, 0
        %s453 = sadd.s32 %s452, %s450
        %s454 = smul.addr %s453, 4
        %s455 = scalar_lea.vmem %s1, %s454
        %p456 = pneg %p88
        %p457 = pneg %p85
        %p458 = scmp.lt.s32.totalorder %s25, 2
        %s459 = scalar_select %p458, %s25, 2
        %s460 = scalar_lea.vmem %s2, %s459
        %p461 = pneg %p114
        %p462 = pneg %p111
        %p463 = scmp.lt.s32.totalorder %s25, 2
        %s464 = scalar_select %p463, %s25, 2
        %s465 = scalar_lea.vmem %s3, %s464
        %p466 = pneg %p140
        %p467 = pneg %p137
        %s468 = smul.u32 16, %s23
        %p469 = scmp.lt.s32.totalorder %s468, 15
        %s470 = scalar_select %p469, %s468, 15
        %p471 = scmp.lt.s32.totalorder %s24, 0
        %s472 = scalar_select %p471, %s24, 0
        %s473 = sadd.s32 %s472, %s470
        %s474 = smul.addr %s473, 8
        %s475 = scalar_lea.vmem %s4, %s474
        %p476 = pneg %p168
        %p477 = pneg %p165
        %p478 = scmp.lt.s32.totalorder %s24, 0
        %s479 = scalar_select %p478, %s24, 0
        %s480 = scalar_lea.vmem %s5, %s479
        %p481 = pneg %p194
        %p482 = pneg %p191
        %p483 = scmp.lt.s32.totalorder %s24, 0
        %s484 = scalar_select %p483, %s24, 0
        %s485 = scalar_lea.vmem %s6, %s484
        %p486 = pneg %p220
        %p487 = pneg %p217
        %p488 = pneg %p248
        %p489 = pneg %p245
        %s490 = smul.u32 16, %s23
        %p491 = scmp.lt.s32.totalorder %s490, 15
        %s492 = scalar_select %p491, %s490, 15
        %p493 = scmp.lt.s32.totalorder %s24, 0
        %s494 = scalar_select %p493, %s24, 0
        %s495 = sadd.s32 %s494, %s492
        %s496 = smul.addr %s495, 8
        %s497 = scalar_lea.vmem %s7, %s496
        %s498 = smul.u32 16, %s23
        %s499 = smul.u32 16, %s25
        %p500 = scmp.lt.s32.totalorder %s499, 47
        %s501 = scalar_select %p500, %s499, 47
        %p502 = scmp.lt.s32.totalorder %s24, 0
        %s503 = scalar_select %p502, %s24, 0
        %s504 = sadd.s32 %s503, %s501
        %s505 = smul.addr %s504, 4
        %s506 = scalar_lea.vmem %s1, %s505
        %s507 = smul.u32 16, %s25
        %p508 = scmp.lt.s32.totalorder %s25, 2
        %s509 = scalar_select %p508, %s25, 2
        %s510 = scalar_lea.vmem %s2, %s509
        %p511 = scmp.lt.s32.totalorder %s25, 2
        %s512 = scalar_select %p511, %s25, 2
        %s513 = scalar_lea.vmem %s3, %s512
        %s514 = smul.u32 16, %s23
        %p515 = scmp.lt.s32.totalorder %s514, 15
        %s516 = scalar_select %p515, %s514, 15
        %p517 = scmp.lt.s32.totalorder %s24, 0
        %s518 = scalar_select %p517, %s24, 0
        %s519 = sadd.s32 %s518, %s516
        %s520 = smul.addr %s519, 8
        %s521 = scalar_lea.vmem %s4, %s520
        %s522 = smul.u32 16, %s23
        %p523 = scmp.lt.s32.totalorder %s24, 0
        %s524 = scalar_select %p523, %s24, 0
        %s525 = scalar_lea.vmem %s5, %s524
        %p526 = scmp.lt.s32.totalorder %s24, 0
        %s527 = scalar_select %p526, %s24, 0
        %s528 = scalar_lea.vmem %s6, %s527
        %s529 = smul.u32 16, %s23
        %p530 = scmp.lt.s32.totalorder %s529, 15
        %s531 = scalar_select %p530, %s529, 15
        %p532 = scmp.lt.s32.totalorder %s24, 0
        %s533 = scalar_select %p532, %s24, 0
        %s534 = sadd.s32 %s533, %s531
        %s535 = smul.addr %s534, 8
        %s536 = scalar_lea.vmem %s7, %s535
        %s537 = smul.u32 16, %s23
        %p538 = scmp.eq.s32.totalorder %s25, 0
        // Predicated region
        $region90: #{resnet_forward.79} parent=84 // pred_check
          %p539 = pneg %p538
        $region91: #{resnet_forward.79} parent=84 // pred_check_branch
          %541 = sbr.rel (%p539) target = $region93
        $region92: #{resnet_forward.79} parent=84 // pred_region
          %542 = vst [vmem:[#allocation2] sm:$0xff] 0.0
          %543 = vst [vmem:[#allocation2 + $0x8] sm:$0xff] 0.0
          %544 = vst [vmem:[#allocation2 + $0x10] sm:$0xff] 0.0
          %545 = vst [vmem:[#allocation2 + $0x18] sm:$0xff] 0.0
          %546 = vst [vmem:[#allocation2 + $0x20] sm:$0xff] 0.0
          %547 = vst [vmem:[#allocation2 + $0x28] sm:$0xff] 0.0
          %548 = vst [vmem:[#allocation2 + $0x30] sm:$0xff] 0.0
          %549 = vst [vmem:[#allocation2 + $0x38] sm:$0xff] 0.0
          %550 = vst [vmem:[#allocation2 + $0x40] sm:$0xff] 0.0
          %551 = vst [vmem:[#allocation2 + $0x48] sm:$0xff] 0.0
          %552 = vst [vmem:[#allocation2 + $0x50] sm:$0xff] 0.0
          %553 = vst [vmem:[#allocation2 + $0x58] sm:$0xff] 0.0
          %554 = vst [vmem:[#allocation2 + $0x60] sm:$0xff] 0.0
          %555 = vst [vmem:[#allocation2 + $0x68] sm:$0xff] 0.0
          %556 = vst [vmem:[#allocation2 + $0x70] sm:$0xff] 0.0
          %557 = vst [vmem:[#allocation2 + $0x78] sm:$0xff] 0.0
        $region93: #{resnet_forward.79} parent=84 // pred_fallthru
          _
        %v558 = vld [vmem:[%s438] sm:$0xf]
        %v559 = vld [vmem:[%s438 + $0x4] sm:$0xf]
        %v560 = vld [vmem:[%s438 + $0x8] sm:$0xf]
        %v561 = vld [vmem:[%s438 + $0xc] sm:$0xf]
        %v562 = vld [vmem:[%s438 + $0x10] sm:$0xf]
        %v563 = vld [vmem:[%s438 + $0x14] sm:$0xf]
        %v564 = vld [vmem:[%s438 + $0x18] sm:$0xf]
        %v565 = vld [vmem:[%s438 + $0x1c] sm:$0xf]
        %v566 = vld [vmem:[%s438 + $0x20] sm:$0xf]
        %v567 = vld [vmem:[%s438 + $0x24] sm:$0xf]
        %v568 = vld [vmem:[%s438 + $0x28] sm:$0xf]
        %v569 = vld [vmem:[%s438 + $0x2c] sm:$0xf]
        %v570 = vld [vmem:[%s438 + $0x30] sm:$0xf]
        %v571 = vld [vmem:[%s438 + $0x34] sm:$0xf]
        %v572 = vld [vmem:[%s438 + $0x38] sm:$0xf]
        %v573 = vld [vmem:[%s438 + $0x3c] sm:$0xf]
        %v574 = vunpack.c.l.bf16 %v558
        %v575 = vunpack.c.l.bf16 %v559
        %v576 = vunpack.c.l.bf16 %v560
        %v577 = vunpack.c.l.bf16 %v561
        %v578 = vunpack.c.l.bf16 %v562
        %v579 = vunpack.c.l.bf16 %v563
        %v580 = vunpack.c.l.bf16 %v564
        %v581 = vunpack.c.l.bf16 %v565
        %v582 = vunpack.c.l.bf16 %v566
        %v583 = vunpack.c.l.bf16 %v567
        %v584 = vunpack.c.l.bf16 %v568
        %v585 = vunpack.c.l.bf16 %v569
        %v586 = vunpack.c.l.bf16 %v570
        %v587 = vunpack.c.l.bf16 %v571
        %v588 = vunpack.c.l.bf16 %v572
        %v589 = vunpack.c.l.bf16 %v573
        %v590 = vld [vmem:[%s510] sm:$0x1]
        %v592 = vperm.slane %v590, 0
        %v594 = vmul.f32 %v574, %v592
        %v595 = vmul.f32 %v575, %v592
        %v596 = vmul.f32 %v576, %v592
        %v597 = vmul.f32 %v577, %v592
        %v598 = vmul.f32 %v578, %v592
        %v599 = vmul.f32 %v579, %v592
        %v600 = vmul.f32 %v580, %v592
        %v601 = vmul.f32 %v581, %v592
        %v602 = vmul.f32 %v582, %v592
        %v603 = vmul.f32 %v583, %v592
        %v604 = vmul.f32 %v584, %v592
        %v605 = vmul.f32 %v585, %v592
        %v606 = vmul.f32 %v586, %v592
        %v607 = vmul.f32 %v587, %v592
        %v608 = vmul.f32 %v588, %v592
        %v609 = vmul.f32 %v589, %v592
        %v610 = vld [vmem:[%s513] sm:$0x1]
        %v612 = vperm.slane %v610, 0
        %v614 = vadd.f32 %v594, %v612
        %v615 = vadd.f32 %v595, %v612
        %v616 = vadd.f32 %v596, %v612
        %v617 = vadd.f32 %v597, %v612
        %v618 = vadd.f32 %v598, %v612
        %v619 = vadd.f32 %v599, %v612
        %v620 = vadd.f32 %v600, %v612
        %v621 = vadd.f32 %v601, %v612
        %v622 = vadd.f32 %v602, %v612
        %v623 = vadd.f32 %v603, %v612
        %v624 = vadd.f32 %v604, %v612
        %v625 = vadd.f32 %v605, %v612
        %v626 = vadd.f32 %v606, %v612
        %v627 = vadd.f32 %v607, %v612
        %v628 = vadd.f32 %v608, %v612
        %v629 = vadd.f32 %v609, %v612
        %v630 = vmax.f32 %v614, 0.0
        %v631 = vmax.f32 %v615, 0.0
        %v632 = vmax.f32 %v616, 0.0
        %v633 = vmax.f32 %v617, 0.0
        %v634 = vmax.f32 %v618, 0.0
        %v635 = vmax.f32 %v619, 0.0
        %v636 = vmax.f32 %v620, 0.0
        %v637 = vmax.f32 %v621, 0.0
        %v638 = vmax.f32 %v622, 0.0
        %v639 = vmax.f32 %v623, 0.0
        %v640 = vmax.f32 %v624, 0.0
        %v641 = vmax.f32 %v625, 0.0
        %v642 = vmax.f32 %v626, 0.0
        %v643 = vmax.f32 %v627, 0.0
        %v644 = vmax.f32 %v628, 0.0
        %v645 = vmax.f32 %v629, 0.0
        %v646 = vpack.c.bf16 %v631, %v630
        %v647 = vpack.c.bf16 %v633, %v632
        %v648 = vpack.c.bf16 %v635, %v634
        %v649 = vpack.c.bf16 %v637, %v636
        %v650 = vpack.c.bf16 %v639, %v638
        %v651 = vpack.c.bf16 %v641, %v640
        %v652 = vpack.c.bf16 %v643, %v642
        %v653 = vpack.c.bf16 %v645, %v644
        %v654 = vld [vmem:[#allocation2] sm:$0xff]
        %v655 = vld [vmem:[#allocation2 + $0x8] sm:$0xff]
        %v656 = vld [vmem:[#allocation2 + $0x10] sm:$0xff]
        %v657 = vld [vmem:[#allocation2 + $0x18] sm:$0xff]
        %v658 = vld [vmem:[#allocation2 + $0x20] sm:$0xff]
        %v659 = vld [vmem:[#allocation2 + $0x28] sm:$0xff]
        %v660 = vld [vmem:[#allocation2 + $0x30] sm:$0xff]
        %v661 = vld [vmem:[#allocation2 + $0x38] sm:$0xff]
        %v662 = vld [vmem:[#allocation2 + $0x40] sm:$0xff]
        %v663 = vld [vmem:[#allocation2 + $0x48] sm:$0xff]
        %v664 = vld [vmem:[#allocation2 + $0x50] sm:$0xff]
        %v665 = vld [vmem:[#allocation2 + $0x58] sm:$0xff]
        %v666 = vld [vmem:[#allocation2 + $0x60] sm:$0xff]
        %v667 = vld [vmem:[#allocation2 + $0x68] sm:$0xff]
        %v668 = vld [vmem:[#allocation2 + $0x70] sm:$0xff]
        %v669 = vld [vmem:[#allocation2 + $0x78] sm:$0xff]
        %v670 = vld [vmem:[%s506] sm:$0xf]
        %v671 = vld [vmem:[%s506 + $0x4] sm:$0xf]
        %v672 = vld [vmem:[%s506 + $0x8] sm:$0xf]
        %v673 = vld [vmem:[%s506 + $0xc] sm:$0xf]
        %v674 = vld [vmem:[%s506 + $0x10] sm:$0xf]
        %v675 = vld [vmem:[%s506 + $0x14] sm:$0xf]
        %v676 = vld [vmem:[%s506 + $0x18] sm:$0xf]
        %v677 = vld [vmem:[%s506 + $0x1c] sm:$0xf]
        %v678 = vld [vmem:[%s506 + $0x20] sm:$0xf]
        %v679 = vld [vmem:[%s506 + $0x24] sm:$0xf]
        %v680 = vld [vmem:[%s506 + $0x28] sm:$0xf]
        %v681 = vld [vmem:[%s506 + $0x2c] sm:$0xf]
        %v682 = vld [vmem:[%s506 + $0x30] sm:$0xf]
        %v683 = vld [vmem:[%s506 + $0x34] sm:$0xf]
        %v684 = vld [vmem:[%s506 + $0x38] sm:$0xf]
        %v685 = vld [vmem:[%s506 + $0x3c] sm:$0xf]
        %v702 = vunpack.c.l.b16 %v670
        %v703 = vunpack.c.l.b16 %v671
        %v704 = vunpack.c.l.b16 %v672
        %v705 = vunpack.c.l.b16 %v673
        %v706 = vunpack.c.l.b16 %v674
        %v707 = vunpack.c.l.b16 %v675
        %v708 = vunpack.c.l.b16 %v676
        %v709 = vunpack.c.l.b16 %v677
        %v710 = vunpack.c.l.b16 %v678
        %v711 = vunpack.c.l.b16 %v679
        %v712 = vunpack.c.l.b16 %v680
        %v713 = vunpack.c.l.b16 %v681
        %v714 = vunpack.c.l.b16 %v682
        %v715 = vunpack.c.l.b16 %v683
        %v716 = vunpack.c.l.b16 %v684
        %v717 = vunpack.c.l.b16 %v685
        %v718 = vpack.c.b16 %v703, %v702
        %v719 = vpack.c.b16 %v705, %v704
        %v720 = vpack.c.b16 %v707, %v706
        %v721 = vpack.c.b16 %v709, %v708
        %v722 = vpack.c.b16 %v711, %v710
        %v723 = vpack.c.b16 %v713, %v712
        %v724 = vpack.c.b16 %v715, %v714
        %v725 = vpack.c.b16 %v717, %v716
        %734 = vmatpush.bf16.msra.mxu0 %v725
        %735 = vmatpush.bf16.msra.mxu0 %v724
        %736 = vmatpush.bf16.msra.mxu0 %v723
        %737 = vmatpush.bf16.msra.mxu0 %v722
        %738 = vmatpush.bf16.msra.mxu0 %v721
        %739 = vmatpush.bf16.msra.mxu0 %v720
        %740 = vmatpush.bf16.msra.mxu0 %v719
        %741 = vmatpush.bf16.msra.mxu0 %v718
        %742 = vmatmul.bf16.gmra.mxu0 %v646
        %v743 = vpop.f32.mrf.mxu0
        %v744 = vadd.f32 0.0, %v743
        %v745 = vpop.f32.mrf.mxu0
        %v746 = vadd.f32 0.0, %v745
        %747 = vmatmul.bf16.gmra.mxu0 %v647
        %v748 = vpop.f32.mrf.mxu0
        %v749 = vadd.f32 0.0, %v748
        %v750 = vpop.f32.mrf.mxu0
        %v751 = vadd.f32 0.0, %v750
        %752 = vmatmul.bf16.gmra.mxu0 %v648
        %v753 = vpop.f32.mrf.mxu0
        %v754 = vadd.f32 0.0, %v753
        %v755 = vpop.f32.mrf.mxu0
        %v756 = vadd.f32 0.0, %v755
        %757 = vmatmul.bf16.gmra.mxu0 %v649
        %v758 = vpop.f32.mrf.mxu0
        %v759 = vadd.f32 0.0, %v758
        %v760 = vpop.f32.mrf.mxu0
        %v761 = vadd.f32 0.0, %v760
        %762 = vmatmul.bf16.gmra.mxu0 %v650
        %v763 = vpop.f32.mrf.mxu0
        %v764 = vadd.f32 0.0, %v763
        %v765 = vpop.f32.mrf.mxu0
        %v766 = vadd.f32 0.0, %v765
        %767 = vmatmul.bf16.gmra.mxu0 %v651
        %v768 = vpop.f32.mrf.mxu0
        %v769 = vadd.f32 0.0, %v768
        %v770 = vpop.f32.mrf.mxu0
        %v771 = vadd.f32 0.0, %v770
        %772 = vmatmul.bf16.gmra.mxu0 %v652
        %v773 = vpop.f32.mrf.mxu0
        %v774 = vadd.f32 0.0, %v773
        %v775 = vpop.f32.mrf.mxu0
        %v776 = vadd.f32 0.0, %v775
        %777 = vmatmul.bf16.gmra.mxu0 %v653
        %v778 = vpop.f32.mrf.mxu0
        %v779 = vadd.f32 0.0, %v778
        %v780 = vpop.f32.mrf.mxu0
        %v781 = vadd.f32 0.0, %v780
        %782 = vdwg.mxu0
        %v783 = vadd.f32 %v654, %v744
        %v784 = vadd.f32 %v655, %v746
        %v785 = vadd.f32 %v656, %v749
        %v786 = vadd.f32 %v657, %v751
        %v787 = vadd.f32 %v658, %v754
        %v788 = vadd.f32 %v659, %v756
        %v789 = vadd.f32 %v660, %v759
        %v790 = vadd.f32 %v661, %v761
        %v791 = vadd.f32 %v662, %v764
        %v792 = vadd.f32 %v663, %v766
        %v793 = vadd.f32 %v664, %v769
        %v794 = vadd.f32 %v665, %v771
        %v795 = vadd.f32 %v666, %v774
        %v796 = vadd.f32 %v667, %v776
        %v797 = vadd.f32 %v668, %v779
        %v798 = vadd.f32 %v669, %v781
        %799 = vst [vmem:[#allocation2] sm:$0xff] %v783
        %800 = vst [vmem:[#allocation2 + $0x8] sm:$0xff] %v784
        %801 = vst [vmem:[#allocation2 + $0x10] sm:$0xff] %v785
        %802 = vst [vmem:[#allocation2 + $0x18] sm:$0xff] %v786
        %803 = vst [vmem:[#allocation2 + $0x20] sm:$0xff] %v787
        %804 = vst [vmem:[#allocation2 + $0x28] sm:$0xff] %v788
        %805 = vst [vmem:[#allocation2 + $0x30] sm:$0xff] %v789
        %806 = vst [vmem:[#allocation2 + $0x38] sm:$0xff] %v790
        %807 = vst [vmem:[#allocation2 + $0x40] sm:$0xff] %v791
        %808 = vst [vmem:[#allocation2 + $0x48] sm:$0xff] %v792
        %809 = vst [vmem:[#allocation2 + $0x50] sm:$0xff] %v793
        %810 = vst [vmem:[#allocation2 + $0x58] sm:$0xff] %v794
        %811 = vst [vmem:[#allocation2 + $0x60] sm:$0xff] %v795
        %812 = vst [vmem:[#allocation2 + $0x68] sm:$0xff] %v796
        %813 = vst [vmem:[#allocation2 + $0x70] sm:$0xff] %v797
        %814 = vst [vmem:[#allocation2 + $0x78] sm:$0xff] %v798
        %p815 = scmp.eq.s32.totalorder %s25, 2
        // Predicated region
        $region94: #{resnet_forward.79} parent=84 // pred_check
          %p816 = pneg %p815
        $region95: #{resnet_forward.79} parent=84 // pred_check_branch
          %818 = sbr.rel (%p816) target = $region97
        $region96: #{resnet_forward.79} parent=84 // pred_region
          %v819 = vld [vmem:[#allocation2] sm:$0xff]
          %v820 = vld [vmem:[#allocation2 + $0x8] sm:$0xff]
          %v821 = vld [vmem:[#allocation2 + $0x10] sm:$0xff]
          %v822 = vld [vmem:[#allocation2 + $0x18] sm:$0xff]
          %v823 = vld [vmem:[#allocation2 + $0x20] sm:$0xff]
          %v824 = vld [vmem:[#allocation2 + $0x28] sm:$0xff]
          %v825 = vld [vmem:[#allocation2 + $0x30] sm:$0xff]
          %v826 = vld [vmem:[#allocation2 + $0x38] sm:$0xff]
          %v827 = vld [vmem:[#allocation2 + $0x40] sm:$0xff]
          %v828 = vld [vmem:[#allocation2 + $0x48] sm:$0xff]
          %v829 = vld [vmem:[#allocation2 + $0x50] sm:$0xff]
          %v830 = vld [vmem:[#allocation2 + $0x58] sm:$0xff]
          %v831 = vld [vmem:[#allocation2 + $0x60] sm:$0xff]
          %v832 = vld [vmem:[#allocation2 + $0x68] sm:$0xff]
          %v833 = vld [vmem:[#allocation2 + $0x70] sm:$0xff]
          %v834 = vld [vmem:[#allocation2 + $0x78] sm:$0xff]
          %v835 = vld [vmem:[%s521] sm:$0xff]
          %v836 = vld [vmem:[%s521 + $0x8] sm:$0xff]
          %v837 = vld [vmem:[%s521 + $0x10] sm:$0xff]
          %v838 = vld [vmem:[%s521 + $0x18] sm:$0xff]
          %v839 = vld [vmem:[%s521 + $0x20] sm:$0xff]
          %v840 = vld [vmem:[%s521 + $0x28] sm:$0xff]
          %v841 = vld [vmem:[%s521 + $0x30] sm:$0xff]
          %v842 = vld [vmem:[%s521 + $0x38] sm:$0xff]
          %v843 = vld [vmem:[%s521 + $0x40] sm:$0xff]
          %v844 = vld [vmem:[%s521 + $0x48] sm:$0xff]
          %v845 = vld [vmem:[%s521 + $0x50] sm:$0xff]
          %v846 = vld [vmem:[%s521 + $0x58] sm:$0xff]
          %v847 = vld [vmem:[%s521 + $0x60] sm:$0xff]
          %v848 = vld [vmem:[%s521 + $0x68] sm:$0xff]
          %v849 = vld [vmem:[%s521 + $0x70] sm:$0xff]
          %v850 = vld [vmem:[%s521 + $0x78] sm:$0xff]
          %v851 = vld [vmem:[%s525] sm:$0x1]
          %v853 = vperm.slane %v851, 0
          %v855 = vmul.f32 %v835, %v853
          %v856 = vmul.f32 %v836, %v853
          %v857 = vmul.f32 %v837, %v853
          %v858 = vmul.f32 %v838, %v853
          %v859 = vmul.f32 %v839, %v853
          %v860 = vmul.f32 %v840, %v853
          %v861 = vmul.f32 %v841, %v853
          %v862 = vmul.f32 %v842, %v853
          %v863 = vmul.f32 %v843, %v853
          %v864 = vmul.f32 %v844, %v853
          %v865 = vmul.f32 %v845, %v853
          %v866 = vmul.f32 %v846, %v853
          %v867 = vmul.f32 %v847, %v853
          %v868 = vmul.f32 %v848, %v853
          %v869 = vmul.f32 %v849, %v853
          %v870 = vmul.f32 %v850, %v853
          %v871 = vadd.f32 %v819, %v855
          %v872 = vadd.f32 %v820, %v856
          %v873 = vadd.f32 %v821, %v857
          %v874 = vadd.f32 %v822, %v858
          %v875 = vadd.f32 %v823, %v859
          %v876 = vadd.f32 %v824, %v860
          %v877 = vadd.f32 %v825, %v861
          %v878 = vadd.f32 %v826, %v862
          %v879 = vadd.f32 %v827, %v863
          %v880 = vadd.f32 %v828, %v864
          %v881 = vadd.f32 %v829, %v865
          %v882 = vadd.f32 %v830, %v866
          %v883 = vadd.f32 %v831, %v867
          %v884 = vadd.f32 %v832, %v868
          %v885 = vadd.f32 %v833, %v869
          %v886 = vadd.f32 %v834, %v870
          %v887 = vld [vmem:[%s528] sm:$0x1]
          %v889 = vperm.slane %v887, 0
          %v891 = vadd.f32 %v871, %v889
          %v892 = vadd.f32 %v872, %v889
          %v893 = vadd.f32 %v873, %v889
          %v894 = vadd.f32 %v874, %v889
          %v895 = vadd.f32 %v875, %v889
          %v896 = vadd.f32 %v876, %v889
          %v897 = vadd.f32 %v877, %v889
          %v898 = vadd.f32 %v878, %v889
          %v899 = vadd.f32 %v879, %v889
          %v900 = vadd.f32 %v880, %v889
          %v901 = vadd.f32 %v881, %v889
          %v902 = vadd.f32 %v882, %v889
          %v903 = vadd.f32 %v883, %v889
          %v904 = vadd.f32 %v884, %v889
          %v905 = vadd.f32 %v885, %v889
          %v906 = vadd.f32 %v886, %v889
          %v907 = vmax.f32 %v891, 0.0
          %v908 = vmax.f32 %v892, 0.0
          %v909 = vmax.f32 %v893, 0.0
          %v910 = vmax.f32 %v894, 0.0
          %v911 = vmax.f32 %v895, 0.0
          %v912 = vmax.f32 %v896, 0.0
          %v913 = vmax.f32 %v897, 0.0
          %v914 = vmax.f32 %v898, 0.0
          %v915 = vmax.f32 %v899, 0.0
          %v916 = vmax.f32 %v900, 0.0
          %v917 = vmax.f32 %v901, 0.0
          %v918 = vmax.f32 %v902, 0.0
          %v919 = vmax.f32 %v903, 0.0
          %v920 = vmax.f32 %v904, 0.0
          %v921 = vmax.f32 %v905, 0.0
          %v922 = vmax.f32 %v906, 0.0
          %923 = vst [vmem:[%s536] sm:$0xff] %v907
          %924 = vst [vmem:[%s536 + $0x8] sm:$0xff] %v908
          %925 = vst [vmem:[%s536 + $0x10] sm:$0xff] %v909
          %926 = vst [vmem:[%s536 + $0x18] sm:$0xff] %v910
          %927 = vst [vmem:[%s536 + $0x20] sm:$0xff] %v911
          %928 = vst [vmem:[%s536 + $0x28] sm:$0xff] %v912
          %929 = vst [vmem:[%s536 + $0x30] sm:$0xff] %v913
          %930 = vst [vmem:[%s536 + $0x38] sm:$0xff] %v914
          %931 = vst [vmem:[%s536 + $0x40] sm:$0xff] %v915
          %932 = vst [vmem:[%s536 + $0x48] sm:$0xff] %v916
          %933 = vst [vmem:[%s536 + $0x50] sm:$0xff] %v917
          %934 = vst [vmem:[%s536 + $0x58] sm:$0xff] %v918
          %935 = vst [vmem:[%s536 + $0x60] sm:$0xff] %v919
          %936 = vst [vmem:[%s536 + $0x68] sm:$0xff] %v920
          %937 = vst [vmem:[%s536 + $0x70] sm:$0xff] %v921
          %938 = vst [vmem:[%s536 + $0x78] sm:$0xff] %v922
        $region97: #{resnet_forward.79} parent=84 // pred_fallthru
          _
        %s939 = smul.u32 16, %s23
        %p940 = scmp.lt.s32.totalorder %s939, 15
        %s941 = scalar_select %p940, %s939, 15
        %p942 = scmp.lt.s32.totalorder %s24, 0
        %s943 = scalar_select %p942, %s24, 0
        %s944 = sadd.s32 %s943, %s941
        %s945 = smul.addr %s944, 8
        %s946 = scalar_lea.vmem %s7, %s945
        // Predicated region
        $region98: #{resnet_forward.79} parent=84 // pred_check
          %p947 = pneg %p245
        $region99: #{resnet_forward.79} parent=84 // pred_check_branch
          %949 = sbr.rel (%p947) target = $region101
        $region100: #{resnet_forward.79} parent=84 // pred_region
          %s950 = smul.u32 16, %s23
        $region101: #{resnet_forward.79} parent=84 // pred_fallthru
          _
        // Predicated region
        $region102: #{resnet_forward.79} parent=84 // pred_check
          %p951 = pneg %p245
        $region103: #{resnet_forward.79} parent=84 // pred_check_branch
          %953 = sbr.rel (%p951) target = $region105
        $region104: #{resnet_forward.79} parent=84 // pred_region
          %s954 = smul.u32 16, %s23
          %p955 = scmp.lt.s32.totalorder %s954, 15
          %s956 = scalar_select %p955, %s954, 15
          %p957 = scmp.lt.s32.totalorder %s24, 0
          %s958 = scalar_select %p957, %s24, 0
          %s959 = sadd.s32 %s958, %s956
          %s960 = smul.addr %s959, 8
          %s961 = scalar_lea.vmem %s7, %s960
        $region105: #{resnet_forward.79} parent=84 // pred_fallthru
          _
      $region85: #{resnet_forward.79} parent=5 // pred_fallthru
        _
      %p962 = scmp.le.s32.totalorder 2, %s13
      // Predicated region
      $region106: #{resnet_forward.79} parent=5 // pred_check
        %p963 = pneg %p962
      $region107: #{resnet_forward.79} parent=5 // pred_check_branch
        %965 = sbr.rel (%p963) target = $region109
      $region108: #{resnet_forward.79} parent=5 // pred_region
        %s966 = ssub.s32 %s13, 2
      $region109: #{resnet_forward.79} parent=5 // pred_fallthru
        _
    $region6: #{resnet_forward.79} parent=1 // loop_footer
      %s17 = sadd.s32 1, %s13
    $region7: #{resnet_forward.79} parent=1 // loop_footer_branch
      %12 = sbr.rel target = $region3
    $region8: #{resnet_forward.79} parent=1 // loop_exit
      _

// kernel: resnet_forward.84
$region0: #{resnet_forward.84}
  #allocation0 [shape = 'u32[]', space=smem, size = 0x4, offset = 0x4, fixed_abs, tag = 'smem constant byte address 0x4 - core index']
  #allocation1 [shape = 'u32[72,128]{1,0:T(1,128)}', space=vmem, size = 0x9000, scoped, tag = 'internal scratch']
  %s0 = inlined_call_operand.vmem [shape: f32[2,64,32], index: 0, kind: input, shape index: {}]
  %s1 = inlined_call_operand.vmem [shape: f32[2,1,32], index: 1, kind: output, shape index: {}]
  %s2 = sld [smem:[#allocation0]]
  $region37: #{resnet_forward.84} parent=0
    _
  %s4 = ssub.s32 1, %s2
  %s5 = scalar_select 0, %s4, %s2
  loop: start=0, step=1, limit=4
  $region2: #{resnet_forward.84} parent=0 // loop_pre_header
    _
  $region3: #{resnet_forward.84} parent=0 // loop_header
    %s7 = sphi 0, %s11
    %p8 = scmp.ge.s32.totalorder %s7, 4
    %s17 = sphi 0, %s19
    %s20 = sphi 0, %s17
    %s21 = sphi 0, %s20
    %s37 = sphi 0, %s21
    %s43 = sphi 0, %s45
    %s46 = sphi 0, %s43
    %s47 = sphi 0, %s46
    %s63 = sphi 0, %s47
  $region4: #{resnet_forward.84} parent=0 // loop_header_branch
    %10 = sbr.rel (%p8) target = $region8
  $region5: #{resnet_forward.84} parent=0 // loop_body
    %s12 = ssub.s32 %s7, 1
    %s13 = ssub.s32 %s7, 2
    %s14 = sadd.s32 %s7, 1
    %s15 = ssub.s32 %s7, %s14
    %p16 = scmp.eq.s32.totalorder %s15, 0
    %s18 = sadd.s32 %s17, 1
    %s19 = scalar_select %p16, %s17, %s18
    %p22 = pneg %p16
    %p23 = scmp.eq.s32.totalorder %s7, 1
    %p24 = por %p22, %p23
    %p25 = scmp.ne.s32.totalorder %s17, %s20
    %p26 = scmp.eq.s32.totalorder %s7, 0
    %p27 = por %p25, %p26
    %p28 = scmp.ne.s32.totalorder %s17, %s20
    %p29 = scmp.eq.s32.totalorder %s12, 1
    %p30 = por %p28, %p29
    %p31 = scmp.ne.s32.totalorder %s20, %s21
    %p32 = scmp.eq.s32.totalorder %s12, 0
    %p33 = por %p31, %p32
    %p34 = scmp.ne.s32.totalorder %s20, %s21
    %p35 = scmp.eq.s32.totalorder %s13, 1
    %p36 = por %p34, %p35
    %p38 = scmp.ne.s32.totalorder %s21, %s37
    %p39 = scmp.eq.s32.totalorder %s13, 0
    %p40 = por %p38, %p39
    %s41 = ssub.s32 %s7, %s14
    %p42 = scmp.eq.s32.totalorder %s41, 0
    %s44 = sadd.s32 %s43, 1
    %s45 = scalar_select %p42, %s43, %s44
    %p48 = pneg %p42
    %p49 = scmp.eq.s32.totalorder %s7, 1
    %p50 = por %p48, %p49
    %p51 = scmp.ne.s32.totalorder %s43, %s46
    %p52 = scmp.eq.s32.totalorder %s7, 0
    %p53 = por %p51, %p52
    %p54 = scmp.ne.s32.totalorder %s43, %s46
    %p55 = scmp.eq.s32.totalorder %s12, 1
    %p56 = por %p54, %p55
    %p57 = scmp.ne.s32.totalorder %s46, %s47
    %p58 = scmp.eq.s32.totalorder %s12, 0
    %p59 = por %p57, %p58
    %p60 = scmp.ne.s32.totalorder %s46, %s47
    %p61 = scmp.eq.s32.totalorder %s13, 1
    %p62 = por %p60, %p61
    %p64 = scmp.ne.s32.totalorder %s47, %s63
    %p65 = scmp.eq.s32.totalorder %s13, 0
    %p66 = por %p64, %p65
    %p67 = scmp.le.s32.totalorder 1, %s7
    %p68 = scmp.lt.s32.totalorder %s7, 3
    %p69 = pnand %p67, %p68
    %p70 = pneg %p69
    // Predicated region
    $region9: #{resnet_forward.84} parent=5 // pred_check
      _
    $region10: #{resnet_forward.84} parent=5 // pred_check_branch
      %72 = sbr.rel (%p69) target = $region12
    $region11: #{resnet_forward.84} parent=5 // pred_region
      %s73 = ssub.s32 %s7, 1
    $region12: #{resnet_forward.84} parent=5 // pred_fallthru
      _
    %p74 = scmp.lt.s32.totalorder %s7, 2
    // Predicated region
    $region13: #{resnet_forward.84} parent=5 // pred_check
      %p75 = pneg %p74
    $region14: #{resnet_forward.84} parent=5 // pred_check_branch
      %77 = sbr.rel (%p75) target = $region16
    $region15: #{resnet_forward.84} parent=5 // pred_region
      // Predicated region
      $region17: #{resnet_forward.84} parent=15 // pred_check
        %p78 = pneg %p27
      $region18: #{resnet_forward.84} parent=15 // pred_check_branch
        %80 = sbr.rel (%p78) target = $region20
      $region19: #{resnet_forward.84} parent=15 // pred_region
        %p81 = scmp.lt.s32.totalorder %s7, 1
        %s82 = scalar_select %p81, %s7, 1
        %s83 = smul.addr %s82, 8
        %s84 = smul.addr %s83, 8
        %s85 = scalar_lea.vmem %s0, %s84
      $region20: #{resnet_forward.84} parent=15 // pred_fallthru
        _
    $region16: #{resnet_forward.84} parent=5 // pred_fallthru
      _
    %p86 = scmp.le.s32.totalorder 1, %s7
    %p87 = scmp.lt.s32.totalorder %s7, 3
    %p88 = pnand %p86, %p87
    %p89 = pneg %p88
    // Predicated region
    $region21: #{resnet_forward.84} parent=5 // pred_check
      _
    $region22: #{resnet_forward.84} parent=5 // pred_check_branch
      %91 = sbr.rel (%p88) target = $region24
    $region23: #{resnet_forward.84} parent=5 // pred_region
      %s92 = ssub.s32 %s7, 1
      %p93 = scmp.lt.s32.totalorder %s12, 1
      %s94 = scalar_select %p93, %s12, 1
      %s95 = smul.addr %s94, 8
      %s96 = smul.addr %s95, 8
      %s97 = scalar_lea.vmem %s0, %s96
      %p98 = pneg %p33
      %p99 = pneg %p30
      %p100 = pneg %p59
      %p101 = pneg %p56
      %p102 = scmp.lt.s32.totalorder %s12, 1
      %s103 = scalar_select %p102, %s12, 1
      %s104 = scalar_lea.vmem %s1, %s103
      %p105 = scmp.lt.s32.totalorder %s12, 1
      %s106 = scalar_select %p105, %s12, 1
      %s107 = smul.addr %s106, 8
      %s108 = smul.addr %s107, 8
      %s109 = scalar_lea.vmem %s0, %s108
      %p110 = scmp.lt.s32.totalorder %s12, 1
      %s111 = scalar_select %p110, %s12, 1
      %s112 = scalar_lea.vmem %s1, %s111
      %v113 = vld [vmem:[%s109] sm:$0xff]
      %v114 = vld [vmem:[%s109 + $0x8] sm:$0xff]
      %v115 = vld [vmem:[%s109 + $0x10] sm:$0xff]
      %v116 = vld [vmem:[%s109 + $0x18] sm:$0xff]
      %v117 = vld [vmem:[%s109 + $0x20] sm:$0xff]
      %v118 = vld [vmem:[%s109 + $0x28] sm:$0xff]
      %v119 = vld [vmem:[%s109 + $0x30] sm:$0xff]
      %v120 = vld [vmem:[%s109 + $0x38] sm:$0xff]
      %vm121 = vcmask 261120
      %v122 = vsel %vm121, %v113, 0.0
      %v123 = vsel %vm121, %v114, 0.0
      %v124 = vadd.f32 %v122, %v123
      %v125 = vsel %vm121, %v115, 0.0
      %v126 = vadd.f32 %v124, %v125
      %v127 = vsel %vm121, %v116, 0.0
      %v128 = vadd.f32 %v126, %v127
      %v129 = vsel %vm121, %v117, 0.0
      %v130 = vadd.f32 %v128, %v129
      %v131 = vsel %vm121, %v118, 0.0
      %v132 = vadd.f32 %v130, %v131
      %v133 = vsel %vm121, %v119, 0.0
      %v134 = vadd.f32 %v132, %v133
      %v135 = vsel %vm121, %v120, 0.0
      %v136 = vadd.f32 %v134, %v135
      %v137 = vrot.slane %v136, 4
      %v138 = vadd.f32 %v136, %v137
      %v139 = vrot.slane %v138, 2
      %v140 = vadd.f32 %v138, %v139
      %v141 = vrot.slane %v140, 1
      %v142 = vadd.f32 %v140, %v141
      %v143 = vrcp.pop 64.0
      %v144 = vmul.f32 64.0, %v143
      %v145 = vsub.f32 1.0, %v144
      %v146 = vmul.f32 %v143, %v145
      %v147 = vadd.f32 %v143, %v146
      %vm148 = vweird.f32 %v143
      %v149 = vsel %vm148, %v143, %v147
      %v150 = vmul.f32 %v142, %v149
      %vm151 = vcmask 253952
      %152 = vst.msk [vmem:[%s112] sm:$0x1] %vm151, %v150
      %p153 = scmp.lt.s32.totalorder %s12, 1
      %s154 = scalar_select %p153, %s12, 1
      %s155 = scalar_lea.vmem %s1, %s154
      // Predicated region
      $region25: #{resnet_forward.84} parent=23 // pred_check
        %p156 = pneg %p56
      $region26: #{resnet_forward.84} parent=23 // pred_check_branch
        %158 = sbr.rel (%p156) target = $region28
      $region27: #{resnet_forward.84} parent=23 // pred_region
        _
      $region28: #{resnet_forward.84} parent=23 // pred_fallthru
        _
    $region24: #{resnet_forward.84} parent=5 // pred_fallthru
      _
    %p159 = scmp.le.s32.totalorder 2, %s7
    // Predicated region
    $region29: #{resnet_forward.84} parent=5 // pred_check
      %p160 = pneg %p159
    $region30: #{resnet_forward.84} parent=5 // pred_check_branch
      %162 = sbr.rel (%p160) target = $region32
    $region31: #{resnet_forward.84} parent=5 // pred_region
      %s163 = ssub.s32 %s7, 2
      // Predicated region
      $region33: #{resnet_forward.84} parent=31 // pred_check
        %p164 = pneg %p62
      $region34: #{resnet_forward.84} parent=31 // pred_check_branch
        %166 = sbr.rel (%p164) target = $region36
      $region35: #{resnet_forward.84} parent=31 // pred_region
        %p167 = scmp.lt.s32.totalorder %s13, 1
        %s168 = scalar_select %p167, %s13, 1
        %s169 = scalar_lea.vmem %s1, %s168
      $region36: #{resnet_forward.84} parent=31 // pred_fallthru
        _
    $region32: #{resnet_forward.84} parent=5 // pred_fallthru
      _
  $region6: #{resnet_forward.84} parent=0 // loop_footer
    %s11 = sadd.s32 1, %s7
  $region7: #{resnet_forward.84} parent=0 // loop_footer_branch
    %6 = sbr.rel target = $region3
  $region8: #{resnet_forward.84} parent=0 // loop_exit
    _

// kernel: resnet_forward.85
$region0: #{resnet_forward.85}
  #allocation0 [shape = 'u32[]', space=smem, size = 0x4, offset = 0x4, fixed_abs, tag = 'smem constant byte address 0x4 - core index']
  #allocation1 [shape = 'u32[72,128]{1,0:T(1,128)}', space=vmem, size = 0x9000, scoped, tag = 'internal scratch']
  #allocation2 [shape = 'f32[8,128]{1,0:T(8,128)}', space=vmem, size = 0x1000, scoped, tag = 'scratch operand']
  %s0 = inlined_call_operand.vmem [shape: bf16[8,128], index: 0, kind: input, shape index: {}]
  %s1 = inlined_call_operand.vmem [shape: bf16[128,128], index: 1, kind: input, shape index: {}]
  %s2 = inlined_call_operand.vmem [shape: f32[1,128], index: 2, kind: input, shape index: {}]
  %s3 = inlined_call_operand.vmem [shape: f32[8,128], index: 3, kind: output, shape index: {}]
  %s4 = sld [smem:[#allocation0]]
  $region30: #{resnet_forward.85} parent=0
    _
  %s6 = ssub.s32 1, %s4
  %s7 = scalar_select 0, %s6, %s4
  // Predicated region
  $region2: #{resnet_forward.85} parent=0 // pred_check
    _
  $region3: #{resnet_forward.85} parent=0 // pred_check_branch
    %9 = sbr.rel (0) target = $region5
  $region4: #{resnet_forward.85} parent=0 // pred_region
    _
  $region5: #{resnet_forward.85} parent=0 // pred_fallthru
    _
  // Predicated region
  $region6: #{resnet_forward.85} parent=0 // pred_check
    _
  $region7: #{resnet_forward.85} parent=0 // pred_check_branch
    %11 = sbr.rel (0) target = $region9
  $region8: #{resnet_forward.85} parent=0 // pred_region
    _
  $region9: #{resnet_forward.85} parent=0 // pred_fallthru
    _
  // Predicated region
  $region10: #{resnet_forward.85} parent=0 // pred_check
    _
  $region11: #{resnet_forward.85} parent=0 // pred_check_branch
    %13 = sbr.rel (0) target = $region13
  $region12: #{resnet_forward.85} parent=0 // pred_region
    _
  $region13: #{resnet_forward.85} parent=0 // pred_fallthru
    _
  %p14 = scmp.eq.s32.totalorder 0, 0
  // Predicated region
  $region14: #{resnet_forward.85} parent=0 // pred_check
    %p15 = pneg %p14
  $region15: #{resnet_forward.85} parent=0 // pred_check_branch
    %17 = sbr.rel (%p15) target = $region17
  $region16: #{resnet_forward.85} parent=0 // pred_region
    %18 = vst [vmem:[#allocation2] sm:$0xff] 0.0
  $region17: #{resnet_forward.85} parent=0 // pred_fallthru
    _
  %v19 = vld [vmem:[%s0] sm:$0xf]
  %v20 = vld [vmem:[#allocation2] sm:$0xff]
  %v21 = vld [vmem:[%s1] sm:$0xf]
  %v22 = vld [vmem:[%s1 + $0x4] sm:$0xf]
  %v23 = vld [vmem:[%s1 + $0x8] sm:$0xf]
  %v24 = vld [vmem:[%s1 + $0xc] sm:$0xf]
  %v25 = vld [vmem:[%s1 + $0x10] sm:$0xf]
  %v26 = vld [vmem:[%s1 + $0x14] sm:$0xf]
  %v27 = vld [vmem:[%s1 + $0x18] sm:$0xf]
  %v28 = vld [vmem:[%s1 + $0x1c] sm:$0xf]
  %v29 = vld [vmem:[%s1 + $0x20] sm:$0xf]
  %v30 = vld [vmem:[%s1 + $0x24] sm:$0xf]
  %v31 = vld [vmem:[%s1 + $0x28] sm:$0xf]
  %v32 = vld [vmem:[%s1 + $0x2c] sm:$0xf]
  %v33 = vld [vmem:[%s1 + $0x30] sm:$0xf]
  %v34 = vld [vmem:[%s1 + $0x34] sm:$0xf]
  %v35 = vld [vmem:[%s1 + $0x38] sm:$0xf]
  %v36 = vld [vmem:[%s1 + $0x3c] sm:$0xf]
  %v53 = vunpack.c.l.b16 %v21
  %v54 = vunpack.c.l.b16 %v22
  %v55 = vunpack.c.l.b16 %v23
  %v56 = vunpack.c.l.b16 %v24
  %v57 = vunpack.c.l.b16 %v25
  %v58 = vunpack.c.l.b16 %v26
  %v59 = vunpack.c.l.b16 %v27
  %v60 = vunpack.c.l.b16 %v28
  %v61 = vunpack.c.l.b16 %v29
  %v62 = vunpack.c.l.b16 %v30
  %v63 = vunpack.c.l.b16 %v31
  %v64 = vunpack.c.l.b16 %v32
  %v65 = vunpack.c.l.b16 %v33
  %v66 = vunpack.c.l.b16 %v34
  %v67 = vunpack.c.l.b16 %v35
  %v68 = vunpack.c.l.b16 %v36
  %v69 = vpack.c.b16 %v54, %v53
  %v70 = vpack.c.b16 %v56, %v55
  %v71 = vpack.c.b16 %v58, %v57
  %v72 = vpack.c.b16 %v60, %v59
  %v73 = vpack.c.b16 %v62, %v61
  %v74 = vpack.c.b16 %v64, %v63
  %v75 = vpack.c.b16 %v66, %v65
  %v76 = vpack.c.b16 %v68, %v67
  %85 = vmatpush.bf16.msra.mxu0 %v76
  %86 = vmatpush.bf16.msra.mxu0 %v75
  %87 = vmatpush.bf16.msra.mxu0 %v74
  %88 = vmatpush.bf16.msra.mxu0 %v73
  %89 = vmatpush.bf16.msra.mxu0 %v72
  %90 = vmatpush.bf16.msra.mxu0 %v71
  %91 = vmatpush.bf16.msra.mxu0 %v70
  %92 = vmatpush.bf16.msra.mxu0 %v69
  %93 = vmatmul.bf16.gmra.mxu0 %v19
  %v94 = vpop.f32.mrf.mxu0
  %v95 = vadd.f32 0.0, %v94
  %v96 = vpop.f32.mrf.mxu0
  %97 = vdwg.mxu0
  %v98 = vadd.f32 %v20, %v95
  %99 = vst [vmem:[#allocation2] sm:$0xff] %v98
  // Predicated region
  $region18: #{resnet_forward.85} parent=0 // pred_check
    %p100 = pneg %p14
  $region19: #{resnet_forward.85} parent=0 // pred_check_branch
    %102 = sbr.rel (%p100) target = $region21
  $region20: #{resnet_forward.85} parent=0 // pred_region
    %v103 = vld [vmem:[#allocation2] sm:$0xff]
    %v104 = vld [vmem:[%s2] sm:$0x1]
    %v106 = vperm.slane %v104, 0
    %v108 = vadd.f32 %v103, %v106
    %109 = vst [vmem:[%s3] sm:$0xff] %v108
  $region21: #{resnet_forward.85} parent=0 // pred_fallthru
    _
  // Predicated region
  $region22: #{resnet_forward.85} parent=0 // pred_check
    _
  $region23: #{resnet_forward.85} parent=0 // pred_check_branch
    %111 = sbr.rel (0) target = $region25
  $region24: #{resnet_forward.85} parent=0 // pred_region
    _
  $region25: #{resnet_forward.85} parent=0 // pred_fallthru
    _
  // Predicated region
  $region26: #{resnet_forward.85} parent=0 // pred_check
    _
  $region27: #{resnet_forward.85} parent=0 // pred_check_branch
    %113 = sbr.rel (0) target = $region29
  $region28: #{resnet_forward.85} parent=0 // pred_region
    _
  $region29: #{resnet_forward.85} parent=0 // pred_fallthru
    _

</llo_original>
